<compile_context>
chip_gen: v5e
topology: v5e:2x2
jax: 0.10.0
libtpu: 0.0.40
codegen_flags: <defaults>
</compile_context>

<pallas_src>
import functools

import numpy as np
import jax
import jax.numpy as jnp
from jax.experimental import pallas as pl
from jax.experimental.pallas import tpu as pltpu


C1IN = 128   # channels after the fc reshape (fixed by the module)
C1OUT = 64   # ConvTranspose2d(128 -> 64)


# ---------------------------------------------------------------------------
# Fully fused generator kernel (single grid point, everything in VMEM)
# ---------------------------------------------------------------------------
def _generator_kernel(onehot_ref, z_ref,
                      lpw_ref, lpb_ref,
                      fcw_ref, fcb_ref,
                      dlw_ref, dlb_ref,
                      bn1g_ref, bn1b_ref,
                      w1b_ref, b1t_ref,
                      bn2g_ref, bn2b_ref,
                      w2b_ref, b2t_ref,
                      out_ref,
                      *, B, init_size, alpha, eps):
    f32 = jnp.float32
    H1 = W1 = init_size          # conv1 input spatial (4)
    OW1 = 2 * W1                 # conv1 output width  (8)
    H2 = 2 * H1                  # conv2 input height  (8)
    L1 = W1 * C1IN               # cols of a conv1 input row  (512)
    L2 = OW1 * C1OUT             # cols of a conv2 input row  (512)

    def lrelu(v):
        return jnp.where(v >= 0, v, alpha * v)

    onehot = onehot_ref[...]

    # ---- label_proj: Linear + LeakyReLU ------------------------------------
    lp = jnp.dot(onehot, lpw_ref[...], preferred_element_type=f32) + lpb_ref[...]
    lp = lrelu(lp)

    # ---- fc: Linear ---------------------------------------------------------
    x = jnp.concatenate([z_ref[...], lp], axis=1)
    fc = jnp.dot(x, fcw_ref[...], preferred_element_type=f32) + fcb_ref[...]

    # ---- deep_label_proj: Linear + LeakyReLU --------------------------------
    deep = jnp.dot(onehot, dlw_ref[...], preferred_element_type=f32) + dlb_ref[...]
    deep = lrelu(deep)

    # ---- BatchNorm1d (training-mode batch stats) + LeakyReLU + residual -----
    mean1 = jnp.mean(fc, axis=0, keepdims=True)
    d1 = fc - mean1
    var1 = jnp.mean(d1 * d1, axis=0, keepdims=True)
    out1 = lrelu(d1 * jax.lax.rsqrt(var1 + eps) * bn1g_ref[...] + bn1b_ref[...]) + deep
    # out1: (B, H1*W1*128); columns were pre-permuted to (h, w, c) order.

    # ---- re-layout to rows (h, b), cols (w, c) ------------------------------
    x1 = jnp.concatenate([out1[:, h * L1:(h + 1) * L1] for h in range(H1)], axis=0)

    # ---- ConvTranspose2d #1 as one band matmul ------------------------------
    zero1 = jnp.zeros((B, L1), f32)
    up1 = jnp.concatenate([zero1, x1[:(H1 - 1) * B, :]], axis=0)   # input row h-1
    dn1 = jnp.concatenate([x1[B:, :], zero1], axis=0)              # input row h+1
    band1 = jnp.concatenate([up1, x1, dn1], axis=1).astype(jnp.bfloat16)
    y1 = jnp.dot(band1, w1b_ref[...], preferred_element_type=f32) + b1t_ref[...]
    # y1: rows (h1', b), cols (ph, ow, c)  -> shape (H1*B, 2*OW1*64)

    # ---- BatchNorm2d(64) + LeakyReLU fused epilogue (train-mode stats) ------
    n_groups = 2 * OW1                       # (ph, ow) column groups of 64
    n_elems = float(B * 2 * H1 * OW1)        # N*H*W for the statistics
    rsum = jnp.sum(y1, axis=0, keepdims=True)
    csum = rsum[:, 0:C1OUT]
    for g in range(1, n_groups):
        csum = csum + rsum[:, g * C1OUT:(g + 1) * C1OUT]
    mean2 = csum / n_elems
    mean2_t = jnp.concatenate([mean2] * n_groups, axis=1)
    d2 = y1 - mean2_t
    rsq = jnp.sum(d2 * d2, axis=0, keepdims=True)
    csq = rsq[:, 0:C1OUT]
    for g in range(1, n_groups):
        csq = csq + rsq[:, g * C1OUT:(g + 1) * C1OUT]
    var2 = csq / n_elems
    scale2 = bn2g_ref[...] * jax.lax.rsqrt(var2 + eps)
    scale2_t = jnp.concatenate([scale2] * n_groups, axis=1)
    shift2_t = jnp.concatenate([bn2b_ref[...]] * n_groups, axis=1)
    x2 = lrelu(d2 * scale2_t + shift2_t)

    # ---- re-layout to conv2 input rows (h2, b), cols (w2, c) ----------------
    x2_in = jnp.concatenate(
        [x2[(h2 // 2) * B:(h2 // 2 + 1) * B, (h2 % 2) * L2:(h2 % 2 + 1) * L2]
         for h2 in range(H2)],
        axis=0)

    # ---- ConvTranspose2d #2 band matmul + Sigmoid ---------------------------
    zero2 = jnp.zeros((B, L2), f32)
    up2 = jnp.concatenate([zero2, x2_in[:(H2 - 1) * B, :]], axis=0)
    dn2 = jnp.concatenate([x2_in[B:, :], zero2], axis=0)
    band2 = jnp.concatenate([up2, x2_in, dn2], axis=1).astype(jnp.bfloat16)
    y2 = jnp.dot(band2, w2b_ref[...], preferred_element_type=f32) + b2t_ref[...]
    out_ref[...] = 1.0 / (1.0 + jnp.exp(-y2))


# ---------------------------------------------------------------------------
# One-time parameter preparation (outside jit): band weights & column perms
# ---------------------------------------------------------------------------
def _phase_tap(p, d):
    """kernel index kh serving output parity p from input offset d = h_in - h'_out."""
    return {(0, 0): 1, (0, -1): 3, (1, 1): 0, (1, 0): 2}.get((p, d))


def _band_weight(w, w_in_size):
    """PyTorch ConvTranspose2d(k=4,s=2,p=1) weight (Cin,Cout,4,4) ->
    band-matmul weight of shape (3*W*Cin, 2*OW*Cout)."""
    cin, cout = int(w.shape[0]), int(w.shape[1])
    W = int(w_in_size)
    OW = 2 * W
    mh = np.zeros((3, 2, 4), np.float32)
    for p in range(2):
        for d in (-1, 0, 1):
            k = _phase_tap(p, d)
            if k is not None:
                mh[d + 1, p, k] = 1.0
    mw = np.zeros((W, OW, 4), np.float32)
    for ow in range(OW):
        wq, pw = ow // 2, ow % 2
        for d in (-1, 0, 1):
            k = _phase_tap(pw, d)
            if k is not None and 0 <= wq + d < W:
                mw[wq + d, ow, k] = 1.0
    wb = jnp.einsum('jpk,wol,cdkl->jwcpod', jnp.asarray(mh), jnp.asarray(mw), w)
    return wb.reshape(3 * W * cin, 2 * OW * cout)


def prepare_kernel_params(params, *, init_size):
    s = init_size

    def perm_mat(w):   # linear output columns (c, h, w) -> (h, w, c)
        k = w.shape[0]
        return w.reshape(k, C1IN, s, s).transpose(0, 2, 3, 1).reshape(k, C1IN * s * s)

    def perm_vec(v):
        return v.reshape(C1IN, s, s).transpose(1, 2, 0).reshape(1, -1)

    return dict(
        lpw=params['lp_w'], lpb=params['lp_b'][None, :],
        fcw=perm_mat(params['fc_w']), fcb=perm_vec(params['fc_b']),
        dlw=perm_mat(params['dl_w']), dlb=perm_vec(params['dl_b']),
        bn1g=perm_vec(params['bn1_g']), bn1b=perm_vec(params['bn1_b']),
        w1b=_band_weight(params['ct1_w'], s).astype(jnp.bfloat16),
        b1t=jnp.tile(params['ct1_b'], 2 * 2 * s)[None, :],
        bn2g=params['bn2_g'][None, :], bn2b=params['bn2_b'][None, :],
        w2b=_band_weight(params['ct2_w'], 2 * s).astype(jnp.bfloat16),
        b2t=jnp.tile(params['ct2_b'], 2 * 4 * s)[None, :],
    )


# ---------------------------------------------------------------------------
# Forward: one_hot -> single fused pallas_call -> tiny NCHW layout glue
# ---------------------------------------------------------------------------
def generator_forward(kparams, labels, z, *, n_classes, init_size, output_channels,
                      alpha=0.2, eps=1e-5):
    B = labels.shape[0]
    H2 = 2 * init_size
    OW2 = 2 * H2
    onehot = jax.nn.one_hot(labels, n_classes, dtype=jnp.float32)

    args = (onehot, z,
            kparams['lpw'], kparams['lpb'],
            kparams['fcw'], kparams['fcb'],
            kparams['dlw'], kparams['dlb'],
            kparams['bn1g'], kparams['bn1b'],
            kparams['w1b'], kparams['b1t'],
            kparams['bn2g'], kparams['bn2b'],
            kparams['w2b'], kparams['b2t'])

    kernel = functools.partial(_generator_kernel, B=B, init_size=init_size,
                               alpha=alpha, eps=eps)
    out_shape = (H2 * B, 2 * OW2 * output_channels)
    out = pl.pallas_call(
        kernel,
        out_shape=jax.ShapeDtypeStruct(out_shape, jnp.float32),
        grid=(1,),
        in_specs=[pl.BlockSpec(a.shape, lambda i: (0, 0)) for a in args],
        out_specs=pl.BlockSpec(out_shape, lambda i: (0, 0)),
        compiler_params=pltpu.CompilerParams(
            dimension_semantics=("arbitrary",),
            vmem_limit_bytes=32 * 1024 * 1024),
    )(*args)

    # rows (h2', b), cols (ph, ow, c)  ->  NCHW  (12 KB of layout glue)
    img = out.reshape(H2, B, 2, OW2, output_channels)
    img = jnp.transpose(img, (1, 4, 0, 2, 3))
    return img.reshape(B, output_channels, 2 * H2, OW2)


# ---------------------------------------------------------------------------
# Deterministic parameter init (shapes from Generator.__init__; PyTorch layouts)
# ---------------------------------------------------------------------------
def init_params(key, latent_dim, n_classes, output_channels, init_size):
    fdim = C1IN * init_size * init_size
    keys = jax.random.split(key, 7)

    def lin(k, fan_in, fan_out):
        lim = 1.0 / float(np.sqrt(fan_in))
        kw, kb = jax.random.split(k)
        w = jax.random.uniform(kw, (fan_in, fan_out), jnp.float32, -lim, lim)
        b = jax.random.uniform(kb, (fan_out,), jnp.float32, -lim, lim)
        return w, b

    lp_w, lp_b = lin(keys[0], n_classes, n_classes)
    fc_w, fc_b = lin(keys[1], latent_dim + n_classes, fdim)
    dl_w, dl_b = lin(keys[2], n_classes, fdim)
    ct1_w = jax.random.normal(keys[3], (C1IN, C1OUT, 4, 4), jnp.float32) * 0.05
    ct1_b = jax.random.normal(keys[4], (C1OUT,), jnp.float32) * 0.01
    ct2_w = jax.random.normal(keys[5], (C1OUT, output_channels, 4, 4), jnp.float32) * 0.05
    ct2_b = jax.random.normal(keys[6], (output_channels,), jnp.float32) * 0.01
    return dict(
        lp_w=lp_w, lp_b=lp_b, fc_w=fc_w, fc_b=fc_b, dl_w=dl_w, dl_b=dl_b,
        bn1_g=jnp.ones((fdim,), jnp.float32), bn1_b=jnp.zeros((fdim,), jnp.float32),
        bn2_g=jnp.ones((C1OUT,), jnp.float32), bn2_b=jnp.zeros((C1OUT,), jnp.float32),
        ct1_w=ct1_w, ct1_b=ct1_b, ct2_w=ct2_w, ct2_b=ct2_b,
    )


if __name__ == "__main__":
    latent_dim, n_classes, out_ch, img_size, alpha = 16, 4, 3, 16, 0.2
    init_size = img_size // 4
    batch = 4

    key = jax.random.PRNGKey(0)
    kp, kl, kz = jax.random.split(key, 3)
    params = init_params(kp, latent_dim, n_classes, out_ch, init_size)
    kparams = prepare_kernel_params(params, init_size=init_size)   # one-time prep
    labels = jax.random.randint(kl, (batch,), 0, n_classes)
    # TODO(synk): torch.randn inside forward has no deterministic Pallas equivalent;
    # the latent z is drawn here with a fixed JAX PRNG key instead.
    z = jax.random.normal(kz, (batch, latent_dim), jnp.float32)

    fwd = jax.jit(functools.partial(generator_forward, n_classes=n_classes,
                                    init_size=init_size, output_channels=out_ch,
                                    alpha=alpha))
    img = fwd(kparams, labels, z)
    jax.block_until_ready(img)

    assert img.shape == (batch, out_ch, img_size, img_size), img.shape
    assert img.dtype == jnp.float32
    assert bool(jnp.all(jnp.isfinite(img)))
    assert bool(jnp.all((img >= 0.0) & (img <= 1.0)))   # sigmoid output range
    print("KERNEL_OK")
</pallas_src>

<mosaic_0001>
module attributes {stable_mosaic.version = 11 : i64} {
  func.func @_generator_kernel(%arg0: i32, %arg1: memref<4x4xf32, #tpu.memory_space<vmem>>, %arg2: memref<4x16xf32, #tpu.memory_space<vmem>>, %arg3: memref<4x4xf32, #tpu.memory_space<vmem>>, %arg4: memref<1x4xf32, #tpu.memory_space<vmem>>, %arg5: memref<20x2048xf32, #tpu.memory_space<vmem>>, %arg6: memref<1x2048xf32, #tpu.memory_space<vmem>>, %arg7: memref<4x2048xf32, #tpu.memory_space<vmem>>, %arg8: memref<1x2048xf32, #tpu.memory_space<vmem>>, %arg9: memref<1x2048xf32, #tpu.memory_space<vmem>>, %arg10: memref<1x2048xf32, #tpu.memory_space<vmem>>, %arg11: memref<1536x1024xbf16, #tpu.memory_space<vmem>>, %arg12: memref<1x1024xf32, #tpu.memory_space<vmem>>, %arg13: memref<1x64xf32, #tpu.memory_space<vmem>>, %arg14: memref<1x64xf32, #tpu.memory_space<vmem>>, %arg15: memref<1536x96xbf16, #tpu.memory_space<vmem>>, %arg16: memref<1x96xf32, #tpu.memory_space<vmem>>, %arg17: memref<32x96xf32, #tpu.memory_space<vmem>>) attributes {dimension_semantics = [#tpu.dimension_semantics<arbitrary>], iteration_bounds = array<i64: 1>, scalar_prefetch = 0 : i64, scratch_operands = 0 : i64, tpu.core_type = #tpu.core_type<tc>, window_params = [{pipeline_mode = #tpu.pipeline_mode<synchronous>, transform_indices = @transform_0, window_bounds = array<i64: 4, 4>}, {pipeline_mode = #tpu.pipeline_mode<synchronous>, transform_indices = @transform_1, window_bounds = array<i64: 4, 16>}, {pipeline_mode = #tpu.pipeline_mode<synchronous>, transform_indices = @transform_2, window_bounds = array<i64: 4, 4>}, {pipeline_mode = #tpu.pipeline_mode<synchronous>, transform_indices = @transform_3, window_bounds = array<i64: 1, 4>}, {pipeline_mode = #tpu.pipeline_mode<synchronous>, transform_indices = @transform_4, window_bounds = array<i64: 20, 2048>}, {pipeline_mode = #tpu.pipeline_mode<synchronous>, transform_indices = @transform_5, window_bounds = array<i64: 1, 2048>}, {pipeline_mode = #tpu.pipeline_mode<synchronous>, transform_indices = @transform_6, window_bounds = array<i64: 4, 2048>}, {pipeline_mode = #tpu.pipeline_mode<synchronous>, transform_indices = @transform_7, window_bounds = array<i64: 1, 2048>}, {pipeline_mode = #tpu.pipeline_mode<synchronous>, transform_indices = @transform_8, window_bounds = array<i64: 1, 2048>}, {pipeline_mode = #tpu.pipeline_mode<synchronous>, transform_indices = @transform_9, window_bounds = array<i64: 1, 2048>}, {pipeline_mode = #tpu.pipeline_mode<synchronous>, transform_indices = @transform_10, window_bounds = array<i64: 1536, 1024>}, {pipeline_mode = #tpu.pipeline_mode<synchronous>, transform_indices = @transform_11, window_bounds = array<i64: 1, 1024>}, {pipeline_mode = #tpu.pipeline_mode<synchronous>, transform_indices = @transform_12, window_bounds = array<i64: 1, 64>}, {pipeline_mode = #tpu.pipeline_mode<synchronous>, transform_indices = @transform_13, window_bounds = array<i64: 1, 64>}, {pipeline_mode = #tpu.pipeline_mode<synchronous>, transform_indices = @transform_14, window_bounds = array<i64: 1536, 96>}, {pipeline_mode = #tpu.pipeline_mode<synchronous>, transform_indices = @transform_15, window_bounds = array<i64: 1, 96>}, {pipeline_mode = #tpu.pipeline_mode<synchronous>, transform_indices = @transform_16, window_bounds = array<i64: 32, 96>}]} {
    %c0 = arith.constant 0 : index
    %c0_0 = arith.constant 0 : index
    %0 = vector.load %arg1[%c0, %c0_0] : memref<4x4xf32, #tpu.memory_space<vmem>>, vector<4x4xf32>
    %c0_1 = arith.constant 0 : index
    %c0_2 = arith.constant 0 : index
    %1 = vector.load %arg3[%c0_1, %c0_2] : memref<4x4xf32, #tpu.memory_space<vmem>>, vector<4x4xf32>
    %cst = arith.constant dense<0.000000e+00> : vector<4x4xf32>
    %2 = tpu.matmul %0, %1, %cst {dimension_numbers = #tpu.dot_dimension_numbers<[1], [0], [0], [1], [0, 0, 1, 1], [], []>} : vector<4x4xf32>, vector<4x4xf32>, vector<4x4xf32> -> vector<4x4xf32>
    %c0_3 = arith.constant 0 : index
    %c0_4 = arith.constant 0 : index
    %3 = vector.load %arg4[%c0_3, %c0_4] : memref<1x4xf32, #tpu.memory_space<vmem>>, vector<1x4xf32>
    %4 = vector.broadcast %3 : vector<1x4xf32> to vector<4x4xf32>
    %5 = arith.addf %2, %4 : vector<4x4xf32>
    %cst_5 = arith.constant 0.000000e+00 : f32
    %6 = vector.broadcast %cst_5 : f32 to vector<4x4xf32>
    %7 = arith.cmpf oge, %5, %6 : vector<4x4xf32>
    %cst_6 = arith.constant 2.000000e-01 : f32
    %8 = vector.broadcast %cst_6 : f32 to vector<4x4xf32>
    %9 = arith.mulf %8, %5 : vector<4x4xf32>
    %10 = arith.select %7, %5, %9 : vector<4x4xi1>, vector<4x4xf32>
    %c0_7 = arith.constant 0 : index
    %c0_8 = arith.constant 0 : index
    %11 = vector.load %arg2[%c0_7, %c0_8] : memref<4x16xf32, #tpu.memory_space<vmem>>, vector<4x16xf32>
    %12 = tpu.concatenate %11, %10 in 1 : vector<4x16xf32>, vector<4x4xf32> -> vector<4x20xf32>
    %c0_9 = arith.constant 0 : index
    %c0_10 = arith.constant 0 : index
    %13 = vector.load %arg5[%c0_9, %c0_10] : memref<20x2048xf32, #tpu.memory_space<vmem>>, vector<20x2048xf32>
    %cst_11 = arith.constant dense<0.000000e+00> : vector<4x2048xf32>
    %14 = tpu.matmul %12, %13, %cst_11 {dimension_numbers = #tpu.dot_dimension_numbers<[1], [0], [0], [1], [0, 0, 1, 1], [], []>} : vector<4x20xf32>, vector<20x2048xf32>, vector<4x2048xf32> -> vector<4x2048xf32>
    %c0_12 = arith.constant 0 : index
    %c0_13 = arith.constant 0 : index
    %15 = vector.load %arg6[%c0_12, %c0_13] : memref<1x2048xf32, #tpu.memory_space<vmem>>, vector<1x2048xf32>
    %16 = vector.broadcast %15 : vector<1x2048xf32> to vector<4x2048xf32>
    %17 = arith.addf %14, %16 : vector<4x2048xf32>
    %c0_14 = arith.constant 0 : index
    %c0_15 = arith.constant 0 : index
    %18 = vector.load %arg7[%c0_14, %c0_15] : memref<4x2048xf32, #tpu.memory_space<vmem>>, vector<4x2048xf32>
    %cst_16 = arith.constant dense<0.000000e+00> : vector<4x2048xf32>
    %19 = tpu.matmul %0, %18, %cst_16 {dimension_numbers = #tpu.dot_dimension_numbers<[1], [0], [0], [1], [0, 0, 1, 1], [], []>} : vector<4x4xf32>, vector<4x2048xf32>, vector<4x2048xf32> -> vector<4x2048xf32>
    %c0_17 = arith.constant 0 : index
    %c0_18 = arith.constant 0 : index
    %20 = vector.load %arg8[%c0_17, %c0_18] : memref<1x2048xf32, #tpu.memory_space<vmem>>, vector<1x2048xf32>
    %21 = vector.broadcast %20 : vector<1x2048xf32> to vector<4x2048xf32>
    %22 = arith.addf %19, %21 : vector<4x2048xf32>
    %cst_19 = arith.constant 0.000000e+00 : f32
    %23 = vector.broadcast %cst_19 : f32 to vector<4x2048xf32>
    %24 = arith.cmpf oge, %22, %23 : vector<4x2048xf32>
    %cst_20 = arith.constant 2.000000e-01 : f32
    %25 = vector.broadcast %cst_20 : f32 to vector<4x2048xf32>
    %26 = arith.mulf %25, %22 : vector<4x2048xf32>
    %27 = arith.select %24, %22, %26 : vector<4x2048xi1>, vector<4x2048xf32>
    %cst_21 = arith.constant dense<0.000000e+00> : vector<2048xf32>
    %28 = vector.multi_reduction <add>, %17, %cst_21 [0] : vector<4x2048xf32> to vector<2048xf32>
    %29 = vector.shape_cast %28 : vector<2048xf32> to vector<1x2048xf32>
    %cst_22 = arith.constant 4.000000e+00 : f32
    %30 = vector.broadcast %cst_22 : f32 to vector<1x2048xf32>
    %31 = arith.divf %29, %30 : vector<1x2048xf32>
    %32 = vector.broadcast %31 : vector<1x2048xf32> to vector<4x2048xf32>
    %33 = arith.subf %17, %32 : vector<4x2048xf32>
    %34 = arith.mulf %33, %33 : vector<4x2048xf32>
    %cst_23 = arith.constant dense<0.000000e+00> : vector<2048xf32>
    %35 = vector.multi_reduction <add>, %34, %cst_23 [0] : vector<4x2048xf32> to vector<2048xf32>
    %36 = vector.shape_cast %35 : vector<2048xf32> to vector<1x2048xf32>
    %cst_24 = arith.constant 4.000000e+00 : f32
    %37 = vector.broadcast %cst_24 : f32 to vector<1x2048xf32>
    %38 = arith.divf %36, %37 : vector<1x2048xf32>
    %cst_25 = arith.constant 9.99999974E-6 : f32
    %39 = vector.broadcast %cst_25 : f32 to vector<1x2048xf32>
    %40 = arith.addf %38, %39 : vector<1x2048xf32>
    %41 = math.rsqrt %40 : vector<1x2048xf32>
    %42 = vector.broadcast %41 : vector<1x2048xf32> to vector<4x2048xf32>
    %43 = arith.mulf %33, %42 : vector<4x2048xf32>
    %c0_26 = arith.constant 0 : index
    %c0_27 = arith.constant 0 : index
    %44 = vector.load %arg9[%c0_26, %c0_27] : memref<1x2048xf32, #tpu.memory_space<vmem>>, vector<1x2048xf32>
    %45 = vector.broadcast %44 : vector<1x2048xf32> to vector<4x2048xf32>
    %46 = arith.mulf %43, %45 : vector<4x2048xf32>
    %c0_28 = arith.constant 0 : index
    %c0_29 = arith.constant 0 : index
    %47 = vector.load %arg10[%c0_28, %c0_29] : memref<1x2048xf32, #tpu.memory_space<vmem>>, vector<1x2048xf32>
    %48 = vector.broadcast %47 : vector<1x2048xf32> to vector<4x2048xf32>
    %49 = arith.addf %46, %48 : vector<4x2048xf32>
    %cst_30 = arith.constant 0.000000e+00 : f32
    %50 = vector.broadcast %cst_30 : f32 to vector<4x2048xf32>
    %51 = arith.cmpf oge, %49, %50 : vector<4x2048xf32>
    %cst_31 = arith.constant 2.000000e-01 : f32
    %52 = vector.broadcast %cst_31 : f32 to vector<4x2048xf32>
    %53 = arith.mulf %52, %49 : vector<4x2048xf32>
    %54 = arith.select %51, %49, %53 : vector<4x2048xi1>, vector<4x2048xf32>
    %55 = arith.addf %54, %27 : vector<4x2048xf32>
    %56 = vector.extract_strided_slice %55 {offsets = [0, 0], sizes = [4, 512], strides = [1, 1]} : vector<4x2048xf32> to vector<4x512xf32>
    %57 = vector.extract_strided_slice %55 {offsets = [0, 512], sizes = [4, 512], strides = [1, 1]} : vector<4x2048xf32> to vector<4x512xf32>
    %58 = vector.extract_strided_slice %55 {offsets = [0, 1024], sizes = [4, 512], strides = [1, 1]} : vector<4x2048xf32> to vector<4x512xf32>
    %59 = vector.extract_strided_slice %55 {offsets = [0, 1536], sizes = [4, 512], strides = [1, 1]} : vector<4x2048xf32> to vector<4x512xf32>
    %60 = tpu.concatenate %56, %57, %58, %59 in 0 : vector<4x512xf32>, vector<4x512xf32>, vector<4x512xf32>, vector<4x512xf32> -> vector<16x512xf32>
    %cst_32 = arith.constant 0.000000e+00 : f32
    %61 = vector.broadcast %cst_32 : f32 to vector<4x512xf32>
    %62 = vector.extract_strided_slice %60 {offsets = [0, 0], sizes = [12, 512], strides = [1, 1]} : vector<16x512xf32> to vector<12x512xf32>
    %63 = tpu.concatenate %61, %62 in 0 : vector<4x512xf32>, vector<12x512xf32> -> vector<16x512xf32>
    %64 = vector.extract_strided_slice %60 {offsets = [4, 0], sizes = [12, 512], strides = [1, 1]} : vector<16x512xf32> to vector<12x512xf32>
    %65 = tpu.concatenate %64, %61 in 0 : vector<12x512xf32>, vector<4x512xf32> -> vector<16x512xf32>
    %66 = tpu.concatenate %63, %60, %65 in 1 : vector<16x512xf32>, vector<16x512xf32>, vector<16x512xf32> -> vector<16x1536xf32>
    %67 = arith.truncf %66 : vector<16x1536xf32> to vector<16x1536xbf16>
    %c0_33 = arith.constant 0 : index
    %c0_34 = arith.constant 0 : index
    %68 = vector.load %arg11[%c0_33, %c0_34] : memref<1536x1024xbf16, #tpu.memory_space<vmem>>, vector<1536x1024xbf16>
    %cst_35 = arith.constant dense<0.000000e+00> : vector<16x1024xf32>
    %69 = tpu.matmul %67, %68, %cst_35 {dimension_numbers = #tpu.dot_dimension_numbers<[1], [0], [0], [1], [0, 0, 1, 1], [], []>} : vector<16x1536xbf16>, vector<1536x1024xbf16>, vector<16x1024xf32> -> vector<16x1024xf32>
    %c0_36 = arith.constant 0 : index
    %c0_37 = arith.constant 0 : index
    %70 = vector.load %arg12[%c0_36, %c0_37] : memref<1x1024xf32, #tpu.memory_space<vmem>>, vector<1x1024xf32>
    %71 = vector.broadcast %70 : vector<1x1024xf32> to vector<16x1024xf32>
    %72 = arith.addf %69, %71 : vector<16x1024xf32>
    %cst_38 = arith.constant dense<0.000000e+00> : vector<1024xf32>
    %73 = vector.multi_reduction <add>, %72, %cst_38 [0] : vector<16x1024xf32> to vector<1024xf32>
    %74 = vector.shape_cast %73 : vector<1024xf32> to vector<1x1024xf32>
    %75 = vector.extract_strided_slice %74 {offsets = [0, 0], sizes = [1, 64], strides = [1, 1]} : vector<1x1024xf32> to vector<1x64xf32>
    %76 = vector.extract_strided_slice %74 {offsets = [0, 64], sizes = [1, 64], strides = [1, 1]} : vector<1x1024xf32> to vector<1x64xf32>
    %77 = arith.addf %75, %76 : vector<1x64xf32>
    %78 = vector.extract_strided_slice %74 {offsets = [0, 128], sizes = [1, 64], strides = [1, 1]} : vector<1x1024xf32> to vector<1x64xf32>
    %79 = arith.addf %77, %78 : vector<1x64xf32>
    %80 = vector.extract_strided_slice %74 {offsets = [0, 192], sizes = [1, 64], strides = [1, 1]} : vector<1x1024xf32> to vector<1x64xf32>
    %81 = arith.addf %79, %80 : vector<1x64xf32>
    %82 = vector.extract_strided_slice %74 {offsets = [0, 256], sizes = [1, 64], strides = [1, 1]} : vector<1x1024xf32> to vector<1x64xf32>
    %83 = arith.addf %81, %82 : vector<1x64xf32>
    %84 = vector.extract_strided_slice %74 {offsets = [0, 320], sizes = [1, 64], strides = [1, 1]} : vector<1x1024xf32> to vector<1x64xf32>
    %85 = arith.addf %83, %84 : vector<1x64xf32>
    %86 = vector.extract_strided_slice %74 {offsets = [0, 384], sizes = [1, 64], strides = [1, 1]} : vector<1x1024xf32> to vector<1x64xf32>
    %87 = arith.addf %85, %86 : vector<1x64xf32>
    %88 = vector.extract_strided_slice %74 {offsets = [0, 448], sizes = [1, 64], strides = [1, 1]} : vector<1x1024xf32> to vector<1x64xf32>
    %89 = arith.addf %87, %88 : vector<1x64xf32>
    %90 = vector.extract_strided_slice %74 {offsets = [0, 512], sizes = [1, 64], strides = [1, 1]} : vector<1x1024xf32> to vector<1x64xf32>
    %91 = arith.addf %89, %90 : vector<1x64xf32>
    %92 = vector.extract_strided_slice %74 {offsets = [0, 576], sizes = [1, 64], strides = [1, 1]} : vector<1x1024xf32> to vector<1x64xf32>
    %93 = arith.addf %91, %92 : vector<1x64xf32>
    %94 = vector.extract_strided_slice %74 {offsets = [0, 640], sizes = [1, 64], strides = [1, 1]} : vector<1x1024xf32> to vector<1x64xf32>
    %95 = arith.addf %93, %94 : vector<1x64xf32>
    %96 = vector.extract_strided_slice %74 {offsets = [0, 704], sizes = [1, 64], strides = [1, 1]} : vector<1x1024xf32> to vector<1x64xf32>
    %97 = arith.addf %95, %96 : vector<1x64xf32>
    %98 = vector.extract_strided_slice %74 {offsets = [0, 768], sizes = [1, 64], strides = [1, 1]} : vector<1x1024xf32> to vector<1x64xf32>
    %99 = arith.addf %97, %98 : vector<1x64xf32>
    %100 = vector.extract_strided_slice %74 {offsets = [0, 832], sizes = [1, 64], strides = [1, 1]} : vector<1x1024xf32> to vector<1x64xf32>
    %101 = arith.addf %99, %100 : vector<1x64xf32>
    %102 = vector.extract_strided_slice %74 {offsets = [0, 896], sizes = [1, 64], strides = [1, 1]} : vector<1x1024xf32> to vector<1x64xf32>
    %103 = arith.addf %101, %102 : vector<1x64xf32>
    %104 = vector.extract_strided_slice %74 {offsets = [0, 960], sizes = [1, 64], strides = [1, 1]} : vector<1x1024xf32> to vector<1x64xf32>
    %105 = arith.addf %103, %104 : vector<1x64xf32>
    %cst_39 = arith.constant 2.560000e+02 : f32
    %106 = vector.broadcast %cst_39 : f32 to vector<1x64xf32>
    %107 = arith.divf %105, %106 : vector<1x64xf32>
    %108 = tpu.concatenate %107, %107, %107, %107, %107, %107, %107, %107, %107, %107, %107, %107, %107, %107, %107, %107 in 1 : vector<1x64xf32>, vector<1x64xf32>, vector<1x64xf32>, vector<1x64xf32>, vector<1x64xf32>, vector<1x64xf32>, vector<1x64xf32>, vector<1x64xf32>, vector<1x64xf32>, vector<1x64xf32>, vector<1x64xf32>, vector<1x64xf32>, vector<1x64xf32>, vector<1x64xf32>, vector<1x64xf32>, vector<1x64xf32> -> vector<1x1024xf32>
    %109 = vector.broadcast %108 : vector<1x1024xf32> to vector<16x1024xf32>
    %110 = arith.subf %72, %109 : vector<16x1024xf32>
    %111 = arith.mulf %110, %110 : vector<16x1024xf32>
    %cst_40 = arith.constant dense<0.000000e+00> : vector<1024xf32>
    %112 = vector.multi_reduction <add>, %111, %cst_40 [0] : vector<16x1024xf32> to vector<1024xf32>
    %113 = vector.shape_cast %112 : vector<1024xf32> to vector<1x1024xf32>
    %114 = vector.extract_strided_slice %113 {offsets = [0, 0], sizes = [1, 64], strides = [1, 1]} : vector<1x1024xf32> to vector<1x64xf32>
    %115 = vector.extract_strided_slice %113 {offsets = [0, 64], sizes = [1, 64], strides = [1, 1]} : vector<1x1024xf32> to vector<1x64xf32>
    %116 = arith.addf %114, %115 : vector<1x64xf32>
    %117 = vector.extract_strided_slice %113 {offsets = [0, 128], sizes = [1, 64], strides = [1, 1]} : vector<1x1024xf32> to vector<1x64xf32>
    %118 = arith.addf %116, %117 : vector<1x64xf32>
    %119 = vector.extract_strided_slice %113 {offsets = [0, 192], sizes = [1, 64], strides = [1, 1]} : vector<1x1024xf32> to vector<1x64xf32>
    %120 = arith.addf %118, %119 : vector<1x64xf32>
    %121 = vector.extract_strided_slice %113 {offsets = [0, 256], sizes = [1, 64], strides = [1, 1]} : vector<1x1024xf32> to vector<1x64xf32>
    %122 = arith.addf %120, %121 : vector<1x64xf32>
    %123 = vector.extract_strided_slice %113 {offsets = [0, 320], sizes = [1, 64], strides = [1, 1]} : vector<1x1024xf32> to vector<1x64xf32>
    %124 = arith.addf %122, %123 : vector<1x64xf32>
    %125 = vector.extract_strided_slice %113 {offsets = [0, 384], sizes = [1, 64], strides = [1, 1]} : vector<1x1024xf32> to vector<1x64xf32>
    %126 = arith.addf %124, %125 : vector<1x64xf32>
    %127 = vector.extract_strided_slice %113 {offsets = [0, 448], sizes = [1, 64], strides = [1, 1]} : vector<1x1024xf32> to vector<1x64xf32>
    %128 = arith.addf %126, %127 : vector<1x64xf32>
    %129 = vector.extract_strided_slice %113 {offsets = [0, 512], sizes = [1, 64], strides = [1, 1]} : vector<1x1024xf32> to vector<1x64xf32>
    %130 = arith.addf %128, %129 : vector<1x64xf32>
    %131 = vector.extract_strided_slice %113 {offsets = [0, 576], sizes = [1, 64], strides = [1, 1]} : vector<1x1024xf32> to vector<1x64xf32>
    %132 = arith.addf %130, %131 : vector<1x64xf32>
    %133 = vector.extract_strided_slice %113 {offsets = [0, 640], sizes = [1, 64], strides = [1, 1]} : vector<1x1024xf32> to vector<1x64xf32>
    %134 = arith.addf %132, %133 : vector<1x64xf32>
    %135 = vector.extract_strided_slice %113 {offsets = [0, 704], sizes = [1, 64], strides = [1, 1]} : vector<1x1024xf32> to vector<1x64xf32>
    %136 = arith.addf %134, %135 : vector<1x64xf32>
    %137 = vector.extract_strided_slice %113 {offsets = [0, 768], sizes = [1, 64], strides = [1, 1]} : vector<1x1024xf32> to vector<1x64xf32>
    %138 = arith.addf %136, %137 : vector<1x64xf32>
    %139 = vector.extract_strided_slice %113 {offsets = [0, 832], sizes = [1, 64], strides = [1, 1]} : vector<1x1024xf32> to vector<1x64xf32>
    %140 = arith.addf %138, %139 : vector<1x64xf32>
    %141 = vector.extract_strided_slice %113 {offsets = [0, 896], sizes = [1, 64], strides = [1, 1]} : vector<1x1024xf32> to vector<1x64xf32>
    %142 = arith.addf %140, %141 : vector<1x64xf32>
    %143 = vector.extract_strided_slice %113 {offsets = [0, 960], sizes = [1, 64], strides = [1, 1]} : vector<1x1024xf32> to vector<1x64xf32>
    %144 = arith.addf %142, %143 : vector<1x64xf32>
    %cst_41 = arith.constant 2.560000e+02 : f32
    %145 = vector.broadcast %cst_41 : f32 to vector<1x64xf32>
    %146 = arith.divf %144, %145 : vector<1x64xf32>
    %c0_42 = arith.constant 0 : index
    %c0_43 = arith.constant 0 : index
    %147 = vector.load %arg13[%c0_42, %c0_43] : memref<1x64xf32, #tpu.memory_space<vmem>>, vector<1x64xf32>
    %cst_44 = arith.constant 9.99999974E-6 : f32
    %148 = vector.broadcast %cst_44 : f32 to vector<1x64xf32>
    %149 = arith.addf %146, %148 : vector<1x64xf32>
    %150 = math.rsqrt %149 : vector<1x64xf32>
    %151 = arith.mulf %147, %150 : vector<1x64xf32>
    %152 = tpu.concatenate %151, %151, %151, %151, %151, %151, %151, %151, %151, %151, %151, %151, %151, %151, %151, %151 in 1 : vector<1x64xf32>, vector<1x64xf32>, vector<1x64xf32>, vector<1x64xf32>, vector<1x64xf32>, vector<1x64xf32>, vector<1x64xf32>, vector<1x64xf32>, vector<1x64xf32>, vector<1x64xf32>, vector<1x64xf32>, vector<1x64xf32>, vector<1x64xf32>, vector<1x64xf32>, vector<1x64xf32>, vector<1x64xf32> -> vector<1x1024xf32>
    %c0_45 = arith.constant 0 : index
    %c0_46 = arith.constant 0 : index
    %153 = vector.load %arg14[%c0_45, %c0_46] : memref<1x64xf32, #tpu.memory_space<vmem>>, vector<1x64xf32>
    %154 = tpu.concatenate %153, %153, %153, %153, %153, %153, %153, %153, %153, %153, %153, %153, %153, %153, %153, %153 in 1 : vector<1x64xf32>, vector<1x64xf32>, vector<1x64xf32>, vector<1x64xf32>, vector<1x64xf32>, vector<1x64xf32>, vector<1x64xf32>, vector<1x64xf32>, vector<1x64xf32>, vector<1x64xf32>, vector<1x64xf32>, vector<1x64xf32>, vector<1x64xf32>, vector<1x64xf32>, vector<1x64xf32>, vector<1x64xf32> -> vector<1x1024xf32>
    %155 = vector.broadcast %152 : vector<1x1024xf32> to vector<16x1024xf32>
    %156 = arith.mulf %110, %155 : vector<16x1024xf32>
    %157 = vector.broadcast %154 : vector<1x1024xf32> to vector<16x1024xf32>
    %158 = arith.addf %156, %157 : vector<16x1024xf32>
    %cst_47 = arith.constant 0.000000e+00 : f32
    %159 = vector.broadcast %cst_47 : f32 to vector<16x1024xf32>
    %160 = arith.cmpf oge, %158, %159 : vector<16x1024xf32>
    %cst_48 = arith.constant 2.000000e-01 : f32
    %161 = vector.broadcast %cst_48 : f32 to vector<16x1024xf32>
    %162 = arith.mulf %161, %158 : vector<16x1024xf32>
    %163 = arith.select %160, %158, %162 : vector<16x1024xi1>, vector<16x1024xf32>
    %164 = vector.extract_strided_slice %163 {offsets = [0, 0], sizes = [4, 512], strides = [1, 1]} : vector<16x1024xf32> to vector<4x512xf32>
    %165 = vector.extract_strided_slice %163 {offsets = [0, 512], sizes = [4, 512], strides = [1, 1]} : vector<16x1024xf32> to vector<4x512xf32>
    %166 = vector.extract_strided_slice %163 {offsets = [4, 0], sizes = [4, 512], strides = [1, 1]} : vector<16x1024xf32> to vector<4x512xf32>
    %167 = vector.extract_strided_slice %163 {offsets = [4, 512], sizes = [4, 512], strides = [1, 1]} : vector<16x1024xf32> to vector<4x512xf32>
    %168 = vector.extract_strided_slice %163 {offsets = [8, 0], sizes = [4, 512], strides = [1, 1]} : vector<16x1024xf32> to vector<4x512xf32>
    %169 = vector.extract_strided_slice %163 {offsets = [8, 512], sizes = [4, 512], strides = [1, 1]} : vector<16x1024xf32> to vector<4x512xf32>
    %170 = vector.extract_strided_slice %163 {offsets = [12, 0], sizes = [4, 512], strides = [1, 1]} : vector<16x1024xf32> to vector<4x512xf32>
    %171 = vector.extract_strided_slice %163 {offsets = [12, 512], sizes = [4, 512], strides = [1, 1]} : vector<16x1024xf32> to vector<4x512xf32>
    %172 = tpu.concatenate %164, %165, %166, %167, %168, %169, %170, %171 in 0 : vector<4x512xf32>, vector<4x512xf32>, vector<4x512xf32>, vector<4x512xf32>, vector<4x512xf32>, vector<4x512xf32>, vector<4x512xf32>, vector<4x512xf32> -> vector<32x512xf32>
    %cst_49 = arith.constant 0.000000e+00 : f32
    %173 = vector.broadcast %cst_49 : f32 to vector<4x512xf32>
    %174 = vector.extract_strided_slice %172 {offsets = [0, 0], sizes = [28, 512], strides = [1, 1]} : vector<32x512xf32> to vector<28x512xf32>
    %175 = tpu.concatenate %173, %174 in 0 : vector<4x512xf32>, vector<28x512xf32> -> vector<32x512xf32>
    %176 = vector.extract_strided_slice %172 {offsets = [4, 0], sizes = [28, 512], strides = [1, 1]} : vector<32x512xf32> to vector<28x512xf32>
    %177 = tpu.concatenate %176, %173 in 0 : vector<28x512xf32>, vector<4x512xf32> -> vector<32x512xf32>
    %178 = tpu.concatenate %175, %172, %177 in 1 : vector<32x512xf32>, vector<32x512xf32>, vector<32x512xf32> -> vector<32x1536xf32>
    %179 = arith.truncf %178 : vector<32x1536xf32> to vector<32x1536xbf16>
    %c0_50 = arith.constant 0 : index
    %c0_51 = arith.constant 0 : index
    %180 = vector.load %arg15[%c0_50, %c0_51] : memref<1536x96xbf16, #tpu.memory_space<vmem>>, vector<1536x96xbf16>
    %cst_52 = arith.constant dense<0.000000e+00> : vector<32x96xf32>
    %181 = tpu.matmul %179, %180, %cst_52 {dimension_numbers = #tpu.dot_dimension_numbers<[1], [0], [0], [1], [0, 0, 1, 1], [], []>} : vector<32x1536xbf16>, vector<1536x96xbf16>, vector<32x96xf32> -> vector<32x96xf32>
    %c0_53 = arith.constant 0 : index
    %c0_54 = arith.constant 0 : index
    %182 = vector.load %arg16[%c0_53, %c0_54] : memref<1x96xf32, #tpu.memory_space<vmem>>, vector<1x96xf32>
    %183 = vector.broadcast %182 : vector<1x96xf32> to vector<32x96xf32>
    %184 = arith.addf %181, %183 : vector<32x96xf32>
    %cst_55 = arith.constant 0.000000e+00 : f32
    %185 = vector.broadcast %cst_55 : f32 to vector<32x96xf32>
    %186 = arith.subf %185, %184 : vector<32x96xf32>
    %187 = math.exp %186 : vector<32x96xf32>
    %cst_56 = arith.constant 1.000000e+00 : f32
    %188 = vector.broadcast %cst_56 : f32 to vector<32x96xf32>
    %189 = arith.addf %188, %187 : vector<32x96xf32>
    %cst_57 = arith.constant 1.000000e+00 : f32
    %190 = vector.broadcast %cst_57 : f32 to vector<32x96xf32>
    %191 = arith.divf %190, %189 : vector<32x96xf32>
    %c0_58 = arith.constant 0 : index
    %c0_59 = arith.constant 0 : index
    %192 = vector.load %arg17[%c0_58, %c0_59] : memref<32x96xf32, #tpu.memory_space<vmem>>, vector<32x96xf32>
    tpu.vector_store %arg17[%c0_58, %c0_59], %191 {strides = array<i32>} : memref<32x96xf32, #tpu.memory_space<vmem>>, vector<32x96xf32>,
    return
  }
  func.func @transform_0(%arg0: i32) -> (i32, i32) {
    %c0_i32 = arith.constant 0 : i32
    %c0_i32_0 = arith.constant 0 : i32
    %c0_i32_1 = arith.constant 0 : i32
    return %c0_i32, %c0_i32_0 : i32, i32
  }
  func.func @transform_1(%arg0: i32) -> (i32, i32) {
    %c0_i32 = arith.constant 0 : i32
    %c0_i32_0 = arith.constant 0 : i32
    %c0_i32_1 = arith.constant 0 : i32
    return %c0_i32, %c0_i32_0 : i32, i32
  }
  func.func @transform_2(%arg0: i32) -> (i32, i32) {
    %c0_i32 = arith.constant 0 : i32
    %c0_i32_0 = arith.constant 0 : i32
    %c0_i32_1 = arith.constant 0 : i32
    return %c0_i32, %c0_i32_0 : i32, i32
  }
  func.func @transform_3(%arg0: i32) -> (i32, i32) {
    %c0_i32 = arith.constant 0 : i32
    %c0_i32_0 = arith.constant 0 : i32
    %c0_i32_1 = arith.constant 0 : i32
    return %c0_i32, %c0_i32_0 : i32, i32
  }
  func.func @transform_4(%arg0: i32) -> (i32, i32) {
    %c0_i32 = arith.constant 0 : i32
    %c0_i32_0 = arith.constant 0 : i32
    %c0_i32_1 = arith.constant 0 : i32
    return %c0_i32, %c0_i32_0 : i32, i32
  }
  func.func @transform_5(%arg0: i32) -> (i32, i32) {
    %c0_i32 = arith.constant 0 : i32
    %c0_i32_0 = arith.constant 0 : i32
    %c0_i32_1 = arith.constant 0 : i32
    return %c0_i32, %c0_i32_0 : i32, i32
  }
  func.func @transform_6(%arg0: i32) -> (i32, i32) {
    %c0_i32 = arith.constant 0 : i32
    %c0_i32_0 = arith.constant 0 : i32
    %c0_i32_1 = arith.constant 0 : i32
    return %c0_i32, %c0_i32_0 : i32, i32
  }
  func.func @transform_7(%arg0: i32) -> (i32, i32) {
    %c0_i32 = arith.constant 0 : i32
    %c0_i32_0 = arith.constant 0 : i32
    %c0_i32_1 = arith.constant 0 : i32
    return %c0_i32, %c0_i32_0 : i32, i32
  }
  func.func @transform_8(%arg0: i32) -> (i32, i32) {
    %c0_i32 = arith.constant 0 : i32
    %c0_i32_0 = arith.constant 0 : i32
    %c0_i32_1 = arith.constant 0 : i32
    return %c0_i32, %c0_i32_0 : i32, i32
  }
  func.func @transform_9(%arg0: i32) -> (i32, i32) {
    %c0_i32 = arith.constant 0 : i32
    %c0_i32_0 = arith.constant 0 : i32
    %c0_i32_1 = arith.constant 0 : i32
    return %c0_i32, %c0_i32_0 : i32, i32
  }
  func.func @transform_10(%arg0: i32) -> (i32, i32) {
    %c0_i32 = arith.constant 0 : i32
    %c0_i32_0 = arith.constant 0 : i32
    %c0_i32_1 = arith.constant 0 : i32
    return %c0_i32, %c0_i32_0 : i32, i32
  }
  func.func @transform_11(%arg0: i32) -> (i32, i32) {
    %c0_i32 = arith.constant 0 : i32
    %c0_i32_0 = arith.constant 0 : i32
    %c0_i32_1 = arith.constant 0 : i32
    return %c0_i32, %c0_i32_0 : i32, i32
  }
  func.func @transform_12(%arg0: i32) -> (i32, i32) {
    %c0_i32 = arith.constant 0 : i32
    %c0_i32_0 = arith.constant 0 : i32
    %c0_i32_1 = arith.constant 0 : i32
    return %c0_i32, %c0_i32_0 : i32, i32
  }
  func.func @transform_13(%arg0: i32) -> (i32, i32) {
    %c0_i32 = arith.constant 0 : i32
    %c0_i32_0 = arith.constant 0 : i32
    %c0_i32_1 = arith.constant 0 : i32
    return %c0_i32, %c0_i32_0 : i32, i32
  }
  func.func @transform_14(%arg0: i32) -> (i32, i32) {
    %c0_i32 = arith.constant 0 : i32
    %c0_i32_0 = arith.constant 0 : i32
    %c0_i32_1 = arith.constant 0 : i32
    return %c0_i32, %c0_i32_0 : i32, i32
  }
  func.func @transform_15(%arg0: i32) -> (i32, i32) {
    %c0_i32 = arith.constant 0 : i32
    %c0_i32_0 = arith.constant 0 : i32
    %c0_i32_1 = arith.constant 0 : i32
    return %c0_i32, %c0_i32_0 : i32, i32
  }
  func.func @transform_16(%arg0: i32) -> (i32, i32) {
    %c0_i32 = arith.constant 0 : i32
    %c0_i32_0 = arith.constant 0 : i32
    %c0_i32_1 = arith.constant 0 : i32
    return %c0_i32, %c0_i32_0 : i32, i32
  }
}

</mosaic_0001>

<llo_original>
// kernel: generator_forward.1
$region0: #{generator_forward.1}
  #allocation0 [shape = 'u32[]', space=smem, size = 0x4, offset = 0x4, fixed_abs, tag = 'smem constant byte address 0x4 - core index']
  #allocation1 [shape = 'u32[72,128]{1,0:T(1,128)}', space=vmem, size = 0x9000, scoped, tag = 'internal scratch']
  %s0 = inlined_call_operand.vmem [shape: f32[4,4], index: 0, kind: input, shape index: {}]
  %s1 = inlined_call_operand.hbm [shape: f32[4,16], index: 1, kind: input, shape index: {}]
  %s2 = inlined_call_operand.hbm [shape: f32[4,4], index: 2, kind: input, shape index: {}]
  %s3 = inlined_call_operand.hbm [shape: f32[1,4], index: 3, kind: input, shape index: {}]
  %s4 = inlined_call_operand.hbm [shape: f32[20,2048], index: 4, kind: input, shape index: {}]
  %s5 = inlined_call_operand.hbm [shape: f32[1,2048], index: 5, kind: input, shape index: {}]
  %s6 = inlined_call_operand.hbm [shape: f32[4,2048], index: 6, kind: input, shape index: {}]
  %s7 = inlined_call_operand.hbm [shape: f32[1,2048], index: 7, kind: input, shape index: {}]
  %s8 = inlined_call_operand.hbm [shape: f32[1,2048], index: 8, kind: input, shape index: {}]
  %s9 = inlined_call_operand.hbm [shape: f32[1,2048], index: 9, kind: input, shape index: {}]
  %s10 = inlined_call_operand.hbm [shape: bf16[1536,1024], index: 10, kind: input, shape index: {}]
  %s11 = inlined_call_operand.hbm [shape: f32[1,1024], index: 11, kind: input, shape index: {}]
  %s12 = inlined_call_operand.hbm [shape: f32[1,64], index: 12, kind: input, shape index: {}]
  %s13 = inlined_call_operand.hbm [shape: f32[1,64], index: 13, kind: input, shape index: {}]
  %s14 = inlined_call_operand.vmem [shape: bf16[1536,96], index: 14, kind: input, shape index: {}]
  %s15 = inlined_call_operand.hbm [shape: f32[1,96], index: 15, kind: input, shape index: {}]
  %s16 = inlined_call_operand.vmem [shape: f32[32,96], index: 16, kind: output, shape index: {}]
  %s17 = sld [smem:[#allocation0]]
  $region130: #{generator_forward.1} parent=0
    _
  %s19 = ssub.s32 1, %s17
  %s20 = scalar_select 0, %s19, %s17
  $region1: #{generator_forward.1} parent=0
    #allocation2 [shape = 'u8[2048]{0}', space=vmem, size = 0x800, scoped, tag = 'input window, operand 1, single buffered']
    #allocation3 [shape = 's32[1]{0}', space=sflag, size = 0x4, scoped, tag = 'scoped memory for generator_forward.1']
    #allocation4 [shape = 'u8[2048]{0}', space=vmem, size = 0x800, scoped, tag = 'input window, operand 2, single buffered']
    #allocation5 [shape = 's32[1]{0}', space=sflag, size = 0x4, scoped, tag = 'scoped memory for generator_forward.1']
    #allocation6 [shape = 'u8[512]{0}', space=vmem, size = 0x400, scoped, tag = 'input window, operand 3, single buffered']
    #allocation7 [shape = 'u8[196608]{0}', space=vmem, size = 0x30000, scoped, tag = 'input window, operand 4, single buffered']
    #allocation8 [shape = 's32[1]{0}', space=sflag, size = 0x4, scoped, tag = 'scoped memory for generator_forward.1']
    #allocation9 [shape = 'u8[8192]{0}', space=vmem, size = 0x2000, scoped, tag = 'input window, operand 5, single buffered']
    #allocation10 [shape = 'u8[32768]{0}', space=vmem, size = 0x8000, scoped, tag = 'input window, operand 6, single buffered']
    #allocation11 [shape = 's32[1]{0}', space=sflag, size = 0x4, scoped, tag = 'scoped memory for generator_forward.1']
    #allocation12 [shape = 'u8[8192]{0}', space=vmem, size = 0x2000, scoped, tag = 'input window, operand 7, single buffered']
    #allocation13 [shape = 'u8[8192]{0}', space=vmem, size = 0x2000, scoped, tag = 'input window, operand 8, single buffered']
    #allocation14 [shape = 's32[1]{0}', space=sflag, size = 0x4, scoped, tag = 'scoped memory for generator_forward.1']
    #allocation15 [shape = 'u8[8192]{0}', space=vmem, size = 0x2000, scoped, tag = 'input window, operand 9, single buffered']
    #allocation16 [shape = 'u8[3145728]{0}', space=vmem, size = 0x300000, scoped, tag = 'input window, operand 10, single buffered']
    #allocation17 [shape = 's32[1]{0}', space=sflag, size = 0x4, scoped, tag = 'scoped memory for generator_forward.1']
    #allocation18 [shape = 'u8[4096]{0}', space=vmem, size = 0x1000, scoped, tag = 'input window, operand 11, single buffered']
    #allocation19 [shape = 'u8[512]{0}', space=vmem, size = 0x400, scoped, tag = 'input window, operand 12, single buffered']
    #allocation20 [shape = 's32[1]{0}', space=sflag, size = 0x4, scoped, tag = 'scoped memory for generator_forward.1']
    #allocation21 [shape = 'u8[512]{0}', space=vmem, size = 0x400, scoped, tag = 'input window, operand 13, single buffered']
    #allocation22 [shape = 'u8[512]{0}', space=vmem, size = 0x400, scoped, tag = 'input window, operand 15, single buffered']
    #allocation23 [shape = 's32[1]{0}', space=sflag, size = 0x4, scoped, tag = 'scoped memory for generator_forward.1']
    %21 = vsyncpa [#allocation3], 0
    %22 = vsyncpa [#allocation5], 0
    %23 = vsyncpa [#allocation8], 0
    %24 = vsyncpa [#allocation11], 0
    %25 = vsyncpa [#allocation14], 0
    %26 = vsyncpa [#allocation17], 0
    %27 = vsyncpa [#allocation20], 0
    %28 = vsyncpa [#allocation23], 0
    // Predicated region
    $region2: #{generator_forward.1} parent=1 // pred_check
      _
    $region3: #{generator_forward.1} parent=1 // pred_check_branch
      %30 = sbr.rel (0) target = $region5
    $region4: #{generator_forward.1} parent=1 // pred_region
      _
    $region5: #{generator_forward.1} parent=1 // pred_fallthru
      _
    // Predicated region
    $region6: #{generator_forward.1} parent=1 // pred_check
      _
    $region7: #{generator_forward.1} parent=1 // pred_check_branch
      %32 = sbr.rel (0) target = $region9
    $region8: #{generator_forward.1} parent=1 // pred_region
      %34 = vsyncadd [#allocation3], 0
      %s36 = sshll.u32 %s1, 4
      %s37 = int_to_ptr.hbm [resolvable:$true] %s36
      %s38 = sshll.u32 [#allocation2], 4
      %s39 = int_to_ptr.vmem [resolvable:$true] %s38
      %41 = dma.hbm_to_vmem [thread:$0]  %s37, 64, %s39, [#allocation3]
    $region9: #{generator_forward.1} parent=1 // pred_fallthru
      _
    // Predicated region
    $region10: #{generator_forward.1} parent=1 // pred_check
      _
    $region11: #{generator_forward.1} parent=1 // pred_check_branch
      %43 = sbr.rel (0) target = $region13
    $region12: #{generator_forward.1} parent=1 // pred_region
      %45 = vsyncadd [#allocation5], 0
      %s47 = sshll.u32 %s2, 4
      %s48 = int_to_ptr.hbm [resolvable:$true] %s47
      %s49 = sshll.u32 [#allocation4], 4
      %s50 = int_to_ptr.vmem [resolvable:$true] %s49
      %52 = dma.hbm_to_vmem [thread:$0]  %s48, 64, %s50, [#allocation5]
    $region13: #{generator_forward.1} parent=1 // pred_fallthru
      _
    // Predicated region
    $region14: #{generator_forward.1} parent=1 // pred_check
      _
    $region15: #{generator_forward.1} parent=1 // pred_check_branch
      %54 = sbr.rel (0) target = $region17
    $region16: #{generator_forward.1} parent=1 // pred_region
      %56 = vsyncadd [#allocation5], 0
      %s58 = sshll.u32 %s3, 4
      %s59 = int_to_ptr.hbm [resolvable:$true] %s58
      %s60 = sshll.u32 [#allocation6], 4
      %s61 = int_to_ptr.vmem [resolvable:$true] %s60
      %63 = dma.hbm_to_vmem [thread:$0]  %s59, 16, %s61, [#allocation5]
    $region17: #{generator_forward.1} parent=1 // pred_fallthru
      _
    // Predicated region
    $region18: #{generator_forward.1} parent=1 // pred_check
      _
    $region19: #{generator_forward.1} parent=1 // pred_check_branch
      %65 = sbr.rel (0) target = $region21
    $region20: #{generator_forward.1} parent=1 // pred_region
      %67 = vsyncadd [#allocation8], 0
      %s68 = sshll.u32 %s4, 4
      %s69 = int_to_ptr.hbm [resolvable:$true] %s68
      %s70 = sshll.u32 [#allocation7], 4
      %s71 = int_to_ptr.vmem [resolvable:$true] %s70
      %76 = dma.hbm_to_vmem [thread:$0]  %s69, 6144, %s71, [#allocation8], 2048, 2048, 128
    $region21: #{generator_forward.1} parent=1 // pred_fallthru
      _
    // Predicated region
    $region22: #{generator_forward.1} parent=1 // pred_check
      _
    $region23: #{generator_forward.1} parent=1 // pred_check_branch
      %78 = sbr.rel (0) target = $region25
    $region24: #{generator_forward.1} parent=1 // pred_region
      %80 = vsyncadd [#allocation8], 0
      %s82 = sshll.u32 %s5, 4
      %s83 = int_to_ptr.hbm [resolvable:$true] %s82
      %s84 = sshll.u32 [#allocation9], 4
      %s85 = int_to_ptr.vmem [resolvable:$true] %s84
      %87 = dma.hbm_to_vmem [thread:$0]  %s83, 256, %s85, [#allocation8]
    $region25: #{generator_forward.1} parent=1 // pred_fallthru
      _
    // Predicated region
    $region26: #{generator_forward.1} parent=1 // pred_check
      _
    $region27: #{generator_forward.1} parent=1 // pred_check_branch
      %89 = sbr.rel (0) target = $region29
    $region28: #{generator_forward.1} parent=1 // pred_region
      %91 = vsyncadd [#allocation11], 0
      %s93 = sshll.u32 %s6, 4
      %s94 = int_to_ptr.hbm [resolvable:$true] %s93
      %s95 = sshll.u32 [#allocation10], 4
      %s96 = int_to_ptr.vmem [resolvable:$true] %s95
      %98 = dma.hbm_to_vmem [thread:$0]  %s94, 1024, %s96, [#allocation11]
    $region29: #{generator_forward.1} parent=1 // pred_fallthru
      _
    // Predicated region
    $region30: #{generator_forward.1} parent=1 // pred_check
      _
    $region31: #{generator_forward.1} parent=1 // pred_check_branch
      %100 = sbr.rel (0) target = $region33
    $region32: #{generator_forward.1} parent=1 // pred_region
      %102 = vsyncadd [#allocation11], 0
      %s104 = sshll.u32 %s7, 4
      %s105 = int_to_ptr.hbm [resolvable:$true] %s104
      %s106 = sshll.u32 [#allocation12], 4
      %s107 = int_to_ptr.vmem [resolvable:$true] %s106
      %109 = dma.hbm_to_vmem [thread:$0]  %s105, 256, %s107, [#allocation11]
    $region33: #{generator_forward.1} parent=1 // pred_fallthru
      _
    // Predicated region
    $region34: #{generator_forward.1} parent=1 // pred_check
      _
    $region35: #{generator_forward.1} parent=1 // pred_check_branch
      %111 = sbr.rel (0) target = $region37
    $region36: #{generator_forward.1} parent=1 // pred_region
      %113 = vsyncadd [#allocation14], 0
      %s115 = sshll.u32 %s8, 4
      %s116 = int_to_ptr.hbm [resolvable:$true] %s115
      %s117 = sshll.u32 [#allocation13], 4
      %s118 = int_to_ptr.vmem [resolvable:$true] %s117
      %120 = dma.hbm_to_vmem [thread:$0]  %s116, 256, %s118, [#allocation14]
    $region37: #{generator_forward.1} parent=1 // pred_fallthru
      _
    // Predicated region
    $region38: #{generator_forward.1} parent=1 // pred_check
      _
    $region39: #{generator_forward.1} parent=1 // pred_check_branch
      %122 = sbr.rel (0) target = $region41
    $region40: #{generator_forward.1} parent=1 // pred_region
      %124 = vsyncadd [#allocation14], 0
      %s126 = sshll.u32 %s9, 4
      %s127 = int_to_ptr.hbm [resolvable:$true] %s126
      %s128 = sshll.u32 [#allocation15], 4
      %s129 = int_to_ptr.vmem [resolvable:$true] %s128
      %131 = dma.hbm_to_vmem [thread:$0]  %s127, 256, %s129, [#allocation14]
    $region41: #{generator_forward.1} parent=1 // pred_fallthru
      _
    // Predicated region
    $region42: #{generator_forward.1} parent=1 // pred_check
      _
    $region43: #{generator_forward.1} parent=1 // pred_check_branch
      %133 = sbr.rel (0) target = $region45
    $region44: #{generator_forward.1} parent=1 // pred_region
      %135 = vsyncadd [#allocation17], 0
      %s136 = sshll.u32 %s10, 4
      %s137 = int_to_ptr.hbm [resolvable:$true] %s136
      %s138 = sshll.u32 [#allocation16], 4
      %s139 = int_to_ptr.vmem [resolvable:$true] %s138
      %144 = dma.hbm_to_vmem [thread:$0]  %s137, 98304, %s139, [#allocation17], 512, 512, 32
    $region45: #{generator_forward.1} parent=1 // pred_fallthru
      _
    // Predicated region
    $region46: #{generator_forward.1} parent=1 // pred_check
      _
    $region47: #{generator_forward.1} parent=1 // pred_check_branch
      %146 = sbr.rel (0) target = $region49
    $region48: #{generator_forward.1} parent=1 // pred_region
      %148 = vsyncadd [#allocation17], 0
      %s150 = sshll.u32 %s11, 4
      %s151 = int_to_ptr.hbm [resolvable:$true] %s150
      %s152 = sshll.u32 [#allocation18], 4
      %s153 = int_to_ptr.vmem [resolvable:$true] %s152
      %155 = dma.hbm_to_vmem [thread:$0]  %s151, 128, %s153, [#allocation17]
    $region49: #{generator_forward.1} parent=1 // pred_fallthru
      _
    // Predicated region
    $region50: #{generator_forward.1} parent=1 // pred_check
      _
    $region51: #{generator_forward.1} parent=1 // pred_check_branch
      %157 = sbr.rel (0) target = $region53
    $region52: #{generator_forward.1} parent=1 // pred_region
      %159 = vsyncadd [#allocation20], 0
      %s161 = sshll.u32 %s12, 4
      %s162 = int_to_ptr.hbm [resolvable:$true] %s161
      %s163 = sshll.u32 [#allocation19], 4
      %s164 = int_to_ptr.vmem [resolvable:$true] %s163
      %166 = dma.hbm_to_vmem [thread:$0]  %s162, 16, %s164, [#allocation20]
    $region53: #{generator_forward.1} parent=1 // pred_fallthru
      _
    // Predicated region
    $region54: #{generator_forward.1} parent=1 // pred_check
      _
    $region55: #{generator_forward.1} parent=1 // pred_check_branch
      %168 = sbr.rel (0) target = $region57
    $region56: #{generator_forward.1} parent=1 // pred_region
      %170 = vsyncadd [#allocation20], 0
      %s172 = sshll.u32 %s13, 4
      %s173 = int_to_ptr.hbm [resolvable:$true] %s172
      %s174 = sshll.u32 [#allocation21], 4
      %s175 = int_to_ptr.vmem [resolvable:$true] %s174
      %177 = dma.hbm_to_vmem [thread:$0]  %s173, 16, %s175, [#allocation20]
    $region57: #{generator_forward.1} parent=1 // pred_fallthru
      _
    // Predicated region
    $region58: #{generator_forward.1} parent=1 // pred_check
      _
    $region59: #{generator_forward.1} parent=1 // pred_check_branch
      %179 = sbr.rel (0) target = $region61
    $region60: #{generator_forward.1} parent=1 // pred_region
      _
    $region61: #{generator_forward.1} parent=1 // pred_fallthru
      _
    // Predicated region
    $region62: #{generator_forward.1} parent=1 // pred_check
      _
    $region63: #{generator_forward.1} parent=1 // pred_check_branch
      %181 = sbr.rel (0) target = $region65
    $region64: #{generator_forward.1} parent=1 // pred_region
      %183 = vsyncadd [#allocation23], 0
      %s185 = sshll.u32 %s15, 4
      %s186 = int_to_ptr.hbm [resolvable:$true] %s185
      %s187 = sshll.u32 [#allocation22], 4
      %s188 = int_to_ptr.vmem [resolvable:$true] %s187
      %190 = dma.hbm_to_vmem [thread:$0]  %s186, 16, %s188, [#allocation23]
    $region65: #{generator_forward.1} parent=1 // pred_fallthru
      _
    // Predicated region
    $region66: #{generator_forward.1} parent=1 // pred_check
      _
    $region67: #{generator_forward.1} parent=1 // pred_check_branch
      %192 = sbr.rel (0) target = $region69
    $region68: #{generator_forward.1} parent=1 // pred_region
      %194 = dma.done [#allocation3], 64
    $region69: #{generator_forward.1} parent=1 // pred_fallthru
      _
    // Predicated region
    $region70: #{generator_forward.1} parent=1 // pred_check
      _
    $region71: #{generator_forward.1} parent=1 // pred_check_branch
      %196 = sbr.rel (0) target = $region73
    $region72: #{generator_forward.1} parent=1 // pred_region
      %198 = dma.done [#allocation5], 64
    $region73: #{generator_forward.1} parent=1 // pred_fallthru
      _
    // Predicated region
    $region74: #{generator_forward.1} parent=1 // pred_check
      _
    $region75: #{generator_forward.1} parent=1 // pred_check_branch
      %200 = sbr.rel (0) target = $region77
    $region76: #{generator_forward.1} parent=1 // pred_region
      %202 = dma.done [#allocation5], 16
    $region77: #{generator_forward.1} parent=1 // pred_fallthru
      _
    // Predicated region
    $region78: #{generator_forward.1} parent=1 // pred_check
      _
    $region79: #{generator_forward.1} parent=1 // pred_check_branch
      %204 = sbr.rel (0) target = $region81
    $region80: #{generator_forward.1} parent=1 // pred_region
      %206 = dma.done [#allocation8], 6144
    $region81: #{generator_forward.1} parent=1 // pred_fallthru
      _
    // Predicated region
    $region82: #{generator_forward.1} parent=1 // pred_check
      _
    $region83: #{generator_forward.1} parent=1 // pred_check_branch
      %208 = sbr.rel (0) target = $region85
    $region84: #{generator_forward.1} parent=1 // pred_region
      %210 = dma.done [#allocation8], 256
    $region85: #{generator_forward.1} parent=1 // pred_fallthru
      _
    // Predicated region
    $region86: #{generator_forward.1} parent=1 // pred_check
      _
    $region87: #{generator_forward.1} parent=1 // pred_check_branch
      %212 = sbr.rel (0) target = $region89
    $region88: #{generator_forward.1} parent=1 // pred_region
      %214 = dma.done [#allocation11], 1024
    $region89: #{generator_forward.1} parent=1 // pred_fallthru
      _
    // Predicated region
    $region90: #{generator_forward.1} parent=1 // pred_check
      _
    $region91: #{generator_forward.1} parent=1 // pred_check_branch
      %216 = sbr.rel (0) target = $region93
    $region92: #{generator_forward.1} parent=1 // pred_region
      %218 = dma.done [#allocation11], 256
    $region93: #{generator_forward.1} parent=1 // pred_fallthru
      _
    // Predicated region
    $region94: #{generator_forward.1} parent=1 // pred_check
      _
    $region95: #{generator_forward.1} parent=1 // pred_check_branch
      %220 = sbr.rel (0) target = $region97
    $region96: #{generator_forward.1} parent=1 // pred_region
      %222 = dma.done [#allocation14], 256
    $region97: #{generator_forward.1} parent=1 // pred_fallthru
      _
    // Predicated region
    $region98: #{generator_forward.1} parent=1 // pred_check
      _
    $region99: #{generator_forward.1} parent=1 // pred_check_branch
      %224 = sbr.rel (0) target = $region101
    $region100: #{generator_forward.1} parent=1 // pred_region
      %226 = dma.done [#allocation14], 256
    $region101: #{generator_forward.1} parent=1 // pred_fallthru
      _
    // Predicated region
    $region102: #{generator_forward.1} parent=1 // pred_check
      _
    $region103: #{generator_forward.1} parent=1 // pred_check_branch
      %228 = sbr.rel (0) target = $region105
    $region104: #{generator_forward.1} parent=1 // pred_region
      %230 = dma.done [#allocation17], 98304
    $region105: #{generator_forward.1} parent=1 // pred_fallthru
      _
    // Predicated region
    $region106: #{generator_forward.1} parent=1 // pred_check
      _
    $region107: #{generator_forward.1} parent=1 // pred_check_branch
      %232 = sbr.rel (0) target = $region109
    $region108: #{generator_forward.1} parent=1 // pred_region
      %234 = dma.done [#allocation17], 128
    $region109: #{generator_forward.1} parent=1 // pred_fallthru
      _
    // Predicated region
    $region110: #{generator_forward.1} parent=1 // pred_check
      _
    $region111: #{generator_forward.1} parent=1 // pred_check_branch
      %236 = sbr.rel (0) target = $region113
    $region112: #{generator_forward.1} parent=1 // pred_region
      %238 = dma.done [#allocation20], 16
    $region113: #{generator_forward.1} parent=1 // pred_fallthru
      _
    // Predicated region
    $region114: #{generator_forward.1} parent=1 // pred_check
      _
    $region115: #{generator_forward.1} parent=1 // pred_check_branch
      %240 = sbr.rel (0) target = $region117
    $region116: #{generator_forward.1} parent=1 // pred_region
      %242 = dma.done [#allocation20], 16
    $region117: #{generator_forward.1} parent=1 // pred_fallthru
      _
    // Predicated region
    $region118: #{generator_forward.1} parent=1 // pred_check
      _
    $region119: #{generator_forward.1} parent=1 // pred_check_branch
      %244 = sbr.rel (0) target = $region121
    $region120: #{generator_forward.1} parent=1 // pred_region
      %246 = dma.done [#allocation23], 16
    $region121: #{generator_forward.1} parent=1 // pred_fallthru
      _
    %v247 = vld [vmem:[%s0] sm:$0xf]
    %v248 = vld [vmem:[#allocation4] sm:$0xf]
    %v249 = vld [vmem:[#allocation6] sm:$0x1]
    %v251 = vperm.slane %v249, 0
    %vm253 = vcmask 31744
    %v255 = vsel %vm253, %v247, 0
    %vm257 = vcmask 1043456
    %v259 = vsel %vm257, %v248, 0
    %261 = vmatpush.msra.mxu0 0.0
    %262 = vmatpush.msra.mxu0 0.0
    %263 = vmatpush.msra.mxu0 0.0
    %264 = vmatpush.msra.mxu0 0.0
    %265 = vmatpush.msra.mxu0 0.0
    %266 = vmatpush.msra.mxu0 0.0
    %267 = vmatpush.msra.mxu0 0.0
    %268 = vmatpush.msra.mxu0 0.0
    %269 = vmatpush.msra.mxu0 0.0
    %270 = vmatpush.msra.mxu0 0.0
    %271 = vmatpush.msra.mxu0 0.0
    %272 = vmatpush.msra.mxu0 0.0
    %273 = vmatpush.msra.mxu0 0.0
    %274 = vmatpush.msra.mxu0 0.0
    %275 = vmatpush.msra.mxu0 0.0
    %276 = vmatpush.msra.mxu0 %v259
    %277 = vmatmul.f32.gmra.mxu0 %v255
    %v278 = vpop.f32.mrf.mxu0
    %v279 = vadd.f32 %v251, %v278
    %280 = vdwg.mxu0
    %vm281 = vcmp.ge.f32.partialorder %v279, 0.0
    %v282 = vmul.f32 %v279, 0.2
    %v283 = vsel %vm281, %v279, %v282
    %v284 = vld [vmem:[#allocation2] sm:$0xf]
    %286 = vrot.lane.b32.xlu0 %v283, 16
    %v287 = vpop.permute.xlu0 %286
    %vm289 = vcmask 130048
    %v290 = vsel %vm289, %v284, %v287
    %v291 = vld [vmem:[#allocation7] sm:$0xff]
    %v292 = vld [vmem:[#allocation7 + $0x8] sm:$0xff]
    %v293 = vld [vmem:[#allocation7 + $0x10] sm:$0xff]
    %v294 = vld [vmem:[#allocation7 + $0x18] sm:$0xff]
    %v295 = vld [vmem:[#allocation7 + $0x20] sm:$0xff]
    %v296 = vld [vmem:[#allocation7 + $0x28] sm:$0xff]
    %v297 = vld [vmem:[#allocation7 + $0x30] sm:$0xff]
    %v298 = vld [vmem:[#allocation7 + $0x38] sm:$0xff]
    %v299 = vld [vmem:[#allocation7 + $0x40] sm:$0xff]
    %v300 = vld [vmem:[#allocation7 + $0x48] sm:$0xff]
    %v301 = vld [vmem:[#allocation7 + $0x50] sm:$0xff]
    %v302 = vld [vmem:[#allocation7 + $0x58] sm:$0xff]
    %v303 = vld [vmem:[#allocation7 + $0x60] sm:$0xff]
    %v304 = vld [vmem:[#allocation7 + $0x68] sm:$0xff]
    %v305 = vld [vmem:[#allocation7 + $0x70] sm:$0xff]
    %v306 = vld [vmem:[#allocation7 + $0x78] sm:$0xff]
    %v307 = vld [vmem:[#allocation7 + $0x80] sm:$0xff]
    %v308 = vld [vmem:[#allocation7 + $0x88] sm:$0xff]
    %v309 = vld [vmem:[#allocation7 + $0x90] sm:$0xff]
    %v310 = vld [vmem:[#allocation7 + $0x98] sm:$0xff]
    %v311 = vld [vmem:[#allocation7 + $0xa0] sm:$0xff]
    %v312 = vld [vmem:[#allocation7 + $0xa8] sm:$0xff]
    %v313 = vld [vmem:[#allocation7 + $0xb0] sm:$0xff]
    %v314 = vld [vmem:[#allocation7 + $0xb8] sm:$0xff]
    %v315 = vld [vmem:[#allocation7 + $0xc0] sm:$0xff]
    %v316 = vld [vmem:[#allocation7 + $0xc8] sm:$0xff]
    %v317 = vld [vmem:[#allocation7 + $0xd0] sm:$0xff]
    %v318 = vld [vmem:[#allocation7 + $0xd8] sm:$0xff]
    %v319 = vld [vmem:[#allocation7 + $0xe0] sm:$0xff]
    %v320 = vld [vmem:[#allocation7 + $0xe8] sm:$0xff]
    %v321 = vld [vmem:[#allocation7 + $0xf0] sm:$0xff]
    %v322 = vld [vmem:[#allocation7 + $0xf8] sm:$0xff]
    %v323 = vld [vmem:[#allocation7 + $0x100] sm:$0xf]
    %v324 = vld [vmem:[#allocation7 + $0x108] sm:$0xf]
    %v325 = vld [vmem:[#allocation7 + $0x110] sm:$0xf]
    %v326 = vld [vmem:[#allocation7 + $0x118] sm:$0xf]
    %v327 = vld [vmem:[#allocation7 + $0x120] sm:$0xf]
    %v328 = vld [vmem:[#allocation7 + $0x128] sm:$0xf]
    %v329 = vld [vmem:[#allocation7 + $0x130] sm:$0xf]
    %v330 = vld [vmem:[#allocation7 + $0x138] sm:$0xf]
    %v331 = vld [vmem:[#allocation7 + $0x140] sm:$0xf]
    %v332 = vld [vmem:[#allocation7 + $0x148] sm:$0xf]
    %v333 = vld [vmem:[#allocation7 + $0x150] sm:$0xf]
    %v334 = vld [vmem:[#allocation7 + $0x158] sm:$0xf]
    %v335 = vld [vmem:[#allocation7 + $0x160] sm:$0xf]
    %v336 = vld [vmem:[#allocation7 + $0x168] sm:$0xf]
    %v337 = vld [vmem:[#allocation7 + $0x170] sm:$0xf]
    %v338 = vld [vmem:[#allocation7 + $0x178] sm:$0xf]
    %v339 = vld [vmem:[#allocation9] sm:$0xff]
    %v340 = vld [vmem:[#allocation9 + $0x8] sm:$0xff]
    %v343 = vperm.slane %v339, 0
    %v344 = vperm.slane %v339, 1
    %v345 = vperm.slane %v339, 2
    %v346 = vperm.slane %v339, 3
    %v347 = vperm.slane %v339, 4
    %v348 = vperm.slane %v339, 5
    %v349 = vperm.slane %v339, 6
    %v350 = vperm.slane %v339, 7
    %v351 = vperm.slane %v340, 0
    %v352 = vperm.slane %v340, 1
    %v353 = vperm.slane %v340, 2
    %v354 = vperm.slane %v340, 3
    %v355 = vperm.slane %v340, 4
    %v356 = vperm.slane %v340, 5
    %v357 = vperm.slane %v340, 6
    %v358 = vperm.slane %v340, 7
    %vm375 = vcmask 162816
    %v377 = vsel %vm375, %v290, 0
    %v380 = vsel %vm257, %v323, 0
    %v383 = vsel %vm257, %v324, 0
    %v386 = vsel %vm257, %v325, 0
    %v389 = vsel %vm257, %v326, 0
    %v392 = vsel %vm257, %v327, 0
    %v395 = vsel %vm257, %v328, 0
    %v398 = vsel %vm257, %v329, 0
    %v401 = vsel %vm257, %v330, 0
    %v404 = vsel %vm257, %v331, 0
    %v407 = vsel %vm257, %v332, 0
    %v410 = vsel %vm257, %v333, 0
    %v413 = vsel %vm257, %v334, 0
    %v416 = vsel %vm257, %v335, 0
    %v419 = vsel %vm257, %v336, 0
    %v422 = vsel %vm257, %v337, 0
    %v425 = vsel %vm257, %v338, 0
    %427 = vmatpush.msra.mxu0 0.0
    %428 = vmatpush.msra.mxu0 0.0
    %429 = vmatpush.msra.mxu0 0.0
    %430 = vmatpush.msra.mxu0 0.0
    %431 = vmatpush.msra.mxu0 0.0
    %432 = vmatpush.msra.mxu0 0.0
    %433 = vmatpush.msra.mxu0 0.0
    %434 = vmatpush.msra.mxu0 0.0
    %435 = vmatpush.msra.mxu0 0.0
    %436 = vmatpush.msra.mxu0 0.0
    %437 = vmatpush.msra.mxu0 0.0
    %438 = vmatpush.msra.mxu0 0.0
    %439 = vmatpush.msra.mxu0 0.0
    %440 = vmatpush.msra.mxu0 %v380
    %441 = vmatpush.msra.mxu0 %v307
    %442 = vmatpush.msra.mxu0 %v291
    %443 = vmatmul.f32.gmra.mxu0 %v377
    %v444 = vpop.f32.mrf.mxu0
    %v445 = vadd.f32 %v343, %v444
    %446 = vdwg.mxu0
    %447 = vmatpush.msra.mxu0 0.0
    %448 = vmatpush.msra.mxu0 0.0
    %449 = vmatpush.msra.mxu0 0.0
    %450 = vmatpush.msra.mxu0 0.0
    %451 = vmatpush.msra.mxu0 0.0
    %452 = vmatpush.msra.mxu0 0.0
    %453 = vmatpush.msra.mxu0 0.0
    %454 = vmatpush.msra.mxu0 0.0
    %455 = vmatpush.msra.mxu0 0.0
    %456 = vmatpush.msra.mxu0 0.0
    %457 = vmatpush.msra.mxu0 0.0
    %458 = vmatpush.msra.mxu0 0.0
    %459 = vmatpush.msra.mxu0 0.0
    %460 = vmatpush.msra.mxu0 %v383
    %461 = vmatpush.msra.mxu0 %v308
    %462 = vmatpush.msra.mxu0 %v292
    %463 = vmatmul.f32.gmra.mxu0 %v377
    %v464 = vpop.f32.mrf.mxu0
    %v465 = vadd.f32 %v344, %v464
    %466 = vdwg.mxu0
    %467 = vmatpush.msra.mxu0 0.0
    %468 = vmatpush.msra.mxu0 0.0
    %469 = vmatpush.msra.mxu0 0.0
    %470 = vmatpush.msra.mxu0 0.0
    %471 = vmatpush.msra.mxu0 0.0
    %472 = vmatpush.msra.mxu0 0.0
    %473 = vmatpush.msra.mxu0 0.0
    %474 = vmatpush.msra.mxu0 0.0
    %475 = vmatpush.msra.mxu0 0.0
    %476 = vmatpush.msra.mxu0 0.0
    %477 = vmatpush.msra.mxu0 0.0
    %478 = vmatpush.msra.mxu0 0.0
    %479 = vmatpush.msra.mxu0 0.0
    %480 = vmatpush.msra.mxu0 %v386
    %481 = vmatpush.msra.mxu0 %v309
    %482 = vmatpush.msra.mxu0 %v293
    %483 = vmatmul.f32.gmra.mxu0 %v377
    %v484 = vpop.f32.mrf.mxu0
    %v485 = vadd.f32 %v345, %v484
    %486 = vdwg.mxu0
    %487 = vmatpush.msra.mxu0 0.0
    %488 = vmatpush.msra.mxu0 0.0
    %489 = vmatpush.msra.mxu0 0.0
    %490 = vmatpush.msra.mxu0 0.0
    %491 = vmatpush.msra.mxu0 0.0
    %492 = vmatpush.msra.mxu0 0.0
    %493 = vmatpush.msra.mxu0 0.0
    %494 = vmatpush.msra.mxu0 0.0
    %495 = vmatpush.msra.mxu0 0.0
    %496 = vmatpush.msra.mxu0 0.0
    %497 = vmatpush.msra.mxu0 0.0
    %498 = vmatpush.msra.mxu0 0.0
    %499 = vmatpush.msra.mxu0 0.0
    %500 = vmatpush.msra.mxu0 %v389
    %501 = vmatpush.msra.mxu0 %v310
    %502 = vmatpush.msra.mxu0 %v294
    %503 = vmatmul.f32.gmra.mxu0 %v377
    %v504 = vpop.f32.mrf.mxu0
    %v505 = vadd.f32 %v346, %v504
    %506 = vdwg.mxu0
    %507 = vmatpush.msra.mxu0 0.0
    %508 = vmatpush.msra.mxu0 0.0
    %509 = vmatpush.msra.mxu0 0.0
    %510 = vmatpush.msra.mxu0 0.0
    %511 = vmatpush.msra.mxu0 0.0
    %512 = vmatpush.msra.mxu0 0.0
    %513 = vmatpush.msra.mxu0 0.0
    %514 = vmatpush.msra.mxu0 0.0
    %515 = vmatpush.msra.mxu0 0.0
    %516 = vmatpush.msra.mxu0 0.0
    %517 = vmatpush.msra.mxu0 0.0
    %518 = vmatpush.msra.mxu0 0.0
    %519 = vmatpush.msra.mxu0 0.0
    %520 = vmatpush.msra.mxu0 %v392
    %521 = vmatpush.msra.mxu0 %v311
    %522 = vmatpush.msra.mxu0 %v295
    %523 = vmatmul.f32.gmra.mxu0 %v377
    %v524 = vpop.f32.mrf.mxu0
    %v525 = vadd.f32 %v347, %v524
    %526 = vdwg.mxu0
    %527 = vmatpush.msra.mxu0 0.0
    %528 = vmatpush.msra.mxu0 0.0
    %529 = vmatpush.msra.mxu0 0.0
    %530 = vmatpush.msra.mxu0 0.0
    %531 = vmatpush.msra.mxu0 0.0
    %532 = vmatpush.msra.mxu0 0.0
    %533 = vmatpush.msra.mxu0 0.0
    %534 = vmatpush.msra.mxu0 0.0
    %535 = vmatpush.msra.mxu0 0.0
    %536 = vmatpush.msra.mxu0 0.0
    %537 = vmatpush.msra.mxu0 0.0
    %538 = vmatpush.msra.mxu0 0.0
    %539 = vmatpush.msra.mxu0 0.0
    %540 = vmatpush.msra.mxu0 %v395
    %541 = vmatpush.msra.mxu0 %v312
    %542 = vmatpush.msra.mxu0 %v296
    %543 = vmatmul.f32.gmra.mxu0 %v377
    %v544 = vpop.f32.mrf.mxu0
    %v545 = vadd.f32 %v348, %v544
    %546 = vdwg.mxu0
    %547 = vmatpush.msra.mxu0 0.0
    %548 = vmatpush.msra.mxu0 0.0
    %549 = vmatpush.msra.mxu0 0.0
    %550 = vmatpush.msra.mxu0 0.0
    %551 = vmatpush.msra.mxu0 0.0
    %552 = vmatpush.msra.mxu0 0.0
    %553 = vmatpush.msra.mxu0 0.0
    %554 = vmatpush.msra.mxu0 0.0
    %555 = vmatpush.msra.mxu0 0.0
    %556 = vmatpush.msra.mxu0 0.0
    %557 = vmatpush.msra.mxu0 0.0
    %558 = vmatpush.msra.mxu0 0.0
    %559 = vmatpush.msra.mxu0 0.0
    %560 = vmatpush.msra.mxu0 %v398
    %561 = vmatpush.msra.mxu0 %v313
    %562 = vmatpush.msra.mxu0 %v297
    %563 = vmatmul.f32.gmra.mxu0 %v377
    %v564 = vpop.f32.mrf.mxu0
    %v565 = vadd.f32 %v349, %v564
    %566 = vdwg.mxu0
    %567 = vmatpush.msra.mxu0 0.0
    %568 = vmatpush.msra.mxu0 0.0
    %569 = vmatpush.msra.mxu0 0.0
    %570 = vmatpush.msra.mxu0 0.0
    %571 = vmatpush.msra.mxu0 0.0
    %572 = vmatpush.msra.mxu0 0.0
    %573 = vmatpush.msra.mxu0 0.0
    %574 = vmatpush.msra.mxu0 0.0
    %575 = vmatpush.msra.mxu0 0.0
    %576 = vmatpush.msra.mxu0 0.0
    %577 = vmatpush.msra.mxu0 0.0
    %578 = vmatpush.msra.mxu0 0.0
    %579 = vmatpush.msra.mxu0 0.0
    %580 = vmatpush.msra.mxu0 %v401
    %581 = vmatpush.msra.mxu0 %v314
    %582 = vmatpush.msra.mxu0 %v298
    %583 = vmatmul.f32.gmra.mxu0 %v377
    %v584 = vpop.f32.mrf.mxu0
    %v585 = vadd.f32 %v350, %v584
    %586 = vdwg.mxu0
    %587 = vmatpush.msra.mxu0 0.0
    %588 = vmatpush.msra.mxu0 0.0
    %589 = vmatpush.msra.mxu0 0.0
    %590 = vmatpush.msra.mxu0 0.0
    %591 = vmatpush.msra.mxu0 0.0
    %592 = vmatpush.msra.mxu0 0.0
    %593 = vmatpush.msra.mxu0 0.0
    %594 = vmatpush.msra.mxu0 0.0
    %595 = vmatpush.msra.mxu0 0.0
    %596 = vmatpush.msra.mxu0 0.0
    %597 = vmatpush.msra.mxu0 0.0
    %598 = vmatpush.msra.mxu0 0.0
    %599 = vmatpush.msra.mxu0 0.0
    %600 = vmatpush.msra.mxu0 %v404
    %601 = vmatpush.msra.mxu0 %v315
    %602 = vmatpush.msra.mxu0 %v299
    %603 = vmatmul.f32.gmra.mxu0 %v377
    %v604 = vpop.f32.mrf.mxu0
    %v605 = vadd.f32 %v351, %v604
    %606 = vdwg.mxu0
    %607 = vmatpush.msra.mxu0 0.0
    %608 = vmatpush.msra.mxu0 0.0
    %609 = vmatpush.msra.mxu0 0.0
    %610 = vmatpush.msra.mxu0 0.0
    %611 = vmatpush.msra.mxu0 0.0
    %612 = vmatpush.msra.mxu0 0.0
    %613 = vmatpush.msra.mxu0 0.0
    %614 = vmatpush.msra.mxu0 0.0
    %615 = vmatpush.msra.mxu0 0.0
    %616 = vmatpush.msra.mxu0 0.0
    %617 = vmatpush.msra.mxu0 0.0
    %618 = vmatpush.msra.mxu0 0.0
    %619 = vmatpush.msra.mxu0 0.0
    %620 = vmatpush.msra.mxu0 %v407
    %621 = vmatpush.msra.mxu0 %v316
    %622 = vmatpush.msra.mxu0 %v300
    %623 = vmatmul.f32.gmra.mxu0 %v377
    %v624 = vpop.f32.mrf.mxu0
    %v625 = vadd.f32 %v352, %v624
    %626 = vdwg.mxu0
    %627 = vmatpush.msra.mxu0 0.0
    %628 = vmatpush.msra.mxu0 0.0
    %629 = vmatpush.msra.mxu0 0.0
    %630 = vmatpush.msra.mxu0 0.0
    %631 = vmatpush.msra.mxu0 0.0
    %632 = vmatpush.msra.mxu0 0.0
    %633 = vmatpush.msra.mxu0 0.0
    %634 = vmatpush.msra.mxu0 0.0
    %635 = vmatpush.msra.mxu0 0.0
    %636 = vmatpush.msra.mxu0 0.0
    %637 = vmatpush.msra.mxu0 0.0
    %638 = vmatpush.msra.mxu0 0.0
    %639 = vmatpush.msra.mxu0 0.0
    %640 = vmatpush.msra.mxu0 %v410
    %641 = vmatpush.msra.mxu0 %v317
    %642 = vmatpush.msra.mxu0 %v301
    %643 = vmatmul.f32.gmra.mxu0 %v377
    %v644 = vpop.f32.mrf.mxu0
    %v645 = vadd.f32 %v353, %v644
    %646 = vdwg.mxu0
    %647 = vmatpush.msra.mxu0 0.0
    %648 = vmatpush.msra.mxu0 0.0
    %649 = vmatpush.msra.mxu0 0.0
    %650 = vmatpush.msra.mxu0 0.0
    %651 = vmatpush.msra.mxu0 0.0
    %652 = vmatpush.msra.mxu0 0.0
    %653 = vmatpush.msra.mxu0 0.0
    %654 = vmatpush.msra.mxu0 0.0
    %655 = vmatpush.msra.mxu0 0.0
    %656 = vmatpush.msra.mxu0 0.0
    %657 = vmatpush.msra.mxu0 0.0
    %658 = vmatpush.msra.mxu0 0.0
    %659 = vmatpush.msra.mxu0 0.0
    %660 = vmatpush.msra.mxu0 %v413
    %661 = vmatpush.msra.mxu0 %v318
    %662 = vmatpush.msra.mxu0 %v302
    %663 = vmatmul.f32.gmra.mxu0 %v377
    %v664 = vpop.f32.mrf.mxu0
    %v665 = vadd.f32 %v354, %v664
    %666 = vdwg.mxu0
    %667 = vmatpush.msra.mxu0 0.0
    %668 = vmatpush.msra.mxu0 0.0
    %669 = vmatpush.msra.mxu0 0.0
    %670 = vmatpush.msra.mxu0 0.0
    %671 = vmatpush.msra.mxu0 0.0
    %672 = vmatpush.msra.mxu0 0.0
    %673 = vmatpush.msra.mxu0 0.0
    %674 = vmatpush.msra.mxu0 0.0
    %675 = vmatpush.msra.mxu0 0.0
    %676 = vmatpush.msra.mxu0 0.0
    %677 = vmatpush.msra.mxu0 0.0
    %678 = vmatpush.msra.mxu0 0.0
    %679 = vmatpush.msra.mxu0 0.0
    %680 = vmatpush.msra.mxu0 %v416
    %681 = vmatpush.msra.mxu0 %v319
    %682 = vmatpush.msra.mxu0 %v303
    %683 = vmatmul.f32.gmra.mxu0 %v377
    %v684 = vpop.f32.mrf.mxu0
    %v685 = vadd.f32 %v355, %v684
    %686 = vdwg.mxu0
    %687 = vmatpush.msra.mxu0 0.0
    %688 = vmatpush.msra.mxu0 0.0
    %689 = vmatpush.msra.mxu0 0.0
    %690 = vmatpush.msra.mxu0 0.0
    %691 = vmatpush.msra.mxu0 0.0
    %692 = vmatpush.msra.mxu0 0.0
    %693 = vmatpush.msra.mxu0 0.0
    %694 = vmatpush.msra.mxu0 0.0
    %695 = vmatpush.msra.mxu0 0.0
    %696 = vmatpush.msra.mxu0 0.0
    %697 = vmatpush.msra.mxu0 0.0
    %698 = vmatpush.msra.mxu0 0.0
    %699 = vmatpush.msra.mxu0 0.0
    %700 = vmatpush.msra.mxu0 %v419
    %701 = vmatpush.msra.mxu0 %v320
    %702 = vmatpush.msra.mxu0 %v304
    %703 = vmatmul.f32.gmra.mxu0 %v377
    %v704 = vpop.f32.mrf.mxu0
    %v705 = vadd.f32 %v356, %v704
    %706 = vdwg.mxu0
    %707 = vmatpush.msra.mxu0 0.0
    %708 = vmatpush.msra.mxu0 0.0
    %709 = vmatpush.msra.mxu0 0.0
    %710 = vmatpush.msra.mxu0 0.0
    %711 = vmatpush.msra.mxu0 0.0
    %712 = vmatpush.msra.mxu0 0.0
    %713 = vmatpush.msra.mxu0 0.0
    %714 = vmatpush.msra.mxu0 0.0
    %715 = vmatpush.msra.mxu0 0.0
    %716 = vmatpush.msra.mxu0 0.0
    %717 = vmatpush.msra.mxu0 0.0
    %718 = vmatpush.msra.mxu0 0.0
    %719 = vmatpush.msra.mxu0 0.0
    %720 = vmatpush.msra.mxu0 %v422
    %721 = vmatpush.msra.mxu0 %v321
    %722 = vmatpush.msra.mxu0 %v305
    %723 = vmatmul.f32.gmra.mxu0 %v377
    %v724 = vpop.f32.mrf.mxu0
    %v725 = vadd.f32 %v357, %v724
    %726 = vdwg.mxu0
    %727 = vmatpush.msra.mxu0 0.0
    %728 = vmatpush.msra.mxu0 0.0
    %729 = vmatpush.msra.mxu0 0.0
    %730 = vmatpush.msra.mxu0 0.0
    %731 = vmatpush.msra.mxu0 0.0
    %732 = vmatpush.msra.mxu0 0.0
    %733 = vmatpush.msra.mxu0 0.0
    %734 = vmatpush.msra.mxu0 0.0
    %735 = vmatpush.msra.mxu0 0.0
    %736 = vmatpush.msra.mxu0 0.0
    %737 = vmatpush.msra.mxu0 0.0
    %738 = vmatpush.msra.mxu0 0.0
    %739 = vmatpush.msra.mxu0 0.0
    %740 = vmatpush.msra.mxu0 %v425
    %741 = vmatpush.msra.mxu0 %v322
    %742 = vmatpush.msra.mxu0 %v306
    %743 = vmatmul.f32.gmra.mxu0 %v377
    %v744 = vpop.f32.mrf.mxu0
    %v745 = vadd.f32 %v358, %v744
    %746 = vdwg.mxu0
    %v747 = vld [vmem:[#allocation10] sm:$0xff]
    %v748 = vld [vmem:[#allocation10 + $0x8] sm:$0xff]
    %v749 = vld [vmem:[#allocation10 + $0x10] sm:$0xff]
    %v750 = vld [vmem:[#allocation10 + $0x18] sm:$0xff]
    %v751 = vld [vmem:[#allocation10 + $0x20] sm:$0xff]
    %v752 = vld [vmem:[#allocation10 + $0x28] sm:$0xff]
    %v753 = vld [vmem:[#allocation10 + $0x30] sm:$0xff]
    %v754 = vld [vmem:[#allocation10 + $0x38] sm:$0xff]
    %v755 = vld [vmem:[#allocation12] sm:$0xff]
    %v756 = vld [vmem:[#allocation12 + $0x8] sm:$0xff]
    %v759 = vperm.slane %v755, 0
    %v760 = vperm.slane %v755, 1
    %v761 = vperm.slane %v755, 2
    %v762 = vperm.slane %v755, 3
    %v763 = vperm.slane %v755, 4
    %v764 = vperm.slane %v755, 5
    %v765 = vperm.slane %v755, 6
    %v766 = vperm.slane %v755, 7
    %v767 = vperm.slane %v756, 0
    %v768 = vperm.slane %v756, 1
    %v769 = vperm.slane %v756, 2
    %v770 = vperm.slane %v756, 3
    %v771 = vperm.slane %v756, 4
    %v772 = vperm.slane %v756, 5
    %v773 = vperm.slane %v756, 6
    %v774 = vperm.slane %v756, 7
    %799 = vst [vmem:[#allocation1] ss:$2 sm:$0xff] %v747
    %s800 = scalar_lea.vmem [#allocation1], 16
    %801 = vst [vmem:[%s800] ss:$2 sm:$0xff] %v748
    %s802 = scalar_lea.vmem [#allocation1], 32
    %803 = vst [vmem:[%s802] ss:$2 sm:$0xff] %v749
    %s804 = scalar_lea.vmem [#allocation1], 48
    %805 = vst [vmem:[%s804] ss:$2 sm:$0xff] %v750
    %v806 = vld.sshfl [vmem:[#allocation1] sm:$0xff pattern:$0x75316420]
    %v807 = vld.sshfl [vmem:[#allocation1 + $0x8] sm:$0xff pattern:$0x75316420]
    %v808 = vld.sshfl [vmem:[#allocation1 + $0x10] sm:$0xff pattern:$0x75316420]
    %v809 = vld.sshfl [vmem:[#allocation1 + $0x18] sm:$0xff pattern:$0x75316420]
    %v810 = vld.sshfl [vmem:[#allocation1 + $0x20] sm:$0xff pattern:$0x75316420]
    %v811 = vld.sshfl [vmem:[#allocation1 + $0x28] sm:$0xff pattern:$0x75316420]
    %v812 = vld.sshfl [vmem:[#allocation1 + $0x30] sm:$0xff pattern:$0x75316420]
    %v813 = vld.sshfl [vmem:[#allocation1 + $0x38] sm:$0xff pattern:$0x75316420]
    %814 = vst [vmem:[#allocation1] ss:$2 sm:$0xff] %v751
    %815 = vst [vmem:[%s800] ss:$2 sm:$0xff] %v752
    %816 = vst [vmem:[%s802] ss:$2 sm:$0xff] %v753
    %817 = vst [vmem:[%s804] ss:$2 sm:$0xff] %v754
    %v818 = vld.sshfl [vmem:[#allocation1] sm:$0xff pattern:$0x75316420]
    %v819 = vld.sshfl [vmem:[#allocation1 + $0x8] sm:$0xff pattern:$0x75316420]
    %v820 = vld.sshfl [vmem:[#allocation1 + $0x10] sm:$0xff pattern:$0x75316420]
    %v821 = vld.sshfl [vmem:[#allocation1 + $0x18] sm:$0xff pattern:$0x75316420]
    %v822 = vld.sshfl [vmem:[#allocation1 + $0x20] sm:$0xff pattern:$0x75316420]
    %v823 = vld.sshfl [vmem:[#allocation1 + $0x28] sm:$0xff pattern:$0x75316420]
    %v824 = vld.sshfl [vmem:[#allocation1 + $0x30] sm:$0xff pattern:$0x75316420]
    %v825 = vld.sshfl [vmem:[#allocation1 + $0x38] sm:$0xff pattern:$0x75316420]
    %v826 = vsel %vm257, %v806, 0
    %v828 = vsel %vm257, %v807, 0
    %v830 = vsel %vm257, %v808, 0
    %v832 = vsel %vm257, %v809, 0
    %v834 = vsel %vm257, %v810, 0
    %v836 = vsel %vm257, %v811, 0
    %v838 = vsel %vm257, %v812, 0
    %v840 = vsel %vm257, %v813, 0
    %v842 = vsel %vm257, %v818, 0
    %v844 = vsel %vm257, %v819, 0
    %v846 = vsel %vm257, %v820, 0
    %v848 = vsel %vm257, %v821, 0
    %v850 = vsel %vm257, %v822, 0
    %v852 = vsel %vm257, %v823, 0
    %v854 = vsel %vm257, %v824, 0
    %v856 = vsel %vm257, %v825, 0
    %858 = vmatpush.msra.mxu0 0.0
    %859 = vmatpush.msra.mxu0 0.0
    %860 = vmatpush.msra.mxu0 0.0
    %861 = vmatpush.msra.mxu0 0.0
    %862 = vmatpush.msra.mxu0 0.0
    %863 = vmatpush.msra.mxu0 0.0
    %864 = vmatpush.msra.mxu0 0.0
    %865 = vmatpush.msra.mxu0 0.0
    %866 = vmatpush.msra.mxu0 0.0
    %867 = vmatpush.msra.mxu0 0.0
    %868 = vmatpush.msra.mxu0 0.0
    %869 = vmatpush.msra.mxu0 0.0
    %870 = vmatpush.msra.mxu0 0.0
    %871 = vmatpush.msra.mxu0 0.0
    %872 = vmatpush.msra.mxu0 0.0
    %873 = vmatpush.msra.mxu0 %v826
    %874 = vmatmul.f32.gmra.mxu0 %v255
    %v875 = vpop.f32.mrf.mxu0
    %v876 = vadd.f32 %v759, %v875
    %877 = vdwg.mxu0
    %878 = vmatpush.msra.mxu0 0.0
    %879 = vmatpush.msra.mxu0 0.0
    %880 = vmatpush.msra.mxu0 0.0
    %881 = vmatpush.msra.mxu0 0.0
    %882 = vmatpush.msra.mxu0 0.0
    %883 = vmatpush.msra.mxu0 0.0
    %884 = vmatpush.msra.mxu0 0.0
    %885 = vmatpush.msra.mxu0 0.0
    %886 = vmatpush.msra.mxu0 0.0
    %887 = vmatpush.msra.mxu0 0.0
    %888 = vmatpush.msra.mxu0 0.0
    %889 = vmatpush.msra.mxu0 0.0
    %890 = vmatpush.msra.mxu0 0.0
    %891 = vmatpush.msra.mxu0 0.0
    %892 = vmatpush.msra.mxu0 0.0
    %893 = vmatpush.msra.mxu0 %v828
    %894 = vmatmul.f32.gmra.mxu0 %v255
    %v895 = vpop.f32.mrf.mxu0
    %v896 = vadd.f32 %v760, %v895
    %897 = vdwg.mxu0
    %898 = vmatpush.msra.mxu0 0.0
    %899 = vmatpush.msra.mxu0 0.0
    %900 = vmatpush.msra.mxu0 0.0
    %901 = vmatpush.msra.mxu0 0.0
    %902 = vmatpush.msra.mxu0 0.0
    %903 = vmatpush.msra.mxu0 0.0
    %904 = vmatpush.msra.mxu0 0.0
    %905 = vmatpush.msra.mxu0 0.0
    %906 = vmatpush.msra.mxu0 0.0
    %907 = vmatpush.msra.mxu0 0.0
    %908 = vmatpush.msra.mxu0 0.0
    %909 = vmatpush.msra.mxu0 0.0
    %910 = vmatpush.msra.mxu0 0.0
    %911 = vmatpush.msra.mxu0 0.0
    %912 = vmatpush.msra.mxu0 0.0
    %913 = vmatpush.msra.mxu0 %v830
    %914 = vmatmul.f32.gmra.mxu0 %v255
    %v915 = vpop.f32.mrf.mxu0
    %v916 = vadd.f32 %v761, %v915
    %917 = vdwg.mxu0
    %918 = vmatpush.msra.mxu0 0.0
    %919 = vmatpush.msra.mxu0 0.0
    %920 = vmatpush.msra.mxu0 0.0
    %921 = vmatpush.msra.mxu0 0.0
    %922 = vmatpush.msra.mxu0 0.0
    %923 = vmatpush.msra.mxu0 0.0
    %924 = vmatpush.msra.mxu0 0.0
    %925 = vmatpush.msra.mxu0 0.0
    %926 = vmatpush.msra.mxu0 0.0
    %927 = vmatpush.msra.mxu0 0.0
    %928 = vmatpush.msra.mxu0 0.0
    %929 = vmatpush.msra.mxu0 0.0
    %930 = vmatpush.msra.mxu0 0.0
    %931 = vmatpush.msra.mxu0 0.0
    %932 = vmatpush.msra.mxu0 0.0
    %933 = vmatpush.msra.mxu0 %v832
    %934 = vmatmul.f32.gmra.mxu0 %v255
    %v935 = vpop.f32.mrf.mxu0
    %v936 = vadd.f32 %v762, %v935
    %937 = vdwg.mxu0
    %938 = vmatpush.msra.mxu0 0.0
    %939 = vmatpush.msra.mxu0 0.0
    %940 = vmatpush.msra.mxu0 0.0
    %941 = vmatpush.msra.mxu0 0.0
    %942 = vmatpush.msra.mxu0 0.0
    %943 = vmatpush.msra.mxu0 0.0
    %944 = vmatpush.msra.mxu0 0.0
    %945 = vmatpush.msra.mxu0 0.0
    %946 = vmatpush.msra.mxu0 0.0
    %947 = vmatpush.msra.mxu0 0.0
    %948 = vmatpush.msra.mxu0 0.0
    %949 = vmatpush.msra.mxu0 0.0
    %950 = vmatpush.msra.mxu0 0.0
    %951 = vmatpush.msra.mxu0 0.0
    %952 = vmatpush.msra.mxu0 0.0
    %953 = vmatpush.msra.mxu0 %v834
    %954 = vmatmul.f32.gmra.mxu0 %v255
    %v955 = vpop.f32.mrf.mxu0
    %v956 = vadd.f32 %v763, %v955
    %957 = vdwg.mxu0
    %958 = vmatpush.msra.mxu0 0.0
    %959 = vmatpush.msra.mxu0 0.0
    %960 = vmatpush.msra.mxu0 0.0
    %961 = vmatpush.msra.mxu0 0.0
    %962 = vmatpush.msra.mxu0 0.0
    %963 = vmatpush.msra.mxu0 0.0
    %964 = vmatpush.msra.mxu0 0.0
    %965 = vmatpush.msra.mxu0 0.0
    %966 = vmatpush.msra.mxu0 0.0
    %967 = vmatpush.msra.mxu0 0.0
    %968 = vmatpush.msra.mxu0 0.0
    %969 = vmatpush.msra.mxu0 0.0
    %970 = vmatpush.msra.mxu0 0.0
    %971 = vmatpush.msra.mxu0 0.0
    %972 = vmatpush.msra.mxu0 0.0
    %973 = vmatpush.msra.mxu0 %v836
    %974 = vmatmul.f32.gmra.mxu0 %v255
    %v975 = vpop.f32.mrf.mxu0
    %v976 = vadd.f32 %v764, %v975
    %977 = vdwg.mxu0
    %978 = vmatpush.msra.mxu0 0.0
    %979 = vmatpush.msra.mxu0 0.0
    %980 = vmatpush.msra.mxu0 0.0
    %981 = vmatpush.msra.mxu0 0.0
    %982 = vmatpush.msra.mxu0 0.0
    %983 = vmatpush.msra.mxu0 0.0
    %984 = vmatpush.msra.mxu0 0.0
    %985 = vmatpush.msra.mxu0 0.0
    %986 = vmatpush.msra.mxu0 0.0
    %987 = vmatpush.msra.mxu0 0.0
    %988 = vmatpush.msra.mxu0 0.0
    %989 = vmatpush.msra.mxu0 0.0
    %990 = vmatpush.msra.mxu0 0.0
    %991 = vmatpush.msra.mxu0 0.0
    %992 = vmatpush.msra.mxu0 0.0
    %993 = vmatpush.msra.mxu0 %v838
    %994 = vmatmul.f32.gmra.mxu0 %v255
    %v995 = vpop.f32.mrf.mxu0
    %v996 = vadd.f32 %v765, %v995
    %997 = vdwg.mxu0
    %998 = vmatpush.msra.mxu0 0.0
    %999 = vmatpush.msra.mxu0 0.0
    %1000 = vmatpush.msra.mxu0 0.0
    %1001 = vmatpush.msra.mxu0 0.0
    %1002 = vmatpush.msra.mxu0 0.0
    %1003 = vmatpush.msra.mxu0 0.0
    %1004 = vmatpush.msra.mxu0 0.0
    %1005 = vmatpush.msra.mxu0 0.0
    %1006 = vmatpush.msra.mxu0 0.0
    %1007 = vmatpush.msra.mxu0 0.0
    %1008 = vmatpush.msra.mxu0 0.0
    %1009 = vmatpush.msra.mxu0 0.0
    %1010 = vmatpush.msra.mxu0 0.0
    %1011 = vmatpush.msra.mxu0 0.0
    %1012 = vmatpush.msra.mxu0 0.0
    %1013 = vmatpush.msra.mxu0 %v840
    %1014 = vmatmul.f32.gmra.mxu0 %v255
    %v1015 = vpop.f32.mrf.mxu0
    %v1016 = vadd.f32 %v766, %v1015
    %1017 = vdwg.mxu0
    %1018 = vmatpush.msra.mxu0 0.0
    %1019 = vmatpush.msra.mxu0 0.0
    %1020 = vmatpush.msra.mxu0 0.0
    %1021 = vmatpush.msra.mxu0 0.0
    %1022 = vmatpush.msra.mxu0 0.0
    %1023 = vmatpush.msra.mxu0 0.0
    %1024 = vmatpush.msra.mxu0 0.0
    %1025 = vmatpush.msra.mxu0 0.0
    %1026 = vmatpush.msra.mxu0 0.0
    %1027 = vmatpush.msra.mxu0 0.0
    %1028 = vmatpush.msra.mxu0 0.0
    %1029 = vmatpush.msra.mxu0 0.0
    %1030 = vmatpush.msra.mxu0 0.0
    %1031 = vmatpush.msra.mxu0 0.0
    %1032 = vmatpush.msra.mxu0 0.0
    %1033 = vmatpush.msra.mxu0 %v842
    %1034 = vmatmul.f32.gmra.mxu0 %v255
    %v1035 = vpop.f32.mrf.mxu0
    %v1036 = vadd.f32 %v767, %v1035
    %1037 = vdwg.mxu0
    %1038 = vmatpush.msra.mxu0 0.0
    %1039 = vmatpush.msra.mxu0 0.0
    %1040 = vmatpush.msra.mxu0 0.0
    %1041 = vmatpush.msra.mxu0 0.0
    %1042 = vmatpush.msra.mxu0 0.0
    %1043 = vmatpush.msra.mxu0 0.0
    %1044 = vmatpush.msra.mxu0 0.0
    %1045 = vmatpush.msra.mxu0 0.0
    %1046 = vmatpush.msra.mxu0 0.0
    %1047 = vmatpush.msra.mxu0 0.0
    %1048 = vmatpush.msra.mxu0 0.0
    %1049 = vmatpush.msra.mxu0 0.0
    %1050 = vmatpush.msra.mxu0 0.0
    %1051 = vmatpush.msra.mxu0 0.0
    %1052 = vmatpush.msra.mxu0 0.0
    %1053 = vmatpush.msra.mxu0 %v844
    %1054 = vmatmul.f32.gmra.mxu0 %v255
    %v1055 = vpop.f32.mrf.mxu0
    %v1056 = vadd.f32 %v768, %v1055
    %1057 = vdwg.mxu0
    %1058 = vmatpush.msra.mxu0 0.0
    %1059 = vmatpush.msra.mxu0 0.0
    %1060 = vmatpush.msra.mxu0 0.0
    %1061 = vmatpush.msra.mxu0 0.0
    %1062 = vmatpush.msra.mxu0 0.0
    %1063 = vmatpush.msra.mxu0 0.0
    %1064 = vmatpush.msra.mxu0 0.0
    %1065 = vmatpush.msra.mxu0 0.0
    %1066 = vmatpush.msra.mxu0 0.0
    %1067 = vmatpush.msra.mxu0 0.0
    %1068 = vmatpush.msra.mxu0 0.0
    %1069 = vmatpush.msra.mxu0 0.0
    %1070 = vmatpush.msra.mxu0 0.0
    %1071 = vmatpush.msra.mxu0 0.0
    %1072 = vmatpush.msra.mxu0 0.0
    %1073 = vmatpush.msra.mxu0 %v846
    %1074 = vmatmul.f32.gmra.mxu0 %v255
    %v1075 = vpop.f32.mrf.mxu0
    %v1076 = vadd.f32 %v769, %v1075
    %1077 = vdwg.mxu0
    %1078 = vmatpush.msra.mxu0 0.0
    %1079 = vmatpush.msra.mxu0 0.0
    %1080 = vmatpush.msra.mxu0 0.0
    %1081 = vmatpush.msra.mxu0 0.0
    %1082 = vmatpush.msra.mxu0 0.0
    %1083 = vmatpush.msra.mxu0 0.0
    %1084 = vmatpush.msra.mxu0 0.0
    %1085 = vmatpush.msra.mxu0 0.0
    %1086 = vmatpush.msra.mxu0 0.0
    %1087 = vmatpush.msra.mxu0 0.0
    %1088 = vmatpush.msra.mxu0 0.0
    %1089 = vmatpush.msra.mxu0 0.0
    %1090 = vmatpush.msra.mxu0 0.0
    %1091 = vmatpush.msra.mxu0 0.0
    %1092 = vmatpush.msra.mxu0 0.0
    %1093 = vmatpush.msra.mxu0 %v848
    %1094 = vmatmul.f32.gmra.mxu0 %v255
    %v1095 = vpop.f32.mrf.mxu0
    %v1096 = vadd.f32 %v770, %v1095
    %1097 = vdwg.mxu0
    %1098 = vmatpush.msra.mxu0 0.0
    %1099 = vmatpush.msra.mxu0 0.0
    %1100 = vmatpush.msra.mxu0 0.0
    %1101 = vmatpush.msra.mxu0 0.0
    %1102 = vmatpush.msra.mxu0 0.0
    %1103 = vmatpush.msra.mxu0 0.0
    %1104 = vmatpush.msra.mxu0 0.0
    %1105 = vmatpush.msra.mxu0 0.0
    %1106 = vmatpush.msra.mxu0 0.0
    %1107 = vmatpush.msra.mxu0 0.0
    %1108 = vmatpush.msra.mxu0 0.0
    %1109 = vmatpush.msra.mxu0 0.0
    %1110 = vmatpush.msra.mxu0 0.0
    %1111 = vmatpush.msra.mxu0 0.0
    %1112 = vmatpush.msra.mxu0 0.0
    %1113 = vmatpush.msra.mxu0 %v850
    %1114 = vmatmul.f32.gmra.mxu0 %v255
    %v1115 = vpop.f32.mrf.mxu0
    %v1116 = vadd.f32 %v771, %v1115
    %1117 = vdwg.mxu0
    %1118 = vmatpush.msra.mxu0 0.0
    %1119 = vmatpush.msra.mxu0 0.0
    %1120 = vmatpush.msra.mxu0 0.0
    %1121 = vmatpush.msra.mxu0 0.0
    %1122 = vmatpush.msra.mxu0 0.0
    %1123 = vmatpush.msra.mxu0 0.0
    %1124 = vmatpush.msra.mxu0 0.0
    %1125 = vmatpush.msra.mxu0 0.0
    %1126 = vmatpush.msra.mxu0 0.0
    %1127 = vmatpush.msra.mxu0 0.0
    %1128 = vmatpush.msra.mxu0 0.0
    %1129 = vmatpush.msra.mxu0 0.0
    %1130 = vmatpush.msra.mxu0 0.0
    %1131 = vmatpush.msra.mxu0 0.0
    %1132 = vmatpush.msra.mxu0 0.0
    %1133 = vmatpush.msra.mxu0 %v852
    %1134 = vmatmul.f32.gmra.mxu0 %v255
    %v1135 = vpop.f32.mrf.mxu0
    %v1136 = vadd.f32 %v772, %v1135
    %1137 = vdwg.mxu0
    %1138 = vmatpush.msra.mxu0 0.0
    %1139 = vmatpush.msra.mxu0 0.0
    %1140 = vmatpush.msra.mxu0 0.0
    %1141 = vmatpush.msra.mxu0 0.0
    %1142 = vmatpush.msra.mxu0 0.0
    %1143 = vmatpush.msra.mxu0 0.0
    %1144 = vmatpush.msra.mxu0 0.0
    %1145 = vmatpush.msra.mxu0 0.0
    %1146 = vmatpush.msra.mxu0 0.0
    %1147 = vmatpush.msra.mxu0 0.0
    %1148 = vmatpush.msra.mxu0 0.0
    %1149 = vmatpush.msra.mxu0 0.0
    %1150 = vmatpush.msra.mxu0 0.0
    %1151 = vmatpush.msra.mxu0 0.0
    %1152 = vmatpush.msra.mxu0 0.0
    %1153 = vmatpush.msra.mxu0 %v854
    %1154 = vmatmul.f32.gmra.mxu0 %v255
    %v1155 = vpop.f32.mrf.mxu0
    %v1156 = vadd.f32 %v773, %v1155
    %1157 = vdwg.mxu0
    %1158 = vmatpush.msra.mxu0 0.0
    %1159 = vmatpush.msra.mxu0 0.0
    %1160 = vmatpush.msra.mxu0 0.0
    %1161 = vmatpush.msra.mxu0 0.0
    %1162 = vmatpush.msra.mxu0 0.0
    %1163 = vmatpush.msra.mxu0 0.0
    %1164 = vmatpush.msra.mxu0 0.0
    %1165 = vmatpush.msra.mxu0 0.0
    %1166 = vmatpush.msra.mxu0 0.0
    %1167 = vmatpush.msra.mxu0 0.0
    %1168 = vmatpush.msra.mxu0 0.0
    %1169 = vmatpush.msra.mxu0 0.0
    %1170 = vmatpush.msra.mxu0 0.0
    %1171 = vmatpush.msra.mxu0 0.0
    %1172 = vmatpush.msra.mxu0 0.0
    %1173 = vmatpush.msra.mxu0 %v856
    %1174 = vmatmul.f32.gmra.mxu0 %v255
    %v1175 = vpop.f32.mrf.mxu0
    %v1176 = vadd.f32 %v774, %v1175
    %1177 = vdwg.mxu0
    %vm1178 = vcmp.ge.f32.partialorder %v876, 0.0
    %vm1179 = vcmp.ge.f32.partialorder %v896, 0.0
    %vm1180 = vcmp.ge.f32.partialorder %v916, 0.0
    %vm1181 = vcmp.ge.f32.partialorder %v936, 0.0
    %vm1182 = vcmp.ge.f32.partialorder %v956, 0.0
    %vm1183 = vcmp.ge.f32.partialorder %v976, 0.0
    %vm1184 = vcmp.ge.f32.partialorder %v996, 0.0
    %vm1185 = vcmp.ge.f32.partialorder %v1016, 0.0
    %vm1186 = vcmp.ge.f32.partialorder %v1036, 0.0
    %vm1187 = vcmp.ge.f32.partialorder %v1056, 0.0
    %vm1188 = vcmp.ge.f32.partialorder %v1076, 0.0
    %vm1189 = vcmp.ge.f32.partialorder %v1096, 0.0
    %vm1190 = vcmp.ge.f32.partialorder %v1116, 0.0
    %vm1191 = vcmp.ge.f32.partialorder %v1136, 0.0
    %vm1192 = vcmp.ge.f32.partialorder %v1156, 0.0
    %vm1193 = vcmp.ge.f32.partialorder %v1176, 0.0
    %v1194 = vmul.f32 %v876, 0.2
    %v1195 = vmul.f32 %v896, 0.2
    %v1196 = vmul.f32 %v916, 0.2
    %v1197 = vmul.f32 %v936, 0.2
    %v1198 = vmul.f32 %v956, 0.2
    %v1199 = vmul.f32 %v976, 0.2
    %v1200 = vmul.f32 %v996, 0.2
    %v1201 = vmul.f32 %v1016, 0.2
    %v1202 = vmul.f32 %v1036, 0.2
    %v1203 = vmul.f32 %v1056, 0.2
    %v1204 = vmul.f32 %v1076, 0.2
    %v1205 = vmul.f32 %v1096, 0.2
    %v1206 = vmul.f32 %v1116, 0.2
    %v1207 = vmul.f32 %v1136, 0.2
    %v1208 = vmul.f32 %v1156, 0.2
    %v1209 = vmul.f32 %v1176, 0.2
    %v1210 = vsel %vm1178, %v876, %v1194
    %v1211 = vsel %vm1179, %v896, %v1195
    %v1212 = vsel %vm1180, %v916, %v1196
    %v1213 = vsel %vm1181, %v936, %v1197
    %v1214 = vsel %vm1182, %v956, %v1198
    %v1215 = vsel %vm1183, %v976, %v1199
    %v1216 = vsel %vm1184, %v996, %v1200
    %v1217 = vsel %vm1185, %v1016, %v1201
    %v1218 = vsel %vm1186, %v1036, %v1202
    %v1219 = vsel %vm1187, %v1056, %v1203
    %v1220 = vsel %vm1188, %v1076, %v1204
    %v1221 = vsel %vm1189, %v1096, %v1205
    %v1222 = vsel %vm1190, %v1116, %v1206
    %v1223 = vsel %vm1191, %v1136, %v1207
    %v1224 = vsel %vm1192, %v1156, %v1208
    %v1225 = vsel %vm1193, %v1176, %v1209
    %v1226 = vsel %vm257, %v445, 0.0
    %v1227 = vrot.slane %v1226, 4
    %v1228 = vadd.f32 %v1226, %v1227
    %v1229 = vrot.slane %v1228, 2
    %v1230 = vadd.f32 %v1228, %v1229
    %v1231 = vrot.slane %v1230, 1
    %v1232 = vadd.f32 %v1230, %v1231
    %v1233 = vsel %vm257, %v465, 0.0
    %v1234 = vrot.slane %v1233, 4
    %v1235 = vadd.f32 %v1233, %v1234
    %v1236 = vrot.slane %v1235, 2
    %v1237 = vadd.f32 %v1235, %v1236
    %v1238 = vrot.slane %v1237, 1
    %v1239 = vadd.f32 %v1237, %v1238
    %v1240 = vsel %vm257, %v485, 0.0
    %v1241 = vrot.slane %v1240, 4
    %v1242 = vadd.f32 %v1240, %v1241
    %v1243 = vrot.slane %v1242, 2
    %v1244 = vadd.f32 %v1242, %v1243
    %v1245 = vrot.slane %v1244, 1
    %v1246 = vadd.f32 %v1244, %v1245
    %v1247 = vsel %vm257, %v505, 0.0
    %v1248 = vrot.slane %v1247, 4
    %v1249 = vadd.f32 %v1247, %v1248
    %v1250 = vrot.slane %v1249, 2
    %v1251 = vadd.f32 %v1249, %v1250
    %v1252 = vrot.slane %v1251, 1
    %v1253 = vadd.f32 %v1251, %v1252
    %v1254 = vsel %vm257, %v525, 0.0
    %v1255 = vrot.slane %v1254, 4
    %v1256 = vadd.f32 %v1254, %v1255
    %v1257 = vrot.slane %v1256, 2
    %v1258 = vadd.f32 %v1256, %v1257
    %v1259 = vrot.slane %v1258, 1
    %v1260 = vadd.f32 %v1258, %v1259
    %v1261 = vsel %vm257, %v545, 0.0
    %v1262 = vrot.slane %v1261, 4
    %v1263 = vadd.f32 %v1261, %v1262
    %v1264 = vrot.slane %v1263, 2
    %v1265 = vadd.f32 %v1263, %v1264
    %v1266 = vrot.slane %v1265, 1
    %v1267 = vadd.f32 %v1265, %v1266
    %v1268 = vsel %vm257, %v565, 0.0
    %v1269 = vrot.slane %v1268, 4
    %v1270 = vadd.f32 %v1268, %v1269
    %v1271 = vrot.slane %v1270, 2
    %v1272 = vadd.f32 %v1270, %v1271
    %v1273 = vrot.slane %v1272, 1
    %v1274 = vadd.f32 %v1272, %v1273
    %v1275 = vsel %vm257, %v585, 0.0
    %v1276 = vrot.slane %v1275, 4
    %v1277 = vadd.f32 %v1275, %v1276
    %v1278 = vrot.slane %v1277, 2
    %v1279 = vadd.f32 %v1277, %v1278
    %v1280 = vrot.slane %v1279, 1
    %v1281 = vadd.f32 %v1279, %v1280
    %v1282 = vsel %vm257, %v605, 0.0
    %v1283 = vrot.slane %v1282, 4
    %v1284 = vadd.f32 %v1282, %v1283
    %v1285 = vrot.slane %v1284, 2
    %v1286 = vadd.f32 %v1284, %v1285
    %v1287 = vrot.slane %v1286, 1
    %v1288 = vadd.f32 %v1286, %v1287
    %v1289 = vsel %vm257, %v625, 0.0
    %v1290 = vrot.slane %v1289, 4
    %v1291 = vadd.f32 %v1289, %v1290
    %v1292 = vrot.slane %v1291, 2
    %v1293 = vadd.f32 %v1291, %v1292
    %v1294 = vrot.slane %v1293, 1
    %v1295 = vadd.f32 %v1293, %v1294
    %v1296 = vsel %vm257, %v645, 0.0
    %v1297 = vrot.slane %v1296, 4
    %v1298 = vadd.f32 %v1296, %v1297
    %v1299 = vrot.slane %v1298, 2
    %v1300 = vadd.f32 %v1298, %v1299
    %v1301 = vrot.slane %v1300, 1
    %v1302 = vadd.f32 %v1300, %v1301
    %v1303 = vsel %vm257, %v665, 0.0
    %v1304 = vrot.slane %v1303, 4
    %v1305 = vadd.f32 %v1303, %v1304
    %v1306 = vrot.slane %v1305, 2
    %v1307 = vadd.f32 %v1305, %v1306
    %v1308 = vrot.slane %v1307, 1
    %v1309 = vadd.f32 %v1307, %v1308
    %v1310 = vsel %vm257, %v685, 0.0
    %v1311 = vrot.slane %v1310, 4
    %v1312 = vadd.f32 %v1310, %v1311
    %v1313 = vrot.slane %v1312, 2
    %v1314 = vadd.f32 %v1312, %v1313
    %v1315 = vrot.slane %v1314, 1
    %v1316 = vadd.f32 %v1314, %v1315
    %v1317 = vsel %vm257, %v705, 0.0
    %v1318 = vrot.slane %v1317, 4
    %v1319 = vadd.f32 %v1317, %v1318
    %v1320 = vrot.slane %v1319, 2
    %v1321 = vadd.f32 %v1319, %v1320
    %v1322 = vrot.slane %v1321, 1
    %v1323 = vadd.f32 %v1321, %v1322
    %v1324 = vsel %vm257, %v725, 0.0
    %v1325 = vrot.slane %v1324, 4
    %v1326 = vadd.f32 %v1324, %v1325
    %v1327 = vrot.slane %v1326, 2
    %v1328 = vadd.f32 %v1326, %v1327
    %v1329 = vrot.slane %v1328, 1
    %v1330 = vadd.f32 %v1328, %v1329
    %v1331 = vsel %vm257, %v745, 0.0
    %v1332 = vrot.slane %v1331, 4
    %v1333 = vadd.f32 %v1331, %v1332
    %v1334 = vrot.slane %v1333, 2
    %v1335 = vadd.f32 %v1333, %v1334
    %v1336 = vrot.slane %v1335, 1
    %v1337 = vadd.f32 %v1335, %v1336
    %v1338 = vrcp.pop 4.0
    %v1339 = vmul.f32 4.0, %v1338
    %v1340 = vsub.f32 1.0, %v1339
    %v1341 = vmul.f32 %v1338, %v1340
    %v1342 = vadd.f32 %v1338, %v1341
    %vm1343 = vweird.f32 %v1338
    %v1344 = vsel %vm1343, %v1338, %v1342
    %v1345 = vmul.f32 %v1232, %v1344
    %v1346 = vmul.f32 %v1239, %v1344
    %v1347 = vmul.f32 %v1246, %v1344
    %v1348 = vmul.f32 %v1253, %v1344
    %v1349 = vmul.f32 %v1260, %v1344
    %v1350 = vmul.f32 %v1267, %v1344
    %v1351 = vmul.f32 %v1274, %v1344
    %v1352 = vmul.f32 %v1281, %v1344
    %v1353 = vmul.f32 %v1288, %v1344
    %v1354 = vmul.f32 %v1295, %v1344
    %v1355 = vmul.f32 %v1302, %v1344
    %v1356 = vmul.f32 %v1309, %v1344
    %v1357 = vmul.f32 %v1316, %v1344
    %v1358 = vmul.f32 %v1323, %v1344
    %v1359 = vmul.f32 %v1330, %v1344
    %v1360 = vmul.f32 %v1337, %v1344
    %v1361 = vsub.f32 %v445, %v1345
    %v1362 = vsub.f32 %v465, %v1346
    %v1363 = vsub.f32 %v485, %v1347
    %v1364 = vsub.f32 %v505, %v1348
    %v1365 = vsub.f32 %v525, %v1349
    %v1366 = vsub.f32 %v545, %v1350
    %v1367 = vsub.f32 %v565, %v1351
    %v1368 = vsub.f32 %v585, %v1352
    %v1369 = vsub.f32 %v605, %v1353
    %v1370 = vsub.f32 %v625, %v1354
    %v1371 = vsub.f32 %v645, %v1355
    %v1372 = vsub.f32 %v665, %v1356
    %v1373 = vsub.f32 %v685, %v1357
    %v1374 = vsub.f32 %v705, %v1358
    %v1375 = vsub.f32 %v725, %v1359
    %v1376 = vsub.f32 %v745, %v1360
    %v1377 = vmul.f32 %v1361, %v1361
    %v1378 = vmul.f32 %v1362, %v1362
    %v1379 = vmul.f32 %v1363, %v1363
    %v1380 = vmul.f32 %v1364, %v1364
    %v1381 = vmul.f32 %v1365, %v1365
    %v1382 = vmul.f32 %v1366, %v1366
    %v1383 = vmul.f32 %v1367, %v1367
    %v1384 = vmul.f32 %v1368, %v1368
    %v1385 = vmul.f32 %v1369, %v1369
    %v1386 = vmul.f32 %v1370, %v1370
    %v1387 = vmul.f32 %v1371, %v1371
    %v1388 = vmul.f32 %v1372, %v1372
    %v1389 = vmul.f32 %v1373, %v1373
    %v1390 = vmul.f32 %v1374, %v1374
    %v1391 = vmul.f32 %v1375, %v1375
    %v1392 = vmul.f32 %v1376, %v1376
    %v1393 = vsel %vm257, %v1377, 0.0
    %v1394 = vrot.slane %v1393, 4
    %v1395 = vadd.f32 %v1393, %v1394
    %v1396 = vrot.slane %v1395, 2
    %v1397 = vadd.f32 %v1395, %v1396
    %v1398 = vrot.slane %v1397, 1
    %v1399 = vadd.f32 %v1397, %v1398
    %v1400 = vsel %vm257, %v1378, 0.0
    %v1401 = vrot.slane %v1400, 4
    %v1402 = vadd.f32 %v1400, %v1401
    %v1403 = vrot.slane %v1402, 2
    %v1404 = vadd.f32 %v1402, %v1403
    %v1405 = vrot.slane %v1404, 1
    %v1406 = vadd.f32 %v1404, %v1405
    %v1407 = vsel %vm257, %v1379, 0.0
    %v1408 = vrot.slane %v1407, 4
    %v1409 = vadd.f32 %v1407, %v1408
    %v1410 = vrot.slane %v1409, 2
    %v1411 = vadd.f32 %v1409, %v1410
    %v1412 = vrot.slane %v1411, 1
    %v1413 = vadd.f32 %v1411, %v1412
    %v1414 = vsel %vm257, %v1380, 0.0
    %v1415 = vrot.slane %v1414, 4
    %v1416 = vadd.f32 %v1414, %v1415
    %v1417 = vrot.slane %v1416, 2
    %v1418 = vadd.f32 %v1416, %v1417
    %v1419 = vrot.slane %v1418, 1
    %v1420 = vadd.f32 %v1418, %v1419
    %v1421 = vsel %vm257, %v1381, 0.0
    %v1422 = vrot.slane %v1421, 4
    %v1423 = vadd.f32 %v1421, %v1422
    %v1424 = vrot.slane %v1423, 2
    %v1425 = vadd.f32 %v1423, %v1424
    %v1426 = vrot.slane %v1425, 1
    %v1427 = vadd.f32 %v1425, %v1426
    %v1428 = vsel %vm257, %v1382, 0.0
    %v1429 = vrot.slane %v1428, 4
    %v1430 = vadd.f32 %v1428, %v1429
    %v1431 = vrot.slane %v1430, 2
    %v1432 = vadd.f32 %v1430, %v1431
    %v1433 = vrot.slane %v1432, 1
    %v1434 = vadd.f32 %v1432, %v1433
    %v1435 = vsel %vm257, %v1383, 0.0
    %v1436 = vrot.slane %v1435, 4
    %v1437 = vadd.f32 %v1435, %v1436
    %v1438 = vrot.slane %v1437, 2
    %v1439 = vadd.f32 %v1437, %v1438
    %v1440 = vrot.slane %v1439, 1
    %v1441 = vadd.f32 %v1439, %v1440
    %v1442 = vsel %vm257, %v1384, 0.0
    %v1443 = vrot.slane %v1442, 4
    %v1444 = vadd.f32 %v1442, %v1443
    %v1445 = vrot.slane %v1444, 2
    %v1446 = vadd.f32 %v1444, %v1445
    %v1447 = vrot.slane %v1446, 1
    %v1448 = vadd.f32 %v1446, %v1447
    %v1449 = vsel %vm257, %v1385, 0.0
    %v1450 = vrot.slane %v1449, 4
    %v1451 = vadd.f32 %v1449, %v1450
    %v1452 = vrot.slane %v1451, 2
    %v1453 = vadd.f32 %v1451, %v1452
    %v1454 = vrot.slane %v1453, 1
    %v1455 = vadd.f32 %v1453, %v1454
    %v1456 = vsel %vm257, %v1386, 0.0
    %v1457 = vrot.slane %v1456, 4
    %v1458 = vadd.f32 %v1456, %v1457
    %v1459 = vrot.slane %v1458, 2
    %v1460 = vadd.f32 %v1458, %v1459
    %v1461 = vrot.slane %v1460, 1
    %v1462 = vadd.f32 %v1460, %v1461
    %v1463 = vsel %vm257, %v1387, 0.0
    %v1464 = vrot.slane %v1463, 4
    %v1465 = vadd.f32 %v1463, %v1464
    %v1466 = vrot.slane %v1465, 2
    %v1467 = vadd.f32 %v1465, %v1466
    %v1468 = vrot.slane %v1467, 1
    %v1469 = vadd.f32 %v1467, %v1468
    %v1470 = vsel %vm257, %v1388, 0.0
    %v1471 = vrot.slane %v1470, 4
    %v1472 = vadd.f32 %v1470, %v1471
    %v1473 = vrot.slane %v1472, 2
    %v1474 = vadd.f32 %v1472, %v1473
    %v1475 = vrot.slane %v1474, 1
    %v1476 = vadd.f32 %v1474, %v1475
    %v1477 = vsel %vm257, %v1389, 0.0
    %v1478 = vrot.slane %v1477, 4
    %v1479 = vadd.f32 %v1477, %v1478
    %v1480 = vrot.slane %v1479, 2
    %v1481 = vadd.f32 %v1479, %v1480
    %v1482 = vrot.slane %v1481, 1
    %v1483 = vadd.f32 %v1481, %v1482
    %v1484 = vsel %vm257, %v1390, 0.0
    %v1485 = vrot.slane %v1484, 4
    %v1486 = vadd.f32 %v1484, %v1485
    %v1487 = vrot.slane %v1486, 2
    %v1488 = vadd.f32 %v1486, %v1487
    %v1489 = vrot.slane %v1488, 1
    %v1490 = vadd.f32 %v1488, %v1489
    %v1491 = vsel %vm257, %v1391, 0.0
    %v1492 = vrot.slane %v1491, 4
    %v1493 = vadd.f32 %v1491, %v1492
    %v1494 = vrot.slane %v1493, 2
    %v1495 = vadd.f32 %v1493, %v1494
    %v1496 = vrot.slane %v1495, 1
    %v1497 = vadd.f32 %v1495, %v1496
    %v1498 = vsel %vm257, %v1392, 0.0
    %v1499 = vrot.slane %v1498, 4
    %v1500 = vadd.f32 %v1498, %v1499
    %v1501 = vrot.slane %v1500, 2
    %v1502 = vadd.f32 %v1500, %v1501
    %v1503 = vrot.slane %v1502, 1
    %v1504 = vadd.f32 %v1502, %v1503
    %v1505 = vmul.f32 %v1399, %v1344
    %v1506 = vmul.f32 %v1406, %v1344
    %v1507 = vmul.f32 %v1413, %v1344
    %v1508 = vmul.f32 %v1420, %v1344
    %v1509 = vmul.f32 %v1427, %v1344
    %v1510 = vmul.f32 %v1434, %v1344
    %v1511 = vmul.f32 %v1441, %v1344
    %v1512 = vmul.f32 %v1448, %v1344
    %v1513 = vmul.f32 %v1455, %v1344
    %v1514 = vmul.f32 %v1462, %v1344
    %v1515 = vmul.f32 %v1469, %v1344
    %v1516 = vmul.f32 %v1476, %v1344
    %v1517 = vmul.f32 %v1483, %v1344
    %v1518 = vmul.f32 %v1490, %v1344
    %v1519 = vmul.f32 %v1497, %v1344
    %v1520 = vmul.f32 %v1504, %v1344
    %v1521 = vadd.f32 %v1505, 1e-05
    %v1522 = vadd.f32 %v1506, 1e-05
    %v1523 = vadd.f32 %v1507, 1e-05
    %v1524 = vadd.f32 %v1508, 1e-05
    %v1525 = vadd.f32 %v1509, 1e-05
    %v1526 = vadd.f32 %v1510, 1e-05
    %v1527 = vadd.f32 %v1511, 1e-05
    %v1528 = vadd.f32 %v1512, 1e-05
    %v1529 = vadd.f32 %v1513, 1e-05
    %v1530 = vadd.f32 %v1514, 1e-05
    %v1531 = vadd.f32 %v1515, 1e-05
    %v1532 = vadd.f32 %v1516, 1e-05
    %v1533 = vadd.f32 %v1517, 1e-05
    %v1534 = vadd.f32 %v1518, 1e-05
    %v1535 = vadd.f32 %v1519, 1e-05
    %v1536 = vadd.f32 %v1520, 1e-05
    %v1537 = vrsqrt.pop %v1521
    %v1538 = vmul.f32 %v1537, %v1521
    %v1539 = vmul.f32 %v1538, %v1537
    %v1540 = vmul.f32 0.5, %v1539
    %v1541 = vsub.f32 1.5, %v1540
    %v1542 = vmul.f32 %v1537, %v1541
    %vm1543 = vweird.f32 %v1521
    %vm1544 = vweird.f32 %v1537
    %vm1545 = vmor %vm1543, %vm1544
    %v1546 = vsel %vm1545, %v1537, %v1542
    %v1547 = vrsqrt.pop %v1522
    %v1548 = vmul.f32 %v1547, %v1522
    %v1549 = vmul.f32 %v1548, %v1547
    %v1550 = vmul.f32 0.5, %v1549
    %v1551 = vsub.f32 1.5, %v1550
    %v1552 = vmul.f32 %v1547, %v1551
    %vm1553 = vweird.f32 %v1522
    %vm1554 = vweird.f32 %v1547
    %vm1555 = vmor %vm1553, %vm1554
    %v1556 = vsel %vm1555, %v1547, %v1552
    %v1557 = vrsqrt.pop %v1523
    %v1558 = vmul.f32 %v1557, %v1523
    %v1559 = vmul.f32 %v1558, %v1557
    %v1560 = vmul.f32 0.5, %v1559
    %v1561 = vsub.f32 1.5, %v1560
    %v1562 = vmul.f32 %v1557, %v1561
    %vm1563 = vweird.f32 %v1523
    %vm1564 = vweird.f32 %v1557
    %vm1565 = vmor %vm1563, %vm1564
    %v1566 = vsel %vm1565, %v1557, %v1562
    %v1567 = vrsqrt.pop %v1524
    %v1568 = vmul.f32 %v1567, %v1524
    %v1569 = vmul.f32 %v1568, %v1567
    %v1570 = vmul.f32 0.5, %v1569
    %v1571 = vsub.f32 1.5, %v1570
    %v1572 = vmul.f32 %v1567, %v1571
    %vm1573 = vweird.f32 %v1524
    %vm1574 = vweird.f32 %v1567
    %vm1575 = vmor %vm1573, %vm1574
    %v1576 = vsel %vm1575, %v1567, %v1572
    %v1577 = vrsqrt.pop %v1525
    %v1578 = vmul.f32 %v1577, %v1525
    %v1579 = vmul.f32 %v1578, %v1577
    %v1580 = vmul.f32 0.5, %v1579
    %v1581 = vsub.f32 1.5, %v1580
    %v1582 = vmul.f32 %v1577, %v1581
    %vm1583 = vweird.f32 %v1525
    %vm1584 = vweird.f32 %v1577
    %vm1585 = vmor %vm1583, %vm1584
    %v1586 = vsel %vm1585, %v1577, %v1582
    %v1587 = vrsqrt.pop %v1526
    %v1588 = vmul.f32 %v1587, %v1526
    %v1589 = vmul.f32 %v1588, %v1587
    %v1590 = vmul.f32 0.5, %v1589
    %v1591 = vsub.f32 1.5, %v1590
    %v1592 = vmul.f32 %v1587, %v1591
    %vm1593 = vweird.f32 %v1526
    %vm1594 = vweird.f32 %v1587
    %vm1595 = vmor %vm1593, %vm1594
    %v1596 = vsel %vm1595, %v1587, %v1592
    %v1597 = vrsqrt.pop %v1527
    %v1598 = vmul.f32 %v1597, %v1527
    %v1599 = vmul.f32 %v1598, %v1597
    %v1600 = vmul.f32 0.5, %v1599
    %v1601 = vsub.f32 1.5, %v1600
    %v1602 = vmul.f32 %v1597, %v1601
    %vm1603 = vweird.f32 %v1527
    %vm1604 = vweird.f32 %v1597
    %vm1605 = vmor %vm1603, %vm1604
    %v1606 = vsel %vm1605, %v1597, %v1602
    %v1607 = vrsqrt.pop %v1528
    %v1608 = vmul.f32 %v1607, %v1528
    %v1609 = vmul.f32 %v1608, %v1607
    %v1610 = vmul.f32 0.5, %v1609
    %v1611 = vsub.f32 1.5, %v1610
    %v1612 = vmul.f32 %v1607, %v1611
    %vm1613 = vweird.f32 %v1528
    %vm1614 = vweird.f32 %v1607
    %vm1615 = vmor %vm1613, %vm1614
    %v1616 = vsel %vm1615, %v1607, %v1612
    %v1617 = vrsqrt.pop %v1529
    %v1618 = vmul.f32 %v1617, %v1529
    %v1619 = vmul.f32 %v1618, %v1617
    %v1620 = vmul.f32 0.5, %v1619
    %v1621 = vsub.f32 1.5, %v1620
    %v1622 = vmul.f32 %v1617, %v1621
    %vm1623 = vweird.f32 %v1529
    %vm1624 = vweird.f32 %v1617
    %vm1625 = vmor %vm1623, %vm1624
    %v1626 = vsel %vm1625, %v1617, %v1622
    %v1627 = vrsqrt.pop %v1530
    %v1628 = vmul.f32 %v1627, %v1530
    %v1629 = vmul.f32 %v1628, %v1627
    %v1630 = vmul.f32 0.5, %v1629
    %v1631 = vsub.f32 1.5, %v1630
    %v1632 = vmul.f32 %v1627, %v1631
    %vm1633 = vweird.f32 %v1530
    %vm1634 = vweird.f32 %v1627
    %vm1635 = vmor %vm1633, %vm1634
    %v1636 = vsel %vm1635, %v1627, %v1632
    %v1637 = vrsqrt.pop %v1531
    %v1638 = vmul.f32 %v1637, %v1531
    %v1639 = vmul.f32 %v1638, %v1637
    %v1640 = vmul.f32 0.5, %v1639
    %v1641 = vsub.f32 1.5, %v1640
    %v1642 = vmul.f32 %v1637, %v1641
    %vm1643 = vweird.f32 %v1531
    %vm1644 = vweird.f32 %v1637
    %vm1645 = vmor %vm1643, %vm1644
    %v1646 = vsel %vm1645, %v1637, %v1642
    %v1647 = vrsqrt.pop %v1532
    %v1648 = vmul.f32 %v1647, %v1532
    %v1649 = vmul.f32 %v1648, %v1647
    %v1650 = vmul.f32 0.5, %v1649
    %v1651 = vsub.f32 1.5, %v1650
    %v1652 = vmul.f32 %v1647, %v1651
    %vm1653 = vweird.f32 %v1532
    %vm1654 = vweird.f32 %v1647
    %vm1655 = vmor %vm1653, %vm1654
    %v1656 = vsel %vm1655, %v1647, %v1652
    %v1657 = vrsqrt.pop %v1533
    %v1658 = vmul.f32 %v1657, %v1533
    %v1659 = vmul.f32 %v1658, %v1657
    %v1660 = vmul.f32 0.5, %v1659
    %v1661 = vsub.f32 1.5, %v1660
    %v1662 = vmul.f32 %v1657, %v1661
    %vm1663 = vweird.f32 %v1533
    %vm1664 = vweird.f32 %v1657
    %vm1665 = vmor %vm1663, %vm1664
    %v1666 = vsel %vm1665, %v1657, %v1662
    %v1667 = vrsqrt.pop %v1534
    %v1668 = vmul.f32 %v1667, %v1534
    %v1669 = vmul.f32 %v1668, %v1667
    %v1670 = vmul.f32 0.5, %v1669
    %v1671 = vsub.f32 1.5, %v1670
    %v1672 = vmul.f32 %v1667, %v1671
    %vm1673 = vweird.f32 %v1534
    %vm1674 = vweird.f32 %v1667
    %vm1675 = vmor %vm1673, %vm1674
    %v1676 = vsel %vm1675, %v1667, %v1672
    %v1677 = vrsqrt.pop %v1535
    %v1678 = vmul.f32 %v1677, %v1535
    %v1679 = vmul.f32 %v1678, %v1677
    %v1680 = vmul.f32 0.5, %v1679
    %v1681 = vsub.f32 1.5, %v1680
    %v1682 = vmul.f32 %v1677, %v1681
    %vm1683 = vweird.f32 %v1535
    %vm1684 = vweird.f32 %v1677
    %vm1685 = vmor %vm1683, %vm1684
    %v1686 = vsel %vm1685, %v1677, %v1682
    %v1687 = vrsqrt.pop %v1536
    %v1688 = vmul.f32 %v1687, %v1536
    %v1689 = vmul.f32 %v1688, %v1687
    %v1690 = vmul.f32 0.5, %v1689
    %v1691 = vsub.f32 1.5, %v1690
    %v1692 = vmul.f32 %v1687, %v1691
    %vm1693 = vweird.f32 %v1536
    %vm1694 = vweird.f32 %v1687
    %vm1695 = vmor %vm1693, %vm1694
    %v1696 = vsel %vm1695, %v1687, %v1692
    %v1697 = vmul.f32 %v1361, %v1546
    %v1698 = vmul.f32 %v1362, %v1556
    %v1699 = vmul.f32 %v1363, %v1566
    %v1700 = vmul.f32 %v1364, %v1576
    %v1701 = vmul.f32 %v1365, %v1586
    %v1702 = vmul.f32 %v1366, %v1596
    %v1703 = vmul.f32 %v1367, %v1606
    %v1704 = vmul.f32 %v1368, %v1616
    %v1705 = vmul.f32 %v1369, %v1626
    %v1706 = vmul.f32 %v1370, %v1636
    %v1707 = vmul.f32 %v1371, %v1646
    %v1708 = vmul.f32 %v1372, %v1656
    %v1709 = vmul.f32 %v1373, %v1666
    %v1710 = vmul.f32 %v1374, %v1676
    %v1711 = vmul.f32 %v1375, %v1686
    %v1712 = vmul.f32 %v1376, %v1696
    %v1713 = vld [vmem:[#allocation13] sm:$0xff]
    %v1714 = vld [vmem:[#allocation13 + $0x8] sm:$0xff]
    %v1717 = vperm.slane %v1713, 0
    %v1718 = vperm.slane %v1713, 1
    %v1719 = vperm.slane %v1713, 2
    %v1720 = vperm.slane %v1713, 3
    %v1721 = vperm.slane %v1713, 4
    %v1722 = vperm.slane %v1713, 5
    %v1723 = vperm.slane %v1713, 6
    %v1724 = vperm.slane %v1713, 7
    %v1725 = vperm.slane %v1714, 0
    %v1726 = vperm.slane %v1714, 1
    %v1727 = vperm.slane %v1714, 2
    %v1728 = vperm.slane %v1714, 3
    %v1729 = vperm.slane %v1714, 4
    %v1730 = vperm.slane %v1714, 5
    %v1731 = vperm.slane %v1714, 6
    %v1732 = vperm.slane %v1714, 7
    %v1749 = vmul.f32 %v1697, %v1717
    %v1750 = vmul.f32 %v1698, %v1718
    %v1751 = vmul.f32 %v1699, %v1719
    %v1752 = vmul.f32 %v1700, %v1720
    %v1753 = vmul.f32 %v1701, %v1721
    %v1754 = vmul.f32 %v1702, %v1722
    %v1755 = vmul.f32 %v1703, %v1723
    %v1756 = vmul.f32 %v1704, %v1724
    %v1757 = vmul.f32 %v1705, %v1725
    %v1758 = vmul.f32 %v1706, %v1726
    %v1759 = vmul.f32 %v1707, %v1727
    %v1760 = vmul.f32 %v1708, %v1728
    %v1761 = vmul.f32 %v1709, %v1729
    %v1762 = vmul.f32 %v1710, %v1730
    %v1763 = vmul.f32 %v1711, %v1731
    %v1764 = vmul.f32 %v1712, %v1732
    %v1765 = vld [vmem:[#allocation15] sm:$0xff]
    %v1766 = vld [vmem:[#allocation15 + $0x8] sm:$0xff]
    %v1769 = vperm.slane %v1765, 0
    %v1770 = vperm.slane %v1765, 1
    %v1771 = vperm.slane %v1765, 2
    %v1772 = vperm.slane %v1765, 3
    %v1773 = vperm.slane %v1765, 4
    %v1774 = vperm.slane %v1765, 5
    %v1775 = vperm.slane %v1765, 6
    %v1776 = vperm.slane %v1765, 7
    %v1777 = vperm.slane %v1766, 0
    %v1778 = vperm.slane %v1766, 1
    %v1779 = vperm.slane %v1766, 2
    %v1780 = vperm.slane %v1766, 3
    %v1781 = vperm.slane %v1766, 4
    %v1782 = vperm.slane %v1766, 5
    %v1783 = vperm.slane %v1766, 6
    %v1784 = vperm.slane %v1766, 7
    %v1801 = vadd.f32 %v1749, %v1769
    %v1802 = vadd.f32 %v1750, %v1770
    %v1803 = vadd.f32 %v1751, %v1771
    %v1804 = vadd.f32 %v1752, %v1772
    %v1805 = vadd.f32 %v1753, %v1773
    %v1806 = vadd.f32 %v1754, %v1774
    %v1807 = vadd.f32 %v1755, %v1775
    %v1808 = vadd.f32 %v1756, %v1776
    %v1809 = vadd.f32 %v1757, %v1777
    %v1810 = vadd.f32 %v1758, %v1778
    %v1811 = vadd.f32 %v1759, %v1779
    %v1812 = vadd.f32 %v1760, %v1780
    %v1813 = vadd.f32 %v1761, %v1781
    %v1814 = vadd.f32 %v1762, %v1782
    %v1815 = vadd.f32 %v1763, %v1783
    %v1816 = vadd.f32 %v1764, %v1784
    %vm1817 = vcmp.ge.f32.partialorder %v1801, 0.0
    %vm1818 = vcmp.ge.f32.partialorder %v1802, 0.0
    %vm1819 = vcmp.ge.f32.partialorder %v1803, 0.0
    %vm1820 = vcmp.ge.f32.partialorder %v1804, 0.0
    %vm1821 = vcmp.ge.f32.partialorder %v1805, 0.0
    %vm1822 = vcmp.ge.f32.partialorder %v1806, 0.0
    %vm1823 = vcmp.ge.f32.partialorder %v1807, 0.0
    %vm1824 = vcmp.ge.f32.partialorder %v1808, 0.0
    %vm1825 = vcmp.ge.f32.partialorder %v1809, 0.0
    %vm1826 = vcmp.ge.f32.partialorder %v1810, 0.0
    %vm1827 = vcmp.ge.f32.partialorder %v1811, 0.0
    %vm1828 = vcmp.ge.f32.partialorder %v1812, 0.0
    %vm1829 = vcmp.ge.f32.partialorder %v1813, 0.0
    %vm1830 = vcmp.ge.f32.partialorder %v1814, 0.0
    %vm1831 = vcmp.ge.f32.partialorder %v1815, 0.0
    %vm1832 = vcmp.ge.f32.partialorder %v1816, 0.0
    %v1833 = vmul.f32 %v1801, 0.2
    %v1834 = vmul.f32 %v1802, 0.2
    %v1835 = vmul.f32 %v1803, 0.2
    %v1836 = vmul.f32 %v1804, 0.2
    %v1837 = vmul.f32 %v1805, 0.2
    %v1838 = vmul.f32 %v1806, 0.2
    %v1839 = vmul.f32 %v1807, 0.2
    %v1840 = vmul.f32 %v1808, 0.2
    %v1841 = vmul.f32 %v1809, 0.2
    %v1842 = vmul.f32 %v1810, 0.2
    %v1843 = vmul.f32 %v1811, 0.2
    %v1844 = vmul.f32 %v1812, 0.2
    %v1845 = vmul.f32 %v1813, 0.2
    %v1846 = vmul.f32 %v1814, 0.2
    %v1847 = vmul.f32 %v1815, 0.2
    %v1848 = vmul.f32 %v1816, 0.2
    %v1849 = vsel %vm1817, %v1801, %v1833
    %v1850 = vsel %vm1818, %v1802, %v1834
    %v1851 = vsel %vm1819, %v1803, %v1835
    %v1852 = vsel %vm1820, %v1804, %v1836
    %v1853 = vsel %vm1821, %v1805, %v1837
    %v1854 = vsel %vm1822, %v1806, %v1838
    %v1855 = vsel %vm1823, %v1807, %v1839
    %v1856 = vsel %vm1824, %v1808, %v1840
    %v1857 = vsel %vm1825, %v1809, %v1841
    %v1858 = vsel %vm1826, %v1810, %v1842
    %v1859 = vsel %vm1827, %v1811, %v1843
    %v1860 = vsel %vm1828, %v1812, %v1844
    %v1861 = vsel %vm1829, %v1813, %v1845
    %v1862 = vsel %vm1830, %v1814, %v1846
    %v1863 = vsel %vm1831, %v1815, %v1847
    %v1864 = vsel %vm1832, %v1816, %v1848
    %v1865 = vadd.f32 %v1849, %v1210
    %v1866 = vadd.f32 %v1850, %v1211
    %v1867 = vadd.f32 %v1851, %v1212
    %v1868 = vadd.f32 %v1852, %v1213
    %v1869 = vadd.f32 %v1853, %v1214
    %v1870 = vadd.f32 %v1854, %v1215
    %v1871 = vadd.f32 %v1855, %v1216
    %v1872 = vadd.f32 %v1856, %v1217
    %v1873 = vadd.f32 %v1857, %v1218
    %v1874 = vadd.f32 %v1858, %v1219
    %v1875 = vadd.f32 %v1859, %v1220
    %v1876 = vadd.f32 %v1860, %v1221
    %v1877 = vadd.f32 %v1861, %v1222
    %v1878 = vadd.f32 %v1862, %v1223
    %v1879 = vadd.f32 %v1863, %v1224
    %v1880 = vadd.f32 %v1864, %v1225
    %v1885 = vrot.slane %v1869, 4
    %v1886 = vrot.slane %v1870, 4
    %v1887 = vrot.slane %v1871, 4
    %v1888 = vrot.slane %v1872, 4
    %v1897 = vrot.slane %v1877, 4
    %v1898 = vrot.slane %v1878, 4
    %v1899 = vrot.slane %v1879, 4
    %v1900 = vrot.slane %v1880, 4
    %v1905 = vsel %vm257, %v1865, %v1885
    %v1906 = vsel %vm257, %v1866, %v1886
    %v1907 = vsel %vm257, %v1867, %v1887
    %v1908 = vsel %vm257, %v1868, %v1888
    %v1909 = vsel %vm257, %v1873, %v1897
    %v1910 = vsel %vm257, %v1874, %v1898
    %v1911 = vsel %vm257, %v1875, %v1899
    %v1912 = vsel %vm257, %v1876, %v1900
    %v1921 = vrot.slane %v1905, 4
    %v1922 = vrot.slane %v1906, 4
    %v1923 = vrot.slane %v1907, 4
    %v1924 = vrot.slane %v1908, 4
    %v1925 = vrot.slane %v1909, 4
    %v1926 = vsel %vm257, %v1921, %v1925
    %v1927 = vrot.slane %v1910, 4
    %v1928 = vsel %vm257, %v1922, %v1927
    %v1929 = vrot.slane %v1911, 4
    %v1930 = vsel %vm257, %v1923, %v1929
    %v1931 = vrot.slane %v1912, 4
    %v1932 = vsel %vm257, %v1924, %v1931
    %v1941 = vsel %vm257, 0.0, %v1921
    %v1942 = vsel %vm257, 0.0, %v1922
    %v1943 = vsel %vm257, 0.0, %v1923
    %v1944 = vsel %vm257, 0.0, %v1924
    %v1949 = vsel %vm257, %v1925, 0.0
    %v1950 = vsel %vm257, %v1927, 0.0
    %v1951 = vsel %vm257, %v1929, 0.0
    %v1952 = vsel %vm257, %v1931, 0.0
    %v1953 = vpack.c.bf16 %v1926, %v1941
    %v1954 = vpack.c.bf16 %v1928, %v1942
    %v1955 = vpack.c.bf16 %v1930, %v1943
    %v1956 = vpack.c.bf16 %v1932, %v1944
    %v1957 = vpack.c.bf16 %v1909, %v1905
    %v1958 = vpack.c.bf16 %v1910, %v1906
    %v1959 = vpack.c.bf16 %v1911, %v1907
    %v1960 = vpack.c.bf16 %v1912, %v1908
    %v1961 = vpack.c.bf16 %v1949, %v1926
    %v1962 = vpack.c.bf16 %v1950, %v1928
    %v1963 = vpack.c.bf16 %v1951, %v1930
    %v1964 = vpack.c.bf16 %v1952, %v1932
    %v1965 = vld [vmem:[#allocation16] sm:$0xff]
    %v1966 = vld [vmem:[#allocation16 + $0x8] sm:$0xff]
    %v1967 = vld [vmem:[#allocation16 + $0x10] sm:$0xff]
    %v1968 = vld [vmem:[#allocation16 + $0x18] sm:$0xff]
    %v1969 = vld [vmem:[#allocation16 + $0x20] sm:$0xff]
    %v1970 = vld [vmem:[#allocation16 + $0x28] sm:$0xff]
    %v1971 = vld [vmem:[#allocation16 + $0x30] sm:$0xff]
    %v1972 = vld [vmem:[#allocation16 + $0x38] sm:$0xff]
    %v1973 = vld [vmem:[#allocation16 + $0x40] sm:$0xff]
    %v1974 = vld [vmem:[#allocation16 + $0x48] sm:$0xff]
    %v1975 = vld [vmem:[#allocation16 + $0x50] sm:$0xff]
    %v1976 = vld [vmem:[#allocation16 + $0x58] sm:$0xff]
    %v1977 = vld [vmem:[#allocation16 + $0x60] sm:$0xff]
    %v1978 = vld [vmem:[#allocation16 + $0x68] sm:$0xff]
    %v1979 = vld [vmem:[#allocation16 + $0x70] sm:$0xff]
    %v1980 = vld [vmem:[#allocation16 + $0x78] sm:$0xff]
    %v1981 = vld [vmem:[#allocation16 + $0x80] sm:$0xff]
    %v1982 = vld [vmem:[#allocation16 + $0x88] sm:$0xff]
    %v1983 = vld [vmem:[#allocation16 + $0x90] sm:$0xff]
    %v1984 = vld [vmem:[#allocation16 + $0x98] sm:$0xff]
    %v1985 = vld [vmem:[#allocation16 + $0xa0] sm:$0xff]
    %v1986 = vld [vmem:[#allocation16 + $0xa8] sm:$0xff]
    %v1987 = vld [vmem:[#allocation16 + $0xb0] sm:$0xff]
    %v1988 = vld [vmem:[#allocation16 + $0xb8] sm:$0xff]
    %v1989 = vld [vmem:[#allocation16 + $0xc0] sm:$0xff]
    %v1990 = vld [vmem:[#allocation16 + $0xc8] sm:$0xff]
    %v1991 = vld [vmem:[#allocation16 + $0xd0] sm:$0xff]
    %v1992 = vld [vmem:[#allocation16 + $0xd8] sm:$0xff]
    %v1993 = vld [vmem:[#allocation16 + $0xe0] sm:$0xff]
    %v1994 = vld [vmem:[#allocation16 + $0xe8] sm:$0xff]
    %v1995 = vld [vmem:[#allocation16 + $0xf0] sm:$0xff]
    %v1996 = vld [vmem:[#allocation16 + $0xf8] sm:$0xff]
    %v1997 = vld [vmem:[#allocation16 + $0x100] sm:$0xff]
    %v1998 = vld [vmem:[#allocation16 + $0x108] sm:$0xff]
    %v1999 = vld [vmem:[#allocation16 + $0x110] sm:$0xff]
    %v2000 = vld [vmem:[#allocation16 + $0x118] sm:$0xff]
    %v2001 = vld [vmem:[#allocation16 + $0x120] sm:$0xff]
    %v2002 = vld [vmem:[#allocation16 + $0x128] sm:$0xff]
    %v2003 = vld [vmem:[#allocation16 + $0x130] sm:$0xff]
    %v2004 = vld [vmem:[#allocation16 + $0x138] sm:$0xff]
    %v2005 = vld [vmem:[#allocation16 + $0x140] sm:$0xff]
    %v2006 = vld [vmem:[#allocation16 + $0x148] sm:$0xff]
    %v2007 = vld [vmem:[#allocation16 + $0x150] sm:$0xff]
    %v2008 = vld [vmem:[#allocation16 + $0x158] sm:$0xff]
    %v2009 = vld [vmem:[#allocation16 + $0x160] sm:$0xff]
    %v2010 = vld [vmem:[#allocation16 + $0x168] sm:$0xff]
    %v2011 = vld [vmem:[#allocation16 + $0x170] sm:$0xff]
    %v2012 = vld [vmem:[#allocation16 + $0x178] sm:$0xff]
    %v2013 = vld [vmem:[#allocation16 + $0x180] sm:$0xff]
    %v2014 = vld [vmem:[#allocation16 + $0x188] sm:$0xff]
    %v2015 = vld [vmem:[#allocation16 + $0x190] sm:$0xff]
    %v2016 = vld [vmem:[#allocation16 + $0x198] sm:$0xff]
    %v2017 = vld [vmem:[#allocation16 + $0x1a0] sm:$0xff]
    %v2018 = vld [vmem:[#allocation16 + $0x1a8] sm:$0xff]
    %v2019 = vld [vmem:[#allocation16 + $0x1b0] sm:$0xff]
    %v2020 = vld [vmem:[#allocation16 + $0x1b8] sm:$0xff]
    %v2021 = vld [vmem:[#allocation16 + $0x1c0] sm:$0xff]
    %v2022 = vld [vmem:[#allocation16 + $0x1c8] sm:$0xff]
    %v2023 = vld [vmem:[#allocation16 + $0x1d0] sm:$0xff]
    %v2024 = vld [vmem:[#allocation16 + $0x1d8] sm:$0xff]
    %v2025 = vld [vmem:[#allocation16 + $0x1e0] sm:$0xff]
    %v2026 = vld [vmem:[#allocation16 + $0x1e8] sm:$0xff]
    %v2027 = vld [vmem:[#allocation16 + $0x1f0] sm:$0xff]
    %v2028 = vld [vmem:[#allocation16 + $0x1f8] sm:$0xff]
    %v2029 = vld [vmem:[#allocation16 + $0x200] sm:$0xff]
    %v2030 = vld [vmem:[#allocation16 + $0x208] sm:$0xff]
    %v2031 = vld [vmem:[#allocation16 + $0x210] sm:$0xff]
    %v2032 = vld [vmem:[#allocation16 + $0x218] sm:$0xff]
    %v2033 = vld [vmem:[#allocation16 + $0x220] sm:$0xff]
    %v2034 = vld [vmem:[#allocation16 + $0x228] sm:$0xff]
    %v2035 = vld [vmem:[#allocation16 + $0x230] sm:$0xff]
    %v2036 = vld [vmem:[#allocation16 + $0x238] sm:$0xff]
    %v2037 = vld [vmem:[#allocation16 + $0x240] sm:$0xff]
    %v2038 = vld [vmem:[#allocation16 + $0x248] sm:$0xff]
    %v2039 = vld [vmem:[#allocation16 + $0x250] sm:$0xff]
    %v2040 = vld [vmem:[#allocation16 + $0x258] sm:$0xff]
    %v2041 = vld [vmem:[#allocation16 + $0x260] sm:$0xff]
    %v2042 = vld [vmem:[#allocation16 + $0x268] sm:$0xff]
    %v2043 = vld [vmem:[#allocation16 + $0x270] sm:$0xff]
    %v2044 = vld [vmem:[#allocation16 + $0x278] sm:$0xff]
    %v2045 = vld [vmem:[#allocation16 + $0x280] sm:$0xff]
    %v2046 = vld [vmem:[#allocation16 + $0x288] sm:$0xff]
    %v2047 = vld [vmem:[#allocation16 + $0x290] sm:$0xff]
    %v2048 = vld [vmem:[#allocation16 + $0x298] sm:$0xff]
    %v2049 = vld [vmem:[#allocation16 + $0x2a0] sm:$0xff]
    %v2050 = vld [vmem:[#allocation16 + $0x2a8] sm:$0xff]
    %v2051 = vld [vmem:[#allocation16 + $0x2b0] sm:$0xff]
    %v2052 = vld [vmem:[#allocation16 + $0x2b8] sm:$0xff]
    %v2053 = vld [vmem:[#allocation16 + $0x2c0] sm:$0xff]
    %v2054 = vld [vmem:[#allocation16 + $0x2c8] sm:$0xff]
    %v2055 = vld [vmem:[#allocation16 + $0x2d0] sm:$0xff]
    %v2056 = vld [vmem:[#allocation16 + $0x2d8] sm:$0xff]
    %v2057 = vld [vmem:[#allocation16 + $0x2e0] sm:$0xff]
    %v2058 = vld [vmem:[#allocation16 + $0x2e8] sm:$0xff]
    %v2059 = vld [vmem:[#allocation16 + $0x2f0] sm:$0xff]
    %v2060 = vld [vmem:[#allocation16 + $0x2f8] sm:$0xff]
    %v2061 = vld [vmem:[#allocation16 + $0x300] sm:$0xff]
    %v2062 = vld [vmem:[#allocation16 + $0x308] sm:$0xff]
    %v2063 = vld [vmem:[#allocation16 + $0x310] sm:$0xff]
    %v2064 = vld [vmem:[#allocation16 + $0x318] sm:$0xff]
    %v2065 = vld [vmem:[#allocation16 + $0x320] sm:$0xff]
    %v2066 = vld [vmem:[#allocation16 + $0x328] sm:$0xff]
    %v2067 = vld [vmem:[#allocation16 + $0x330] sm:$0xff]
    %v2068 = vld [vmem:[#allocation16 + $0x338] sm:$0xff]
    %v2069 = vld [vmem:[#allocation16 + $0x340] sm:$0xff]
    %v2070 = vld [vmem:[#allocation16 + $0x348] sm:$0xff]
    %v2071 = vld [vmem:[#allocation16 + $0x350] sm:$0xff]
    %v2072 = vld [vmem:[#allocation16 + $0x358] sm:$0xff]
    %v2073 = vld [vmem:[#allocation16 + $0x360] sm:$0xff]
    %v2074 = vld [vmem:[#allocation16 + $0x368] sm:$0xff]
    %v2075 = vld [vmem:[#allocation16 + $0x370] sm:$0xff]
    %v2076 = vld [vmem:[#allocation16 + $0x378] sm:$0xff]
    %v2077 = vld [vmem:[#allocation16 + $0x380] sm:$0xff]
    %v2078 = vld [vmem:[#allocation16 + $0x388] sm:$0xff]
    %v2079 = vld [vmem:[#allocation16 + $0x390] sm:$0xff]
    %v2080 = vld [vmem:[#allocation16 + $0x398] sm:$0xff]
    %v2081 = vld [vmem:[#allocation16 + $0x3a0] sm:$0xff]
    %v2082 = vld [vmem:[#allocation16 + $0x3a8] sm:$0xff]
    %v2083 = vld [vmem:[#allocation16 + $0x3b0] sm:$0xff]
    %v2084 = vld [vmem:[#allocation16 + $0x3b8] sm:$0xff]
    %v2085 = vld [vmem:[#allocation16 + $0x3c0] sm:$0xff]
    %v2086 = vld [vmem:[#allocation16 + $0x3c8] sm:$0xff]
    %v2087 = vld [vmem:[#allocation16 + $0x3d0] sm:$0xff]
    %v2088 = vld [vmem:[#allocation16 + $0x3d8] sm:$0xff]
    %v2089 = vld [vmem:[#allocation16 + $0x3e0] sm:$0xff]
    %v2090 = vld [vmem:[#allocation16 + $0x3e8] sm:$0xff]
    %v2091 = vld [vmem:[#allocation16 + $0x3f0] sm:$0xff]
    %v2092 = vld [vmem:[#allocation16 + $0x3f8] sm:$0xff]
    %v2093 = vld [vmem:[#allocation16 + $0x400] sm:$0xff]
    %v2094 = vld [vmem:[#allocation16 + $0x408] sm:$0xff]
    %v2095 = vld [vmem:[#allocation16 + $0x410] sm:$0xff]
    %v2096 = vld [vmem:[#allocation16 + $0x418] sm:$0xff]
    %v2097 = vld [vmem:[#allocation16 + $0x420] sm:$0xff]
    %v2098 = vld [vmem:[#allocation16 + $0x428] sm:$0xff]
    %v2099 = vld [vmem:[#allocation16 + $0x430] sm:$0xff]
    %v2100 = vld [vmem:[#allocation16 + $0x438] sm:$0xff]
    %v2101 = vld [vmem:[#allocation16 + $0x440] sm:$0xff]
    %v2102 = vld [vmem:[#allocation16 + $0x448] sm:$0xff]
    %v2103 = vld [vmem:[#allocation16 + $0x450] sm:$0xff]
    %v2104 = vld [vmem:[#allocation16 + $0x458] sm:$0xff]
    %v2105 = vld [vmem:[#allocation16 + $0x460] sm:$0xff]
    %v2106 = vld [vmem:[#allocation16 + $0x468] sm:$0xff]
    %v2107 = vld [vmem:[#allocation16 + $0x470] sm:$0xff]
    %v2108 = vld [vmem:[#allocation16 + $0x478] sm:$0xff]
    %v2109 = vld [vmem:[#allocation16 + $0x480] sm:$0xff]
    %v2110 = vld [vmem:[#allocation16 + $0x488] sm:$0xff]
    %v2111 = vld [vmem:[#allocation16 + $0x490] sm:$0xff]
    %v2112 = vld [vmem:[#allocation16 + $0x498] sm:$0xff]
    %v2113 = vld [vmem:[#allocation16 + $0x4a0] sm:$0xff]
    %v2114 = vld [vmem:[#allocation16 + $0x4a8] sm:$0xff]
    %v2115 = vld [vmem:[#allocation16 + $0x4b0] sm:$0xff]
    %v2116 = vld [vmem:[#allocation16 + $0x4b8] sm:$0xff]
    %v2117 = vld [vmem:[#allocation16 + $0x4c0] sm:$0xff]
    %v2118 = vld [vmem:[#allocation16 + $0x4c8] sm:$0xff]
    %v2119 = vld [vmem:[#allocation16 + $0x4d0] sm:$0xff]
    %v2120 = vld [vmem:[#allocation16 + $0x4d8] sm:$0xff]
    %v2121 = vld [vmem:[#allocation16 + $0x4e0] sm:$0xff]
    %v2122 = vld [vmem:[#allocation16 + $0x4e8] sm:$0xff]
    %v2123 = vld [vmem:[#allocation16 + $0x4f0] sm:$0xff]
    %v2124 = vld [vmem:[#allocation16 + $0x4f8] sm:$0xff]
    %v2125 = vld [vmem:[#allocation16 + $0x500] sm:$0xff]
    %v2126 = vld [vmem:[#allocation16 + $0x508] sm:$0xff]
    %v2127 = vld [vmem:[#allocation16 + $0x510] sm:$0xff]
    %v2128 = vld [vmem:[#allocation16 + $0x518] sm:$0xff]
    %v2129 = vld [vmem:[#allocation16 + $0x520] sm:$0xff]
    %v2130 = vld [vmem:[#allocation16 + $0x528] sm:$0xff]
    %v2131 = vld [vmem:[#allocation16 + $0x530] sm:$0xff]
    %v2132 = vld [vmem:[#allocation16 + $0x538] sm:$0xff]
    %v2133 = vld [vmem:[#allocation16 + $0x540] sm:$0xff]
    %v2134 = vld [vmem:[#allocation16 + $0x548] sm:$0xff]
    %v2135 = vld [vmem:[#allocation16 + $0x550] sm:$0xff]
    %v2136 = vld [vmem:[#allocation16 + $0x558] sm:$0xff]
    %v2137 = vld [vmem:[#allocation16 + $0x560] sm:$0xff]
    %v2138 = vld [vmem:[#allocation16 + $0x568] sm:$0xff]
    %v2139 = vld [vmem:[#allocation16 + $0x570] sm:$0xff]
    %v2140 = vld [vmem:[#allocation16 + $0x578] sm:$0xff]
    %v2141 = vld [vmem:[#allocation16 + $0x580] sm:$0xff]
    %v2142 = vld [vmem:[#allocation16 + $0x588] sm:$0xff]
    %v2143 = vld [vmem:[#allocation16 + $0x590] sm:$0xff]
    %v2144 = vld [vmem:[#allocation16 + $0x598] sm:$0xff]
    %v2145 = vld [vmem:[#allocation16 + $0x5a0] sm:$0xff]
    %v2146 = vld [vmem:[#allocation16 + $0x5a8] sm:$0xff]
    %v2147 = vld [vmem:[#allocation16 + $0x5b0] sm:$0xff]
    %v2148 = vld [vmem:[#allocation16 + $0x5b8] sm:$0xff]
    %v2149 = vld [vmem:[#allocation16 + $0x5c0] sm:$0xff]
    %v2150 = vld [vmem:[#allocation16 + $0x5c8] sm:$0xff]
    %v2151 = vld [vmem:[#allocation16 + $0x5d0] sm:$0xff]
    %v2152 = vld [vmem:[#allocation16 + $0x5d8] sm:$0xff]
    %v2153 = vld [vmem:[#allocation16 + $0x5e0] sm:$0xff]
    %v2154 = vld [vmem:[#allocation16 + $0x5e8] sm:$0xff]
    %v2155 = vld [vmem:[#allocation16 + $0x5f0] sm:$0xff]
    %v2156 = vld [vmem:[#allocation16 + $0x5f8] sm:$0xff]
    %v2157 = vld [vmem:[#allocation16 + $0x600] sm:$0xff]
    %v2158 = vld [vmem:[#allocation16 + $0x608] sm:$0xff]
    %v2159 = vld [vmem:[#allocation16 + $0x610] sm:$0xff]
    %v2160 = vld [vmem:[#allocation16 + $0x618] sm:$0xff]
    %v2161 = vld [vmem:[#allocation16 + $0x620] sm:$0xff]
    %v2162 = vld [vmem:[#allocation16 + $0x628] sm:$0xff]
    %v2163 = vld [vmem:[#allocation16 + $0x630] sm:$0xff]
    %v2164 = vld [vmem:[#allocation16 + $0x638] sm:$0xff]
    %v2165 = vld [vmem:[#allocation16 + $0x640] sm:$0xff]
    %v2166 = vld [vmem:[#allocation16 + $0x648] sm:$0xff]
    %v2167 = vld [vmem:[#allocation16 + $0x650] sm:$0xff]
    %v2168 = vld [vmem:[#allocation16 + $0x658] sm:$0xff]
    %v2169 = vld [vmem:[#allocation16 + $0x660] sm:$0xff]
    %v2170 = vld [vmem:[#allocation16 + $0x668] sm:$0xff]
    %v2171 = vld [vmem:[#allocation16 + $0x670] sm:$0xff]
    %v2172 = vld [vmem:[#allocation16 + $0x678] sm:$0xff]
    %v2173 = vld [vmem:[#allocation16 + $0x680] sm:$0xff]
    %v2174 = vld [vmem:[#allocation16 + $0x688] sm:$0xff]
    %v2175 = vld [vmem:[#allocation16 + $0x690] sm:$0xff]
    %v2176 = vld [vmem:[#allocation16 + $0x698] sm:$0xff]
    %v2177 = vld [vmem:[#allocation16 + $0x6a0] sm:$0xff]
    %v2178 = vld [vmem:[#allocation16 + $0x6a8] sm:$0xff]
    %v2179 = vld [vmem:[#allocation16 + $0x6b0] sm:$0xff]
    %v2180 = vld [vmem:[#allocation16 + $0x6b8] sm:$0xff]
    %v2181 = vld [vmem:[#allocation16 + $0x6c0] sm:$0xff]
    %v2182 = vld [vmem:[#allocation16 + $0x6c8] sm:$0xff]
    %v2183 = vld [vmem:[#allocation16 + $0x6d0] sm:$0xff]
    %v2184 = vld [vmem:[#allocation16 + $0x6d8] sm:$0xff]
    %v2185 = vld [vmem:[#allocation16 + $0x6e0] sm:$0xff]
    %v2186 = vld [vmem:[#allocation16 + $0x6e8] sm:$0xff]
    %v2187 = vld [vmem:[#allocation16 + $0x6f0] sm:$0xff]
    %v2188 = vld [vmem:[#allocation16 + $0x6f8] sm:$0xff]
    %v2189 = vld [vmem:[#allocation16 + $0x700] sm:$0xff]
    %v2190 = vld [vmem:[#allocation16 + $0x708] sm:$0xff]
    %v2191 = vld [vmem:[#allocation16 + $0x710] sm:$0xff]
    %v2192 = vld [vmem:[#allocation16 + $0x718] sm:$0xff]
    %v2193 = vld [vmem:[#allocation16 + $0x720] sm:$0xff]
    %v2194 = vld [vmem:[#allocation16 + $0x728] sm:$0xff]
    %v2195 = vld [vmem:[#allocation16 + $0x730] sm:$0xff]
    %v2196 = vld [vmem:[#allocation16 + $0x738] sm:$0xff]
    %v2197 = vld [vmem:[#allocation16 + $0x740] sm:$0xff]
    %v2198 = vld [vmem:[#allocation16 + $0x748] sm:$0xff]
    %v2199 = vld [vmem:[#allocation16 + $0x750] sm:$0xff]
    %v2200 = vld [vmem:[#allocation16 + $0x758] sm:$0xff]
    %v2201 = vld [vmem:[#allocation16 + $0x760] sm:$0xff]
    %v2202 = vld [vmem:[#allocation16 + $0x768] sm:$0xff]
    %v2203 = vld [vmem:[#allocation16 + $0x770] sm:$0xff]
    %v2204 = vld [vmem:[#allocation16 + $0x778] sm:$0xff]
    %v2205 = vld [vmem:[#allocation16 + $0x780] sm:$0xff]
    %v2206 = vld [vmem:[#allocation16 + $0x788] sm:$0xff]
    %v2207 = vld [vmem:[#allocation16 + $0x790] sm:$0xff]
    %v2208 = vld [vmem:[#allocation16 + $0x798] sm:$0xff]
    %v2209 = vld [vmem:[#allocation16 + $0x7a0] sm:$0xff]
    %v2210 = vld [vmem:[#allocation16 + $0x7a8] sm:$0xff]
    %v2211 = vld [vmem:[#allocation16 + $0x7b0] sm:$0xff]
    %v2212 = vld [vmem:[#allocation16 + $0x7b8] sm:$0xff]
    %v2213 = vld [vmem:[#allocation16 + $0x7c0] sm:$0xff]
    %v2214 = vld [vmem:[#allocation16 + $0x7c8] sm:$0xff]
    %v2215 = vld [vmem:[#allocation16 + $0x7d0] sm:$0xff]
    %v2216 = vld [vmem:[#allocation16 + $0x7d8] sm:$0xff]
    %v2217 = vld [vmem:[#allocation16 + $0x7e0] sm:$0xff]
    %v2218 = vld [vmem:[#allocation16 + $0x7e8] sm:$0xff]
    %v2219 = vld [vmem:[#allocation16 + $0x7f0] sm:$0xff]
    %v2220 = vld [vmem:[#allocation16 + $0x7f8] sm:$0xff]
    %v2221 = vld [vmem:[#allocation16 + $0x800] sm:$0xff]
    %v2222 = vld [vmem:[#allocation16 + $0x808] sm:$0xff]
    %v2223 = vld [vmem:[#allocation16 + $0x810] sm:$0xff]
    %v2224 = vld [vmem:[#allocation16 + $0x818] sm:$0xff]
    %v2225 = vld [vmem:[#allocation16 + $0x820] sm:$0xff]
    %v2226 = vld [vmem:[#allocation16 + $0x828] sm:$0xff]
    %v2227 = vld [vmem:[#allocation16 + $0x830] sm:$0xff]
    %v2228 = vld [vmem:[#allocation16 + $0x838] sm:$0xff]
    %v2229 = vld [vmem:[#allocation16 + $0x840] sm:$0xff]
    %v2230 = vld [vmem:[#allocation16 + $0x848] sm:$0xff]
    %v2231 = vld [vmem:[#allocation16 + $0x850] sm:$0xff]
    %v2232 = vld [vmem:[#allocation16 + $0x858] sm:$0xff]
    %v2233 = vld [vmem:[#allocation16 + $0x860] sm:$0xff]
    %v2234 = vld [vmem:[#allocation16 + $0x868] sm:$0xff]
    %v2235 = vld [vmem:[#allocation16 + $0x870] sm:$0xff]
    %v2236 = vld [vmem:[#allocation16 + $0x878] sm:$0xff]
    %v2237 = vld [vmem:[#allocation16 + $0x880] sm:$0xff]
    %v2238 = vld [vmem:[#allocation16 + $0x888] sm:$0xff]
    %v2239 = vld [vmem:[#allocation16 + $0x890] sm:$0xff]
    %v2240 = vld [vmem:[#allocation16 + $0x898] sm:$0xff]
    %v2241 = vld [vmem:[#allocation16 + $0x8a0] sm:$0xff]
    %v2242 = vld [vmem:[#allocation16 + $0x8a8] sm:$0xff]
    %v2243 = vld [vmem:[#allocation16 + $0x8b0] sm:$0xff]
    %v2244 = vld [vmem:[#allocation16 + $0x8b8] sm:$0xff]
    %v2245 = vld [vmem:[#allocation16 + $0x8c0] sm:$0xff]
    %v2246 = vld [vmem:[#allocation16 + $0x8c8] sm:$0xff]
    %v2247 = vld [vmem:[#allocation16 + $0x8d0] sm:$0xff]
    %v2248 = vld [vmem:[#allocation16 + $0x8d8] sm:$0xff]
    %v2249 = vld [vmem:[#allocation16 + $0x8e0] sm:$0xff]
    %v2250 = vld [vmem:[#allocation16 + $0x8e8] sm:$0xff]
    %v2251 = vld [vmem:[#allocation16 + $0x8f0] sm:$0xff]
    %v2252 = vld [vmem:[#allocation16 + $0x8f8] sm:$0xff]
    %v2253 = vld [vmem:[#allocation16 + $0x900] sm:$0xff]
    %v2254 = vld [vmem:[#allocation16 + $0x908] sm:$0xff]
    %v2255 = vld [vmem:[#allocation16 + $0x910] sm:$0xff]
    %v2256 = vld [vmem:[#allocation16 + $0x918] sm:$0xff]
    %v2257 = vld [vmem:[#allocation16 + $0x920] sm:$0xff]
    %v2258 = vld [vmem:[#allocation16 + $0x928] sm:$0xff]
    %v2259 = vld [vmem:[#allocation16 + $0x930] sm:$0xff]
    %v2260 = vld [vmem:[#allocation16 + $0x938] sm:$0xff]
    %v2261 = vld [vmem:[#allocation16 + $0x940] sm:$0xff]
    %v2262 = vld [vmem:[#allocation16 + $0x948] sm:$0xff]
    %v2263 = vld [vmem:[#allocation16 + $0x950] sm:$0xff]
    %v2264 = vld [vmem:[#allocation16 + $0x958] sm:$0xff]
    %v2265 = vld [vmem:[#allocation16 + $0x960] sm:$0xff]
    %v2266 = vld [vmem:[#allocation16 + $0x968] sm:$0xff]
    %v2267 = vld [vmem:[#allocation16 + $0x970] sm:$0xff]
    %v2268 = vld [vmem:[#allocation16 + $0x978] sm:$0xff]
    %v2269 = vld [vmem:[#allocation16 + $0x980] sm:$0xff]
    %v2270 = vld [vmem:[#allocation16 + $0x988] sm:$0xff]
    %v2271 = vld [vmem:[#allocation16 + $0x990] sm:$0xff]
    %v2272 = vld [vmem:[#allocation16 + $0x998] sm:$0xff]
    %v2273 = vld [vmem:[#allocation16 + $0x9a0] sm:$0xff]
    %v2274 = vld [vmem:[#allocation16 + $0x9a8] sm:$0xff]
    %v2275 = vld [vmem:[#allocation16 + $0x9b0] sm:$0xff]
    %v2276 = vld [vmem:[#allocation16 + $0x9b8] sm:$0xff]
    %v2277 = vld [vmem:[#allocation16 + $0x9c0] sm:$0xff]
    %v2278 = vld [vmem:[#allocation16 + $0x9c8] sm:$0xff]
    %v2279 = vld [vmem:[#allocation16 + $0x9d0] sm:$0xff]
    %v2280 = vld [vmem:[#allocation16 + $0x9d8] sm:$0xff]
    %v2281 = vld [vmem:[#allocation16 + $0x9e0] sm:$0xff]
    %v2282 = vld [vmem:[#allocation16 + $0x9e8] sm:$0xff]
    %v2283 = vld [vmem:[#allocation16 + $0x9f0] sm:$0xff]
    %v2284 = vld [vmem:[#allocation16 + $0x9f8] sm:$0xff]
    %v2285 = vld [vmem:[#allocation16 + $0xa00] sm:$0xff]
    %v2286 = vld [vmem:[#allocation16 + $0xa08] sm:$0xff]
    %v2287 = vld [vmem:[#allocation16 + $0xa10] sm:$0xff]
    %v2288 = vld [vmem:[#allocation16 + $0xa18] sm:$0xff]
    %v2289 = vld [vmem:[#allocation16 + $0xa20] sm:$0xff]
    %v2290 = vld [vmem:[#allocation16 + $0xa28] sm:$0xff]
    %v2291 = vld [vmem:[#allocation16 + $0xa30] sm:$0xff]
    %v2292 = vld [vmem:[#allocation16 + $0xa38] sm:$0xff]
    %v2293 = vld [vmem:[#allocation16 + $0xa40] sm:$0xff]
    %v2294 = vld [vmem:[#allocation16 + $0xa48] sm:$0xff]
    %v2295 = vld [vmem:[#allocation16 + $0xa50] sm:$0xff]
    %v2296 = vld [vmem:[#allocation16 + $0xa58] sm:$0xff]
    %v2297 = vld [vmem:[#allocation16 + $0xa60] sm:$0xff]
    %v2298 = vld [vmem:[#allocation16 + $0xa68] sm:$0xff]
    %v2299 = vld [vmem:[#allocation16 + $0xa70] sm:$0xff]
    %v2300 = vld [vmem:[#allocation16 + $0xa78] sm:$0xff]
    %v2301 = vld [vmem:[#allocation16 + $0xa80] sm:$0xff]
    %v2302 = vld [vmem:[#allocation16 + $0xa88] sm:$0xff]
    %v2303 = vld [vmem:[#allocation16 + $0xa90] sm:$0xff]
    %v2304 = vld [vmem:[#allocation16 + $0xa98] sm:$0xff]
    %v2305 = vld [vmem:[#allocation16 + $0xaa0] sm:$0xff]
    %v2306 = vld [vmem:[#allocation16 + $0xaa8] sm:$0xff]
    %v2307 = vld [vmem:[#allocation16 + $0xab0] sm:$0xff]
    %v2308 = vld [vmem:[#allocation16 + $0xab8] sm:$0xff]
    %v2309 = vld [vmem:[#allocation16 + $0xac0] sm:$0xff]
    %v2310 = vld [vmem:[#allocation16 + $0xac8] sm:$0xff]
    %v2311 = vld [vmem:[#allocation16 + $0xad0] sm:$0xff]
    %v2312 = vld [vmem:[#allocation16 + $0xad8] sm:$0xff]
    %v2313 = vld [vmem:[#allocation16 + $0xae0] sm:$0xff]
    %v2314 = vld [vmem:[#allocation16 + $0xae8] sm:$0xff]
    %v2315 = vld [vmem:[#allocation16 + $0xaf0] sm:$0xff]
    %v2316 = vld [vmem:[#allocation16 + $0xaf8] sm:$0xff]
    %v2317 = vld [vmem:[#allocation16 + $0xb00] sm:$0xff]
    %v2318 = vld [vmem:[#allocation16 + $0xb08] sm:$0xff]
    %v2319 = vld [vmem:[#allocation16 + $0xb10] sm:$0xff]
    %v2320 = vld [vmem:[#allocation16 + $0xb18] sm:$0xff]
    %v2321 = vld [vmem:[#allocation16 + $0xb20] sm:$0xff]
    %v2322 = vld [vmem:[#allocation16 + $0xb28] sm:$0xff]
    %v2323 = vld [vmem:[#allocation16 + $0xb30] sm:$0xff]
    %v2324 = vld [vmem:[#allocation16 + $0xb38] sm:$0xff]
    %v2325 = vld [vmem:[#allocation16 + $0xb40] sm:$0xff]
    %v2326 = vld [vmem:[#allocation16 + $0xb48] sm:$0xff]
    %v2327 = vld [vmem:[#allocation16 + $0xb50] sm:$0xff]
    %v2328 = vld [vmem:[#allocation16 + $0xb58] sm:$0xff]
    %v2329 = vld [vmem:[#allocation16 + $0xb60] sm:$0xff]
    %v2330 = vld [vmem:[#allocation16 + $0xb68] sm:$0xff]
    %v2331 = vld [vmem:[#allocation16 + $0xb70] sm:$0xff]
    %v2332 = vld [vmem:[#allocation16 + $0xb78] sm:$0xff]
    %v2333 = vld [vmem:[#allocation16 + $0xb80] sm:$0xff]
    %v2334 = vld [vmem:[#allocation16 + $0xb88] sm:$0xff]
    %v2335 = vld [vmem:[#allocation16 + $0xb90] sm:$0xff]
    %v2336 = vld [vmem:[#allocation16 + $0xb98] sm:$0xff]
    %v2337 = vld [vmem:[#allocation16 + $0xba0] sm:$0xff]
    %v2338 = vld [vmem:[#allocation16 + $0xba8] sm:$0xff]
    %v2339 = vld [vmem:[#allocation16 + $0xbb0] sm:$0xff]
    %v2340 = vld [vmem:[#allocation16 + $0xbb8] sm:$0xff]
    %v2341 = vld [vmem:[#allocation16 + $0xbc0] sm:$0xff]
    %v2342 = vld [vmem:[#allocation16 + $0xbc8] sm:$0xff]
    %v2343 = vld [vmem:[#allocation16 + $0xbd0] sm:$0xff]
    %v2344 = vld [vmem:[#allocation16 + $0xbd8] sm:$0xff]
    %v2345 = vld [vmem:[#allocation16 + $0xbe0] sm:$0xff]
    %v2346 = vld [vmem:[#allocation16 + $0xbe8] sm:$0xff]
    %v2347 = vld [vmem:[#allocation16 + $0xbf0] sm:$0xff]
    %v2348 = vld [vmem:[#allocation16 + $0xbf8] sm:$0xff]
    %v2349 = vld [vmem:[#allocation16 + $0xc00] sm:$0xff]
    %v2350 = vld [vmem:[#allocation16 + $0xc08] sm:$0xff]
    %v2351 = vld [vmem:[#allocation16 + $0xc10] sm:$0xff]
    %v2352 = vld [vmem:[#allocation16 + $0xc18] sm:$0xff]
    %v2353 = vld [vmem:[#allocation16 + $0xc20] sm:$0xff]
    %v2354 = vld [vmem:[#allocation16 + $0xc28] sm:$0xff]
    %v2355 = vld [vmem:[#allocation16 + $0xc30] sm:$0xff]
    %v2356 = vld [vmem:[#allocation16 + $0xc38] sm:$0xff]
    %v2357 = vld [vmem:[#allocation16 + $0xc40] sm:$0xff]
    %v2358 = vld [vmem:[#allocation16 + $0xc48] sm:$0xff]
    %v2359 = vld [vmem:[#allocation16 + $0xc50] sm:$0xff]
    %v2360 = vld [vmem:[#allocation16 + $0xc58] sm:$0xff]
    %v2361 = vld [vmem:[#allocation16 + $0xc60] sm:$0xff]
    %v2362 = vld [vmem:[#allocation16 + $0xc68] sm:$0xff]
    %v2363 = vld [vmem:[#allocation16 + $0xc70] sm:$0xff]
    %v2364 = vld [vmem:[#allocation16 + $0xc78] sm:$0xff]
    %v2365 = vld [vmem:[#allocation16 + $0xc80] sm:$0xff]
    %v2366 = vld [vmem:[#allocation16 + $0xc88] sm:$0xff]
    %v2367 = vld [vmem:[#allocation16 + $0xc90] sm:$0xff]
    %v2368 = vld [vmem:[#allocation16 + $0xc98] sm:$0xff]
    %v2369 = vld [vmem:[#allocation16 + $0xca0] sm:$0xff]
    %v2370 = vld [vmem:[#allocation16 + $0xca8] sm:$0xff]
    %v2371 = vld [vmem:[#allocation16 + $0xcb0] sm:$0xff]
    %v2372 = vld [vmem:[#allocation16 + $0xcb8] sm:$0xff]
    %v2373 = vld [vmem:[#allocation16 + $0xcc0] sm:$0xff]
    %v2374 = vld [vmem:[#allocation16 + $0xcc8] sm:$0xff]
    %v2375 = vld [vmem:[#allocation16 + $0xcd0] sm:$0xff]
    %v2376 = vld [vmem:[#allocation16 + $0xcd8] sm:$0xff]
    %v2377 = vld [vmem:[#allocation16 + $0xce0] sm:$0xff]
    %v2378 = vld [vmem:[#allocation16 + $0xce8] sm:$0xff]
    %v2379 = vld [vmem:[#allocation16 + $0xcf0] sm:$0xff]
    %v2380 = vld [vmem:[#allocation16 + $0xcf8] sm:$0xff]
    %v2381 = vld [vmem:[#allocation16 + $0xd00] sm:$0xff]
    %v2382 = vld [vmem:[#allocation16 + $0xd08] sm:$0xff]
    %v2383 = vld [vmem:[#allocation16 + $0xd10] sm:$0xff]
    %v2384 = vld [vmem:[#allocation16 + $0xd18] sm:$0xff]
    %v2385 = vld [vmem:[#allocation16 + $0xd20] sm:$0xff]
    %v2386 = vld [vmem:[#allocation16 + $0xd28] sm:$0xff]
    %v2387 = vld [vmem:[#allocation16 + $0xd30] sm:$0xff]
    %v2388 = vld [vmem:[#allocation16 + $0xd38] sm:$0xff]
    %v2389 = vld [vmem:[#allocation16 + $0xd40] sm:$0xff]
    %v2390 = vld [vmem:[#allocation16 + $0xd48] sm:$0xff]
    %v2391 = vld [vmem:[#allocation16 + $0xd50] sm:$0xff]
    %v2392 = vld [vmem:[#allocation16 + $0xd58] sm:$0xff]
    %v2393 = vld [vmem:[#allocation16 + $0xd60] sm:$0xff]
    %v2394 = vld [vmem:[#allocation16 + $0xd68] sm:$0xff]
    %v2395 = vld [vmem:[#allocation16 + $0xd70] sm:$0xff]
    %v2396 = vld [vmem:[#allocation16 + $0xd78] sm:$0xff]
    %v2397 = vld [vmem:[#allocation16 + $0xd80] sm:$0xff]
    %v2398 = vld [vmem:[#allocation16 + $0xd88] sm:$0xff]
    %v2399 = vld [vmem:[#allocation16 + $0xd90] sm:$0xff]
    %v2400 = vld [vmem:[#allocation16 + $0xd98] sm:$0xff]
    %v2401 = vld [vmem:[#allocation16 + $0xda0] sm:$0xff]
    %v2402 = vld [vmem:[#allocation16 + $0xda8] sm:$0xff]
    %v2403 = vld [vmem:[#allocation16 + $0xdb0] sm:$0xff]
    %v2404 = vld [vmem:[#allocation16 + $0xdb8] sm:$0xff]
    %v2405 = vld [vmem:[#allocation16 + $0xdc0] sm:$0xff]
    %v2406 = vld [vmem:[#allocation16 + $0xdc8] sm:$0xff]
    %v2407 = vld [vmem:[#allocation16 + $0xdd0] sm:$0xff]
    %v2408 = vld [vmem:[#allocation16 + $0xdd8] sm:$0xff]
    %v2409 = vld [vmem:[#allocation16 + $0xde0] sm:$0xff]
    %v2410 = vld [vmem:[#allocation16 + $0xde8] sm:$0xff]
    %v2411 = vld [vmem:[#allocation16 + $0xdf0] sm:$0xff]
    %v2412 = vld [vmem:[#allocation16 + $0xdf8] sm:$0xff]
    %v2413 = vld [vmem:[#allocation16 + $0xe00] sm:$0xff]
    %v2414 = vld [vmem:[#allocation16 + $0xe08] sm:$0xff]
    %v2415 = vld [vmem:[#allocation16 + $0xe10] sm:$0xff]
    %v2416 = vld [vmem:[#allocation16 + $0xe18] sm:$0xff]
    %v2417 = vld [vmem:[#allocation16 + $0xe20] sm:$0xff]
    %v2418 = vld [vmem:[#allocation16 + $0xe28] sm:$0xff]
    %v2419 = vld [vmem:[#allocation16 + $0xe30] sm:$0xff]
    %v2420 = vld [vmem:[#allocation16 + $0xe38] sm:$0xff]
    %v2421 = vld [vmem:[#allocation16 + $0xe40] sm:$0xff]
    %v2422 = vld [vmem:[#allocation16 + $0xe48] sm:$0xff]
    %v2423 = vld [vmem:[#allocation16 + $0xe50] sm:$0xff]
    %v2424 = vld [vmem:[#allocation16 + $0xe58] sm:$0xff]
    %v2425 = vld [vmem:[#allocation16 + $0xe60] sm:$0xff]
    %v2426 = vld [vmem:[#allocation16 + $0xe68] sm:$0xff]
    %v2427 = vld [vmem:[#allocation16 + $0xe70] sm:$0xff]
    %v2428 = vld [vmem:[#allocation16 + $0xe78] sm:$0xff]
    %v2429 = vld [vmem:[#allocation16 + $0xe80] sm:$0xff]
    %v2430 = vld [vmem:[#allocation16 + $0xe88] sm:$0xff]
    %v2431 = vld [vmem:[#allocation16 + $0xe90] sm:$0xff]
    %v2432 = vld [vmem:[#allocation16 + $0xe98] sm:$0xff]
    %v2433 = vld [vmem:[#allocation16 + $0xea0] sm:$0xff]
    %v2434 = vld [vmem:[#allocation16 + $0xea8] sm:$0xff]
    %v2435 = vld [vmem:[#allocation16 + $0xeb0] sm:$0xff]
    %v2436 = vld [vmem:[#allocation16 + $0xeb8] sm:$0xff]
    %v2437 = vld [vmem:[#allocation16 + $0xec0] sm:$0xff]
    %v2438 = vld [vmem:[#allocation16 + $0xec8] sm:$0xff]
    %v2439 = vld [vmem:[#allocation16 + $0xed0] sm:$0xff]
    %v2440 = vld [vmem:[#allocation16 + $0xed8] sm:$0xff]
    %v2441 = vld [vmem:[#allocation16 + $0xee0] sm:$0xff]
    %v2442 = vld [vmem:[#allocation16 + $0xee8] sm:$0xff]
    %v2443 = vld [vmem:[#allocation16 + $0xef0] sm:$0xff]
    %v2444 = vld [vmem:[#allocation16 + $0xef8] sm:$0xff]
    %v2445 = vld [vmem:[#allocation16 + $0xf00] sm:$0xff]
    %v2446 = vld [vmem:[#allocation16 + $0xf08] sm:$0xff]
    %v2447 = vld [vmem:[#allocation16 + $0xf10] sm:$0xff]
    %v2448 = vld [vmem:[#allocation16 + $0xf18] sm:$0xff]
    %v2449 = vld [vmem:[#allocation16 + $0xf20] sm:$0xff]
    %v2450 = vld [vmem:[#allocation16 + $0xf28] sm:$0xff]
    %v2451 = vld [vmem:[#allocation16 + $0xf30] sm:$0xff]
    %v2452 = vld [vmem:[#allocation16 + $0xf38] sm:$0xff]
    %v2453 = vld [vmem:[#allocation16 + $0xf40] sm:$0xff]
    %v2454 = vld [vmem:[#allocation16 + $0xf48] sm:$0xff]
    %v2455 = vld [vmem:[#allocation16 + $0xf50] sm:$0xff]
    %v2456 = vld [vmem:[#allocation16 + $0xf58] sm:$0xff]
    %v2457 = vld [vmem:[#allocation16 + $0xf60] sm:$0xff]
    %v2458 = vld [vmem:[#allocation16 + $0xf68] sm:$0xff]
    %v2459 = vld [vmem:[#allocation16 + $0xf70] sm:$0xff]
    %v2460 = vld [vmem:[#allocation16 + $0xf78] sm:$0xff]
    %v2461 = vld [vmem:[#allocation16 + $0xf80] sm:$0xff]
    %v2462 = vld [vmem:[#allocation16 + $0xf88] sm:$0xff]
    %v2463 = vld [vmem:[#allocation16 + $0xf90] sm:$0xff]
    %v2464 = vld [vmem:[#allocation16 + $0xf98] sm:$0xff]
    %v2465 = vld [vmem:[#allocation16 + $0xfa0] sm:$0xff]
    %v2466 = vld [vmem:[#allocation16 + $0xfa8] sm:$0xff]
    %v2467 = vld [vmem:[#allocation16 + $0xfb0] sm:$0xff]
    %v2468 = vld [vmem:[#allocation16 + $0xfb8] sm:$0xff]
    %v2469 = vld [vmem:[#allocation16 + $0xfc0] sm:$0xff]
    %v2470 = vld [vmem:[#allocation16 + $0xfc8] sm:$0xff]
    %v2471 = vld [vmem:[#allocation16 + $0xfd0] sm:$0xff]
    %v2472 = vld [vmem:[#allocation16 + $0xfd8] sm:$0xff]
    %v2473 = vld [vmem:[#allocation16 + $0xfe0] sm:$0xff]
    %v2474 = vld [vmem:[#allocation16 + $0xfe8] sm:$0xff]
    %v2475 = vld [vmem:[#allocation16 + $0xff0] sm:$0xff]
    %v2476 = vld [vmem:[#allocation16 + $0xff8] sm:$0xff]
    %v2477 = vld [vmem:[#allocation16 + $0x1000] sm:$0xff]
    %v2478 = vld [vmem:[#allocation16 + $0x1008] sm:$0xff]
    %v2479 = vld [vmem:[#allocation16 + $0x1010] sm:$0xff]
    %v2480 = vld [vmem:[#allocation16 + $0x1018] sm:$0xff]
    %v2481 = vld [vmem:[#allocation16 + $0x1020] sm:$0xff]
    %v2482 = vld [vmem:[#allocation16 + $0x1028] sm:$0xff]
    %v2483 = vld [vmem:[#allocation16 + $0x1030] sm:$0xff]
    %v2484 = vld [vmem:[#allocation16 + $0x1038] sm:$0xff]
    %v2485 = vld [vmem:[#allocation16 + $0x1040] sm:$0xff]
    %v2486 = vld [vmem:[#allocation16 + $0x1048] sm:$0xff]
    %v2487 = vld [vmem:[#allocation16 + $0x1050] sm:$0xff]
    %v2488 = vld [vmem:[#allocation16 + $0x1058] sm:$0xff]
    %v2489 = vld [vmem:[#allocation16 + $0x1060] sm:$0xff]
    %v2490 = vld [vmem:[#allocation16 + $0x1068] sm:$0xff]
    %v2491 = vld [vmem:[#allocation16 + $0x1070] sm:$0xff]
    %v2492 = vld [vmem:[#allocation16 + $0x1078] sm:$0xff]
    %v2493 = vld [vmem:[#allocation16 + $0x1080] sm:$0xff]
    %v2494 = vld [vmem:[#allocation16 + $0x1088] sm:$0xff]
    %v2495 = vld [vmem:[#allocation16 + $0x1090] sm:$0xff]
    %v2496 = vld [vmem:[#allocation16 + $0x1098] sm:$0xff]
    %v2497 = vld [vmem:[#allocation16 + $0x10a0] sm:$0xff]
    %v2498 = vld [vmem:[#allocation16 + $0x10a8] sm:$0xff]
    %v2499 = vld [vmem:[#allocation16 + $0x10b0] sm:$0xff]
    %v2500 = vld [vmem:[#allocation16 + $0x10b8] sm:$0xff]
    %v2501 = vld [vmem:[#allocation16 + $0x10c0] sm:$0xff]
    %v2502 = vld [vmem:[#allocation16 + $0x10c8] sm:$0xff]
    %v2503 = vld [vmem:[#allocation16 + $0x10d0] sm:$0xff]
    %v2504 = vld [vmem:[#allocation16 + $0x10d8] sm:$0xff]
    %v2505 = vld [vmem:[#allocation16 + $0x10e0] sm:$0xff]
    %v2506 = vld [vmem:[#allocation16 + $0x10e8] sm:$0xff]
    %v2507 = vld [vmem:[#allocation16 + $0x10f0] sm:$0xff]
    %v2508 = vld [vmem:[#allocation16 + $0x10f8] sm:$0xff]
    %v2509 = vld [vmem:[#allocation16 + $0x1100] sm:$0xff]
    %v2510 = vld [vmem:[#allocation16 + $0x1108] sm:$0xff]
    %v2511 = vld [vmem:[#allocation16 + $0x1110] sm:$0xff]
    %v2512 = vld [vmem:[#allocation16 + $0x1118] sm:$0xff]
    %v2513 = vld [vmem:[#allocation16 + $0x1120] sm:$0xff]
    %v2514 = vld [vmem:[#allocation16 + $0x1128] sm:$0xff]
    %v2515 = vld [vmem:[#allocation16 + $0x1130] sm:$0xff]
    %v2516 = vld [vmem:[#allocation16 + $0x1138] sm:$0xff]
    %v2517 = vld [vmem:[#allocation16 + $0x1140] sm:$0xff]
    %v2518 = vld [vmem:[#allocation16 + $0x1148] sm:$0xff]
    %v2519 = vld [vmem:[#allocation16 + $0x1150] sm:$0xff]
    %v2520 = vld [vmem:[#allocation16 + $0x1158] sm:$0xff]
    %v2521 = vld [vmem:[#allocation16 + $0x1160] sm:$0xff]
    %v2522 = vld [vmem:[#allocation16 + $0x1168] sm:$0xff]
    %v2523 = vld [vmem:[#allocation16 + $0x1170] sm:$0xff]
    %v2524 = vld [vmem:[#allocation16 + $0x1178] sm:$0xff]
    %v2525 = vld [vmem:[#allocation16 + $0x1180] sm:$0xff]
    %v2526 = vld [vmem:[#allocation16 + $0x1188] sm:$0xff]
    %v2527 = vld [vmem:[#allocation16 + $0x1190] sm:$0xff]
    %v2528 = vld [vmem:[#allocation16 + $0x1198] sm:$0xff]
    %v2529 = vld [vmem:[#allocation16 + $0x11a0] sm:$0xff]
    %v2530 = vld [vmem:[#allocation16 + $0x11a8] sm:$0xff]
    %v2531 = vld [vmem:[#allocation16 + $0x11b0] sm:$0xff]
    %v2532 = vld [vmem:[#allocation16 + $0x11b8] sm:$0xff]
    %v2533 = vld [vmem:[#allocation16 + $0x11c0] sm:$0xff]
    %v2534 = vld [vmem:[#allocation16 + $0x11c8] sm:$0xff]
    %v2535 = vld [vmem:[#allocation16 + $0x11d0] sm:$0xff]
    %v2536 = vld [vmem:[#allocation16 + $0x11d8] sm:$0xff]
    %v2537 = vld [vmem:[#allocation16 + $0x11e0] sm:$0xff]
    %v2538 = vld [vmem:[#allocation16 + $0x11e8] sm:$0xff]
    %v2539 = vld [vmem:[#allocation16 + $0x11f0] sm:$0xff]
    %v2540 = vld [vmem:[#allocation16 + $0x11f8] sm:$0xff]
    %v2541 = vld [vmem:[#allocation16 + $0x1200] sm:$0xff]
    %v2542 = vld [vmem:[#allocation16 + $0x1208] sm:$0xff]
    %v2543 = vld [vmem:[#allocation16 + $0x1210] sm:$0xff]
    %v2544 = vld [vmem:[#allocation16 + $0x1218] sm:$0xff]
    %v2545 = vld [vmem:[#allocation16 + $0x1220] sm:$0xff]
    %v2546 = vld [vmem:[#allocation16 + $0x1228] sm:$0xff]
    %v2547 = vld [vmem:[#allocation16 + $0x1230] sm:$0xff]
    %v2548 = vld [vmem:[#allocation16 + $0x1238] sm:$0xff]
    %v2549 = vld [vmem:[#allocation16 + $0x1240] sm:$0xff]
    %v2550 = vld [vmem:[#allocation16 + $0x1248] sm:$0xff]
    %v2551 = vld [vmem:[#allocation16 + $0x1250] sm:$0xff]
    %v2552 = vld [vmem:[#allocation16 + $0x1258] sm:$0xff]
    %v2553 = vld [vmem:[#allocation16 + $0x1260] sm:$0xff]
    %v2554 = vld [vmem:[#allocation16 + $0x1268] sm:$0xff]
    %v2555 = vld [vmem:[#allocation16 + $0x1270] sm:$0xff]
    %v2556 = vld [vmem:[#allocation16 + $0x1278] sm:$0xff]
    %v2557 = vld [vmem:[#allocation16 + $0x1280] sm:$0xff]
    %v2558 = vld [vmem:[#allocation16 + $0x1288] sm:$0xff]
    %v2559 = vld [vmem:[#allocation16 + $0x1290] sm:$0xff]
    %v2560 = vld [vmem:[#allocation16 + $0x1298] sm:$0xff]
    %v2561 = vld [vmem:[#allocation16 + $0x12a0] sm:$0xff]
    %v2562 = vld [vmem:[#allocation16 + $0x12a8] sm:$0xff]
    %v2563 = vld [vmem:[#allocation16 + $0x12b0] sm:$0xff]
    %v2564 = vld [vmem:[#allocation16 + $0x12b8] sm:$0xff]
    %v2565 = vld [vmem:[#allocation16 + $0x12c0] sm:$0xff]
    %v2566 = vld [vmem:[#allocation16 + $0x12c8] sm:$0xff]
    %v2567 = vld [vmem:[#allocation16 + $0x12d0] sm:$0xff]
    %v2568 = vld [vmem:[#allocation16 + $0x12d8] sm:$0xff]
    %v2569 = vld [vmem:[#allocation16 + $0x12e0] sm:$0xff]
    %v2570 = vld [vmem:[#allocation16 + $0x12e8] sm:$0xff]
    %v2571 = vld [vmem:[#allocation16 + $0x12f0] sm:$0xff]
    %v2572 = vld [vmem:[#allocation16 + $0x12f8] sm:$0xff]
    %v2573 = vld [vmem:[#allocation16 + $0x1300] sm:$0xff]
    %v2574 = vld [vmem:[#allocation16 + $0x1308] sm:$0xff]
    %v2575 = vld [vmem:[#allocation16 + $0x1310] sm:$0xff]
    %v2576 = vld [vmem:[#allocation16 + $0x1318] sm:$0xff]
    %v2577 = vld [vmem:[#allocation16 + $0x1320] sm:$0xff]
    %v2578 = vld [vmem:[#allocation16 + $0x1328] sm:$0xff]
    %v2579 = vld [vmem:[#allocation16 + $0x1330] sm:$0xff]
    %v2580 = vld [vmem:[#allocation16 + $0x1338] sm:$0xff]
    %v2581 = vld [vmem:[#allocation16 + $0x1340] sm:$0xff]
    %v2582 = vld [vmem:[#allocation16 + $0x1348] sm:$0xff]
    %v2583 = vld [vmem:[#allocation16 + $0x1350] sm:$0xff]
    %v2584 = vld [vmem:[#allocation16 + $0x1358] sm:$0xff]
    %v2585 = vld [vmem:[#allocation16 + $0x1360] sm:$0xff]
    %v2586 = vld [vmem:[#allocation16 + $0x1368] sm:$0xff]
    %v2587 = vld [vmem:[#allocation16 + $0x1370] sm:$0xff]
    %v2588 = vld [vmem:[#allocation16 + $0x1378] sm:$0xff]
    %v2589 = vld [vmem:[#allocation16 + $0x1380] sm:$0xff]
    %v2590 = vld [vmem:[#allocation16 + $0x1388] sm:$0xff]
    %v2591 = vld [vmem:[#allocation16 + $0x1390] sm:$0xff]
    %v2592 = vld [vmem:[#allocation16 + $0x1398] sm:$0xff]
    %v2593 = vld [vmem:[#allocation16 + $0x13a0] sm:$0xff]
    %v2594 = vld [vmem:[#allocation16 + $0x13a8] sm:$0xff]
    %v2595 = vld [vmem:[#allocation16 + $0x13b0] sm:$0xff]
    %v2596 = vld [vmem:[#allocation16 + $0x13b8] sm:$0xff]
    %v2597 = vld [vmem:[#allocation16 + $0x13c0] sm:$0xff]
    %v2598 = vld [vmem:[#allocation16 + $0x13c8] sm:$0xff]
    %v2599 = vld [vmem:[#allocation16 + $0x13d0] sm:$0xff]
    %v2600 = vld [vmem:[#allocation16 + $0x13d8] sm:$0xff]
    %v2601 = vld [vmem:[#allocation16 + $0x13e0] sm:$0xff]
    %v2602 = vld [vmem:[#allocation16 + $0x13e8] sm:$0xff]
    %v2603 = vld [vmem:[#allocation16 + $0x13f0] sm:$0xff]
    %v2604 = vld [vmem:[#allocation16 + $0x13f8] sm:$0xff]
    %v2605 = vld [vmem:[#allocation16 + $0x1400] sm:$0xff]
    %v2606 = vld [vmem:[#allocation16 + $0x1408] sm:$0xff]
    %v2607 = vld [vmem:[#allocation16 + $0x1410] sm:$0xff]
    %v2608 = vld [vmem:[#allocation16 + $0x1418] sm:$0xff]
    %v2609 = vld [vmem:[#allocation16 + $0x1420] sm:$0xff]
    %v2610 = vld [vmem:[#allocation16 + $0x1428] sm:$0xff]
    %v2611 = vld [vmem:[#allocation16 + $0x1430] sm:$0xff]
    %v2612 = vld [vmem:[#allocation16 + $0x1438] sm:$0xff]
    %v2613 = vld [vmem:[#allocation16 + $0x1440] sm:$0xff]
    %v2614 = vld [vmem:[#allocation16 + $0x1448] sm:$0xff]
    %v2615 = vld [vmem:[#allocation16 + $0x1450] sm:$0xff]
    %v2616 = vld [vmem:[#allocation16 + $0x1458] sm:$0xff]
    %v2617 = vld [vmem:[#allocation16 + $0x1460] sm:$0xff]
    %v2618 = vld [vmem:[#allocation16 + $0x1468] sm:$0xff]
    %v2619 = vld [vmem:[#allocation16 + $0x1470] sm:$0xff]
    %v2620 = vld [vmem:[#allocation16 + $0x1478] sm:$0xff]
    %v2621 = vld [vmem:[#allocation16 + $0x1480] sm:$0xff]
    %v2622 = vld [vmem:[#allocation16 + $0x1488] sm:$0xff]
    %v2623 = vld [vmem:[#allocation16 + $0x1490] sm:$0xff]
    %v2624 = vld [vmem:[#allocation16 + $0x1498] sm:$0xff]
    %v2625 = vld [vmem:[#allocation16 + $0x14a0] sm:$0xff]
    %v2626 = vld [vmem:[#allocation16 + $0x14a8] sm:$0xff]
    %v2627 = vld [vmem:[#allocation16 + $0x14b0] sm:$0xff]
    %v2628 = vld [vmem:[#allocation16 + $0x14b8] sm:$0xff]
    %v2629 = vld [vmem:[#allocation16 + $0x14c0] sm:$0xff]
    %v2630 = vld [vmem:[#allocation16 + $0x14c8] sm:$0xff]
    %v2631 = vld [vmem:[#allocation16 + $0x14d0] sm:$0xff]
    %v2632 = vld [vmem:[#allocation16 + $0x14d8] sm:$0xff]
    %v2633 = vld [vmem:[#allocation16 + $0x14e0] sm:$0xff]
    %v2634 = vld [vmem:[#allocation16 + $0x14e8] sm:$0xff]
    %v2635 = vld [vmem:[#allocation16 + $0x14f0] sm:$0xff]
    %v2636 = vld [vmem:[#allocation16 + $0x14f8] sm:$0xff]
    %v2637 = vld [vmem:[#allocation16 + $0x1500] sm:$0xff]
    %v2638 = vld [vmem:[#allocation16 + $0x1508] sm:$0xff]
    %v2639 = vld [vmem:[#allocation16 + $0x1510] sm:$0xff]
    %v2640 = vld [vmem:[#allocation16 + $0x1518] sm:$0xff]
    %v2641 = vld [vmem:[#allocation16 + $0x1520] sm:$0xff]
    %v2642 = vld [vmem:[#allocation16 + $0x1528] sm:$0xff]
    %v2643 = vld [vmem:[#allocation16 + $0x1530] sm:$0xff]
    %v2644 = vld [vmem:[#allocation16 + $0x1538] sm:$0xff]
    %v2645 = vld [vmem:[#allocation16 + $0x1540] sm:$0xff]
    %v2646 = vld [vmem:[#allocation16 + $0x1548] sm:$0xff]
    %v2647 = vld [vmem:[#allocation16 + $0x1550] sm:$0xff]
    %v2648 = vld [vmem:[#allocation16 + $0x1558] sm:$0xff]
    %v2649 = vld [vmem:[#allocation16 + $0x1560] sm:$0xff]
    %v2650 = vld [vmem:[#allocation16 + $0x1568] sm:$0xff]
    %v2651 = vld [vmem:[#allocation16 + $0x1570] sm:$0xff]
    %v2652 = vld [vmem:[#allocation16 + $0x1578] sm:$0xff]
    %v2653 = vld [vmem:[#allocation16 + $0x1580] sm:$0xff]
    %v2654 = vld [vmem:[#allocation16 + $0x1588] sm:$0xff]
    %v2655 = vld [vmem:[#allocation16 + $0x1590] sm:$0xff]
    %v2656 = vld [vmem:[#allocation16 + $0x1598] sm:$0xff]
    %v2657 = vld [vmem:[#allocation16 + $0x15a0] sm:$0xff]
    %v2658 = vld [vmem:[#allocation16 + $0x15a8] sm:$0xff]
    %v2659 = vld [vmem:[#allocation16 + $0x15b0] sm:$0xff]
    %v2660 = vld [vmem:[#allocation16 + $0x15b8] sm:$0xff]
    %v2661 = vld [vmem:[#allocation16 + $0x15c0] sm:$0xff]
    %v2662 = vld [vmem:[#allocation16 + $0x15c8] sm:$0xff]
    %v2663 = vld [vmem:[#allocation16 + $0x15d0] sm:$0xff]
    %v2664 = vld [vmem:[#allocation16 + $0x15d8] sm:$0xff]
    %v2665 = vld [vmem:[#allocation16 + $0x15e0] sm:$0xff]
    %v2666 = vld [vmem:[#allocation16 + $0x15e8] sm:$0xff]
    %v2667 = vld [vmem:[#allocation16 + $0x15f0] sm:$0xff]
    %v2668 = vld [vmem:[#allocation16 + $0x15f8] sm:$0xff]
    %v2669 = vld [vmem:[#allocation16 + $0x1600] sm:$0xff]
    %v2670 = vld [vmem:[#allocation16 + $0x1608] sm:$0xff]
    %v2671 = vld [vmem:[#allocation16 + $0x1610] sm:$0xff]
    %v2672 = vld [vmem:[#allocation16 + $0x1618] sm:$0xff]
    %v2673 = vld [vmem:[#allocation16 + $0x1620] sm:$0xff]
    %v2674 = vld [vmem:[#allocation16 + $0x1628] sm:$0xff]
    %v2675 = vld [vmem:[#allocation16 + $0x1630] sm:$0xff]
    %v2676 = vld [vmem:[#allocation16 + $0x1638] sm:$0xff]
    %v2677 = vld [vmem:[#allocation16 + $0x1640] sm:$0xff]
    %v2678 = vld [vmem:[#allocation16 + $0x1648] sm:$0xff]
    %v2679 = vld [vmem:[#allocation16 + $0x1650] sm:$0xff]
    %v2680 = vld [vmem:[#allocation16 + $0x1658] sm:$0xff]
    %v2681 = vld [vmem:[#allocation16 + $0x1660] sm:$0xff]
    %v2682 = vld [vmem:[#allocation16 + $0x1668] sm:$0xff]
    %v2683 = vld [vmem:[#allocation16 + $0x1670] sm:$0xff]
    %v2684 = vld [vmem:[#allocation16 + $0x1678] sm:$0xff]
    %v2685 = vld [vmem:[#allocation16 + $0x1680] sm:$0xff]
    %v2686 = vld [vmem:[#allocation16 + $0x1688] sm:$0xff]
    %v2687 = vld [vmem:[#allocation16 + $0x1690] sm:$0xff]
    %v2688 = vld [vmem:[#allocation16 + $0x1698] sm:$0xff]
    %v2689 = vld [vmem:[#allocation16 + $0x16a0] sm:$0xff]
    %v2690 = vld [vmem:[#allocation16 + $0x16a8] sm:$0xff]
    %v2691 = vld [vmem:[#allocation16 + $0x16b0] sm:$0xff]
    %v2692 = vld [vmem:[#allocation16 + $0x16b8] sm:$0xff]
    %v2693 = vld [vmem:[#allocation16 + $0x16c0] sm:$0xff]
    %v2694 = vld [vmem:[#allocation16 + $0x16c8] sm:$0xff]
    %v2695 = vld [vmem:[#allocation16 + $0x16d0] sm:$0xff]
    %v2696 = vld [vmem:[#allocation16 + $0x16d8] sm:$0xff]
    %v2697 = vld [vmem:[#allocation16 + $0x16e0] sm:$0xff]
    %v2698 = vld [vmem:[#allocation16 + $0x16e8] sm:$0xff]
    %v2699 = vld [vmem:[#allocation16 + $0x16f0] sm:$0xff]
    %v2700 = vld [vmem:[#allocation16 + $0x16f8] sm:$0xff]
    %v2701 = vld [vmem:[#allocation16 + $0x1700] sm:$0xff]
    %v2702 = vld [vmem:[#allocation16 + $0x1708] sm:$0xff]
    %v2703 = vld [vmem:[#allocation16 + $0x1710] sm:$0xff]
    %v2704 = vld [vmem:[#allocation16 + $0x1718] sm:$0xff]
    %v2705 = vld [vmem:[#allocation16 + $0x1720] sm:$0xff]
    %v2706 = vld [vmem:[#allocation16 + $0x1728] sm:$0xff]
    %v2707 = vld [vmem:[#allocation16 + $0x1730] sm:$0xff]
    %v2708 = vld [vmem:[#allocation16 + $0x1738] sm:$0xff]
    %v2709 = vld [vmem:[#allocation16 + $0x1740] sm:$0xff]
    %v2710 = vld [vmem:[#allocation16 + $0x1748] sm:$0xff]
    %v2711 = vld [vmem:[#allocation16 + $0x1750] sm:$0xff]
    %v2712 = vld [vmem:[#allocation16 + $0x1758] sm:$0xff]
    %v2713 = vld [vmem:[#allocation16 + $0x1760] sm:$0xff]
    %v2714 = vld [vmem:[#allocation16 + $0x1768] sm:$0xff]
    %v2715 = vld [vmem:[#allocation16 + $0x1770] sm:$0xff]
    %v2716 = vld [vmem:[#allocation16 + $0x1778] sm:$0xff]
    %v2717 = vld [vmem:[#allocation16 + $0x1780] sm:$0xff]
    %v2718 = vld [vmem:[#allocation16 + $0x1788] sm:$0xff]
    %v2719 = vld [vmem:[#allocation16 + $0x1790] sm:$0xff]
    %v2720 = vld [vmem:[#allocation16 + $0x1798] sm:$0xff]
    %v2721 = vld [vmem:[#allocation16 + $0x17a0] sm:$0xff]
    %v2722 = vld [vmem:[#allocation16 + $0x17a8] sm:$0xff]
    %v2723 = vld [vmem:[#allocation16 + $0x17b0] sm:$0xff]
    %v2724 = vld [vmem:[#allocation16 + $0x17b8] sm:$0xff]
    %v2725 = vld [vmem:[#allocation16 + $0x17c0] sm:$0xff]
    %v2726 = vld [vmem:[#allocation16 + $0x17c8] sm:$0xff]
    %v2727 = vld [vmem:[#allocation16 + $0x17d0] sm:$0xff]
    %v2728 = vld [vmem:[#allocation16 + $0x17d8] sm:$0xff]
    %v2729 = vld [vmem:[#allocation16 + $0x17e0] sm:$0xff]
    %v2730 = vld [vmem:[#allocation16 + $0x17e8] sm:$0xff]
    %v2731 = vld [vmem:[#allocation16 + $0x17f0] sm:$0xff]
    %v2732 = vld [vmem:[#allocation16 + $0x17f8] sm:$0xff]
    %v2733 = vld [vmem:[#allocation18] sm:$0xff]
    %v2735 = vperm.slane %v2733, 0
    %v2736 = vperm.slane %v2733, 1
    %v2737 = vperm.slane %v2733, 2
    %v2738 = vperm.slane %v2733, 3
    %v2739 = vperm.slane %v2733, 4
    %v2740 = vperm.slane %v2733, 5
    %v2741 = vperm.slane %v2733, 6
    %v2742 = vperm.slane %v2733, 7
    %v3519 = vunpack.c.l.b16 %v1965
    %v3520 = vunpack.c.h.b16 %v1965
    %v3521 = vunpack.c.l.b16 %v1966
    %v3522 = vunpack.c.h.b16 %v1966
    %v3523 = vunpack.c.l.b16 %v1967
    %v3524 = vunpack.c.h.b16 %v1967
    %v3525 = vunpack.c.l.b16 %v1968
    %v3526 = vunpack.c.h.b16 %v1968
    %v3527 = vunpack.c.l.b16 %v1969
    %v3528 = vunpack.c.h.b16 %v1969
    %v3529 = vunpack.c.l.b16 %v1970
    %v3530 = vunpack.c.h.b16 %v1970
    %v3531 = vunpack.c.l.b16 %v1971
    %v3532 = vunpack.c.h.b16 %v1971
    %v3533 = vunpack.c.l.b16 %v1972
    %v3534 = vunpack.c.h.b16 %v1972
    %v3535 = vunpack.c.l.b16 %v1973
    %v3536 = vunpack.c.h.b16 %v1973
    %v3537 = vunpack.c.l.b16 %v1974
    %v3538 = vunpack.c.h.b16 %v1974
    %v3539 = vunpack.c.l.b16 %v1975
    %v3540 = vunpack.c.h.b16 %v1975
    %v3541 = vunpack.c.l.b16 %v1976
    %v3542 = vunpack.c.h.b16 %v1976
    %v3543 = vunpack.c.l.b16 %v1977
    %v3544 = vunpack.c.h.b16 %v1977
    %v3545 = vunpack.c.l.b16 %v1978
    %v3546 = vunpack.c.h.b16 %v1978
    %v3547 = vunpack.c.l.b16 %v1979
    %v3548 = vunpack.c.h.b16 %v1979
    %v3549 = vunpack.c.l.b16 %v1980
    %v3550 = vunpack.c.h.b16 %v1980
    %v3551 = vunpack.c.l.b16 %v1981
    %v3552 = vunpack.c.h.b16 %v1981
    %v3553 = vunpack.c.l.b16 %v1982
    %v3554 = vunpack.c.h.b16 %v1982
    %v3555 = vunpack.c.l.b16 %v1983
    %v3556 = vunpack.c.h.b16 %v1983
    %v3557 = vunpack.c.l.b16 %v1984
    %v3558 = vunpack.c.h.b16 %v1984
    %v3559 = vunpack.c.l.b16 %v1985
    %v3560 = vunpack.c.h.b16 %v1985
    %v3561 = vunpack.c.l.b16 %v1986
    %v3562 = vunpack.c.h.b16 %v1986
    %v3563 = vunpack.c.l.b16 %v1987
    %v3564 = vunpack.c.h.b16 %v1987
    %v3565 = vunpack.c.l.b16 %v1988
    %v3566 = vunpack.c.h.b16 %v1988
    %v3567 = vunpack.c.l.b16 %v1989
    %v3568 = vunpack.c.h.b16 %v1989
    %v3569 = vunpack.c.l.b16 %v1990
    %v3570 = vunpack.c.h.b16 %v1990
    %v3571 = vunpack.c.l.b16 %v1991
    %v3572 = vunpack.c.h.b16 %v1991
    %v3573 = vunpack.c.l.b16 %v1992
    %v3574 = vunpack.c.h.b16 %v1992
    %v3575 = vunpack.c.l.b16 %v1993
    %v3576 = vunpack.c.h.b16 %v1993
    %v3577 = vunpack.c.l.b16 %v1994
    %v3578 = vunpack.c.h.b16 %v1994
    %v3579 = vunpack.c.l.b16 %v1995
    %v3580 = vunpack.c.h.b16 %v1995
    %v3581 = vunpack.c.l.b16 %v1996
    %v3582 = vunpack.c.h.b16 %v1996
    %v3583 = vunpack.c.l.b16 %v1997
    %v3584 = vunpack.c.h.b16 %v1997
    %v3585 = vunpack.c.l.b16 %v1998
    %v3586 = vunpack.c.h.b16 %v1998
    %v3587 = vunpack.c.l.b16 %v1999
    %v3588 = vunpack.c.h.b16 %v1999
    %v3589 = vunpack.c.l.b16 %v2000
    %v3590 = vunpack.c.h.b16 %v2000
    %v3591 = vunpack.c.l.b16 %v2001
    %v3592 = vunpack.c.h.b16 %v2001
    %v3593 = vunpack.c.l.b16 %v2002
    %v3594 = vunpack.c.h.b16 %v2002
    %v3595 = vunpack.c.l.b16 %v2003
    %v3596 = vunpack.c.h.b16 %v2003
    %v3597 = vunpack.c.l.b16 %v2004
    %v3598 = vunpack.c.h.b16 %v2004
    %v3599 = vunpack.c.l.b16 %v2005
    %v3600 = vunpack.c.h.b16 %v2005
    %v3601 = vunpack.c.l.b16 %v2006
    %v3602 = vunpack.c.h.b16 %v2006
    %v3603 = vunpack.c.l.b16 %v2007
    %v3604 = vunpack.c.h.b16 %v2007
    %v3605 = vunpack.c.l.b16 %v2008
    %v3606 = vunpack.c.h.b16 %v2008
    %v3607 = vunpack.c.l.b16 %v2009
    %v3608 = vunpack.c.h.b16 %v2009
    %v3609 = vunpack.c.l.b16 %v2010
    %v3610 = vunpack.c.h.b16 %v2010
    %v3611 = vunpack.c.l.b16 %v2011
    %v3612 = vunpack.c.h.b16 %v2011
    %v3613 = vunpack.c.l.b16 %v2012
    %v3614 = vunpack.c.h.b16 %v2012
    %v3615 = vunpack.c.l.b16 %v2013
    %v3616 = vunpack.c.h.b16 %v2013
    %v3617 = vunpack.c.l.b16 %v2014
    %v3618 = vunpack.c.h.b16 %v2014
    %v3619 = vunpack.c.l.b16 %v2015
    %v3620 = vunpack.c.h.b16 %v2015
    %v3621 = vunpack.c.l.b16 %v2016
    %v3622 = vunpack.c.h.b16 %v2016
    %v3623 = vunpack.c.l.b16 %v2017
    %v3624 = vunpack.c.h.b16 %v2017
    %v3625 = vunpack.c.l.b16 %v2018
    %v3626 = vunpack.c.h.b16 %v2018
    %v3627 = vunpack.c.l.b16 %v2019
    %v3628 = vunpack.c.h.b16 %v2019
    %v3629 = vunpack.c.l.b16 %v2020
    %v3630 = vunpack.c.h.b16 %v2020
    %v3631 = vunpack.c.l.b16 %v2021
    %v3632 = vunpack.c.h.b16 %v2021
    %v3633 = vunpack.c.l.b16 %v2022
    %v3634 = vunpack.c.h.b16 %v2022
    %v3635 = vunpack.c.l.b16 %v2023
    %v3636 = vunpack.c.h.b16 %v2023
    %v3637 = vunpack.c.l.b16 %v2024
    %v3638 = vunpack.c.h.b16 %v2024
    %v3639 = vunpack.c.l.b16 %v2025
    %v3640 = vunpack.c.h.b16 %v2025
    %v3641 = vunpack.c.l.b16 %v2026
    %v3642 = vunpack.c.h.b16 %v2026
    %v3643 = vunpack.c.l.b16 %v2027
    %v3644 = vunpack.c.h.b16 %v2027
    %v3645 = vunpack.c.l.b16 %v2028
    %v3646 = vunpack.c.h.b16 %v2028
    %v3647 = vunpack.c.l.b16 %v2029
    %v3648 = vunpack.c.h.b16 %v2029
    %v3649 = vunpack.c.l.b16 %v2030
    %v3650 = vunpack.c.h.b16 %v2030
    %v3651 = vunpack.c.l.b16 %v2031
    %v3652 = vunpack.c.h.b16 %v2031
    %v3653 = vunpack.c.l.b16 %v2032
    %v3654 = vunpack.c.h.b16 %v2032
    %v3655 = vunpack.c.l.b16 %v2033
    %v3656 = vunpack.c.h.b16 %v2033
    %v3657 = vunpack.c.l.b16 %v2034
    %v3658 = vunpack.c.h.b16 %v2034
    %v3659 = vunpack.c.l.b16 %v2035
    %v3660 = vunpack.c.h.b16 %v2035
    %v3661 = vunpack.c.l.b16 %v2036
    %v3662 = vunpack.c.h.b16 %v2036
    %v3663 = vunpack.c.l.b16 %v2037
    %v3664 = vunpack.c.h.b16 %v2037
    %v3665 = vunpack.c.l.b16 %v2038
    %v3666 = vunpack.c.h.b16 %v2038
    %v3667 = vunpack.c.l.b16 %v2039
    %v3668 = vunpack.c.h.b16 %v2039
    %v3669 = vunpack.c.l.b16 %v2040
    %v3670 = vunpack.c.h.b16 %v2040
    %v3671 = vunpack.c.l.b16 %v2041
    %v3672 = vunpack.c.h.b16 %v2041
    %v3673 = vunpack.c.l.b16 %v2042
    %v3674 = vunpack.c.h.b16 %v2042
    %v3675 = vunpack.c.l.b16 %v2043
    %v3676 = vunpack.c.h.b16 %v2043
    %v3677 = vunpack.c.l.b16 %v2044
    %v3678 = vunpack.c.h.b16 %v2044
    %v3679 = vunpack.c.l.b16 %v2045
    %v3680 = vunpack.c.h.b16 %v2045
    %v3681 = vunpack.c.l.b16 %v2046
    %v3682 = vunpack.c.h.b16 %v2046
    %v3683 = vunpack.c.l.b16 %v2047
    %v3684 = vunpack.c.h.b16 %v2047
    %v3685 = vunpack.c.l.b16 %v2048
    %v3686 = vunpack.c.h.b16 %v2048
    %v3687 = vunpack.c.l.b16 %v2049
    %v3688 = vunpack.c.h.b16 %v2049
    %v3689 = vunpack.c.l.b16 %v2050
    %v3690 = vunpack.c.h.b16 %v2050
    %v3691 = vunpack.c.l.b16 %v2051
    %v3692 = vunpack.c.h.b16 %v2051
    %v3693 = vunpack.c.l.b16 %v2052
    %v3694 = vunpack.c.h.b16 %v2052
    %v3695 = vunpack.c.l.b16 %v2053
    %v3696 = vunpack.c.h.b16 %v2053
    %v3697 = vunpack.c.l.b16 %v2054
    %v3698 = vunpack.c.h.b16 %v2054
    %v3699 = vunpack.c.l.b16 %v2055
    %v3700 = vunpack.c.h.b16 %v2055
    %v3701 = vunpack.c.l.b16 %v2056
    %v3702 = vunpack.c.h.b16 %v2056
    %v3703 = vunpack.c.l.b16 %v2057
    %v3704 = vunpack.c.h.b16 %v2057
    %v3705 = vunpack.c.l.b16 %v2058
    %v3706 = vunpack.c.h.b16 %v2058
    %v3707 = vunpack.c.l.b16 %v2059
    %v3708 = vunpack.c.h.b16 %v2059
    %v3709 = vunpack.c.l.b16 %v2060
    %v3710 = vunpack.c.h.b16 %v2060
    %v3711 = vunpack.c.l.b16 %v2061
    %v3712 = vunpack.c.h.b16 %v2061
    %v3713 = vunpack.c.l.b16 %v2062
    %v3714 = vunpack.c.h.b16 %v2062
    %v3715 = vunpack.c.l.b16 %v2063
    %v3716 = vunpack.c.h.b16 %v2063
    %v3717 = vunpack.c.l.b16 %v2064
    %v3718 = vunpack.c.h.b16 %v2064
    %v3719 = vunpack.c.l.b16 %v2065
    %v3720 = vunpack.c.h.b16 %v2065
    %v3721 = vunpack.c.l.b16 %v2066
    %v3722 = vunpack.c.h.b16 %v2066
    %v3723 = vunpack.c.l.b16 %v2067
    %v3724 = vunpack.c.h.b16 %v2067
    %v3725 = vunpack.c.l.b16 %v2068
    %v3726 = vunpack.c.h.b16 %v2068
    %v3727 = vunpack.c.l.b16 %v2069
    %v3728 = vunpack.c.h.b16 %v2069
    %v3729 = vunpack.c.l.b16 %v2070
    %v3730 = vunpack.c.h.b16 %v2070
    %v3731 = vunpack.c.l.b16 %v2071
    %v3732 = vunpack.c.h.b16 %v2071
    %v3733 = vunpack.c.l.b16 %v2072
    %v3734 = vunpack.c.h.b16 %v2072
    %v3735 = vunpack.c.l.b16 %v2073
    %v3736 = vunpack.c.h.b16 %v2073
    %v3737 = vunpack.c.l.b16 %v2074
    %v3738 = vunpack.c.h.b16 %v2074
    %v3739 = vunpack.c.l.b16 %v2075
    %v3740 = vunpack.c.h.b16 %v2075
    %v3741 = vunpack.c.l.b16 %v2076
    %v3742 = vunpack.c.h.b16 %v2076
    %v3743 = vunpack.c.l.b16 %v2077
    %v3744 = vunpack.c.h.b16 %v2077
    %v3745 = vunpack.c.l.b16 %v2078
    %v3746 = vunpack.c.h.b16 %v2078
    %v3747 = vunpack.c.l.b16 %v2079
    %v3748 = vunpack.c.h.b16 %v2079
    %v3749 = vunpack.c.l.b16 %v2080
    %v3750 = vunpack.c.h.b16 %v2080
    %v3751 = vunpack.c.l.b16 %v2081
    %v3752 = vunpack.c.h.b16 %v2081
    %v3753 = vunpack.c.l.b16 %v2082
    %v3754 = vunpack.c.h.b16 %v2082
    %v3755 = vunpack.c.l.b16 %v2083
    %v3756 = vunpack.c.h.b16 %v2083
    %v3757 = vunpack.c.l.b16 %v2084
    %v3758 = vunpack.c.h.b16 %v2084
    %v3759 = vunpack.c.l.b16 %v2085
    %v3760 = vunpack.c.h.b16 %v2085
    %v3761 = vunpack.c.l.b16 %v2086
    %v3762 = vunpack.c.h.b16 %v2086
    %v3763 = vunpack.c.l.b16 %v2087
    %v3764 = vunpack.c.h.b16 %v2087
    %v3765 = vunpack.c.l.b16 %v2088
    %v3766 = vunpack.c.h.b16 %v2088
    %v3767 = vunpack.c.l.b16 %v2089
    %v3768 = vunpack.c.h.b16 %v2089
    %v3769 = vunpack.c.l.b16 %v2090
    %v3770 = vunpack.c.h.b16 %v2090
    %v3771 = vunpack.c.l.b16 %v2091
    %v3772 = vunpack.c.h.b16 %v2091
    %v3773 = vunpack.c.l.b16 %v2092
    %v3774 = vunpack.c.h.b16 %v2092
    %v3775 = vunpack.c.l.b16 %v2093
    %v3776 = vunpack.c.h.b16 %v2093
    %v3777 = vunpack.c.l.b16 %v2094
    %v3778 = vunpack.c.h.b16 %v2094
    %v3779 = vunpack.c.l.b16 %v2095
    %v3780 = vunpack.c.h.b16 %v2095
    %v3781 = vunpack.c.l.b16 %v2096
    %v3782 = vunpack.c.h.b16 %v2096
    %v3783 = vunpack.c.l.b16 %v2097
    %v3784 = vunpack.c.h.b16 %v2097
    %v3785 = vunpack.c.l.b16 %v2098
    %v3786 = vunpack.c.h.b16 %v2098
    %v3787 = vunpack.c.l.b16 %v2099
    %v3788 = vunpack.c.h.b16 %v2099
    %v3789 = vunpack.c.l.b16 %v2100
    %v3790 = vunpack.c.h.b16 %v2100
    %v3791 = vunpack.c.l.b16 %v2101
    %v3792 = vunpack.c.h.b16 %v2101
    %v3793 = vunpack.c.l.b16 %v2102
    %v3794 = vunpack.c.h.b16 %v2102
    %v3795 = vunpack.c.l.b16 %v2103
    %v3796 = vunpack.c.h.b16 %v2103
    %v3797 = vunpack.c.l.b16 %v2104
    %v3798 = vunpack.c.h.b16 %v2104
    %v3799 = vunpack.c.l.b16 %v2105
    %v3800 = vunpack.c.h.b16 %v2105
    %v3801 = vunpack.c.l.b16 %v2106
    %v3802 = vunpack.c.h.b16 %v2106
    %v3803 = vunpack.c.l.b16 %v2107
    %v3804 = vunpack.c.h.b16 %v2107
    %v3805 = vunpack.c.l.b16 %v2108
    %v3806 = vunpack.c.h.b16 %v2108
    %v3807 = vunpack.c.l.b16 %v2109
    %v3808 = vunpack.c.h.b16 %v2109
    %v3809 = vunpack.c.l.b16 %v2110
    %v3810 = vunpack.c.h.b16 %v2110
    %v3811 = vunpack.c.l.b16 %v2111
    %v3812 = vunpack.c.h.b16 %v2111
    %v3813 = vunpack.c.l.b16 %v2112
    %v3814 = vunpack.c.h.b16 %v2112
    %v3815 = vunpack.c.l.b16 %v2113
    %v3816 = vunpack.c.h.b16 %v2113
    %v3817 = vunpack.c.l.b16 %v2114
    %v3818 = vunpack.c.h.b16 %v2114
    %v3819 = vunpack.c.l.b16 %v2115
    %v3820 = vunpack.c.h.b16 %v2115
    %v3821 = vunpack.c.l.b16 %v2116
    %v3822 = vunpack.c.h.b16 %v2116
    %v3823 = vunpack.c.l.b16 %v2117
    %v3824 = vunpack.c.h.b16 %v2117
    %v3825 = vunpack.c.l.b16 %v2118
    %v3826 = vunpack.c.h.b16 %v2118
    %v3827 = vunpack.c.l.b16 %v2119
    %v3828 = vunpack.c.h.b16 %v2119
    %v3829 = vunpack.c.l.b16 %v2120
    %v3830 = vunpack.c.h.b16 %v2120
    %v3831 = vunpack.c.l.b16 %v2121
    %v3832 = vunpack.c.h.b16 %v2121
    %v3833 = vunpack.c.l.b16 %v2122
    %v3834 = vunpack.c.h.b16 %v2122
    %v3835 = vunpack.c.l.b16 %v2123
    %v3836 = vunpack.c.h.b16 %v2123
    %v3837 = vunpack.c.l.b16 %v2124
    %v3838 = vunpack.c.h.b16 %v2124
    %v3839 = vunpack.c.l.b16 %v2125
    %v3840 = vunpack.c.h.b16 %v2125
    %v3841 = vunpack.c.l.b16 %v2126
    %v3842 = vunpack.c.h.b16 %v2126
    %v3843 = vunpack.c.l.b16 %v2127
    %v3844 = vunpack.c.h.b16 %v2127
    %v3845 = vunpack.c.l.b16 %v2128
    %v3846 = vunpack.c.h.b16 %v2128
    %v3847 = vunpack.c.l.b16 %v2129
    %v3848 = vunpack.c.h.b16 %v2129
    %v3849 = vunpack.c.l.b16 %v2130
    %v3850 = vunpack.c.h.b16 %v2130
    %v3851 = vunpack.c.l.b16 %v2131
    %v3852 = vunpack.c.h.b16 %v2131
    %v3853 = vunpack.c.l.b16 %v2132
    %v3854 = vunpack.c.h.b16 %v2132
    %v3855 = vunpack.c.l.b16 %v2133
    %v3856 = vunpack.c.h.b16 %v2133
    %v3857 = vunpack.c.l.b16 %v2134
    %v3858 = vunpack.c.h.b16 %v2134
    %v3859 = vunpack.c.l.b16 %v2135
    %v3860 = vunpack.c.h.b16 %v2135
    %v3861 = vunpack.c.l.b16 %v2136
    %v3862 = vunpack.c.h.b16 %v2136
    %v3863 = vunpack.c.l.b16 %v2137
    %v3864 = vunpack.c.h.b16 %v2137
    %v3865 = vunpack.c.l.b16 %v2138
    %v3866 = vunpack.c.h.b16 %v2138
    %v3867 = vunpack.c.l.b16 %v2139
    %v3868 = vunpack.c.h.b16 %v2139
    %v3869 = vunpack.c.l.b16 %v2140
    %v3870 = vunpack.c.h.b16 %v2140
    %v3871 = vunpack.c.l.b16 %v2141
    %v3872 = vunpack.c.h.b16 %v2141
    %v3873 = vunpack.c.l.b16 %v2142
    %v3874 = vunpack.c.h.b16 %v2142
    %v3875 = vunpack.c.l.b16 %v2143
    %v3876 = vunpack.c.h.b16 %v2143
    %v3877 = vunpack.c.l.b16 %v2144
    %v3878 = vunpack.c.h.b16 %v2144
    %v3879 = vunpack.c.l.b16 %v2145
    %v3880 = vunpack.c.h.b16 %v2145
    %v3881 = vunpack.c.l.b16 %v2146
    %v3882 = vunpack.c.h.b16 %v2146
    %v3883 = vunpack.c.l.b16 %v2147
    %v3884 = vunpack.c.h.b16 %v2147
    %v3885 = vunpack.c.l.b16 %v2148
    %v3886 = vunpack.c.h.b16 %v2148
    %v3887 = vunpack.c.l.b16 %v2149
    %v3888 = vunpack.c.h.b16 %v2149
    %v3889 = vunpack.c.l.b16 %v2150
    %v3890 = vunpack.c.h.b16 %v2150
    %v3891 = vunpack.c.l.b16 %v2151
    %v3892 = vunpack.c.h.b16 %v2151
    %v3893 = vunpack.c.l.b16 %v2152
    %v3894 = vunpack.c.h.b16 %v2152
    %v3895 = vunpack.c.l.b16 %v2153
    %v3896 = vunpack.c.h.b16 %v2153
    %v3897 = vunpack.c.l.b16 %v2154
    %v3898 = vunpack.c.h.b16 %v2154
    %v3899 = vunpack.c.l.b16 %v2155
    %v3900 = vunpack.c.h.b16 %v2155
    %v3901 = vunpack.c.l.b16 %v2156
    %v3902 = vunpack.c.h.b16 %v2156
    %v3903 = vunpack.c.l.b16 %v2157
    %v3904 = vunpack.c.h.b16 %v2157
    %v3905 = vunpack.c.l.b16 %v2158
    %v3906 = vunpack.c.h.b16 %v2158
    %v3907 = vunpack.c.l.b16 %v2159
    %v3908 = vunpack.c.h.b16 %v2159
    %v3909 = vunpack.c.l.b16 %v2160
    %v3910 = vunpack.c.h.b16 %v2160
    %v3911 = vunpack.c.l.b16 %v2161
    %v3912 = vunpack.c.h.b16 %v2161
    %v3913 = vunpack.c.l.b16 %v2162
    %v3914 = vunpack.c.h.b16 %v2162
    %v3915 = vunpack.c.l.b16 %v2163
    %v3916 = vunpack.c.h.b16 %v2163
    %v3917 = vunpack.c.l.b16 %v2164
    %v3918 = vunpack.c.h.b16 %v2164
    %v3919 = vunpack.c.l.b16 %v2165
    %v3920 = vunpack.c.h.b16 %v2165
    %v3921 = vunpack.c.l.b16 %v2166
    %v3922 = vunpack.c.h.b16 %v2166
    %v3923 = vunpack.c.l.b16 %v2167
    %v3924 = vunpack.c.h.b16 %v2167
    %v3925 = vunpack.c.l.b16 %v2168
    %v3926 = vunpack.c.h.b16 %v2168
    %v3927 = vunpack.c.l.b16 %v2169
    %v3928 = vunpack.c.h.b16 %v2169
    %v3929 = vunpack.c.l.b16 %v2170
    %v3930 = vunpack.c.h.b16 %v2170
    %v3931 = vunpack.c.l.b16 %v2171
    %v3932 = vunpack.c.h.b16 %v2171
    %v3933 = vunpack.c.l.b16 %v2172
    %v3934 = vunpack.c.h.b16 %v2172
    %v3935 = vunpack.c.l.b16 %v2173
    %v3936 = vunpack.c.h.b16 %v2173
    %v3937 = vunpack.c.l.b16 %v2174
    %v3938 = vunpack.c.h.b16 %v2174
    %v3939 = vunpack.c.l.b16 %v2175
    %v3940 = vunpack.c.h.b16 %v2175
    %v3941 = vunpack.c.l.b16 %v2176
    %v3942 = vunpack.c.h.b16 %v2176
    %v3943 = vunpack.c.l.b16 %v2177
    %v3944 = vunpack.c.h.b16 %v2177
    %v3945 = vunpack.c.l.b16 %v2178
    %v3946 = vunpack.c.h.b16 %v2178
    %v3947 = vunpack.c.l.b16 %v2179
    %v3948 = vunpack.c.h.b16 %v2179
    %v3949 = vunpack.c.l.b16 %v2180
    %v3950 = vunpack.c.h.b16 %v2180
    %v3951 = vunpack.c.l.b16 %v2181
    %v3952 = vunpack.c.h.b16 %v2181
    %v3953 = vunpack.c.l.b16 %v2182
    %v3954 = vunpack.c.h.b16 %v2182
    %v3955 = vunpack.c.l.b16 %v2183
    %v3956 = vunpack.c.h.b16 %v2183
    %v3957 = vunpack.c.l.b16 %v2184
    %v3958 = vunpack.c.h.b16 %v2184
    %v3959 = vunpack.c.l.b16 %v2185
    %v3960 = vunpack.c.h.b16 %v2185
    %v3961 = vunpack.c.l.b16 %v2186
    %v3962 = vunpack.c.h.b16 %v2186
    %v3963 = vunpack.c.l.b16 %v2187
    %v3964 = vunpack.c.h.b16 %v2187
    %v3965 = vunpack.c.l.b16 %v2188
    %v3966 = vunpack.c.h.b16 %v2188
    %v3967 = vunpack.c.l.b16 %v2189
    %v3968 = vunpack.c.h.b16 %v2189
    %v3969 = vunpack.c.l.b16 %v2190
    %v3970 = vunpack.c.h.b16 %v2190
    %v3971 = vunpack.c.l.b16 %v2191
    %v3972 = vunpack.c.h.b16 %v2191
    %v3973 = vunpack.c.l.b16 %v2192
    %v3974 = vunpack.c.h.b16 %v2192
    %v3975 = vunpack.c.l.b16 %v2193
    %v3976 = vunpack.c.h.b16 %v2193
    %v3977 = vunpack.c.l.b16 %v2194
    %v3978 = vunpack.c.h.b16 %v2194
    %v3979 = vunpack.c.l.b16 %v2195
    %v3980 = vunpack.c.h.b16 %v2195
    %v3981 = vunpack.c.l.b16 %v2196
    %v3982 = vunpack.c.h.b16 %v2196
    %v3983 = vunpack.c.l.b16 %v2197
    %v3984 = vunpack.c.h.b16 %v2197
    %v3985 = vunpack.c.l.b16 %v2198
    %v3986 = vunpack.c.h.b16 %v2198
    %v3987 = vunpack.c.l.b16 %v2199
    %v3988 = vunpack.c.h.b16 %v2199
    %v3989 = vunpack.c.l.b16 %v2200
    %v3990 = vunpack.c.h.b16 %v2200
    %v3991 = vunpack.c.l.b16 %v2201
    %v3992 = vunpack.c.h.b16 %v2201
    %v3993 = vunpack.c.l.b16 %v2202
    %v3994 = vunpack.c.h.b16 %v2202
    %v3995 = vunpack.c.l.b16 %v2203
    %v3996 = vunpack.c.h.b16 %v2203
    %v3997 = vunpack.c.l.b16 %v2204
    %v3998 = vunpack.c.h.b16 %v2204
    %v3999 = vunpack.c.l.b16 %v2205
    %v4000 = vunpack.c.h.b16 %v2205
    %v4001 = vunpack.c.l.b16 %v2206
    %v4002 = vunpack.c.h.b16 %v2206
    %v4003 = vunpack.c.l.b16 %v2207
    %v4004 = vunpack.c.h.b16 %v2207
    %v4005 = vunpack.c.l.b16 %v2208
    %v4006 = vunpack.c.h.b16 %v2208
    %v4007 = vunpack.c.l.b16 %v2209
    %v4008 = vunpack.c.h.b16 %v2209
    %v4009 = vunpack.c.l.b16 %v2210
    %v4010 = vunpack.c.h.b16 %v2210
    %v4011 = vunpack.c.l.b16 %v2211
    %v4012 = vunpack.c.h.b16 %v2211
    %v4013 = vunpack.c.l.b16 %v2212
    %v4014 = vunpack.c.h.b16 %v2212
    %v4015 = vunpack.c.l.b16 %v2213
    %v4016 = vunpack.c.h.b16 %v2213
    %v4017 = vunpack.c.l.b16 %v2214
    %v4018 = vunpack.c.h.b16 %v2214
    %v4019 = vunpack.c.l.b16 %v2215
    %v4020 = vunpack.c.h.b16 %v2215
    %v4021 = vunpack.c.l.b16 %v2216
    %v4022 = vunpack.c.h.b16 %v2216
    %v4023 = vunpack.c.l.b16 %v2217
    %v4024 = vunpack.c.h.b16 %v2217
    %v4025 = vunpack.c.l.b16 %v2218
    %v4026 = vunpack.c.h.b16 %v2218
    %v4027 = vunpack.c.l.b16 %v2219
    %v4028 = vunpack.c.h.b16 %v2219
    %v4029 = vunpack.c.l.b16 %v2220
    %v4030 = vunpack.c.h.b16 %v2220
    %v4031 = vunpack.c.l.b16 %v2221
    %v4032 = vunpack.c.h.b16 %v2221
    %v4033 = vunpack.c.l.b16 %v2222
    %v4034 = vunpack.c.h.b16 %v2222
    %v4035 = vunpack.c.l.b16 %v2223
    %v4036 = vunpack.c.h.b16 %v2223
    %v4037 = vunpack.c.l.b16 %v2224
    %v4038 = vunpack.c.h.b16 %v2224
    %v4039 = vunpack.c.l.b16 %v2225
    %v4040 = vunpack.c.h.b16 %v2225
    %v4041 = vunpack.c.l.b16 %v2226
    %v4042 = vunpack.c.h.b16 %v2226
    %v4043 = vunpack.c.l.b16 %v2227
    %v4044 = vunpack.c.h.b16 %v2227
    %v4045 = vunpack.c.l.b16 %v2228
    %v4046 = vunpack.c.h.b16 %v2228
    %v4047 = vunpack.c.l.b16 %v2229
    %v4048 = vunpack.c.h.b16 %v2229
    %v4049 = vunpack.c.l.b16 %v2230
    %v4050 = vunpack.c.h.b16 %v2230
    %v4051 = vunpack.c.l.b16 %v2231
    %v4052 = vunpack.c.h.b16 %v2231
    %v4053 = vunpack.c.l.b16 %v2232
    %v4054 = vunpack.c.h.b16 %v2232
    %v4055 = vunpack.c.l.b16 %v2233
    %v4056 = vunpack.c.h.b16 %v2233
    %v4057 = vunpack.c.l.b16 %v2234
    %v4058 = vunpack.c.h.b16 %v2234
    %v4059 = vunpack.c.l.b16 %v2235
    %v4060 = vunpack.c.h.b16 %v2235
    %v4061 = vunpack.c.l.b16 %v2236
    %v4062 = vunpack.c.h.b16 %v2236
    %v4063 = vunpack.c.l.b16 %v2237
    %v4064 = vunpack.c.h.b16 %v2237
    %v4065 = vunpack.c.l.b16 %v2238
    %v4066 = vunpack.c.h.b16 %v2238
    %v4067 = vunpack.c.l.b16 %v2239
    %v4068 = vunpack.c.h.b16 %v2239
    %v4069 = vunpack.c.l.b16 %v2240
    %v4070 = vunpack.c.h.b16 %v2240
    %v4071 = vunpack.c.l.b16 %v2241
    %v4072 = vunpack.c.h.b16 %v2241
    %v4073 = vunpack.c.l.b16 %v2242
    %v4074 = vunpack.c.h.b16 %v2242
    %v4075 = vunpack.c.l.b16 %v2243
    %v4076 = vunpack.c.h.b16 %v2243
    %v4077 = vunpack.c.l.b16 %v2244
    %v4078 = vunpack.c.h.b16 %v2244
    %v4079 = vunpack.c.l.b16 %v2245
    %v4080 = vunpack.c.h.b16 %v2245
    %v4081 = vunpack.c.l.b16 %v2246
    %v4082 = vunpack.c.h.b16 %v2246
    %v4083 = vunpack.c.l.b16 %v2247
    %v4084 = vunpack.c.h.b16 %v2247
    %v4085 = vunpack.c.l.b16 %v2248
    %v4086 = vunpack.c.h.b16 %v2248
    %v4087 = vunpack.c.l.b16 %v2249
    %v4088 = vunpack.c.h.b16 %v2249
    %v4089 = vunpack.c.l.b16 %v2250
    %v4090 = vunpack.c.h.b16 %v2250
    %v4091 = vunpack.c.l.b16 %v2251
    %v4092 = vunpack.c.h.b16 %v2251
    %v4093 = vunpack.c.l.b16 %v2252
    %v4094 = vunpack.c.h.b16 %v2252
    %v4095 = vunpack.c.l.b16 %v2253
    %v4096 = vunpack.c.h.b16 %v2253
    %v4097 = vunpack.c.l.b16 %v2254
    %v4098 = vunpack.c.h.b16 %v2254
    %v4099 = vunpack.c.l.b16 %v2255
    %v4100 = vunpack.c.h.b16 %v2255
    %v4101 = vunpack.c.l.b16 %v2256
    %v4102 = vunpack.c.h.b16 %v2256
    %v4103 = vunpack.c.l.b16 %v2257
    %v4104 = vunpack.c.h.b16 %v2257
    %v4105 = vunpack.c.l.b16 %v2258
    %v4106 = vunpack.c.h.b16 %v2258
    %v4107 = vunpack.c.l.b16 %v2259
    %v4108 = vunpack.c.h.b16 %v2259
    %v4109 = vunpack.c.l.b16 %v2260
    %v4110 = vunpack.c.h.b16 %v2260
    %v4111 = vunpack.c.l.b16 %v2261
    %v4112 = vunpack.c.h.b16 %v2261
    %v4113 = vunpack.c.l.b16 %v2262
    %v4114 = vunpack.c.h.b16 %v2262
    %v4115 = vunpack.c.l.b16 %v2263
    %v4116 = vunpack.c.h.b16 %v2263
    %v4117 = vunpack.c.l.b16 %v2264
    %v4118 = vunpack.c.h.b16 %v2264
    %v4119 = vunpack.c.l.b16 %v2265
    %v4120 = vunpack.c.h.b16 %v2265
    %v4121 = vunpack.c.l.b16 %v2266
    %v4122 = vunpack.c.h.b16 %v2266
    %v4123 = vunpack.c.l.b16 %v2267
    %v4124 = vunpack.c.h.b16 %v2267
    %v4125 = vunpack.c.l.b16 %v2268
    %v4126 = vunpack.c.h.b16 %v2268
    %v4127 = vunpack.c.l.b16 %v2269
    %v4128 = vunpack.c.h.b16 %v2269
    %v4129 = vunpack.c.l.b16 %v2270
    %v4130 = vunpack.c.h.b16 %v2270
    %v4131 = vunpack.c.l.b16 %v2271
    %v4132 = vunpack.c.h.b16 %v2271
    %v4133 = vunpack.c.l.b16 %v2272
    %v4134 = vunpack.c.h.b16 %v2272
    %v4135 = vunpack.c.l.b16 %v2273
    %v4136 = vunpack.c.h.b16 %v2273
    %v4137 = vunpack.c.l.b16 %v2274
    %v4138 = vunpack.c.h.b16 %v2274
    %v4139 = vunpack.c.l.b16 %v2275
    %v4140 = vunpack.c.h.b16 %v2275
    %v4141 = vunpack.c.l.b16 %v2276
    %v4142 = vunpack.c.h.b16 %v2276
    %v4143 = vunpack.c.l.b16 %v2277
    %v4144 = vunpack.c.h.b16 %v2277
    %v4145 = vunpack.c.l.b16 %v2278
    %v4146 = vunpack.c.h.b16 %v2278
    %v4147 = vunpack.c.l.b16 %v2279
    %v4148 = vunpack.c.h.b16 %v2279
    %v4149 = vunpack.c.l.b16 %v2280
    %v4150 = vunpack.c.h.b16 %v2280
    %v4151 = vunpack.c.l.b16 %v2281
    %v4152 = vunpack.c.h.b16 %v2281
    %v4153 = vunpack.c.l.b16 %v2282
    %v4154 = vunpack.c.h.b16 %v2282
    %v4155 = vunpack.c.l.b16 %v2283
    %v4156 = vunpack.c.h.b16 %v2283
    %v4157 = vunpack.c.l.b16 %v2284
    %v4158 = vunpack.c.h.b16 %v2284
    %v4159 = vunpack.c.l.b16 %v2285
    %v4160 = vunpack.c.h.b16 %v2285
    %v4161 = vunpack.c.l.b16 %v2286
    %v4162 = vunpack.c.h.b16 %v2286
    %v4163 = vunpack.c.l.b16 %v2287
    %v4164 = vunpack.c.h.b16 %v2287
    %v4165 = vunpack.c.l.b16 %v2288
    %v4166 = vunpack.c.h.b16 %v2288
    %v4167 = vunpack.c.l.b16 %v2289
    %v4168 = vunpack.c.h.b16 %v2289
    %v4169 = vunpack.c.l.b16 %v2290
    %v4170 = vunpack.c.h.b16 %v2290
    %v4171 = vunpack.c.l.b16 %v2291
    %v4172 = vunpack.c.h.b16 %v2291
    %v4173 = vunpack.c.l.b16 %v2292
    %v4174 = vunpack.c.h.b16 %v2292
    %v4175 = vunpack.c.l.b16 %v2293
    %v4176 = vunpack.c.h.b16 %v2293
    %v4177 = vunpack.c.l.b16 %v2294
    %v4178 = vunpack.c.h.b16 %v2294
    %v4179 = vunpack.c.l.b16 %v2295
    %v4180 = vunpack.c.h.b16 %v2295
    %v4181 = vunpack.c.l.b16 %v2296
    %v4182 = vunpack.c.h.b16 %v2296
    %v4183 = vunpack.c.l.b16 %v2297
    %v4184 = vunpack.c.h.b16 %v2297
    %v4185 = vunpack.c.l.b16 %v2298
    %v4186 = vunpack.c.h.b16 %v2298
    %v4187 = vunpack.c.l.b16 %v2299
    %v4188 = vunpack.c.h.b16 %v2299
    %v4189 = vunpack.c.l.b16 %v2300
    %v4190 = vunpack.c.h.b16 %v2300
    %v4191 = vunpack.c.l.b16 %v2301
    %v4192 = vunpack.c.h.b16 %v2301
    %v4193 = vunpack.c.l.b16 %v2302
    %v4194 = vunpack.c.h.b16 %v2302
    %v4195 = vunpack.c.l.b16 %v2303
    %v4196 = vunpack.c.h.b16 %v2303
    %v4197 = vunpack.c.l.b16 %v2304
    %v4198 = vunpack.c.h.b16 %v2304
    %v4199 = vunpack.c.l.b16 %v2305
    %v4200 = vunpack.c.h.b16 %v2305
    %v4201 = vunpack.c.l.b16 %v2306
    %v4202 = vunpack.c.h.b16 %v2306
    %v4203 = vunpack.c.l.b16 %v2307
    %v4204 = vunpack.c.h.b16 %v2307
    %v4205 = vunpack.c.l.b16 %v2308
    %v4206 = vunpack.c.h.b16 %v2308
    %v4207 = vunpack.c.l.b16 %v2309
    %v4208 = vunpack.c.h.b16 %v2309
    %v4209 = vunpack.c.l.b16 %v2310
    %v4210 = vunpack.c.h.b16 %v2310
    %v4211 = vunpack.c.l.b16 %v2311
    %v4212 = vunpack.c.h.b16 %v2311
    %v4213 = vunpack.c.l.b16 %v2312
    %v4214 = vunpack.c.h.b16 %v2312
    %v4215 = vunpack.c.l.b16 %v2313
    %v4216 = vunpack.c.h.b16 %v2313
    %v4217 = vunpack.c.l.b16 %v2314
    %v4218 = vunpack.c.h.b16 %v2314
    %v4219 = vunpack.c.l.b16 %v2315
    %v4220 = vunpack.c.h.b16 %v2315
    %v4221 = vunpack.c.l.b16 %v2316
    %v4222 = vunpack.c.h.b16 %v2316
    %v4223 = vunpack.c.l.b16 %v2317
    %v4224 = vunpack.c.h.b16 %v2317
    %v4225 = vunpack.c.l.b16 %v2318
    %v4226 = vunpack.c.h.b16 %v2318
    %v4227 = vunpack.c.l.b16 %v2319
    %v4228 = vunpack.c.h.b16 %v2319
    %v4229 = vunpack.c.l.b16 %v2320
    %v4230 = vunpack.c.h.b16 %v2320
    %v4231 = vunpack.c.l.b16 %v2321
    %v4232 = vunpack.c.h.b16 %v2321
    %v4233 = vunpack.c.l.b16 %v2322
    %v4234 = vunpack.c.h.b16 %v2322
    %v4235 = vunpack.c.l.b16 %v2323
    %v4236 = vunpack.c.h.b16 %v2323
    %v4237 = vunpack.c.l.b16 %v2324
    %v4238 = vunpack.c.h.b16 %v2324
    %v4239 = vunpack.c.l.b16 %v2325
    %v4240 = vunpack.c.h.b16 %v2325
    %v4241 = vunpack.c.l.b16 %v2326
    %v4242 = vunpack.c.h.b16 %v2326
    %v4243 = vunpack.c.l.b16 %v2327
    %v4244 = vunpack.c.h.b16 %v2327
    %v4245 = vunpack.c.l.b16 %v2328
    %v4246 = vunpack.c.h.b16 %v2328
    %v4247 = vunpack.c.l.b16 %v2329
    %v4248 = vunpack.c.h.b16 %v2329
    %v4249 = vunpack.c.l.b16 %v2330
    %v4250 = vunpack.c.h.b16 %v2330
    %v4251 = vunpack.c.l.b16 %v2331
    %v4252 = vunpack.c.h.b16 %v2331
    %v4253 = vunpack.c.l.b16 %v2332
    %v4254 = vunpack.c.h.b16 %v2332
    %v4255 = vunpack.c.l.b16 %v2333
    %v4256 = vunpack.c.h.b16 %v2333
    %v4257 = vunpack.c.l.b16 %v2334
    %v4258 = vunpack.c.h.b16 %v2334
    %v4259 = vunpack.c.l.b16 %v2335
    %v4260 = vunpack.c.h.b16 %v2335
    %v4261 = vunpack.c.l.b16 %v2336
    %v4262 = vunpack.c.h.b16 %v2336
    %v4263 = vunpack.c.l.b16 %v2337
    %v4264 = vunpack.c.h.b16 %v2337
    %v4265 = vunpack.c.l.b16 %v2338
    %v4266 = vunpack.c.h.b16 %v2338
    %v4267 = vunpack.c.l.b16 %v2339
    %v4268 = vunpack.c.h.b16 %v2339
    %v4269 = vunpack.c.l.b16 %v2340
    %v4270 = vunpack.c.h.b16 %v2340
    %v4271 = vunpack.c.l.b16 %v2341
    %v4272 = vunpack.c.h.b16 %v2341
    %v4273 = vunpack.c.l.b16 %v2342
    %v4274 = vunpack.c.h.b16 %v2342
    %v4275 = vunpack.c.l.b16 %v2343
    %v4276 = vunpack.c.h.b16 %v2343
    %v4277 = vunpack.c.l.b16 %v2344
    %v4278 = vunpack.c.h.b16 %v2344
    %v4279 = vunpack.c.l.b16 %v2345
    %v4280 = vunpack.c.h.b16 %v2345
    %v4281 = vunpack.c.l.b16 %v2346
    %v4282 = vunpack.c.h.b16 %v2346
    %v4283 = vunpack.c.l.b16 %v2347
    %v4284 = vunpack.c.h.b16 %v2347
    %v4285 = vunpack.c.l.b16 %v2348
    %v4286 = vunpack.c.h.b16 %v2348
    %v4287 = vunpack.c.l.b16 %v2349
    %v4288 = vunpack.c.h.b16 %v2349
    %v4289 = vunpack.c.l.b16 %v2350
    %v4290 = vunpack.c.h.b16 %v2350
    %v4291 = vunpack.c.l.b16 %v2351
    %v4292 = vunpack.c.h.b16 %v2351
    %v4293 = vunpack.c.l.b16 %v2352
    %v4294 = vunpack.c.h.b16 %v2352
    %v4295 = vunpack.c.l.b16 %v2353
    %v4296 = vunpack.c.h.b16 %v2353
    %v4297 = vunpack.c.l.b16 %v2354
    %v4298 = vunpack.c.h.b16 %v2354
    %v4299 = vunpack.c.l.b16 %v2355
    %v4300 = vunpack.c.h.b16 %v2355
    %v4301 = vunpack.c.l.b16 %v2356
    %v4302 = vunpack.c.h.b16 %v2356
    %v4303 = vunpack.c.l.b16 %v2357
    %v4304 = vunpack.c.h.b16 %v2357
    %v4305 = vunpack.c.l.b16 %v2358
    %v4306 = vunpack.c.h.b16 %v2358
    %v4307 = vunpack.c.l.b16 %v2359
    %v4308 = vunpack.c.h.b16 %v2359
    %v4309 = vunpack.c.l.b16 %v2360
    %v4310 = vunpack.c.h.b16 %v2360
    %v4311 = vunpack.c.l.b16 %v2361
    %v4312 = vunpack.c.h.b16 %v2361
    %v4313 = vunpack.c.l.b16 %v2362
    %v4314 = vunpack.c.h.b16 %v2362
    %v4315 = vunpack.c.l.b16 %v2363
    %v4316 = vunpack.c.h.b16 %v2363
    %v4317 = vunpack.c.l.b16 %v2364
    %v4318 = vunpack.c.h.b16 %v2364
    %v4319 = vunpack.c.l.b16 %v2365
    %v4320 = vunpack.c.h.b16 %v2365
    %v4321 = vunpack.c.l.b16 %v2366
    %v4322 = vunpack.c.h.b16 %v2366
    %v4323 = vunpack.c.l.b16 %v2367
    %v4324 = vunpack.c.h.b16 %v2367
    %v4325 = vunpack.c.l.b16 %v2368
    %v4326 = vunpack.c.h.b16 %v2368
    %v4327 = vunpack.c.l.b16 %v2369
    %v4328 = vunpack.c.h.b16 %v2369
    %v4329 = vunpack.c.l.b16 %v2370
    %v4330 = vunpack.c.h.b16 %v2370
    %v4331 = vunpack.c.l.b16 %v2371
    %v4332 = vunpack.c.h.b16 %v2371
    %v4333 = vunpack.c.l.b16 %v2372
    %v4334 = vunpack.c.h.b16 %v2372
    %v4335 = vunpack.c.l.b16 %v2373
    %v4336 = vunpack.c.h.b16 %v2373
    %v4337 = vunpack.c.l.b16 %v2374
    %v4338 = vunpack.c.h.b16 %v2374
    %v4339 = vunpack.c.l.b16 %v2375
    %v4340 = vunpack.c.h.b16 %v2375
    %v4341 = vunpack.c.l.b16 %v2376
    %v4342 = vunpack.c.h.b16 %v2376
    %v4343 = vunpack.c.l.b16 %v2377
    %v4344 = vunpack.c.h.b16 %v2377
    %v4345 = vunpack.c.l.b16 %v2378
    %v4346 = vunpack.c.h.b16 %v2378
    %v4347 = vunpack.c.l.b16 %v2379
    %v4348 = vunpack.c.h.b16 %v2379
    %v4349 = vunpack.c.l.b16 %v2380
    %v4350 = vunpack.c.h.b16 %v2380
    %v4351 = vunpack.c.l.b16 %v2381
    %v4352 = vunpack.c.h.b16 %v2381
    %v4353 = vunpack.c.l.b16 %v2382
    %v4354 = vunpack.c.h.b16 %v2382
    %v4355 = vunpack.c.l.b16 %v2383
    %v4356 = vunpack.c.h.b16 %v2383
    %v4357 = vunpack.c.l.b16 %v2384
    %v4358 = vunpack.c.h.b16 %v2384
    %v4359 = vunpack.c.l.b16 %v2385
    %v4360 = vunpack.c.h.b16 %v2385
    %v4361 = vunpack.c.l.b16 %v2386
    %v4362 = vunpack.c.h.b16 %v2386
    %v4363 = vunpack.c.l.b16 %v2387
    %v4364 = vunpack.c.h.b16 %v2387
    %v4365 = vunpack.c.l.b16 %v2388
    %v4366 = vunpack.c.h.b16 %v2388
    %v4367 = vunpack.c.l.b16 %v2389
    %v4368 = vunpack.c.h.b16 %v2389
    %v4369 = vunpack.c.l.b16 %v2390
    %v4370 = vunpack.c.h.b16 %v2390
    %v4371 = vunpack.c.l.b16 %v2391
    %v4372 = vunpack.c.h.b16 %v2391
    %v4373 = vunpack.c.l.b16 %v2392
    %v4374 = vunpack.c.h.b16 %v2392
    %v4375 = vunpack.c.l.b16 %v2393
    %v4376 = vunpack.c.h.b16 %v2393
    %v4377 = vunpack.c.l.b16 %v2394
    %v4378 = vunpack.c.h.b16 %v2394
    %v4379 = vunpack.c.l.b16 %v2395
    %v4380 = vunpack.c.h.b16 %v2395
    %v4381 = vunpack.c.l.b16 %v2396
    %v4382 = vunpack.c.h.b16 %v2396
    %v4383 = vunpack.c.l.b16 %v2397
    %v4384 = vunpack.c.h.b16 %v2397
    %v4385 = vunpack.c.l.b16 %v2398
    %v4386 = vunpack.c.h.b16 %v2398
    %v4387 = vunpack.c.l.b16 %v2399
    %v4388 = vunpack.c.h.b16 %v2399
    %v4389 = vunpack.c.l.b16 %v2400
    %v4390 = vunpack.c.h.b16 %v2400
    %v4391 = vunpack.c.l.b16 %v2401
    %v4392 = vunpack.c.h.b16 %v2401
    %v4393 = vunpack.c.l.b16 %v2402
    %v4394 = vunpack.c.h.b16 %v2402
    %v4395 = vunpack.c.l.b16 %v2403
    %v4396 = vunpack.c.h.b16 %v2403
    %v4397 = vunpack.c.l.b16 %v2404
    %v4398 = vunpack.c.h.b16 %v2404
    %v4399 = vunpack.c.l.b16 %v2405
    %v4400 = vunpack.c.h.b16 %v2405
    %v4401 = vunpack.c.l.b16 %v2406
    %v4402 = vunpack.c.h.b16 %v2406
    %v4403 = vunpack.c.l.b16 %v2407
    %v4404 = vunpack.c.h.b16 %v2407
    %v4405 = vunpack.c.l.b16 %v2408
    %v4406 = vunpack.c.h.b16 %v2408
    %v4407 = vunpack.c.l.b16 %v2409
    %v4408 = vunpack.c.h.b16 %v2409
    %v4409 = vunpack.c.l.b16 %v2410
    %v4410 = vunpack.c.h.b16 %v2410
    %v4411 = vunpack.c.l.b16 %v2411
    %v4412 = vunpack.c.h.b16 %v2411
    %v4413 = vunpack.c.l.b16 %v2412
    %v4414 = vunpack.c.h.b16 %v2412
    %v4415 = vunpack.c.l.b16 %v2413
    %v4416 = vunpack.c.h.b16 %v2413
    %v4417 = vunpack.c.l.b16 %v2414
    %v4418 = vunpack.c.h.b16 %v2414
    %v4419 = vunpack.c.l.b16 %v2415
    %v4420 = vunpack.c.h.b16 %v2415
    %v4421 = vunpack.c.l.b16 %v2416
    %v4422 = vunpack.c.h.b16 %v2416
    %v4423 = vunpack.c.l.b16 %v2417
    %v4424 = vunpack.c.h.b16 %v2417
    %v4425 = vunpack.c.l.b16 %v2418
    %v4426 = vunpack.c.h.b16 %v2418
    %v4427 = vunpack.c.l.b16 %v2419
    %v4428 = vunpack.c.h.b16 %v2419
    %v4429 = vunpack.c.l.b16 %v2420
    %v4430 = vunpack.c.h.b16 %v2420
    %v4431 = vunpack.c.l.b16 %v2421
    %v4432 = vunpack.c.h.b16 %v2421
    %v4433 = vunpack.c.l.b16 %v2422
    %v4434 = vunpack.c.h.b16 %v2422
    %v4435 = vunpack.c.l.b16 %v2423
    %v4436 = vunpack.c.h.b16 %v2423
    %v4437 = vunpack.c.l.b16 %v2424
    %v4438 = vunpack.c.h.b16 %v2424
    %v4439 = vunpack.c.l.b16 %v2425
    %v4440 = vunpack.c.h.b16 %v2425
    %v4441 = vunpack.c.l.b16 %v2426
    %v4442 = vunpack.c.h.b16 %v2426
    %v4443 = vunpack.c.l.b16 %v2427
    %v4444 = vunpack.c.h.b16 %v2427
    %v4445 = vunpack.c.l.b16 %v2428
    %v4446 = vunpack.c.h.b16 %v2428
    %v4447 = vunpack.c.l.b16 %v2429
    %v4448 = vunpack.c.h.b16 %v2429
    %v4449 = vunpack.c.l.b16 %v2430
    %v4450 = vunpack.c.h.b16 %v2430
    %v4451 = vunpack.c.l.b16 %v2431
    %v4452 = vunpack.c.h.b16 %v2431
    %v4453 = vunpack.c.l.b16 %v2432
    %v4454 = vunpack.c.h.b16 %v2432
    %v4455 = vunpack.c.l.b16 %v2433
    %v4456 = vunpack.c.h.b16 %v2433
    %v4457 = vunpack.c.l.b16 %v2434
    %v4458 = vunpack.c.h.b16 %v2434
    %v4459 = vunpack.c.l.b16 %v2435
    %v4460 = vunpack.c.h.b16 %v2435
    %v4461 = vunpack.c.l.b16 %v2436
    %v4462 = vunpack.c.h.b16 %v2436
    %v4463 = vunpack.c.l.b16 %v2437
    %v4464 = vunpack.c.h.b16 %v2437
    %v4465 = vunpack.c.l.b16 %v2438
    %v4466 = vunpack.c.h.b16 %v2438
    %v4467 = vunpack.c.l.b16 %v2439
    %v4468 = vunpack.c.h.b16 %v2439
    %v4469 = vunpack.c.l.b16 %v2440
    %v4470 = vunpack.c.h.b16 %v2440
    %v4471 = vunpack.c.l.b16 %v2441
    %v4472 = vunpack.c.h.b16 %v2441
    %v4473 = vunpack.c.l.b16 %v2442
    %v4474 = vunpack.c.h.b16 %v2442
    %v4475 = vunpack.c.l.b16 %v2443
    %v4476 = vunpack.c.h.b16 %v2443
    %v4477 = vunpack.c.l.b16 %v2444
    %v4478 = vunpack.c.h.b16 %v2444
    %v4479 = vunpack.c.l.b16 %v2445
    %v4480 = vunpack.c.h.b16 %v2445
    %v4481 = vunpack.c.l.b16 %v2446
    %v4482 = vunpack.c.h.b16 %v2446
    %v4483 = vunpack.c.l.b16 %v2447
    %v4484 = vunpack.c.h.b16 %v2447
    %v4485 = vunpack.c.l.b16 %v2448
    %v4486 = vunpack.c.h.b16 %v2448
    %v4487 = vunpack.c.l.b16 %v2449
    %v4488 = vunpack.c.h.b16 %v2449
    %v4489 = vunpack.c.l.b16 %v2450
    %v4490 = vunpack.c.h.b16 %v2450
    %v4491 = vunpack.c.l.b16 %v2451
    %v4492 = vunpack.c.h.b16 %v2451
    %v4493 = vunpack.c.l.b16 %v2452
    %v4494 = vunpack.c.h.b16 %v2452
    %v4495 = vunpack.c.l.b16 %v2453
    %v4496 = vunpack.c.h.b16 %v2453
    %v4497 = vunpack.c.l.b16 %v2454
    %v4498 = vunpack.c.h.b16 %v2454
    %v4499 = vunpack.c.l.b16 %v2455
    %v4500 = vunpack.c.h.b16 %v2455
    %v4501 = vunpack.c.l.b16 %v2456
    %v4502 = vunpack.c.h.b16 %v2456
    %v4503 = vunpack.c.l.b16 %v2457
    %v4504 = vunpack.c.h.b16 %v2457
    %v4505 = vunpack.c.l.b16 %v2458
    %v4506 = vunpack.c.h.b16 %v2458
    %v4507 = vunpack.c.l.b16 %v2459
    %v4508 = vunpack.c.h.b16 %v2459
    %v4509 = vunpack.c.l.b16 %v2460
    %v4510 = vunpack.c.h.b16 %v2460
    %v4511 = vunpack.c.l.b16 %v2461
    %v4512 = vunpack.c.h.b16 %v2461
    %v4513 = vunpack.c.l.b16 %v2462
    %v4514 = vunpack.c.h.b16 %v2462
    %v4515 = vunpack.c.l.b16 %v2463
    %v4516 = vunpack.c.h.b16 %v2463
    %v4517 = vunpack.c.l.b16 %v2464
    %v4518 = vunpack.c.h.b16 %v2464
    %v4519 = vunpack.c.l.b16 %v2465
    %v4520 = vunpack.c.h.b16 %v2465
    %v4521 = vunpack.c.l.b16 %v2466
    %v4522 = vunpack.c.h.b16 %v2466
    %v4523 = vunpack.c.l.b16 %v2467
    %v4524 = vunpack.c.h.b16 %v2467
    %v4525 = vunpack.c.l.b16 %v2468
    %v4526 = vunpack.c.h.b16 %v2468
    %v4527 = vunpack.c.l.b16 %v2469
    %v4528 = vunpack.c.h.b16 %v2469
    %v4529 = vunpack.c.l.b16 %v2470
    %v4530 = vunpack.c.h.b16 %v2470
    %v4531 = vunpack.c.l.b16 %v2471
    %v4532 = vunpack.c.h.b16 %v2471
    %v4533 = vunpack.c.l.b16 %v2472
    %v4534 = vunpack.c.h.b16 %v2472
    %v4535 = vunpack.c.l.b16 %v2473
    %v4536 = vunpack.c.h.b16 %v2473
    %v4537 = vunpack.c.l.b16 %v2474
    %v4538 = vunpack.c.h.b16 %v2474
    %v4539 = vunpack.c.l.b16 %v2475
    %v4540 = vunpack.c.h.b16 %v2475
    %v4541 = vunpack.c.l.b16 %v2476
    %v4542 = vunpack.c.h.b16 %v2476
    %v4543 = vunpack.c.l.b16 %v2477
    %v4544 = vunpack.c.h.b16 %v2477
    %v4545 = vunpack.c.l.b16 %v2478
    %v4546 = vunpack.c.h.b16 %v2478
    %v4547 = vunpack.c.l.b16 %v2479
    %v4548 = vunpack.c.h.b16 %v2479
    %v4549 = vunpack.c.l.b16 %v2480
    %v4550 = vunpack.c.h.b16 %v2480
    %v4551 = vunpack.c.l.b16 %v2481
    %v4552 = vunpack.c.h.b16 %v2481
    %v4553 = vunpack.c.l.b16 %v2482
    %v4554 = vunpack.c.h.b16 %v2482
    %v4555 = vunpack.c.l.b16 %v2483
    %v4556 = vunpack.c.h.b16 %v2483
    %v4557 = vunpack.c.l.b16 %v2484
    %v4558 = vunpack.c.h.b16 %v2484
    %v4559 = vunpack.c.l.b16 %v2485
    %v4560 = vunpack.c.h.b16 %v2485
    %v4561 = vunpack.c.l.b16 %v2486
    %v4562 = vunpack.c.h.b16 %v2486
    %v4563 = vunpack.c.l.b16 %v2487
    %v4564 = vunpack.c.h.b16 %v2487
    %v4565 = vunpack.c.l.b16 %v2488
    %v4566 = vunpack.c.h.b16 %v2488
    %v4567 = vunpack.c.l.b16 %v2489
    %v4568 = vunpack.c.h.b16 %v2489
    %v4569 = vunpack.c.l.b16 %v2490
    %v4570 = vunpack.c.h.b16 %v2490
    %v4571 = vunpack.c.l.b16 %v2491
    %v4572 = vunpack.c.h.b16 %v2491
    %v4573 = vunpack.c.l.b16 %v2492
    %v4574 = vunpack.c.h.b16 %v2492
    %v4575 = vunpack.c.l.b16 %v2493
    %v4576 = vunpack.c.h.b16 %v2493
    %v4577 = vunpack.c.l.b16 %v2494
    %v4578 = vunpack.c.h.b16 %v2494
    %v4579 = vunpack.c.l.b16 %v2495
    %v4580 = vunpack.c.h.b16 %v2495
    %v4581 = vunpack.c.l.b16 %v2496
    %v4582 = vunpack.c.h.b16 %v2496
    %v4583 = vunpack.c.l.b16 %v2497
    %v4584 = vunpack.c.h.b16 %v2497
    %v4585 = vunpack.c.l.b16 %v2498
    %v4586 = vunpack.c.h.b16 %v2498
    %v4587 = vunpack.c.l.b16 %v2499
    %v4588 = vunpack.c.h.b16 %v2499
    %v4589 = vunpack.c.l.b16 %v2500
    %v4590 = vunpack.c.h.b16 %v2500
    %v4591 = vunpack.c.l.b16 %v2501
    %v4592 = vunpack.c.h.b16 %v2501
    %v4593 = vunpack.c.l.b16 %v2502
    %v4594 = vunpack.c.h.b16 %v2502
    %v4595 = vunpack.c.l.b16 %v2503
    %v4596 = vunpack.c.h.b16 %v2503
    %v4597 = vunpack.c.l.b16 %v2504
    %v4598 = vunpack.c.h.b16 %v2504
    %v4599 = vunpack.c.l.b16 %v2505
    %v4600 = vunpack.c.h.b16 %v2505
    %v4601 = vunpack.c.l.b16 %v2506
    %v4602 = vunpack.c.h.b16 %v2506
    %v4603 = vunpack.c.l.b16 %v2507
    %v4604 = vunpack.c.h.b16 %v2507
    %v4605 = vunpack.c.l.b16 %v2508
    %v4606 = vunpack.c.h.b16 %v2508
    %v4607 = vunpack.c.l.b16 %v2509
    %v4608 = vunpack.c.h.b16 %v2509
    %v4609 = vunpack.c.l.b16 %v2510
    %v4610 = vunpack.c.h.b16 %v2510
    %v4611 = vunpack.c.l.b16 %v2511
    %v4612 = vunpack.c.h.b16 %v2511
    %v4613 = vunpack.c.l.b16 %v2512
    %v4614 = vunpack.c.h.b16 %v2512
    %v4615 = vunpack.c.l.b16 %v2513
    %v4616 = vunpack.c.h.b16 %v2513
    %v4617 = vunpack.c.l.b16 %v2514
    %v4618 = vunpack.c.h.b16 %v2514
    %v4619 = vunpack.c.l.b16 %v2515
    %v4620 = vunpack.c.h.b16 %v2515
    %v4621 = vunpack.c.l.b16 %v2516
    %v4622 = vunpack.c.h.b16 %v2516
    %v4623 = vunpack.c.l.b16 %v2517
    %v4624 = vunpack.c.h.b16 %v2517
    %v4625 = vunpack.c.l.b16 %v2518
    %v4626 = vunpack.c.h.b16 %v2518
    %v4627 = vunpack.c.l.b16 %v2519
    %v4628 = vunpack.c.h.b16 %v2519
    %v4629 = vunpack.c.l.b16 %v2520
    %v4630 = vunpack.c.h.b16 %v2520
    %v4631 = vunpack.c.l.b16 %v2521
    %v4632 = vunpack.c.h.b16 %v2521
    %v4633 = vunpack.c.l.b16 %v2522
    %v4634 = vunpack.c.h.b16 %v2522
    %v4635 = vunpack.c.l.b16 %v2523
    %v4636 = vunpack.c.h.b16 %v2523
    %v4637 = vunpack.c.l.b16 %v2524
    %v4638 = vunpack.c.h.b16 %v2524
    %v4639 = vunpack.c.l.b16 %v2525
    %v4640 = vunpack.c.h.b16 %v2525
    %v4641 = vunpack.c.l.b16 %v2526
    %v4642 = vunpack.c.h.b16 %v2526
    %v4643 = vunpack.c.l.b16 %v2527
    %v4644 = vunpack.c.h.b16 %v2527
    %v4645 = vunpack.c.l.b16 %v2528
    %v4646 = vunpack.c.h.b16 %v2528
    %v4647 = vunpack.c.l.b16 %v2529
    %v4648 = vunpack.c.h.b16 %v2529
    %v4649 = vunpack.c.l.b16 %v2530
    %v4650 = vunpack.c.h.b16 %v2530
    %v4651 = vunpack.c.l.b16 %v2531
    %v4652 = vunpack.c.h.b16 %v2531
    %v4653 = vunpack.c.l.b16 %v2532
    %v4654 = vunpack.c.h.b16 %v2532
    %v4655 = vunpack.c.l.b16 %v2533
    %v4656 = vunpack.c.h.b16 %v2533
    %v4657 = vunpack.c.l.b16 %v2534
    %v4658 = vunpack.c.h.b16 %v2534
    %v4659 = vunpack.c.l.b16 %v2535
    %v4660 = vunpack.c.h.b16 %v2535
    %v4661 = vunpack.c.l.b16 %v2536
    %v4662 = vunpack.c.h.b16 %v2536
    %v4663 = vunpack.c.l.b16 %v2537
    %v4664 = vunpack.c.h.b16 %v2537
    %v4665 = vunpack.c.l.b16 %v2538
    %v4666 = vunpack.c.h.b16 %v2538
    %v4667 = vunpack.c.l.b16 %v2539
    %v4668 = vunpack.c.h.b16 %v2539
    %v4669 = vunpack.c.l.b16 %v2540
    %v4670 = vunpack.c.h.b16 %v2540
    %v4671 = vunpack.c.l.b16 %v2541
    %v4672 = vunpack.c.h.b16 %v2541
    %v4673 = vunpack.c.l.b16 %v2542
    %v4674 = vunpack.c.h.b16 %v2542
    %v4675 = vunpack.c.l.b16 %v2543
    %v4676 = vunpack.c.h.b16 %v2543
    %v4677 = vunpack.c.l.b16 %v2544
    %v4678 = vunpack.c.h.b16 %v2544
    %v4679 = vunpack.c.l.b16 %v2545
    %v4680 = vunpack.c.h.b16 %v2545
    %v4681 = vunpack.c.l.b16 %v2546
    %v4682 = vunpack.c.h.b16 %v2546
    %v4683 = vunpack.c.l.b16 %v2547
    %v4684 = vunpack.c.h.b16 %v2547
    %v4685 = vunpack.c.l.b16 %v2548
    %v4686 = vunpack.c.h.b16 %v2548
    %v4687 = vunpack.c.l.b16 %v2549
    %v4688 = vunpack.c.h.b16 %v2549
    %v4689 = vunpack.c.l.b16 %v2550
    %v4690 = vunpack.c.h.b16 %v2550
    %v4691 = vunpack.c.l.b16 %v2551
    %v4692 = vunpack.c.h.b16 %v2551
    %v4693 = vunpack.c.l.b16 %v2552
    %v4694 = vunpack.c.h.b16 %v2552
    %v4695 = vunpack.c.l.b16 %v2553
    %v4696 = vunpack.c.h.b16 %v2553
    %v4697 = vunpack.c.l.b16 %v2554
    %v4698 = vunpack.c.h.b16 %v2554
    %v4699 = vunpack.c.l.b16 %v2555
    %v4700 = vunpack.c.h.b16 %v2555
    %v4701 = vunpack.c.l.b16 %v2556
    %v4702 = vunpack.c.h.b16 %v2556
    %v4703 = vunpack.c.l.b16 %v2557
    %v4704 = vunpack.c.h.b16 %v2557
    %v4705 = vunpack.c.l.b16 %v2558
    %v4706 = vunpack.c.h.b16 %v2558
    %v4707 = vunpack.c.l.b16 %v2559
    %v4708 = vunpack.c.h.b16 %v2559
    %v4709 = vunpack.c.l.b16 %v2560
    %v4710 = vunpack.c.h.b16 %v2560
    %v4711 = vunpack.c.l.b16 %v2561
    %v4712 = vunpack.c.h.b16 %v2561
    %v4713 = vunpack.c.l.b16 %v2562
    %v4714 = vunpack.c.h.b16 %v2562
    %v4715 = vunpack.c.l.b16 %v2563
    %v4716 = vunpack.c.h.b16 %v2563
    %v4717 = vunpack.c.l.b16 %v2564
    %v4718 = vunpack.c.h.b16 %v2564
    %v4719 = vunpack.c.l.b16 %v2565
    %v4720 = vunpack.c.h.b16 %v2565
    %v4721 = vunpack.c.l.b16 %v2566
    %v4722 = vunpack.c.h.b16 %v2566
    %v4723 = vunpack.c.l.b16 %v2567
    %v4724 = vunpack.c.h.b16 %v2567
    %v4725 = vunpack.c.l.b16 %v2568
    %v4726 = vunpack.c.h.b16 %v2568
    %v4727 = vunpack.c.l.b16 %v2569
    %v4728 = vunpack.c.h.b16 %v2569
    %v4729 = vunpack.c.l.b16 %v2570
    %v4730 = vunpack.c.h.b16 %v2570
    %v4731 = vunpack.c.l.b16 %v2571
    %v4732 = vunpack.c.h.b16 %v2571
    %v4733 = vunpack.c.l.b16 %v2572
    %v4734 = vunpack.c.h.b16 %v2572
    %v4735 = vunpack.c.l.b16 %v2573
    %v4736 = vunpack.c.h.b16 %v2573
    %v4737 = vunpack.c.l.b16 %v2574
    %v4738 = vunpack.c.h.b16 %v2574
    %v4739 = vunpack.c.l.b16 %v2575
    %v4740 = vunpack.c.h.b16 %v2575
    %v4741 = vunpack.c.l.b16 %v2576
    %v4742 = vunpack.c.h.b16 %v2576
    %v4743 = vunpack.c.l.b16 %v2577
    %v4744 = vunpack.c.h.b16 %v2577
    %v4745 = vunpack.c.l.b16 %v2578
    %v4746 = vunpack.c.h.b16 %v2578
    %v4747 = vunpack.c.l.b16 %v2579
    %v4748 = vunpack.c.h.b16 %v2579
    %v4749 = vunpack.c.l.b16 %v2580
    %v4750 = vunpack.c.h.b16 %v2580
    %v4751 = vunpack.c.l.b16 %v2581
    %v4752 = vunpack.c.h.b16 %v2581
    %v4753 = vunpack.c.l.b16 %v2582
    %v4754 = vunpack.c.h.b16 %v2582
    %v4755 = vunpack.c.l.b16 %v2583
    %v4756 = vunpack.c.h.b16 %v2583
    %v4757 = vunpack.c.l.b16 %v2584
    %v4758 = vunpack.c.h.b16 %v2584
    %v4759 = vunpack.c.l.b16 %v2585
    %v4760 = vunpack.c.h.b16 %v2585
    %v4761 = vunpack.c.l.b16 %v2586
    %v4762 = vunpack.c.h.b16 %v2586
    %v4763 = vunpack.c.l.b16 %v2587
    %v4764 = vunpack.c.h.b16 %v2587
    %v4765 = vunpack.c.l.b16 %v2588
    %v4766 = vunpack.c.h.b16 %v2588
    %v4767 = vunpack.c.l.b16 %v2589
    %v4768 = vunpack.c.h.b16 %v2589
    %v4769 = vunpack.c.l.b16 %v2590
    %v4770 = vunpack.c.h.b16 %v2590
    %v4771 = vunpack.c.l.b16 %v2591
    %v4772 = vunpack.c.h.b16 %v2591
    %v4773 = vunpack.c.l.b16 %v2592
    %v4774 = vunpack.c.h.b16 %v2592
    %v4775 = vunpack.c.l.b16 %v2593
    %v4776 = vunpack.c.h.b16 %v2593
    %v4777 = vunpack.c.l.b16 %v2594
    %v4778 = vunpack.c.h.b16 %v2594
    %v4779 = vunpack.c.l.b16 %v2595
    %v4780 = vunpack.c.h.b16 %v2595
    %v4781 = vunpack.c.l.b16 %v2596
    %v4782 = vunpack.c.h.b16 %v2596
    %v4783 = vunpack.c.l.b16 %v2597
    %v4784 = vunpack.c.h.b16 %v2597
    %v4785 = vunpack.c.l.b16 %v2598
    %v4786 = vunpack.c.h.b16 %v2598
    %v4787 = vunpack.c.l.b16 %v2599
    %v4788 = vunpack.c.h.b16 %v2599
    %v4789 = vunpack.c.l.b16 %v2600
    %v4790 = vunpack.c.h.b16 %v2600
    %v4791 = vunpack.c.l.b16 %v2601
    %v4792 = vunpack.c.h.b16 %v2601
    %v4793 = vunpack.c.l.b16 %v2602
    %v4794 = vunpack.c.h.b16 %v2602
    %v4795 = vunpack.c.l.b16 %v2603
    %v4796 = vunpack.c.h.b16 %v2603
    %v4797 = vunpack.c.l.b16 %v2604
    %v4798 = vunpack.c.h.b16 %v2604
    %v4799 = vunpack.c.l.b16 %v2605
    %v4800 = vunpack.c.h.b16 %v2605
    %v4801 = vunpack.c.l.b16 %v2606
    %v4802 = vunpack.c.h.b16 %v2606
    %v4803 = vunpack.c.l.b16 %v2607
    %v4804 = vunpack.c.h.b16 %v2607
    %v4805 = vunpack.c.l.b16 %v2608
    %v4806 = vunpack.c.h.b16 %v2608
    %v4807 = vunpack.c.l.b16 %v2609
    %v4808 = vunpack.c.h.b16 %v2609
    %v4809 = vunpack.c.l.b16 %v2610
    %v4810 = vunpack.c.h.b16 %v2610
    %v4811 = vunpack.c.l.b16 %v2611
    %v4812 = vunpack.c.h.b16 %v2611
    %v4813 = vunpack.c.l.b16 %v2612
    %v4814 = vunpack.c.h.b16 %v2612
    %v4815 = vunpack.c.l.b16 %v2613
    %v4816 = vunpack.c.h.b16 %v2613
    %v4817 = vunpack.c.l.b16 %v2614
    %v4818 = vunpack.c.h.b16 %v2614
    %v4819 = vunpack.c.l.b16 %v2615
    %v4820 = vunpack.c.h.b16 %v2615
    %v4821 = vunpack.c.l.b16 %v2616
    %v4822 = vunpack.c.h.b16 %v2616
    %v4823 = vunpack.c.l.b16 %v2617
    %v4824 = vunpack.c.h.b16 %v2617
    %v4825 = vunpack.c.l.b16 %v2618
    %v4826 = vunpack.c.h.b16 %v2618
    %v4827 = vunpack.c.l.b16 %v2619
    %v4828 = vunpack.c.h.b16 %v2619
    %v4829 = vunpack.c.l.b16 %v2620
    %v4830 = vunpack.c.h.b16 %v2620
    %v4831 = vunpack.c.l.b16 %v2621
    %v4832 = vunpack.c.h.b16 %v2621
    %v4833 = vunpack.c.l.b16 %v2622
    %v4834 = vunpack.c.h.b16 %v2622
    %v4835 = vunpack.c.l.b16 %v2623
    %v4836 = vunpack.c.h.b16 %v2623
    %v4837 = vunpack.c.l.b16 %v2624
    %v4838 = vunpack.c.h.b16 %v2624
    %v4839 = vunpack.c.l.b16 %v2625
    %v4840 = vunpack.c.h.b16 %v2625
    %v4841 = vunpack.c.l.b16 %v2626
    %v4842 = vunpack.c.h.b16 %v2626
    %v4843 = vunpack.c.l.b16 %v2627
    %v4844 = vunpack.c.h.b16 %v2627
    %v4845 = vunpack.c.l.b16 %v2628
    %v4846 = vunpack.c.h.b16 %v2628
    %v4847 = vunpack.c.l.b16 %v2629
    %v4848 = vunpack.c.h.b16 %v2629
    %v4849 = vunpack.c.l.b16 %v2630
    %v4850 = vunpack.c.h.b16 %v2630
    %v4851 = vunpack.c.l.b16 %v2631
    %v4852 = vunpack.c.h.b16 %v2631
    %v4853 = vunpack.c.l.b16 %v2632
    %v4854 = vunpack.c.h.b16 %v2632
    %v4855 = vunpack.c.l.b16 %v2633
    %v4856 = vunpack.c.h.b16 %v2633
    %v4857 = vunpack.c.l.b16 %v2634
    %v4858 = vunpack.c.h.b16 %v2634
    %v4859 = vunpack.c.l.b16 %v2635
    %v4860 = vunpack.c.h.b16 %v2635
    %v4861 = vunpack.c.l.b16 %v2636
    %v4862 = vunpack.c.h.b16 %v2636
    %v4863 = vunpack.c.l.b16 %v2637
    %v4864 = vunpack.c.h.b16 %v2637
    %v4865 = vunpack.c.l.b16 %v2638
    %v4866 = vunpack.c.h.b16 %v2638
    %v4867 = vunpack.c.l.b16 %v2639
    %v4868 = vunpack.c.h.b16 %v2639
    %v4869 = vunpack.c.l.b16 %v2640
    %v4870 = vunpack.c.h.b16 %v2640
    %v4871 = vunpack.c.l.b16 %v2641
    %v4872 = vunpack.c.h.b16 %v2641
    %v4873 = vunpack.c.l.b16 %v2642
    %v4874 = vunpack.c.h.b16 %v2642
    %v4875 = vunpack.c.l.b16 %v2643
    %v4876 = vunpack.c.h.b16 %v2643
    %v4877 = vunpack.c.l.b16 %v2644
    %v4878 = vunpack.c.h.b16 %v2644
    %v4879 = vunpack.c.l.b16 %v2645
    %v4880 = vunpack.c.h.b16 %v2645
    %v4881 = vunpack.c.l.b16 %v2646
    %v4882 = vunpack.c.h.b16 %v2646
    %v4883 = vunpack.c.l.b16 %v2647
    %v4884 = vunpack.c.h.b16 %v2647
    %v4885 = vunpack.c.l.b16 %v2648
    %v4886 = vunpack.c.h.b16 %v2648
    %v4887 = vunpack.c.l.b16 %v2649
    %v4888 = vunpack.c.h.b16 %v2649
    %v4889 = vunpack.c.l.b16 %v2650
    %v4890 = vunpack.c.h.b16 %v2650
    %v4891 = vunpack.c.l.b16 %v2651
    %v4892 = vunpack.c.h.b16 %v2651
    %v4893 = vunpack.c.l.b16 %v2652
    %v4894 = vunpack.c.h.b16 %v2652
    %v4895 = vunpack.c.l.b16 %v2653
    %v4896 = vunpack.c.h.b16 %v2653
    %v4897 = vunpack.c.l.b16 %v2654
    %v4898 = vunpack.c.h.b16 %v2654
    %v4899 = vunpack.c.l.b16 %v2655
    %v4900 = vunpack.c.h.b16 %v2655
    %v4901 = vunpack.c.l.b16 %v2656
    %v4902 = vunpack.c.h.b16 %v2656
    %v4903 = vunpack.c.l.b16 %v2657
    %v4904 = vunpack.c.h.b16 %v2657
    %v4905 = vunpack.c.l.b16 %v2658
    %v4906 = vunpack.c.h.b16 %v2658
    %v4907 = vunpack.c.l.b16 %v2659
    %v4908 = vunpack.c.h.b16 %v2659
    %v4909 = vunpack.c.l.b16 %v2660
    %v4910 = vunpack.c.h.b16 %v2660
    %v4911 = vunpack.c.l.b16 %v2661
    %v4912 = vunpack.c.h.b16 %v2661
    %v4913 = vunpack.c.l.b16 %v2662
    %v4914 = vunpack.c.h.b16 %v2662
    %v4915 = vunpack.c.l.b16 %v2663
    %v4916 = vunpack.c.h.b16 %v2663
    %v4917 = vunpack.c.l.b16 %v2664
    %v4918 = vunpack.c.h.b16 %v2664
    %v4919 = vunpack.c.l.b16 %v2665
    %v4920 = vunpack.c.h.b16 %v2665
    %v4921 = vunpack.c.l.b16 %v2666
    %v4922 = vunpack.c.h.b16 %v2666
    %v4923 = vunpack.c.l.b16 %v2667
    %v4924 = vunpack.c.h.b16 %v2667
    %v4925 = vunpack.c.l.b16 %v2668
    %v4926 = vunpack.c.h.b16 %v2668
    %v4927 = vunpack.c.l.b16 %v2669
    %v4928 = vunpack.c.h.b16 %v2669
    %v4929 = vunpack.c.l.b16 %v2670
    %v4930 = vunpack.c.h.b16 %v2670
    %v4931 = vunpack.c.l.b16 %v2671
    %v4932 = vunpack.c.h.b16 %v2671
    %v4933 = vunpack.c.l.b16 %v2672
    %v4934 = vunpack.c.h.b16 %v2672
    %v4935 = vunpack.c.l.b16 %v2673
    %v4936 = vunpack.c.h.b16 %v2673
    %v4937 = vunpack.c.l.b16 %v2674
    %v4938 = vunpack.c.h.b16 %v2674
    %v4939 = vunpack.c.l.b16 %v2675
    %v4940 = vunpack.c.h.b16 %v2675
    %v4941 = vunpack.c.l.b16 %v2676
    %v4942 = vunpack.c.h.b16 %v2676
    %v4943 = vunpack.c.l.b16 %v2677
    %v4944 = vunpack.c.h.b16 %v2677
    %v4945 = vunpack.c.l.b16 %v2678
    %v4946 = vunpack.c.h.b16 %v2678
    %v4947 = vunpack.c.l.b16 %v2679
    %v4948 = vunpack.c.h.b16 %v2679
    %v4949 = vunpack.c.l.b16 %v2680
    %v4950 = vunpack.c.h.b16 %v2680
    %v4951 = vunpack.c.l.b16 %v2681
    %v4952 = vunpack.c.h.b16 %v2681
    %v4953 = vunpack.c.l.b16 %v2682
    %v4954 = vunpack.c.h.b16 %v2682
    %v4955 = vunpack.c.l.b16 %v2683
    %v4956 = vunpack.c.h.b16 %v2683
    %v4957 = vunpack.c.l.b16 %v2684
    %v4958 = vunpack.c.h.b16 %v2684
    %v4959 = vunpack.c.l.b16 %v2685
    %v4960 = vunpack.c.h.b16 %v2685
    %v4961 = vunpack.c.l.b16 %v2686
    %v4962 = vunpack.c.h.b16 %v2686
    %v4963 = vunpack.c.l.b16 %v2687
    %v4964 = vunpack.c.h.b16 %v2687
    %v4965 = vunpack.c.l.b16 %v2688
    %v4966 = vunpack.c.h.b16 %v2688
    %v4967 = vunpack.c.l.b16 %v2689
    %v4968 = vunpack.c.h.b16 %v2689
    %v4969 = vunpack.c.l.b16 %v2690
    %v4970 = vunpack.c.h.b16 %v2690
    %v4971 = vunpack.c.l.b16 %v2691
    %v4972 = vunpack.c.h.b16 %v2691
    %v4973 = vunpack.c.l.b16 %v2692
    %v4974 = vunpack.c.h.b16 %v2692
    %v4975 = vunpack.c.l.b16 %v2693
    %v4976 = vunpack.c.h.b16 %v2693
    %v4977 = vunpack.c.l.b16 %v2694
    %v4978 = vunpack.c.h.b16 %v2694
    %v4979 = vunpack.c.l.b16 %v2695
    %v4980 = vunpack.c.h.b16 %v2695
    %v4981 = vunpack.c.l.b16 %v2696
    %v4982 = vunpack.c.h.b16 %v2696
    %v4983 = vunpack.c.l.b16 %v2697
    %v4984 = vunpack.c.h.b16 %v2697
    %v4985 = vunpack.c.l.b16 %v2698
    %v4986 = vunpack.c.h.b16 %v2698
    %v4987 = vunpack.c.l.b16 %v2699
    %v4988 = vunpack.c.h.b16 %v2699
    %v4989 = vunpack.c.l.b16 %v2700
    %v4990 = vunpack.c.h.b16 %v2700
    %v4991 = vunpack.c.l.b16 %v2701
    %v4992 = vunpack.c.h.b16 %v2701
    %v4993 = vunpack.c.l.b16 %v2702
    %v4994 = vunpack.c.h.b16 %v2702
    %v4995 = vunpack.c.l.b16 %v2703
    %v4996 = vunpack.c.h.b16 %v2703
    %v4997 = vunpack.c.l.b16 %v2704
    %v4998 = vunpack.c.h.b16 %v2704
    %v4999 = vunpack.c.l.b16 %v2705
    %v5000 = vunpack.c.h.b16 %v2705
    %v5001 = vunpack.c.l.b16 %v2706
    %v5002 = vunpack.c.h.b16 %v2706
    %v5003 = vunpack.c.l.b16 %v2707
    %v5004 = vunpack.c.h.b16 %v2707
    %v5005 = vunpack.c.l.b16 %v2708
    %v5006 = vunpack.c.h.b16 %v2708
    %v5007 = vunpack.c.l.b16 %v2709
    %v5008 = vunpack.c.h.b16 %v2709
    %v5009 = vunpack.c.l.b16 %v2710
    %v5010 = vunpack.c.h.b16 %v2710
    %v5011 = vunpack.c.l.b16 %v2711
    %v5012 = vunpack.c.h.b16 %v2711
    %v5013 = vunpack.c.l.b16 %v2712
    %v5014 = vunpack.c.h.b16 %v2712
    %v5015 = vunpack.c.l.b16 %v2713
    %v5016 = vunpack.c.h.b16 %v2713
    %v5017 = vunpack.c.l.b16 %v2714
    %v5018 = vunpack.c.h.b16 %v2714
    %v5019 = vunpack.c.l.b16 %v2715
    %v5020 = vunpack.c.h.b16 %v2715
    %v5021 = vunpack.c.l.b16 %v2716
    %v5022 = vunpack.c.h.b16 %v2716
    %v5023 = vunpack.c.l.b16 %v2717
    %v5024 = vunpack.c.h.b16 %v2717
    %v5025 = vunpack.c.l.b16 %v2718
    %v5026 = vunpack.c.h.b16 %v2718
    %v5027 = vunpack.c.l.b16 %v2719
    %v5028 = vunpack.c.h.b16 %v2719
    %v5029 = vunpack.c.l.b16 %v2720
    %v5030 = vunpack.c.h.b16 %v2720
    %v5031 = vunpack.c.l.b16 %v2721
    %v5032 = vunpack.c.h.b16 %v2721
    %v5033 = vunpack.c.l.b16 %v2722
    %v5034 = vunpack.c.h.b16 %v2722
    %v5035 = vunpack.c.l.b16 %v2723
    %v5036 = vunpack.c.h.b16 %v2723
    %v5037 = vunpack.c.l.b16 %v2724
    %v5038 = vunpack.c.h.b16 %v2724
    %v5039 = vunpack.c.l.b16 %v2725
    %v5040 = vunpack.c.h.b16 %v2725
    %v5041 = vunpack.c.l.b16 %v2726
    %v5042 = vunpack.c.h.b16 %v2726
    %v5043 = vunpack.c.l.b16 %v2727
    %v5044 = vunpack.c.h.b16 %v2727
    %v5045 = vunpack.c.l.b16 %v2728
    %v5046 = vunpack.c.h.b16 %v2728
    %v5047 = vunpack.c.l.b16 %v2729
    %v5048 = vunpack.c.h.b16 %v2729
    %v5049 = vunpack.c.l.b16 %v2730
    %v5050 = vunpack.c.h.b16 %v2730
    %v5051 = vunpack.c.l.b16 %v2731
    %v5052 = vunpack.c.h.b16 %v2731
    %v5053 = vunpack.c.l.b16 %v2732
    %v5054 = vunpack.c.h.b16 %v2732
    %v5055 = vpack.c.b16 %v3527, %v3519
    %v5056 = vpack.c.b16 %v3528, %v3520
    %v5057 = vpack.c.b16 %v3529, %v3521
    %v5058 = vpack.c.b16 %v3530, %v3522
    %v5059 = vpack.c.b16 %v3531, %v3523
    %v5060 = vpack.c.b16 %v3532, %v3524
    %v5061 = vpack.c.b16 %v3533, %v3525
    %v5062 = vpack.c.b16 %v3534, %v3526
    %v5063 = vpack.c.b16 %v3543, %v3535
    %v5064 = vpack.c.b16 %v3544, %v3536
    %v5065 = vpack.c.b16 %v3545, %v3537
    %v5066 = vpack.c.b16 %v3546, %v3538
    %v5067 = vpack.c.b16 %v3547, %v3539
    %v5068 = vpack.c.b16 %v3548, %v3540
    %v5069 = vpack.c.b16 %v3549, %v3541
    %v5070 = vpack.c.b16 %v3550, %v3542
    %v5071 = vpack.c.b16 %v3559, %v3551
    %v5072 = vpack.c.b16 %v3560, %v3552
    %v5073 = vpack.c.b16 %v3561, %v3553
    %v5074 = vpack.c.b16 %v3562, %v3554
    %v5075 = vpack.c.b16 %v3563, %v3555
    %v5076 = vpack.c.b16 %v3564, %v3556
    %v5077 = vpack.c.b16 %v3565, %v3557
    %v5078 = vpack.c.b16 %v3566, %v3558
    %v5079 = vpack.c.b16 %v3575, %v3567
    %v5080 = vpack.c.b16 %v3576, %v3568
    %v5081 = vpack.c.b16 %v3577, %v3569
    %v5082 = vpack.c.b16 %v3578, %v3570
    %v5083 = vpack.c.b16 %v3579, %v3571
    %v5084 = vpack.c.b16 %v3580, %v3572
    %v5085 = vpack.c.b16 %v3581, %v3573
    %v5086 = vpack.c.b16 %v3582, %v3574
    %v5087 = vpack.c.b16 %v3591, %v3583
    %v5088 = vpack.c.b16 %v3592, %v3584
    %v5089 = vpack.c.b16 %v3593, %v3585
    %v5090 = vpack.c.b16 %v3594, %v3586
    %v5091 = vpack.c.b16 %v3595, %v3587
    %v5092 = vpack.c.b16 %v3596, %v3588
    %v5093 = vpack.c.b16 %v3597, %v3589
    %v5094 = vpack.c.b16 %v3598, %v3590
    %v5095 = vpack.c.b16 %v3607, %v3599
    %v5096 = vpack.c.b16 %v3608, %v3600
    %v5097 = vpack.c.b16 %v3609, %v3601
    %v5098 = vpack.c.b16 %v3610, %v3602
    %v5099 = vpack.c.b16 %v3611, %v3603
    %v5100 = vpack.c.b16 %v3612, %v3604
    %v5101 = vpack.c.b16 %v3613, %v3605
    %v5102 = vpack.c.b16 %v3614, %v3606
    %v5103 = vpack.c.b16 %v3623, %v3615
    %v5104 = vpack.c.b16 %v3624, %v3616
    %v5105 = vpack.c.b16 %v3625, %v3617
    %v5106 = vpack.c.b16 %v3626, %v3618
    %v5107 = vpack.c.b16 %v3627, %v3619
    %v5108 = vpack.c.b16 %v3628, %v3620
    %v5109 = vpack.c.b16 %v3629, %v3621
    %v5110 = vpack.c.b16 %v3630, %v3622
    %v5111 = vpack.c.b16 %v3639, %v3631
    %v5112 = vpack.c.b16 %v3640, %v3632
    %v5113 = vpack.c.b16 %v3641, %v3633
    %v5114 = vpack.c.b16 %v3642, %v3634
    %v5115 = vpack.c.b16 %v3643, %v3635
    %v5116 = vpack.c.b16 %v3644, %v3636
    %v5117 = vpack.c.b16 %v3645, %v3637
    %v5118 = vpack.c.b16 %v3646, %v3638
    %v5119 = vpack.c.b16 %v3655, %v3647
    %v5120 = vpack.c.b16 %v3656, %v3648
    %v5121 = vpack.c.b16 %v3657, %v3649
    %v5122 = vpack.c.b16 %v3658, %v3650
    %v5123 = vpack.c.b16 %v3659, %v3651
    %v5124 = vpack.c.b16 %v3660, %v3652
    %v5125 = vpack.c.b16 %v3661, %v3653
    %v5126 = vpack.c.b16 %v3662, %v3654
    %v5127 = vpack.c.b16 %v3671, %v3663
    %v5128 = vpack.c.b16 %v3672, %v3664
    %v5129 = vpack.c.b16 %v3673, %v3665
    %v5130 = vpack.c.b16 %v3674, %v3666
    %v5131 = vpack.c.b16 %v3675, %v3667
    %v5132 = vpack.c.b16 %v3676, %v3668
    %v5133 = vpack.c.b16 %v3677, %v3669
    %v5134 = vpack.c.b16 %v3678, %v3670
    %v5135 = vpack.c.b16 %v3687, %v3679
    %v5136 = vpack.c.b16 %v3688, %v3680
    %v5137 = vpack.c.b16 %v3689, %v3681
    %v5138 = vpack.c.b16 %v3690, %v3682
    %v5139 = vpack.c.b16 %v3691, %v3683
    %v5140 = vpack.c.b16 %v3692, %v3684
    %v5141 = vpack.c.b16 %v3693, %v3685
    %v5142 = vpack.c.b16 %v3694, %v3686
    %v5143 = vpack.c.b16 %v3703, %v3695
    %v5144 = vpack.c.b16 %v3704, %v3696
    %v5145 = vpack.c.b16 %v3705, %v3697
    %v5146 = vpack.c.b16 %v3706, %v3698
    %v5147 = vpack.c.b16 %v3707, %v3699
    %v5148 = vpack.c.b16 %v3708, %v3700
    %v5149 = vpack.c.b16 %v3709, %v3701
    %v5150 = vpack.c.b16 %v3710, %v3702
    %v5151 = vpack.c.b16 %v3719, %v3711
    %v5152 = vpack.c.b16 %v3720, %v3712
    %v5153 = vpack.c.b16 %v3721, %v3713
    %v5154 = vpack.c.b16 %v3722, %v3714
    %v5155 = vpack.c.b16 %v3723, %v3715
    %v5156 = vpack.c.b16 %v3724, %v3716
    %v5157 = vpack.c.b16 %v3725, %v3717
    %v5158 = vpack.c.b16 %v3726, %v3718
    %v5159 = vpack.c.b16 %v3735, %v3727
    %v5160 = vpack.c.b16 %v3736, %v3728
    %v5161 = vpack.c.b16 %v3737, %v3729
    %v5162 = vpack.c.b16 %v3738, %v3730
    %v5163 = vpack.c.b16 %v3739, %v3731
    %v5164 = vpack.c.b16 %v3740, %v3732
    %v5165 = vpack.c.b16 %v3741, %v3733
    %v5166 = vpack.c.b16 %v3742, %v3734
    %v5167 = vpack.c.b16 %v3751, %v3743
    %v5168 = vpack.c.b16 %v3752, %v3744
    %v5169 = vpack.c.b16 %v3753, %v3745
    %v5170 = vpack.c.b16 %v3754, %v3746
    %v5171 = vpack.c.b16 %v3755, %v3747
    %v5172 = vpack.c.b16 %v3756, %v3748
    %v5173 = vpack.c.b16 %v3757, %v3749
    %v5174 = vpack.c.b16 %v3758, %v3750
    %v5175 = vpack.c.b16 %v3767, %v3759
    %v5176 = vpack.c.b16 %v3768, %v3760
    %v5177 = vpack.c.b16 %v3769, %v3761
    %v5178 = vpack.c.b16 %v3770, %v3762
    %v5179 = vpack.c.b16 %v3771, %v3763
    %v5180 = vpack.c.b16 %v3772, %v3764
    %v5181 = vpack.c.b16 %v3773, %v3765
    %v5182 = vpack.c.b16 %v3774, %v3766
    %v5183 = vpack.c.b16 %v3783, %v3775
    %v5184 = vpack.c.b16 %v3784, %v3776
    %v5185 = vpack.c.b16 %v3785, %v3777
    %v5186 = vpack.c.b16 %v3786, %v3778
    %v5187 = vpack.c.b16 %v3787, %v3779
    %v5188 = vpack.c.b16 %v3788, %v3780
    %v5189 = vpack.c.b16 %v3789, %v3781
    %v5190 = vpack.c.b16 %v3790, %v3782
    %v5191 = vpack.c.b16 %v3799, %v3791
    %v5192 = vpack.c.b16 %v3800, %v3792
    %v5193 = vpack.c.b16 %v3801, %v3793
    %v5194 = vpack.c.b16 %v3802, %v3794
    %v5195 = vpack.c.b16 %v3803, %v3795
    %v5196 = vpack.c.b16 %v3804, %v3796
    %v5197 = vpack.c.b16 %v3805, %v3797
    %v5198 = vpack.c.b16 %v3806, %v3798
    %v5199 = vpack.c.b16 %v3815, %v3807
    %v5200 = vpack.c.b16 %v3816, %v3808
    %v5201 = vpack.c.b16 %v3817, %v3809
    %v5202 = vpack.c.b16 %v3818, %v3810
    %v5203 = vpack.c.b16 %v3819, %v3811
    %v5204 = vpack.c.b16 %v3820, %v3812
    %v5205 = vpack.c.b16 %v3821, %v3813
    %v5206 = vpack.c.b16 %v3822, %v3814
    %v5207 = vpack.c.b16 %v3831, %v3823
    %v5208 = vpack.c.b16 %v3832, %v3824
    %v5209 = vpack.c.b16 %v3833, %v3825
    %v5210 = vpack.c.b16 %v3834, %v3826
    %v5211 = vpack.c.b16 %v3835, %v3827
    %v5212 = vpack.c.b16 %v3836, %v3828
    %v5213 = vpack.c.b16 %v3837, %v3829
    %v5214 = vpack.c.b16 %v3838, %v3830
    %v5215 = vpack.c.b16 %v3847, %v3839
    %v5216 = vpack.c.b16 %v3848, %v3840
    %v5217 = vpack.c.b16 %v3849, %v3841
    %v5218 = vpack.c.b16 %v3850, %v3842
    %v5219 = vpack.c.b16 %v3851, %v3843
    %v5220 = vpack.c.b16 %v3852, %v3844
    %v5221 = vpack.c.b16 %v3853, %v3845
    %v5222 = vpack.c.b16 %v3854, %v3846
    %v5223 = vpack.c.b16 %v3863, %v3855
    %v5224 = vpack.c.b16 %v3864, %v3856
    %v5225 = vpack.c.b16 %v3865, %v3857
    %v5226 = vpack.c.b16 %v3866, %v3858
    %v5227 = vpack.c.b16 %v3867, %v3859
    %v5228 = vpack.c.b16 %v3868, %v3860
    %v5229 = vpack.c.b16 %v3869, %v3861
    %v5230 = vpack.c.b16 %v3870, %v3862
    %v5231 = vpack.c.b16 %v3879, %v3871
    %v5232 = vpack.c.b16 %v3880, %v3872
    %v5233 = vpack.c.b16 %v3881, %v3873
    %v5234 = vpack.c.b16 %v3882, %v3874
    %v5235 = vpack.c.b16 %v3883, %v3875
    %v5236 = vpack.c.b16 %v3884, %v3876
    %v5237 = vpack.c.b16 %v3885, %v3877
    %v5238 = vpack.c.b16 %v3886, %v3878
    %v5239 = vpack.c.b16 %v3895, %v3887
    %v5240 = vpack.c.b16 %v3896, %v3888
    %v5241 = vpack.c.b16 %v3897, %v3889
    %v5242 = vpack.c.b16 %v3898, %v3890
    %v5243 = vpack.c.b16 %v3899, %v3891
    %v5244 = vpack.c.b16 %v3900, %v3892
    %v5245 = vpack.c.b16 %v3901, %v3893
    %v5246 = vpack.c.b16 %v3902, %v3894
    %v5247 = vpack.c.b16 %v3911, %v3903
    %v5248 = vpack.c.b16 %v3912, %v3904
    %v5249 = vpack.c.b16 %v3913, %v3905
    %v5250 = vpack.c.b16 %v3914, %v3906
    %v5251 = vpack.c.b16 %v3915, %v3907
    %v5252 = vpack.c.b16 %v3916, %v3908
    %v5253 = vpack.c.b16 %v3917, %v3909
    %v5254 = vpack.c.b16 %v3918, %v3910
    %v5255 = vpack.c.b16 %v3927, %v3919
    %v5256 = vpack.c.b16 %v3928, %v3920
    %v5257 = vpack.c.b16 %v3929, %v3921
    %v5258 = vpack.c.b16 %v3930, %v3922
    %v5259 = vpack.c.b16 %v3931, %v3923
    %v5260 = vpack.c.b16 %v3932, %v3924
    %v5261 = vpack.c.b16 %v3933, %v3925
    %v5262 = vpack.c.b16 %v3934, %v3926
    %v5263 = vpack.c.b16 %v3943, %v3935
    %v5264 = vpack.c.b16 %v3944, %v3936
    %v5265 = vpack.c.b16 %v3945, %v3937
    %v5266 = vpack.c.b16 %v3946, %v3938
    %v5267 = vpack.c.b16 %v3947, %v3939
    %v5268 = vpack.c.b16 %v3948, %v3940
    %v5269 = vpack.c.b16 %v3949, %v3941
    %v5270 = vpack.c.b16 %v3950, %v3942
    %v5271 = vpack.c.b16 %v3959, %v3951
    %v5272 = vpack.c.b16 %v3960, %v3952
    %v5273 = vpack.c.b16 %v3961, %v3953
    %v5274 = vpack.c.b16 %v3962, %v3954
    %v5275 = vpack.c.b16 %v3963, %v3955
    %v5276 = vpack.c.b16 %v3964, %v3956
    %v5277 = vpack.c.b16 %v3965, %v3957
    %v5278 = vpack.c.b16 %v3966, %v3958
    %v5279 = vpack.c.b16 %v3975, %v3967
    %v5280 = vpack.c.b16 %v3976, %v3968
    %v5281 = vpack.c.b16 %v3977, %v3969
    %v5282 = vpack.c.b16 %v3978, %v3970
    %v5283 = vpack.c.b16 %v3979, %v3971
    %v5284 = vpack.c.b16 %v3980, %v3972
    %v5285 = vpack.c.b16 %v3981, %v3973
    %v5286 = vpack.c.b16 %v3982, %v3974
    %v5287 = vpack.c.b16 %v3991, %v3983
    %v5288 = vpack.c.b16 %v3992, %v3984
    %v5289 = vpack.c.b16 %v3993, %v3985
    %v5290 = vpack.c.b16 %v3994, %v3986
    %v5291 = vpack.c.b16 %v3995, %v3987
    %v5292 = vpack.c.b16 %v3996, %v3988
    %v5293 = vpack.c.b16 %v3997, %v3989
    %v5294 = vpack.c.b16 %v3998, %v3990
    %v5295 = vpack.c.b16 %v4007, %v3999
    %v5296 = vpack.c.b16 %v4008, %v4000
    %v5297 = vpack.c.b16 %v4009, %v4001
    %v5298 = vpack.c.b16 %v4010, %v4002
    %v5299 = vpack.c.b16 %v4011, %v4003
    %v5300 = vpack.c.b16 %v4012, %v4004
    %v5301 = vpack.c.b16 %v4013, %v4005
    %v5302 = vpack.c.b16 %v4014, %v4006
    %v5303 = vpack.c.b16 %v4023, %v4015
    %v5304 = vpack.c.b16 %v4024, %v4016
    %v5305 = vpack.c.b16 %v4025, %v4017
    %v5306 = vpack.c.b16 %v4026, %v4018
    %v5307 = vpack.c.b16 %v4027, %v4019
    %v5308 = vpack.c.b16 %v4028, %v4020
    %v5309 = vpack.c.b16 %v4029, %v4021
    %v5310 = vpack.c.b16 %v4030, %v4022
    %v5311 = vpack.c.b16 %v4039, %v4031
    %v5312 = vpack.c.b16 %v4040, %v4032
    %v5313 = vpack.c.b16 %v4041, %v4033
    %v5314 = vpack.c.b16 %v4042, %v4034
    %v5315 = vpack.c.b16 %v4043, %v4035
    %v5316 = vpack.c.b16 %v4044, %v4036
    %v5317 = vpack.c.b16 %v4045, %v4037
    %v5318 = vpack.c.b16 %v4046, %v4038
    %v5319 = vpack.c.b16 %v4055, %v4047
    %v5320 = vpack.c.b16 %v4056, %v4048
    %v5321 = vpack.c.b16 %v4057, %v4049
    %v5322 = vpack.c.b16 %v4058, %v4050
    %v5323 = vpack.c.b16 %v4059, %v4051
    %v5324 = vpack.c.b16 %v4060, %v4052
    %v5325 = vpack.c.b16 %v4061, %v4053
    %v5326 = vpack.c.b16 %v4062, %v4054
    %v5327 = vpack.c.b16 %v4071, %v4063
    %v5328 = vpack.c.b16 %v4072, %v4064
    %v5329 = vpack.c.b16 %v4073, %v4065
    %v5330 = vpack.c.b16 %v4074, %v4066
    %v5331 = vpack.c.b16 %v4075, %v4067
    %v5332 = vpack.c.b16 %v4076, %v4068
    %v5333 = vpack.c.b16 %v4077, %v4069
    %v5334 = vpack.c.b16 %v4078, %v4070
    %v5335 = vpack.c.b16 %v4087, %v4079
    %v5336 = vpack.c.b16 %v4088, %v4080
    %v5337 = vpack.c.b16 %v4089, %v4081
    %v5338 = vpack.c.b16 %v4090, %v4082
    %v5339 = vpack.c.b16 %v4091, %v4083
    %v5340 = vpack.c.b16 %v4092, %v4084
    %v5341 = vpack.c.b16 %v4093, %v4085
    %v5342 = vpack.c.b16 %v4094, %v4086
    %v5343 = vpack.c.b16 %v4103, %v4095
    %v5344 = vpack.c.b16 %v4104, %v4096
    %v5345 = vpack.c.b16 %v4105, %v4097
    %v5346 = vpack.c.b16 %v4106, %v4098
    %v5347 = vpack.c.b16 %v4107, %v4099
    %v5348 = vpack.c.b16 %v4108, %v4100
    %v5349 = vpack.c.b16 %v4109, %v4101
    %v5350 = vpack.c.b16 %v4110, %v4102
    %v5351 = vpack.c.b16 %v4119, %v4111
    %v5352 = vpack.c.b16 %v4120, %v4112
    %v5353 = vpack.c.b16 %v4121, %v4113
    %v5354 = vpack.c.b16 %v4122, %v4114
    %v5355 = vpack.c.b16 %v4123, %v4115
    %v5356 = vpack.c.b16 %v4124, %v4116
    %v5357 = vpack.c.b16 %v4125, %v4117
    %v5358 = vpack.c.b16 %v4126, %v4118
    %v5359 = vpack.c.b16 %v4135, %v4127
    %v5360 = vpack.c.b16 %v4136, %v4128
    %v5361 = vpack.c.b16 %v4137, %v4129
    %v5362 = vpack.c.b16 %v4138, %v4130
    %v5363 = vpack.c.b16 %v4139, %v4131
    %v5364 = vpack.c.b16 %v4140, %v4132
    %v5365 = vpack.c.b16 %v4141, %v4133
    %v5366 = vpack.c.b16 %v4142, %v4134
    %v5367 = vpack.c.b16 %v4151, %v4143
    %v5368 = vpack.c.b16 %v4152, %v4144
    %v5369 = vpack.c.b16 %v4153, %v4145
    %v5370 = vpack.c.b16 %v4154, %v4146
    %v5371 = vpack.c.b16 %v4155, %v4147
    %v5372 = vpack.c.b16 %v4156, %v4148
    %v5373 = vpack.c.b16 %v4157, %v4149
    %v5374 = vpack.c.b16 %v4158, %v4150
    %v5375 = vpack.c.b16 %v4167, %v4159
    %v5376 = vpack.c.b16 %v4168, %v4160
    %v5377 = vpack.c.b16 %v4169, %v4161
    %v5378 = vpack.c.b16 %v4170, %v4162
    %v5379 = vpack.c.b16 %v4171, %v4163
    %v5380 = vpack.c.b16 %v4172, %v4164
    %v5381 = vpack.c.b16 %v4173, %v4165
    %v5382 = vpack.c.b16 %v4174, %v4166
    %v5383 = vpack.c.b16 %v4183, %v4175
    %v5384 = vpack.c.b16 %v4184, %v4176
    %v5385 = vpack.c.b16 %v4185, %v4177
    %v5386 = vpack.c.b16 %v4186, %v4178
    %v5387 = vpack.c.b16 %v4187, %v4179
    %v5388 = vpack.c.b16 %v4188, %v4180
    %v5389 = vpack.c.b16 %v4189, %v4181
    %v5390 = vpack.c.b16 %v4190, %v4182
    %v5391 = vpack.c.b16 %v4199, %v4191
    %v5392 = vpack.c.b16 %v4200, %v4192
    %v5393 = vpack.c.b16 %v4201, %v4193
    %v5394 = vpack.c.b16 %v4202, %v4194
    %v5395 = vpack.c.b16 %v4203, %v4195
    %v5396 = vpack.c.b16 %v4204, %v4196
    %v5397 = vpack.c.b16 %v4205, %v4197
    %v5398 = vpack.c.b16 %v4206, %v4198
    %v5399 = vpack.c.b16 %v4215, %v4207
    %v5400 = vpack.c.b16 %v4216, %v4208
    %v5401 = vpack.c.b16 %v4217, %v4209
    %v5402 = vpack.c.b16 %v4218, %v4210
    %v5403 = vpack.c.b16 %v4219, %v4211
    %v5404 = vpack.c.b16 %v4220, %v4212
    %v5405 = vpack.c.b16 %v4221, %v4213
    %v5406 = vpack.c.b16 %v4222, %v4214
    %v5407 = vpack.c.b16 %v4231, %v4223
    %v5408 = vpack.c.b16 %v4232, %v4224
    %v5409 = vpack.c.b16 %v4233, %v4225
    %v5410 = vpack.c.b16 %v4234, %v4226
    %v5411 = vpack.c.b16 %v4235, %v4227
    %v5412 = vpack.c.b16 %v4236, %v4228
    %v5413 = vpack.c.b16 %v4237, %v4229
    %v5414 = vpack.c.b16 %v4238, %v4230
    %v5415 = vpack.c.b16 %v4247, %v4239
    %v5416 = vpack.c.b16 %v4248, %v4240
    %v5417 = vpack.c.b16 %v4249, %v4241
    %v5418 = vpack.c.b16 %v4250, %v4242
    %v5419 = vpack.c.b16 %v4251, %v4243
    %v5420 = vpack.c.b16 %v4252, %v4244
    %v5421 = vpack.c.b16 %v4253, %v4245
    %v5422 = vpack.c.b16 %v4254, %v4246
    %v5423 = vpack.c.b16 %v4263, %v4255
    %v5424 = vpack.c.b16 %v4264, %v4256
    %v5425 = vpack.c.b16 %v4265, %v4257
    %v5426 = vpack.c.b16 %v4266, %v4258
    %v5427 = vpack.c.b16 %v4267, %v4259
    %v5428 = vpack.c.b16 %v4268, %v4260
    %v5429 = vpack.c.b16 %v4269, %v4261
    %v5430 = vpack.c.b16 %v4270, %v4262
    %v5431 = vpack.c.b16 %v4279, %v4271
    %v5432 = vpack.c.b16 %v4280, %v4272
    %v5433 = vpack.c.b16 %v4281, %v4273
    %v5434 = vpack.c.b16 %v4282, %v4274
    %v5435 = vpack.c.b16 %v4283, %v4275
    %v5436 = vpack.c.b16 %v4284, %v4276
    %v5437 = vpack.c.b16 %v4285, %v4277
    %v5438 = vpack.c.b16 %v4286, %v4278
    %v5439 = vpack.c.b16 %v4295, %v4287
    %v5440 = vpack.c.b16 %v4296, %v4288
    %v5441 = vpack.c.b16 %v4297, %v4289
    %v5442 = vpack.c.b16 %v4298, %v4290
    %v5443 = vpack.c.b16 %v4299, %v4291
    %v5444 = vpack.c.b16 %v4300, %v4292
    %v5445 = vpack.c.b16 %v4301, %v4293
    %v5446 = vpack.c.b16 %v4302, %v4294
    %v5447 = vpack.c.b16 %v4311, %v4303
    %v5448 = vpack.c.b16 %v4312, %v4304
    %v5449 = vpack.c.b16 %v4313, %v4305
    %v5450 = vpack.c.b16 %v4314, %v4306
    %v5451 = vpack.c.b16 %v4315, %v4307
    %v5452 = vpack.c.b16 %v4316, %v4308
    %v5453 = vpack.c.b16 %v4317, %v4309
    %v5454 = vpack.c.b16 %v4318, %v4310
    %v5455 = vpack.c.b16 %v4327, %v4319
    %v5456 = vpack.c.b16 %v4328, %v4320
    %v5457 = vpack.c.b16 %v4329, %v4321
    %v5458 = vpack.c.b16 %v4330, %v4322
    %v5459 = vpack.c.b16 %v4331, %v4323
    %v5460 = vpack.c.b16 %v4332, %v4324
    %v5461 = vpack.c.b16 %v4333, %v4325
    %v5462 = vpack.c.b16 %v4334, %v4326
    %v5463 = vpack.c.b16 %v4343, %v4335
    %v5464 = vpack.c.b16 %v4344, %v4336
    %v5465 = vpack.c.b16 %v4345, %v4337
    %v5466 = vpack.c.b16 %v4346, %v4338
    %v5467 = vpack.c.b16 %v4347, %v4339
    %v5468 = vpack.c.b16 %v4348, %v4340
    %v5469 = vpack.c.b16 %v4349, %v4341
    %v5470 = vpack.c.b16 %v4350, %v4342
    %v5471 = vpack.c.b16 %v4359, %v4351
    %v5472 = vpack.c.b16 %v4360, %v4352
    %v5473 = vpack.c.b16 %v4361, %v4353
    %v5474 = vpack.c.b16 %v4362, %v4354
    %v5475 = vpack.c.b16 %v4363, %v4355
    %v5476 = vpack.c.b16 %v4364, %v4356
    %v5477 = vpack.c.b16 %v4365, %v4357
    %v5478 = vpack.c.b16 %v4366, %v4358
    %v5479 = vpack.c.b16 %v4375, %v4367
    %v5480 = vpack.c.b16 %v4376, %v4368
    %v5481 = vpack.c.b16 %v4377, %v4369
    %v5482 = vpack.c.b16 %v4378, %v4370
    %v5483 = vpack.c.b16 %v4379, %v4371
    %v5484 = vpack.c.b16 %v4380, %v4372
    %v5485 = vpack.c.b16 %v4381, %v4373
    %v5486 = vpack.c.b16 %v4382, %v4374
    %v5487 = vpack.c.b16 %v4391, %v4383
    %v5488 = vpack.c.b16 %v4392, %v4384
    %v5489 = vpack.c.b16 %v4393, %v4385
    %v5490 = vpack.c.b16 %v4394, %v4386
    %v5491 = vpack.c.b16 %v4395, %v4387
    %v5492 = vpack.c.b16 %v4396, %v4388
    %v5493 = vpack.c.b16 %v4397, %v4389
    %v5494 = vpack.c.b16 %v4398, %v4390
    %v5495 = vpack.c.b16 %v4407, %v4399
    %v5496 = vpack.c.b16 %v4408, %v4400
    %v5497 = vpack.c.b16 %v4409, %v4401
    %v5498 = vpack.c.b16 %v4410, %v4402
    %v5499 = vpack.c.b16 %v4411, %v4403
    %v5500 = vpack.c.b16 %v4412, %v4404
    %v5501 = vpack.c.b16 %v4413, %v4405
    %v5502 = vpack.c.b16 %v4414, %v4406
    %v5503 = vpack.c.b16 %v4423, %v4415
    %v5504 = vpack.c.b16 %v4424, %v4416
    %v5505 = vpack.c.b16 %v4425, %v4417
    %v5506 = vpack.c.b16 %v4426, %v4418
    %v5507 = vpack.c.b16 %v4427, %v4419
    %v5508 = vpack.c.b16 %v4428, %v4420
    %v5509 = vpack.c.b16 %v4429, %v4421
    %v5510 = vpack.c.b16 %v4430, %v4422
    %v5511 = vpack.c.b16 %v4439, %v4431
    %v5512 = vpack.c.b16 %v4440, %v4432
    %v5513 = vpack.c.b16 %v4441, %v4433
    %v5514 = vpack.c.b16 %v4442, %v4434
    %v5515 = vpack.c.b16 %v4443, %v4435
    %v5516 = vpack.c.b16 %v4444, %v4436
    %v5517 = vpack.c.b16 %v4445, %v4437
    %v5518 = vpack.c.b16 %v4446, %v4438
    %v5519 = vpack.c.b16 %v4455, %v4447
    %v5520 = vpack.c.b16 %v4456, %v4448
    %v5521 = vpack.c.b16 %v4457, %v4449
    %v5522 = vpack.c.b16 %v4458, %v4450
    %v5523 = vpack.c.b16 %v4459, %v4451
    %v5524 = vpack.c.b16 %v4460, %v4452
    %v5525 = vpack.c.b16 %v4461, %v4453
    %v5526 = vpack.c.b16 %v4462, %v4454
    %v5527 = vpack.c.b16 %v4471, %v4463
    %v5528 = vpack.c.b16 %v4472, %v4464
    %v5529 = vpack.c.b16 %v4473, %v4465
    %v5530 = vpack.c.b16 %v4474, %v4466
    %v5531 = vpack.c.b16 %v4475, %v4467
    %v5532 = vpack.c.b16 %v4476, %v4468
    %v5533 = vpack.c.b16 %v4477, %v4469
    %v5534 = vpack.c.b16 %v4478, %v4470
    %v5535 = vpack.c.b16 %v4487, %v4479
    %v5536 = vpack.c.b16 %v4488, %v4480
    %v5537 = vpack.c.b16 %v4489, %v4481
    %v5538 = vpack.c.b16 %v4490, %v4482
    %v5539 = vpack.c.b16 %v4491, %v4483
    %v5540 = vpack.c.b16 %v4492, %v4484
    %v5541 = vpack.c.b16 %v4493, %v4485
    %v5542 = vpack.c.b16 %v4494, %v4486
    %v5543 = vpack.c.b16 %v4503, %v4495
    %v5544 = vpack.c.b16 %v4504, %v4496
    %v5545 = vpack.c.b16 %v4505, %v4497
    %v5546 = vpack.c.b16 %v4506, %v4498
    %v5547 = vpack.c.b16 %v4507, %v4499
    %v5548 = vpack.c.b16 %v4508, %v4500
    %v5549 = vpack.c.b16 %v4509, %v4501
    %v5550 = vpack.c.b16 %v4510, %v4502
    %v5551 = vpack.c.b16 %v4519, %v4511
    %v5552 = vpack.c.b16 %v4520, %v4512
    %v5553 = vpack.c.b16 %v4521, %v4513
    %v5554 = vpack.c.b16 %v4522, %v4514
    %v5555 = vpack.c.b16 %v4523, %v4515
    %v5556 = vpack.c.b16 %v4524, %v4516
    %v5557 = vpack.c.b16 %v4525, %v4517
    %v5558 = vpack.c.b16 %v4526, %v4518
    %v5559 = vpack.c.b16 %v4535, %v4527
    %v5560 = vpack.c.b16 %v4536, %v4528
    %v5561 = vpack.c.b16 %v4537, %v4529
    %v5562 = vpack.c.b16 %v4538, %v4530
    %v5563 = vpack.c.b16 %v4539, %v4531
    %v5564 = vpack.c.b16 %v4540, %v4532
    %v5565 = vpack.c.b16 %v4541, %v4533
    %v5566 = vpack.c.b16 %v4542, %v4534
    %v5567 = vpack.c.b16 %v4551, %v4543
    %v5568 = vpack.c.b16 %v4552, %v4544
    %v5569 = vpack.c.b16 %v4553, %v4545
    %v5570 = vpack.c.b16 %v4554, %v4546
    %v5571 = vpack.c.b16 %v4555, %v4547
    %v5572 = vpack.c.b16 %v4556, %v4548
    %v5573 = vpack.c.b16 %v4557, %v4549
    %v5574 = vpack.c.b16 %v4558, %v4550
    %v5575 = vpack.c.b16 %v4567, %v4559
    %v5576 = vpack.c.b16 %v4568, %v4560
    %v5577 = vpack.c.b16 %v4569, %v4561
    %v5578 = vpack.c.b16 %v4570, %v4562
    %v5579 = vpack.c.b16 %v4571, %v4563
    %v5580 = vpack.c.b16 %v4572, %v4564
    %v5581 = vpack.c.b16 %v4573, %v4565
    %v5582 = vpack.c.b16 %v4574, %v4566
    %v5583 = vpack.c.b16 %v4583, %v4575
    %v5584 = vpack.c.b16 %v4584, %v4576
    %v5585 = vpack.c.b16 %v4585, %v4577
    %v5586 = vpack.c.b16 %v4586, %v4578
    %v5587 = vpack.c.b16 %v4587, %v4579
    %v5588 = vpack.c.b16 %v4588, %v4580
    %v5589 = vpack.c.b16 %v4589, %v4581
    %v5590 = vpack.c.b16 %v4590, %v4582
    %v5591 = vpack.c.b16 %v4599, %v4591
    %v5592 = vpack.c.b16 %v4600, %v4592
    %v5593 = vpack.c.b16 %v4601, %v4593
    %v5594 = vpack.c.b16 %v4602, %v4594
    %v5595 = vpack.c.b16 %v4603, %v4595
    %v5596 = vpack.c.b16 %v4604, %v4596
    %v5597 = vpack.c.b16 %v4605, %v4597
    %v5598 = vpack.c.b16 %v4606, %v4598
    %v5599 = vpack.c.b16 %v4615, %v4607
    %v5600 = vpack.c.b16 %v4616, %v4608
    %v5601 = vpack.c.b16 %v4617, %v4609
    %v5602 = vpack.c.b16 %v4618, %v4610
    %v5603 = vpack.c.b16 %v4619, %v4611
    %v5604 = vpack.c.b16 %v4620, %v4612
    %v5605 = vpack.c.b16 %v4621, %v4613
    %v5606 = vpack.c.b16 %v4622, %v4614
    %v5607 = vpack.c.b16 %v4631, %v4623
    %v5608 = vpack.c.b16 %v4632, %v4624
    %v5609 = vpack.c.b16 %v4633, %v4625
    %v5610 = vpack.c.b16 %v4634, %v4626
    %v5611 = vpack.c.b16 %v4635, %v4627
    %v5612 = vpack.c.b16 %v4636, %v4628
    %v5613 = vpack.c.b16 %v4637, %v4629
    %v5614 = vpack.c.b16 %v4638, %v4630
    %v5615 = vpack.c.b16 %v4647, %v4639
    %v5616 = vpack.c.b16 %v4648, %v4640
    %v5617 = vpack.c.b16 %v4649, %v4641
    %v5618 = vpack.c.b16 %v4650, %v4642
    %v5619 = vpack.c.b16 %v4651, %v4643
    %v5620 = vpack.c.b16 %v4652, %v4644
    %v5621 = vpack.c.b16 %v4653, %v4645
    %v5622 = vpack.c.b16 %v4654, %v4646
    %v5623 = vpack.c.b16 %v4663, %v4655
    %v5624 = vpack.c.b16 %v4664, %v4656
    %v5625 = vpack.c.b16 %v4665, %v4657
    %v5626 = vpack.c.b16 %v4666, %v4658
    %v5627 = vpack.c.b16 %v4667, %v4659
    %v5628 = vpack.c.b16 %v4668, %v4660
    %v5629 = vpack.c.b16 %v4669, %v4661
    %v5630 = vpack.c.b16 %v4670, %v4662
    %v5631 = vpack.c.b16 %v4679, %v4671
    %v5632 = vpack.c.b16 %v4680, %v4672
    %v5633 = vpack.c.b16 %v4681, %v4673
    %v5634 = vpack.c.b16 %v4682, %v4674
    %v5635 = vpack.c.b16 %v4683, %v4675
    %v5636 = vpack.c.b16 %v4684, %v4676
    %v5637 = vpack.c.b16 %v4685, %v4677
    %v5638 = vpack.c.b16 %v4686, %v4678
    %v5639 = vpack.c.b16 %v4695, %v4687
    %v5640 = vpack.c.b16 %v4696, %v4688
    %v5641 = vpack.c.b16 %v4697, %v4689
    %v5642 = vpack.c.b16 %v4698, %v4690
    %v5643 = vpack.c.b16 %v4699, %v4691
    %v5644 = vpack.c.b16 %v4700, %v4692
    %v5645 = vpack.c.b16 %v4701, %v4693
    %v5646 = vpack.c.b16 %v4702, %v4694
    %v5647 = vpack.c.b16 %v4711, %v4703
    %v5648 = vpack.c.b16 %v4712, %v4704
    %v5649 = vpack.c.b16 %v4713, %v4705
    %v5650 = vpack.c.b16 %v4714, %v4706
    %v5651 = vpack.c.b16 %v4715, %v4707
    %v5652 = vpack.c.b16 %v4716, %v4708
    %v5653 = vpack.c.b16 %v4717, %v4709
    %v5654 = vpack.c.b16 %v4718, %v4710
    %v5655 = vpack.c.b16 %v4727, %v4719
    %v5656 = vpack.c.b16 %v4728, %v4720
    %v5657 = vpack.c.b16 %v4729, %v4721
    %v5658 = vpack.c.b16 %v4730, %v4722
    %v5659 = vpack.c.b16 %v4731, %v4723
    %v5660 = vpack.c.b16 %v4732, %v4724
    %v5661 = vpack.c.b16 %v4733, %v4725
    %v5662 = vpack.c.b16 %v4734, %v4726
    %v5663 = vpack.c.b16 %v4743, %v4735
    %v5664 = vpack.c.b16 %v4744, %v4736
    %v5665 = vpack.c.b16 %v4745, %v4737
    %v5666 = vpack.c.b16 %v4746, %v4738
    %v5667 = vpack.c.b16 %v4747, %v4739
    %v5668 = vpack.c.b16 %v4748, %v4740
    %v5669 = vpack.c.b16 %v4749, %v4741
    %v5670 = vpack.c.b16 %v4750, %v4742
    %v5671 = vpack.c.b16 %v4759, %v4751
    %v5672 = vpack.c.b16 %v4760, %v4752
    %v5673 = vpack.c.b16 %v4761, %v4753
    %v5674 = vpack.c.b16 %v4762, %v4754
    %v5675 = vpack.c.b16 %v4763, %v4755
    %v5676 = vpack.c.b16 %v4764, %v4756
    %v5677 = vpack.c.b16 %v4765, %v4757
    %v5678 = vpack.c.b16 %v4766, %v4758
    %v5679 = vpack.c.b16 %v4775, %v4767
    %v5680 = vpack.c.b16 %v4776, %v4768
    %v5681 = vpack.c.b16 %v4777, %v4769
    %v5682 = vpack.c.b16 %v4778, %v4770
    %v5683 = vpack.c.b16 %v4779, %v4771
    %v5684 = vpack.c.b16 %v4780, %v4772
    %v5685 = vpack.c.b16 %v4781, %v4773
    %v5686 = vpack.c.b16 %v4782, %v4774
    %v5687 = vpack.c.b16 %v4791, %v4783
    %v5688 = vpack.c.b16 %v4792, %v4784
    %v5689 = vpack.c.b16 %v4793, %v4785
    %v5690 = vpack.c.b16 %v4794, %v4786
    %v5691 = vpack.c.b16 %v4795, %v4787
    %v5692 = vpack.c.b16 %v4796, %v4788
    %v5693 = vpack.c.b16 %v4797, %v4789
    %v5694 = vpack.c.b16 %v4798, %v4790
    %v5695 = vpack.c.b16 %v4807, %v4799
    %v5696 = vpack.c.b16 %v4808, %v4800
    %v5697 = vpack.c.b16 %v4809, %v4801
    %v5698 = vpack.c.b16 %v4810, %v4802
    %v5699 = vpack.c.b16 %v4811, %v4803
    %v5700 = vpack.c.b16 %v4812, %v4804
    %v5701 = vpack.c.b16 %v4813, %v4805
    %v5702 = vpack.c.b16 %v4814, %v4806
    %v5703 = vpack.c.b16 %v4823, %v4815
    %v5704 = vpack.c.b16 %v4824, %v4816
    %v5705 = vpack.c.b16 %v4825, %v4817
    %v5706 = vpack.c.b16 %v4826, %v4818
    %v5707 = vpack.c.b16 %v4827, %v4819
    %v5708 = vpack.c.b16 %v4828, %v4820
    %v5709 = vpack.c.b16 %v4829, %v4821
    %v5710 = vpack.c.b16 %v4830, %v4822
    %v5711 = vpack.c.b16 %v4839, %v4831
    %v5712 = vpack.c.b16 %v4840, %v4832
    %v5713 = vpack.c.b16 %v4841, %v4833
    %v5714 = vpack.c.b16 %v4842, %v4834
    %v5715 = vpack.c.b16 %v4843, %v4835
    %v5716 = vpack.c.b16 %v4844, %v4836
    %v5717 = vpack.c.b16 %v4845, %v4837
    %v5718 = vpack.c.b16 %v4846, %v4838
    %v5719 = vpack.c.b16 %v4855, %v4847
    %v5720 = vpack.c.b16 %v4856, %v4848
    %v5721 = vpack.c.b16 %v4857, %v4849
    %v5722 = vpack.c.b16 %v4858, %v4850
    %v5723 = vpack.c.b16 %v4859, %v4851
    %v5724 = vpack.c.b16 %v4860, %v4852
    %v5725 = vpack.c.b16 %v4861, %v4853
    %v5726 = vpack.c.b16 %v4862, %v4854
    %v5727 = vpack.c.b16 %v4871, %v4863
    %v5728 = vpack.c.b16 %v4872, %v4864
    %v5729 = vpack.c.b16 %v4873, %v4865
    %v5730 = vpack.c.b16 %v4874, %v4866
    %v5731 = vpack.c.b16 %v4875, %v4867
    %v5732 = vpack.c.b16 %v4876, %v4868
    %v5733 = vpack.c.b16 %v4877, %v4869
    %v5734 = vpack.c.b16 %v4878, %v4870
    %v5735 = vpack.c.b16 %v4887, %v4879
    %v5736 = vpack.c.b16 %v4888, %v4880
    %v5737 = vpack.c.b16 %v4889, %v4881
    %v5738 = vpack.c.b16 %v4890, %v4882
    %v5739 = vpack.c.b16 %v4891, %v4883
    %v5740 = vpack.c.b16 %v4892, %v4884
    %v5741 = vpack.c.b16 %v4893, %v4885
    %v5742 = vpack.c.b16 %v4894, %v4886
    %v5743 = vpack.c.b16 %v4903, %v4895
    %v5744 = vpack.c.b16 %v4904, %v4896
    %v5745 = vpack.c.b16 %v4905, %v4897
    %v5746 = vpack.c.b16 %v4906, %v4898
    %v5747 = vpack.c.b16 %v4907, %v4899
    %v5748 = vpack.c.b16 %v4908, %v4900
    %v5749 = vpack.c.b16 %v4909, %v4901
    %v5750 = vpack.c.b16 %v4910, %v4902
    %v5751 = vpack.c.b16 %v4919, %v4911
    %v5752 = vpack.c.b16 %v4920, %v4912
    %v5753 = vpack.c.b16 %v4921, %v4913
    %v5754 = vpack.c.b16 %v4922, %v4914
    %v5755 = vpack.c.b16 %v4923, %v4915
    %v5756 = vpack.c.b16 %v4924, %v4916
    %v5757 = vpack.c.b16 %v4925, %v4917
    %v5758 = vpack.c.b16 %v4926, %v4918
    %v5759 = vpack.c.b16 %v4935, %v4927
    %v5760 = vpack.c.b16 %v4936, %v4928
    %v5761 = vpack.c.b16 %v4937, %v4929
    %v5762 = vpack.c.b16 %v4938, %v4930
    %v5763 = vpack.c.b16 %v4939, %v4931
    %v5764 = vpack.c.b16 %v4940, %v4932
    %v5765 = vpack.c.b16 %v4941, %v4933
    %v5766 = vpack.c.b16 %v4942, %v4934
    %v5767 = vpack.c.b16 %v4951, %v4943
    %v5768 = vpack.c.b16 %v4952, %v4944
    %v5769 = vpack.c.b16 %v4953, %v4945
    %v5770 = vpack.c.b16 %v4954, %v4946
    %v5771 = vpack.c.b16 %v4955, %v4947
    %v5772 = vpack.c.b16 %v4956, %v4948
    %v5773 = vpack.c.b16 %v4957, %v4949
    %v5774 = vpack.c.b16 %v4958, %v4950
    %v5775 = vpack.c.b16 %v4967, %v4959
    %v5776 = vpack.c.b16 %v4968, %v4960
    %v5777 = vpack.c.b16 %v4969, %v4961
    %v5778 = vpack.c.b16 %v4970, %v4962
    %v5779 = vpack.c.b16 %v4971, %v4963
    %v5780 = vpack.c.b16 %v4972, %v4964
    %v5781 = vpack.c.b16 %v4973, %v4965
    %v5782 = vpack.c.b16 %v4974, %v4966
    %v5783 = vpack.c.b16 %v4983, %v4975
    %v5784 = vpack.c.b16 %v4984, %v4976
    %v5785 = vpack.c.b16 %v4985, %v4977
    %v5786 = vpack.c.b16 %v4986, %v4978
    %v5787 = vpack.c.b16 %v4987, %v4979
    %v5788 = vpack.c.b16 %v4988, %v4980
    %v5789 = vpack.c.b16 %v4989, %v4981
    %v5790 = vpack.c.b16 %v4990, %v4982
    %v5791 = vpack.c.b16 %v4999, %v4991
    %v5792 = vpack.c.b16 %v5000, %v4992
    %v5793 = vpack.c.b16 %v5001, %v4993
    %v5794 = vpack.c.b16 %v5002, %v4994
    %v5795 = vpack.c.b16 %v5003, %v4995
    %v5796 = vpack.c.b16 %v5004, %v4996
    %v5797 = vpack.c.b16 %v5005, %v4997
    %v5798 = vpack.c.b16 %v5006, %v4998
    %v5799 = vpack.c.b16 %v5015, %v5007
    %v5800 = vpack.c.b16 %v5016, %v5008
    %v5801 = vpack.c.b16 %v5017, %v5009
    %v5802 = vpack.c.b16 %v5018, %v5010
    %v5803 = vpack.c.b16 %v5019, %v5011
    %v5804 = vpack.c.b16 %v5020, %v5012
    %v5805 = vpack.c.b16 %v5021, %v5013
    %v5806 = vpack.c.b16 %v5022, %v5014
    %v5807 = vpack.c.b16 %v5031, %v5023
    %v5808 = vpack.c.b16 %v5032, %v5024
    %v5809 = vpack.c.b16 %v5033, %v5025
    %v5810 = vpack.c.b16 %v5034, %v5026
    %v5811 = vpack.c.b16 %v5035, %v5027
    %v5812 = vpack.c.b16 %v5036, %v5028
    %v5813 = vpack.c.b16 %v5037, %v5029
    %v5814 = vpack.c.b16 %v5038, %v5030
    %v5815 = vpack.c.b16 %v5047, %v5039
    %v5816 = vpack.c.b16 %v5048, %v5040
    %v5817 = vpack.c.b16 %v5049, %v5041
    %v5818 = vpack.c.b16 %v5050, %v5042
    %v5819 = vpack.c.b16 %v5051, %v5043
    %v5820 = vpack.c.b16 %v5052, %v5044
    %v5821 = vpack.c.b16 %v5053, %v5045
    %v5822 = vpack.c.b16 %v5054, %v5046
    %6591 = vmatpush.bf16.msra.mxu0 %v5111
    %6592 = vmatpush.bf16.msra.mxu0 %v5103
    %6593 = vmatpush.bf16.msra.mxu0 %v5095
    %6594 = vmatpush.bf16.msra.mxu0 %v5087
    %6595 = vmatpush.bf16.msra.mxu0 %v5079
    %6596 = vmatpush.bf16.msra.mxu0 %v5071
    %6597 = vmatpush.bf16.msra.mxu0 %v5063
    %6598 = vmatpush.bf16.msra.mxu0 %v5055
    %6599 = vmatmul.bf16.gmra.mxu0 %v1953
    %v6600 = vpop.f32.mrf.mxu0
    %v6601 = vadd.f32 %v2735, %v6600
    %v6602 = vpop.f32.mrf.mxu0
    %v6603 = vadd.f32 %v2735, %v6602
    %6604 = vdwg.mxu0
    %6605 = vmatpush.bf16.msra.mxu0 %v5175
    %6606 = vmatpush.bf16.msra.mxu0 %v5167
    %6607 = vmatpush.bf16.msra.mxu0 %v5159
    %6608 = vmatpush.bf16.msra.mxu0 %v5151
    %6609 = vmatpush.bf16.msra.mxu0 %v5143
    %6610 = vmatpush.bf16.msra.mxu0 %v5135
    %6611 = vmatpush.bf16.msra.mxu0 %v5127
    %6612 = vmatpush.bf16.msra.mxu0 %v5119
    %6613 = vmatmul.bf16.gmra.mxu0 %v1954
    %v6614 = vpop.f32.mrf.mxu0
    %v6615 = vadd.f32 %v6601, %v6614
    %v6616 = vpop.f32.mrf.mxu0
    %v6617 = vadd.f32 %v6603, %v6616
    %6618 = vdwg.mxu0
    %6619 = vmatpush.bf16.msra.mxu0 %v5239
    %6620 = vmatpush.bf16.msra.mxu0 %v5231
    %6621 = vmatpush.bf16.msra.mxu0 %v5223
    %6622 = vmatpush.bf16.msra.mxu0 %v5215
    %6623 = vmatpush.bf16.msra.mxu0 %v5207
    %6624 = vmatpush.bf16.msra.mxu0 %v5199
    %6625 = vmatpush.bf16.msra.mxu0 %v5191
    %6626 = vmatpush.bf16.msra.mxu0 %v5183
    %6627 = vmatmul.bf16.gmra.mxu0 %v1955
    %v6628 = vpop.f32.mrf.mxu0
    %v6629 = vadd.f32 %v6615, %v6628
    %v6630 = vpop.f32.mrf.mxu0
    %v6631 = vadd.f32 %v6617, %v6630
    %6632 = vdwg.mxu0
    %6633 = vmatpush.bf16.msra.mxu0 %v5303
    %6634 = vmatpush.bf16.msra.mxu0 %v5295
    %6635 = vmatpush.bf16.msra.mxu0 %v5287
    %6636 = vmatpush.bf16.msra.mxu0 %v5279
    %6637 = vmatpush.bf16.msra.mxu0 %v5271
    %6638 = vmatpush.bf16.msra.mxu0 %v5263
    %6639 = vmatpush.bf16.msra.mxu0 %v5255
    %6640 = vmatpush.bf16.msra.mxu0 %v5247
    %6641 = vmatmul.bf16.gmra.mxu0 %v1956
    %v6642 = vpop.f32.mrf.mxu0
    %v6643 = vadd.f32 %v6629, %v6642
    %v6644 = vpop.f32.mrf.mxu0
    %v6645 = vadd.f32 %v6631, %v6644
    %6646 = vdwg.mxu0
    %6647 = vmatpush.bf16.msra.mxu0 %v5367
    %6648 = vmatpush.bf16.msra.mxu0 %v5359
    %6649 = vmatpush.bf16.msra.mxu0 %v5351
    %6650 = vmatpush.bf16.msra.mxu0 %v5343
    %6651 = vmatpush.bf16.msra.mxu0 %v5335
    %6652 = vmatpush.bf16.msra.mxu0 %v5327
    %6653 = vmatpush.bf16.msra.mxu0 %v5319
    %6654 = vmatpush.bf16.msra.mxu0 %v5311
    %6655 = vmatmul.bf16.gmra.mxu0 %v1957
    %v6656 = vpop.f32.mrf.mxu0
    %v6657 = vadd.f32 %v6643, %v6656
    %v6658 = vpop.f32.mrf.mxu0
    %v6659 = vadd.f32 %v6645, %v6658
    %6660 = vdwg.mxu0
    %6661 = vmatpush.bf16.msra.mxu0 %v5431
    %6662 = vmatpush.bf16.msra.mxu0 %v5423
    %6663 = vmatpush.bf16.msra.mxu0 %v5415
    %6664 = vmatpush.bf16.msra.mxu0 %v5407
    %6665 = vmatpush.bf16.msra.mxu0 %v5399
    %6666 = vmatpush.bf16.msra.mxu0 %v5391
    %6667 = vmatpush.bf16.msra.mxu0 %v5383
    %6668 = vmatpush.bf16.msra.mxu0 %v5375
    %6669 = vmatmul.bf16.gmra.mxu0 %v1958
    %v6670 = vpop.f32.mrf.mxu0
    %v6671 = vadd.f32 %v6657, %v6670
    %v6672 = vpop.f32.mrf.mxu0
    %v6673 = vadd.f32 %v6659, %v6672
    %6674 = vdwg.mxu0
    %6675 = vmatpush.bf16.msra.mxu0 %v5495
    %6676 = vmatpush.bf16.msra.mxu0 %v5487
    %6677 = vmatpush.bf16.msra.mxu0 %v5479
    %6678 = vmatpush.bf16.msra.mxu0 %v5471
    %6679 = vmatpush.bf16.msra.mxu0 %v5463
    %6680 = vmatpush.bf16.msra.mxu0 %v5455
    %6681 = vmatpush.bf16.msra.mxu0 %v5447
    %6682 = vmatpush.bf16.msra.mxu0 %v5439
    %6683 = vmatmul.bf16.gmra.mxu0 %v1959
    %v6684 = vpop.f32.mrf.mxu0
    %v6685 = vadd.f32 %v6671, %v6684
    %v6686 = vpop.f32.mrf.mxu0
    %v6687 = vadd.f32 %v6673, %v6686
    %6688 = vdwg.mxu0
    %6689 = vmatpush.bf16.msra.mxu0 %v5559
    %6690 = vmatpush.bf16.msra.mxu0 %v5551
    %6691 = vmatpush.bf16.msra.mxu0 %v5543
    %6692 = vmatpush.bf16.msra.mxu0 %v5535
    %6693 = vmatpush.bf16.msra.mxu0 %v5527
    %6694 = vmatpush.bf16.msra.mxu0 %v5519
    %6695 = vmatpush.bf16.msra.mxu0 %v5511
    %6696 = vmatpush.bf16.msra.mxu0 %v5503
    %6697 = vmatmul.bf16.gmra.mxu0 %v1960
    %v6698 = vpop.f32.mrf.mxu0
    %v6699 = vadd.f32 %v6685, %v6698
    %v6700 = vpop.f32.mrf.mxu0
    %v6701 = vadd.f32 %v6687, %v6700
    %6702 = vdwg.mxu0
    %6703 = vmatpush.bf16.msra.mxu0 %v5623
    %6704 = vmatpush.bf16.msra.mxu0 %v5615
    %6705 = vmatpush.bf16.msra.mxu0 %v5607
    %6706 = vmatpush.bf16.msra.mxu0 %v5599
    %6707 = vmatpush.bf16.msra.mxu0 %v5591
    %6708 = vmatpush.bf16.msra.mxu0 %v5583
    %6709 = vmatpush.bf16.msra.mxu0 %v5575
    %6710 = vmatpush.bf16.msra.mxu0 %v5567
    %6711 = vmatmul.bf16.gmra.mxu0 %v1961
    %v6712 = vpop.f32.mrf.mxu0
    %v6713 = vadd.f32 %v6699, %v6712
    %v6714 = vpop.f32.mrf.mxu0
    %v6715 = vadd.f32 %v6701, %v6714
    %6716 = vdwg.mxu0
    %6717 = vmatpush.bf16.msra.mxu0 %v5687
    %6718 = vmatpush.bf16.msra.mxu0 %v5679
    %6719 = vmatpush.bf16.msra.mxu0 %v5671
    %6720 = vmatpush.bf16.msra.mxu0 %v5663
    %6721 = vmatpush.bf16.msra.mxu0 %v5655
    %6722 = vmatpush.bf16.msra.mxu0 %v5647
    %6723 = vmatpush.bf16.msra.mxu0 %v5639
    %6724 = vmatpush.bf16.msra.mxu0 %v5631
    %6725 = vmatmul.bf16.gmra.mxu0 %v1962
    %v6726 = vpop.f32.mrf.mxu0
    %v6727 = vadd.f32 %v6713, %v6726
    %v6728 = vpop.f32.mrf.mxu0
    %v6729 = vadd.f32 %v6715, %v6728
    %6730 = vdwg.mxu0
    %6731 = vmatpush.bf16.msra.mxu0 %v5751
    %6732 = vmatpush.bf16.msra.mxu0 %v5743
    %6733 = vmatpush.bf16.msra.mxu0 %v5735
    %6734 = vmatpush.bf16.msra.mxu0 %v5727
    %6735 = vmatpush.bf16.msra.mxu0 %v5719
    %6736 = vmatpush.bf16.msra.mxu0 %v5711
    %6737 = vmatpush.bf16.msra.mxu0 %v5703
    %6738 = vmatpush.bf16.msra.mxu0 %v5695
    %6739 = vmatmul.bf16.gmra.mxu0 %v1963
    %v6740 = vpop.f32.mrf.mxu0
    %v6741 = vadd.f32 %v6727, %v6740
    %v6742 = vpop.f32.mrf.mxu0
    %v6743 = vadd.f32 %v6729, %v6742
    %6744 = vdwg.mxu0
    %6745 = vmatpush.bf16.msra.mxu0 %v5815
    %6746 = vmatpush.bf16.msra.mxu0 %v5807
    %6747 = vmatpush.bf16.msra.mxu0 %v5799
    %6748 = vmatpush.bf16.msra.mxu0 %v5791
    %6749 = vmatpush.bf16.msra.mxu0 %v5783
    %6750 = vmatpush.bf16.msra.mxu0 %v5775
    %6751 = vmatpush.bf16.msra.mxu0 %v5767
    %6752 = vmatpush.bf16.msra.mxu0 %v5759
    %6753 = vmatmul.bf16.gmra.mxu0 %v1964
    %v6754 = vpop.f32.mrf.mxu0
    %v6755 = vadd.f32 %v6741, %v6754
    %v6756 = vpop.f32.mrf.mxu0
    %v6757 = vadd.f32 %v6743, %v6756
    %6758 = vdwg.mxu0
    %6759 = vmatpush.bf16.msra.mxu0 %v5112
    %6760 = vmatpush.bf16.msra.mxu0 %v5104
    %6761 = vmatpush.bf16.msra.mxu0 %v5096
    %6762 = vmatpush.bf16.msra.mxu0 %v5088
    %6763 = vmatpush.bf16.msra.mxu0 %v5080
    %6764 = vmatpush.bf16.msra.mxu0 %v5072
    %6765 = vmatpush.bf16.msra.mxu0 %v5064
    %6766 = vmatpush.bf16.msra.mxu0 %v5056
    %6767 = vmatmul.bf16.gmra.mxu0 %v1953
    %v6768 = vpop.f32.mrf.mxu0
    %v6769 = vadd.f32 %v2736, %v6768
    %v6770 = vpop.f32.mrf.mxu0
    %v6771 = vadd.f32 %v2736, %v6770
    %6772 = vdwg.mxu0
    %6773 = vmatpush.bf16.msra.mxu0 %v5176
    %6774 = vmatpush.bf16.msra.mxu0 %v5168
    %6775 = vmatpush.bf16.msra.mxu0 %v5160
    %6776 = vmatpush.bf16.msra.mxu0 %v5152
    %6777 = vmatpush.bf16.msra.mxu0 %v5144
    %6778 = vmatpush.bf16.msra.mxu0 %v5136
    %6779 = vmatpush.bf16.msra.mxu0 %v5128
    %6780 = vmatpush.bf16.msra.mxu0 %v5120
    %6781 = vmatmul.bf16.gmra.mxu0 %v1954
    %v6782 = vpop.f32.mrf.mxu0
    %v6783 = vadd.f32 %v6769, %v6782
    %v6784 = vpop.f32.mrf.mxu0
    %v6785 = vadd.f32 %v6771, %v6784
    %6786 = vdwg.mxu0
    %6787 = vmatpush.bf16.msra.mxu0 %v5240
    %6788 = vmatpush.bf16.msra.mxu0 %v5232
    %6789 = vmatpush.bf16.msra.mxu0 %v5224
    %6790 = vmatpush.bf16.msra.mxu0 %v5216
    %6791 = vmatpush.bf16.msra.mxu0 %v5208
    %6792 = vmatpush.bf16.msra.mxu0 %v5200
    %6793 = vmatpush.bf16.msra.mxu0 %v5192
    %6794 = vmatpush.bf16.msra.mxu0 %v5184
    %6795 = vmatmul.bf16.gmra.mxu0 %v1955
    %v6796 = vpop.f32.mrf.mxu0
    %v6797 = vadd.f32 %v6783, %v6796
    %v6798 = vpop.f32.mrf.mxu0
    %v6799 = vadd.f32 %v6785, %v6798
    %6800 = vdwg.mxu0
    %6801 = vmatpush.bf16.msra.mxu0 %v5304
    %6802 = vmatpush.bf16.msra.mxu0 %v5296
    %6803 = vmatpush.bf16.msra.mxu0 %v5288
    %6804 = vmatpush.bf16.msra.mxu0 %v5280
    %6805 = vmatpush.bf16.msra.mxu0 %v5272
    %6806 = vmatpush.bf16.msra.mxu0 %v5264
    %6807 = vmatpush.bf16.msra.mxu0 %v5256
    %6808 = vmatpush.bf16.msra.mxu0 %v5248
    %6809 = vmatmul.bf16.gmra.mxu0 %v1956
    %v6810 = vpop.f32.mrf.mxu0
    %v6811 = vadd.f32 %v6797, %v6810
    %v6812 = vpop.f32.mrf.mxu0
    %v6813 = vadd.f32 %v6799, %v6812
    %6814 = vdwg.mxu0
    %6815 = vmatpush.bf16.msra.mxu0 %v5368
    %6816 = vmatpush.bf16.msra.mxu0 %v5360
    %6817 = vmatpush.bf16.msra.mxu0 %v5352
    %6818 = vmatpush.bf16.msra.mxu0 %v5344
    %6819 = vmatpush.bf16.msra.mxu0 %v5336
    %6820 = vmatpush.bf16.msra.mxu0 %v5328
    %6821 = vmatpush.bf16.msra.mxu0 %v5320
    %6822 = vmatpush.bf16.msra.mxu0 %v5312
    %6823 = vmatmul.bf16.gmra.mxu0 %v1957
    %v6824 = vpop.f32.mrf.mxu0
    %v6825 = vadd.f32 %v6811, %v6824
    %v6826 = vpop.f32.mrf.mxu0
    %v6827 = vadd.f32 %v6813, %v6826
    %6828 = vdwg.mxu0
    %6829 = vmatpush.bf16.msra.mxu0 %v5432
    %6830 = vmatpush.bf16.msra.mxu0 %v5424
    %6831 = vmatpush.bf16.msra.mxu0 %v5416
    %6832 = vmatpush.bf16.msra.mxu0 %v5408
    %6833 = vmatpush.bf16.msra.mxu0 %v5400
    %6834 = vmatpush.bf16.msra.mxu0 %v5392
    %6835 = vmatpush.bf16.msra.mxu0 %v5384
    %6836 = vmatpush.bf16.msra.mxu0 %v5376
    %6837 = vmatmul.bf16.gmra.mxu0 %v1958
    %v6838 = vpop.f32.mrf.mxu0
    %v6839 = vadd.f32 %v6825, %v6838
    %v6840 = vpop.f32.mrf.mxu0
    %v6841 = vadd.f32 %v6827, %v6840
    %6842 = vdwg.mxu0
    %6843 = vmatpush.bf16.msra.mxu0 %v5496
    %6844 = vmatpush.bf16.msra.mxu0 %v5488
    %6845 = vmatpush.bf16.msra.mxu0 %v5480
    %6846 = vmatpush.bf16.msra.mxu0 %v5472
    %6847 = vmatpush.bf16.msra.mxu0 %v5464
    %6848 = vmatpush.bf16.msra.mxu0 %v5456
    %6849 = vmatpush.bf16.msra.mxu0 %v5448
    %6850 = vmatpush.bf16.msra.mxu0 %v5440
    %6851 = vmatmul.bf16.gmra.mxu0 %v1959
    %v6852 = vpop.f32.mrf.mxu0
    %v6853 = vadd.f32 %v6839, %v6852
    %v6854 = vpop.f32.mrf.mxu0
    %v6855 = vadd.f32 %v6841, %v6854
    %6856 = vdwg.mxu0
    %6857 = vmatpush.bf16.msra.mxu0 %v5560
    %6858 = vmatpush.bf16.msra.mxu0 %v5552
    %6859 = vmatpush.bf16.msra.mxu0 %v5544
    %6860 = vmatpush.bf16.msra.mxu0 %v5536
    %6861 = vmatpush.bf16.msra.mxu0 %v5528
    %6862 = vmatpush.bf16.msra.mxu0 %v5520
    %6863 = vmatpush.bf16.msra.mxu0 %v5512
    %6864 = vmatpush.bf16.msra.mxu0 %v5504
    %6865 = vmatmul.bf16.gmra.mxu0 %v1960
    %v6866 = vpop.f32.mrf.mxu0
    %v6867 = vadd.f32 %v6853, %v6866
    %v6868 = vpop.f32.mrf.mxu0
    %v6869 = vadd.f32 %v6855, %v6868
    %6870 = vdwg.mxu0
    %6871 = vmatpush.bf16.msra.mxu0 %v5624
    %6872 = vmatpush.bf16.msra.mxu0 %v5616
    %6873 = vmatpush.bf16.msra.mxu0 %v5608
    %6874 = vmatpush.bf16.msra.mxu0 %v5600
    %6875 = vmatpush.bf16.msra.mxu0 %v5592
    %6876 = vmatpush.bf16.msra.mxu0 %v5584
    %6877 = vmatpush.bf16.msra.mxu0 %v5576
    %6878 = vmatpush.bf16.msra.mxu0 %v5568
    %6879 = vmatmul.bf16.gmra.mxu0 %v1961
    %v6880 = vpop.f32.mrf.mxu0
    %v6881 = vadd.f32 %v6867, %v6880
    %v6882 = vpop.f32.mrf.mxu0
    %v6883 = vadd.f32 %v6869, %v6882
    %6884 = vdwg.mxu0
    %6885 = vmatpush.bf16.msra.mxu0 %v5688
    %6886 = vmatpush.bf16.msra.mxu0 %v5680
    %6887 = vmatpush.bf16.msra.mxu0 %v5672
    %6888 = vmatpush.bf16.msra.mxu0 %v5664
    %6889 = vmatpush.bf16.msra.mxu0 %v5656
    %6890 = vmatpush.bf16.msra.mxu0 %v5648
    %6891 = vmatpush.bf16.msra.mxu0 %v5640
    %6892 = vmatpush.bf16.msra.mxu0 %v5632
    %6893 = vmatmul.bf16.gmra.mxu0 %v1962
    %v6894 = vpop.f32.mrf.mxu0
    %v6895 = vadd.f32 %v6881, %v6894
    %v6896 = vpop.f32.mrf.mxu0
    %v6897 = vadd.f32 %v6883, %v6896
    %6898 = vdwg.mxu0
    %6899 = vmatpush.bf16.msra.mxu0 %v5752
    %6900 = vmatpush.bf16.msra.mxu0 %v5744
    %6901 = vmatpush.bf16.msra.mxu0 %v5736
    %6902 = vmatpush.bf16.msra.mxu0 %v5728
    %6903 = vmatpush.bf16.msra.mxu0 %v5720
    %6904 = vmatpush.bf16.msra.mxu0 %v5712
    %6905 = vmatpush.bf16.msra.mxu0 %v5704
    %6906 = vmatpush.bf16.msra.mxu0 %v5696
    %6907 = vmatmul.bf16.gmra.mxu0 %v1963
    %v6908 = vpop.f32.mrf.mxu0
    %v6909 = vadd.f32 %v6895, %v6908
    %v6910 = vpop.f32.mrf.mxu0
    %v6911 = vadd.f32 %v6897, %v6910
    %6912 = vdwg.mxu0
    %6913 = vmatpush.bf16.msra.mxu0 %v5816
    %6914 = vmatpush.bf16.msra.mxu0 %v5808
    %6915 = vmatpush.bf16.msra.mxu0 %v5800
    %6916 = vmatpush.bf16.msra.mxu0 %v5792
    %6917 = vmatpush.bf16.msra.mxu0 %v5784
    %6918 = vmatpush.bf16.msra.mxu0 %v5776
    %6919 = vmatpush.bf16.msra.mxu0 %v5768
    %6920 = vmatpush.bf16.msra.mxu0 %v5760
    %6921 = vmatmul.bf16.gmra.mxu0 %v1964
    %v6922 = vpop.f32.mrf.mxu0
    %v6923 = vadd.f32 %v6909, %v6922
    %v6924 = vpop.f32.mrf.mxu0
    %v6925 = vadd.f32 %v6911, %v6924
    %6926 = vdwg.mxu0
    %6927 = vmatpush.bf16.msra.mxu0 %v5113
    %6928 = vmatpush.bf16.msra.mxu0 %v5105
    %6929 = vmatpush.bf16.msra.mxu0 %v5097
    %6930 = vmatpush.bf16.msra.mxu0 %v5089
    %6931 = vmatpush.bf16.msra.mxu0 %v5081
    %6932 = vmatpush.bf16.msra.mxu0 %v5073
    %6933 = vmatpush.bf16.msra.mxu0 %v5065
    %6934 = vmatpush.bf16.msra.mxu0 %v5057
    %6935 = vmatmul.bf16.gmra.mxu0 %v1953
    %v6936 = vpop.f32.mrf.mxu0
    %v6937 = vadd.f32 %v2737, %v6936
    %v6938 = vpop.f32.mrf.mxu0
    %v6939 = vadd.f32 %v2737, %v6938
    %6940 = vdwg.mxu0
    %6941 = vmatpush.bf16.msra.mxu0 %v5177
    %6942 = vmatpush.bf16.msra.mxu0 %v5169
    %6943 = vmatpush.bf16.msra.mxu0 %v5161
    %6944 = vmatpush.bf16.msra.mxu0 %v5153
    %6945 = vmatpush.bf16.msra.mxu0 %v5145
    %6946 = vmatpush.bf16.msra.mxu0 %v5137
    %6947 = vmatpush.bf16.msra.mxu0 %v5129
    %6948 = vmatpush.bf16.msra.mxu0 %v5121
    %6949 = vmatmul.bf16.gmra.mxu0 %v1954
    %v6950 = vpop.f32.mrf.mxu0
    %v6951 = vadd.f32 %v6937, %v6950
    %v6952 = vpop.f32.mrf.mxu0
    %v6953 = vadd.f32 %v6939, %v6952
    %6954 = vdwg.mxu0
    %6955 = vmatpush.bf16.msra.mxu0 %v5241
    %6956 = vmatpush.bf16.msra.mxu0 %v5233
    %6957 = vmatpush.bf16.msra.mxu0 %v5225
    %6958 = vmatpush.bf16.msra.mxu0 %v5217
    %6959 = vmatpush.bf16.msra.mxu0 %v5209
    %6960 = vmatpush.bf16.msra.mxu0 %v5201
    %6961 = vmatpush.bf16.msra.mxu0 %v5193
    %6962 = vmatpush.bf16.msra.mxu0 %v5185
    %6963 = vmatmul.bf16.gmra.mxu0 %v1955
    %v6964 = vpop.f32.mrf.mxu0
    %v6965 = vadd.f32 %v6951, %v6964
    %v6966 = vpop.f32.mrf.mxu0
    %v6967 = vadd.f32 %v6953, %v6966
    %6968 = vdwg.mxu0
    %6969 = vmatpush.bf16.msra.mxu0 %v5305
    %6970 = vmatpush.bf16.msra.mxu0 %v5297
    %6971 = vmatpush.bf16.msra.mxu0 %v5289
    %6972 = vmatpush.bf16.msra.mxu0 %v5281
    %6973 = vmatpush.bf16.msra.mxu0 %v5273
    %6974 = vmatpush.bf16.msra.mxu0 %v5265
    %6975 = vmatpush.bf16.msra.mxu0 %v5257
    %6976 = vmatpush.bf16.msra.mxu0 %v5249
    %6977 = vmatmul.bf16.gmra.mxu0 %v1956
    %v6978 = vpop.f32.mrf.mxu0
    %v6979 = vadd.f32 %v6965, %v6978
    %v6980 = vpop.f32.mrf.mxu0
    %v6981 = vadd.f32 %v6967, %v6980
    %6982 = vdwg.mxu0
    %6983 = vmatpush.bf16.msra.mxu0 %v5369
    %6984 = vmatpush.bf16.msra.mxu0 %v5361
    %6985 = vmatpush.bf16.msra.mxu0 %v5353
    %6986 = vmatpush.bf16.msra.mxu0 %v5345
    %6987 = vmatpush.bf16.msra.mxu0 %v5337
    %6988 = vmatpush.bf16.msra.mxu0 %v5329
    %6989 = vmatpush.bf16.msra.mxu0 %v5321
    %6990 = vmatpush.bf16.msra.mxu0 %v5313
    %6991 = vmatmul.bf16.gmra.mxu0 %v1957
    %v6992 = vpop.f32.mrf.mxu0
    %v6993 = vadd.f32 %v6979, %v6992
    %v6994 = vpop.f32.mrf.mxu0
    %v6995 = vadd.f32 %v6981, %v6994
    %6996 = vdwg.mxu0
    %6997 = vmatpush.bf16.msra.mxu0 %v5433
    %6998 = vmatpush.bf16.msra.mxu0 %v5425
    %6999 = vmatpush.bf16.msra.mxu0 %v5417
    %7000 = vmatpush.bf16.msra.mxu0 %v5409
    %7001 = vmatpush.bf16.msra.mxu0 %v5401
    %7002 = vmatpush.bf16.msra.mxu0 %v5393
    %7003 = vmatpush.bf16.msra.mxu0 %v5385
    %7004 = vmatpush.bf16.msra.mxu0 %v5377
    %7005 = vmatmul.bf16.gmra.mxu0 %v1958
    %v7006 = vpop.f32.mrf.mxu0
    %v7007 = vadd.f32 %v6993, %v7006
    %v7008 = vpop.f32.mrf.mxu0
    %v7009 = vadd.f32 %v6995, %v7008
    %7010 = vdwg.mxu0
    %7011 = vmatpush.bf16.msra.mxu0 %v5497
    %7012 = vmatpush.bf16.msra.mxu0 %v5489
    %7013 = vmatpush.bf16.msra.mxu0 %v5481
    %7014 = vmatpush.bf16.msra.mxu0 %v5473
    %7015 = vmatpush.bf16.msra.mxu0 %v5465
    %7016 = vmatpush.bf16.msra.mxu0 %v5457
    %7017 = vmatpush.bf16.msra.mxu0 %v5449
    %7018 = vmatpush.bf16.msra.mxu0 %v5441
    %7019 = vmatmul.bf16.gmra.mxu0 %v1959
    %v7020 = vpop.f32.mrf.mxu0
    %v7021 = vadd.f32 %v7007, %v7020
    %v7022 = vpop.f32.mrf.mxu0
    %v7023 = vadd.f32 %v7009, %v7022
    %7024 = vdwg.mxu0
    %7025 = vmatpush.bf16.msra.mxu0 %v5561
    %7026 = vmatpush.bf16.msra.mxu0 %v5553
    %7027 = vmatpush.bf16.msra.mxu0 %v5545
    %7028 = vmatpush.bf16.msra.mxu0 %v5537
    %7029 = vmatpush.bf16.msra.mxu0 %v5529
    %7030 = vmatpush.bf16.msra.mxu0 %v5521
    %7031 = vmatpush.bf16.msra.mxu0 %v5513
    %7032 = vmatpush.bf16.msra.mxu0 %v5505
    %7033 = vmatmul.bf16.gmra.mxu0 %v1960
    %v7034 = vpop.f32.mrf.mxu0
    %v7035 = vadd.f32 %v7021, %v7034
    %v7036 = vpop.f32.mrf.mxu0
    %v7037 = vadd.f32 %v7023, %v7036
    %7038 = vdwg.mxu0
    %7039 = vmatpush.bf16.msra.mxu0 %v5625
    %7040 = vmatpush.bf16.msra.mxu0 %v5617
    %7041 = vmatpush.bf16.msra.mxu0 %v5609
    %7042 = vmatpush.bf16.msra.mxu0 %v5601
    %7043 = vmatpush.bf16.msra.mxu0 %v5593
    %7044 = vmatpush.bf16.msra.mxu0 %v5585
    %7045 = vmatpush.bf16.msra.mxu0 %v5577
    %7046 = vmatpush.bf16.msra.mxu0 %v5569
    %7047 = vmatmul.bf16.gmra.mxu0 %v1961
    %v7048 = vpop.f32.mrf.mxu0
    %v7049 = vadd.f32 %v7035, %v7048
    %v7050 = vpop.f32.mrf.mxu0
    %v7051 = vadd.f32 %v7037, %v7050
    %7052 = vdwg.mxu0
    %7053 = vmatpush.bf16.msra.mxu0 %v5689
    %7054 = vmatpush.bf16.msra.mxu0 %v5681
    %7055 = vmatpush.bf16.msra.mxu0 %v5673
    %7056 = vmatpush.bf16.msra.mxu0 %v5665
    %7057 = vmatpush.bf16.msra.mxu0 %v5657
    %7058 = vmatpush.bf16.msra.mxu0 %v5649
    %7059 = vmatpush.bf16.msra.mxu0 %v5641
    %7060 = vmatpush.bf16.msra.mxu0 %v5633
    %7061 = vmatmul.bf16.gmra.mxu0 %v1962
    %v7062 = vpop.f32.mrf.mxu0
    %v7063 = vadd.f32 %v7049, %v7062
    %v7064 = vpop.f32.mrf.mxu0
    %v7065 = vadd.f32 %v7051, %v7064
    %7066 = vdwg.mxu0
    %7067 = vmatpush.bf16.msra.mxu0 %v5753
    %7068 = vmatpush.bf16.msra.mxu0 %v5745
    %7069 = vmatpush.bf16.msra.mxu0 %v5737
    %7070 = vmatpush.bf16.msra.mxu0 %v5729
    %7071 = vmatpush.bf16.msra.mxu0 %v5721
    %7072 = vmatpush.bf16.msra.mxu0 %v5713
    %7073 = vmatpush.bf16.msra.mxu0 %v5705
    %7074 = vmatpush.bf16.msra.mxu0 %v5697
    %7075 = vmatmul.bf16.gmra.mxu0 %v1963
    %v7076 = vpop.f32.mrf.mxu0
    %v7077 = vadd.f32 %v7063, %v7076
    %v7078 = vpop.f32.mrf.mxu0
    %v7079 = vadd.f32 %v7065, %v7078
    %7080 = vdwg.mxu0
    %7081 = vmatpush.bf16.msra.mxu0 %v5817
    %7082 = vmatpush.bf16.msra.mxu0 %v5809
    %7083 = vmatpush.bf16.msra.mxu0 %v5801
    %7084 = vmatpush.bf16.msra.mxu0 %v5793
    %7085 = vmatpush.bf16.msra.mxu0 %v5785
    %7086 = vmatpush.bf16.msra.mxu0 %v5777
    %7087 = vmatpush.bf16.msra.mxu0 %v5769
    %7088 = vmatpush.bf16.msra.mxu0 %v5761
    %7089 = vmatmul.bf16.gmra.mxu0 %v1964
    %v7090 = vpop.f32.mrf.mxu0
    %v7091 = vadd.f32 %v7077, %v7090
    %v7092 = vpop.f32.mrf.mxu0
    %v7093 = vadd.f32 %v7079, %v7092
    %7094 = vdwg.mxu0
    %7095 = vmatpush.bf16.msra.mxu0 %v5114
    %7096 = vmatpush.bf16.msra.mxu0 %v5106
    %7097 = vmatpush.bf16.msra.mxu0 %v5098
    %7098 = vmatpush.bf16.msra.mxu0 %v5090
    %7099 = vmatpush.bf16.msra.mxu0 %v5082
    %7100 = vmatpush.bf16.msra.mxu0 %v5074
    %7101 = vmatpush.bf16.msra.mxu0 %v5066
    %7102 = vmatpush.bf16.msra.mxu0 %v5058
    %7103 = vmatmul.bf16.gmra.mxu0 %v1953
    %v7104 = vpop.f32.mrf.mxu0
    %v7105 = vadd.f32 %v2738, %v7104
    %v7106 = vpop.f32.mrf.mxu0
    %v7107 = vadd.f32 %v2738, %v7106
    %7108 = vdwg.mxu0
    %7109 = vmatpush.bf16.msra.mxu0 %v5178
    %7110 = vmatpush.bf16.msra.mxu0 %v5170
    %7111 = vmatpush.bf16.msra.mxu0 %v5162
    %7112 = vmatpush.bf16.msra.mxu0 %v5154
    %7113 = vmatpush.bf16.msra.mxu0 %v5146
    %7114 = vmatpush.bf16.msra.mxu0 %v5138
    %7115 = vmatpush.bf16.msra.mxu0 %v5130
    %7116 = vmatpush.bf16.msra.mxu0 %v5122
    %7117 = vmatmul.bf16.gmra.mxu0 %v1954
    %v7118 = vpop.f32.mrf.mxu0
    %v7119 = vadd.f32 %v7105, %v7118
    %v7120 = vpop.f32.mrf.mxu0
    %v7121 = vadd.f32 %v7107, %v7120
    %7122 = vdwg.mxu0
    %7123 = vmatpush.bf16.msra.mxu0 %v5242
    %7124 = vmatpush.bf16.msra.mxu0 %v5234
    %7125 = vmatpush.bf16.msra.mxu0 %v5226
    %7126 = vmatpush.bf16.msra.mxu0 %v5218
    %7127 = vmatpush.bf16.msra.mxu0 %v5210
    %7128 = vmatpush.bf16.msra.mxu0 %v5202
    %7129 = vmatpush.bf16.msra.mxu0 %v5194
    %7130 = vmatpush.bf16.msra.mxu0 %v5186
    %7131 = vmatmul.bf16.gmra.mxu0 %v1955
    %v7132 = vpop.f32.mrf.mxu0
    %v7133 = vadd.f32 %v7119, %v7132
    %v7134 = vpop.f32.mrf.mxu0
    %v7135 = vadd.f32 %v7121, %v7134
    %7136 = vdwg.mxu0
    %7137 = vmatpush.bf16.msra.mxu0 %v5306
    %7138 = vmatpush.bf16.msra.mxu0 %v5298
    %7139 = vmatpush.bf16.msra.mxu0 %v5290
    %7140 = vmatpush.bf16.msra.mxu0 %v5282
    %7141 = vmatpush.bf16.msra.mxu0 %v5274
    %7142 = vmatpush.bf16.msra.mxu0 %v5266
    %7143 = vmatpush.bf16.msra.mxu0 %v5258
    %7144 = vmatpush.bf16.msra.mxu0 %v5250
    %7145 = vmatmul.bf16.gmra.mxu0 %v1956
    %v7146 = vpop.f32.mrf.mxu0
    %v7147 = vadd.f32 %v7133, %v7146
    %v7148 = vpop.f32.mrf.mxu0
    %v7149 = vadd.f32 %v7135, %v7148
    %7150 = vdwg.mxu0
    %7151 = vmatpush.bf16.msra.mxu0 %v5370
    %7152 = vmatpush.bf16.msra.mxu0 %v5362
    %7153 = vmatpush.bf16.msra.mxu0 %v5354
    %7154 = vmatpush.bf16.msra.mxu0 %v5346
    %7155 = vmatpush.bf16.msra.mxu0 %v5338
    %7156 = vmatpush.bf16.msra.mxu0 %v5330
    %7157 = vmatpush.bf16.msra.mxu0 %v5322
    %7158 = vmatpush.bf16.msra.mxu0 %v5314
    %7159 = vmatmul.bf16.gmra.mxu0 %v1957
    %v7160 = vpop.f32.mrf.mxu0
    %v7161 = vadd.f32 %v7147, %v7160
    %v7162 = vpop.f32.mrf.mxu0
    %v7163 = vadd.f32 %v7149, %v7162
    %7164 = vdwg.mxu0
    %7165 = vmatpush.bf16.msra.mxu0 %v5434
    %7166 = vmatpush.bf16.msra.mxu0 %v5426
    %7167 = vmatpush.bf16.msra.mxu0 %v5418
    %7168 = vmatpush.bf16.msra.mxu0 %v5410
    %7169 = vmatpush.bf16.msra.mxu0 %v5402
    %7170 = vmatpush.bf16.msra.mxu0 %v5394
    %7171 = vmatpush.bf16.msra.mxu0 %v5386
    %7172 = vmatpush.bf16.msra.mxu0 %v5378
    %7173 = vmatmul.bf16.gmra.mxu0 %v1958
    %v7174 = vpop.f32.mrf.mxu0
    %v7175 = vadd.f32 %v7161, %v7174
    %v7176 = vpop.f32.mrf.mxu0
    %v7177 = vadd.f32 %v7163, %v7176
    %7178 = vdwg.mxu0
    %7179 = vmatpush.bf16.msra.mxu0 %v5498
    %7180 = vmatpush.bf16.msra.mxu0 %v5490
    %7181 = vmatpush.bf16.msra.mxu0 %v5482
    %7182 = vmatpush.bf16.msra.mxu0 %v5474
    %7183 = vmatpush.bf16.msra.mxu0 %v5466
    %7184 = vmatpush.bf16.msra.mxu0 %v5458
    %7185 = vmatpush.bf16.msra.mxu0 %v5450
    %7186 = vmatpush.bf16.msra.mxu0 %v5442
    %7187 = vmatmul.bf16.gmra.mxu0 %v1959
    %v7188 = vpop.f32.mrf.mxu0
    %v7189 = vadd.f32 %v7175, %v7188
    %v7190 = vpop.f32.mrf.mxu0
    %v7191 = vadd.f32 %v7177, %v7190
    %7192 = vdwg.mxu0
    %7193 = vmatpush.bf16.msra.mxu0 %v5562
    %7194 = vmatpush.bf16.msra.mxu0 %v5554
    %7195 = vmatpush.bf16.msra.mxu0 %v5546
    %7196 = vmatpush.bf16.msra.mxu0 %v5538
    %7197 = vmatpush.bf16.msra.mxu0 %v5530
    %7198 = vmatpush.bf16.msra.mxu0 %v5522
    %7199 = vmatpush.bf16.msra.mxu0 %v5514
    %7200 = vmatpush.bf16.msra.mxu0 %v5506
    %7201 = vmatmul.bf16.gmra.mxu0 %v1960
    %v7202 = vpop.f32.mrf.mxu0
    %v7203 = vadd.f32 %v7189, %v7202
    %v7204 = vpop.f32.mrf.mxu0
    %v7205 = vadd.f32 %v7191, %v7204
    %7206 = vdwg.mxu0
    %7207 = vmatpush.bf16.msra.mxu0 %v5626
    %7208 = vmatpush.bf16.msra.mxu0 %v5618
    %7209 = vmatpush.bf16.msra.mxu0 %v5610
    %7210 = vmatpush.bf16.msra.mxu0 %v5602
    %7211 = vmatpush.bf16.msra.mxu0 %v5594
    %7212 = vmatpush.bf16.msra.mxu0 %v5586
    %7213 = vmatpush.bf16.msra.mxu0 %v5578
    %7214 = vmatpush.bf16.msra.mxu0 %v5570
    %7215 = vmatmul.bf16.gmra.mxu0 %v1961
    %v7216 = vpop.f32.mrf.mxu0
    %v7217 = vadd.f32 %v7203, %v7216
    %v7218 = vpop.f32.mrf.mxu0
    %v7219 = vadd.f32 %v7205, %v7218
    %7220 = vdwg.mxu0
    %7221 = vmatpush.bf16.msra.mxu0 %v5690
    %7222 = vmatpush.bf16.msra.mxu0 %v5682
    %7223 = vmatpush.bf16.msra.mxu0 %v5674
    %7224 = vmatpush.bf16.msra.mxu0 %v5666
    %7225 = vmatpush.bf16.msra.mxu0 %v5658
    %7226 = vmatpush.bf16.msra.mxu0 %v5650
    %7227 = vmatpush.bf16.msra.mxu0 %v5642
    %7228 = vmatpush.bf16.msra.mxu0 %v5634
    %7229 = vmatmul.bf16.gmra.mxu0 %v1962
    %v7230 = vpop.f32.mrf.mxu0
    %v7231 = vadd.f32 %v7217, %v7230
    %v7232 = vpop.f32.mrf.mxu0
    %v7233 = vadd.f32 %v7219, %v7232
    %7234 = vdwg.mxu0
    %7235 = vmatpush.bf16.msra.mxu0 %v5754
    %7236 = vmatpush.bf16.msra.mxu0 %v5746
    %7237 = vmatpush.bf16.msra.mxu0 %v5738
    %7238 = vmatpush.bf16.msra.mxu0 %v5730
    %7239 = vmatpush.bf16.msra.mxu0 %v5722
    %7240 = vmatpush.bf16.msra.mxu0 %v5714
    %7241 = vmatpush.bf16.msra.mxu0 %v5706
    %7242 = vmatpush.bf16.msra.mxu0 %v5698
    %7243 = vmatmul.bf16.gmra.mxu0 %v1963
    %v7244 = vpop.f32.mrf.mxu0
    %v7245 = vadd.f32 %v7231, %v7244
    %v7246 = vpop.f32.mrf.mxu0
    %v7247 = vadd.f32 %v7233, %v7246
    %7248 = vdwg.mxu0
    %7249 = vmatpush.bf16.msra.mxu0 %v5818
    %7250 = vmatpush.bf16.msra.mxu0 %v5810
    %7251 = vmatpush.bf16.msra.mxu0 %v5802
    %7252 = vmatpush.bf16.msra.mxu0 %v5794
    %7253 = vmatpush.bf16.msra.mxu0 %v5786
    %7254 = vmatpush.bf16.msra.mxu0 %v5778
    %7255 = vmatpush.bf16.msra.mxu0 %v5770
    %7256 = vmatpush.bf16.msra.mxu0 %v5762
    %7257 = vmatmul.bf16.gmra.mxu0 %v1964
    %v7258 = vpop.f32.mrf.mxu0
    %v7259 = vadd.f32 %v7245, %v7258
    %v7260 = vpop.f32.mrf.mxu0
    %v7261 = vadd.f32 %v7247, %v7260
    %7262 = vdwg.mxu0
    %7263 = vmatpush.bf16.msra.mxu0 %v5115
    %7264 = vmatpush.bf16.msra.mxu0 %v5107
    %7265 = vmatpush.bf16.msra.mxu0 %v5099
    %7266 = vmatpush.bf16.msra.mxu0 %v5091
    %7267 = vmatpush.bf16.msra.mxu0 %v5083
    %7268 = vmatpush.bf16.msra.mxu0 %v5075
    %7269 = vmatpush.bf16.msra.mxu0 %v5067
    %7270 = vmatpush.bf16.msra.mxu0 %v5059
    %7271 = vmatmul.bf16.gmra.mxu0 %v1953
    %v7272 = vpop.f32.mrf.mxu0
    %v7273 = vadd.f32 %v2739, %v7272
    %v7274 = vpop.f32.mrf.mxu0
    %v7275 = vadd.f32 %v2739, %v7274
    %7276 = vdwg.mxu0
    %7277 = vmatpush.bf16.msra.mxu0 %v5179
    %7278 = vmatpush.bf16.msra.mxu0 %v5171
    %7279 = vmatpush.bf16.msra.mxu0 %v5163
    %7280 = vmatpush.bf16.msra.mxu0 %v5155
    %7281 = vmatpush.bf16.msra.mxu0 %v5147
    %7282 = vmatpush.bf16.msra.mxu0 %v5139
    %7283 = vmatpush.bf16.msra.mxu0 %v5131
    %7284 = vmatpush.bf16.msra.mxu0 %v5123
    %7285 = vmatmul.bf16.gmra.mxu0 %v1954
    %v7286 = vpop.f32.mrf.mxu0
    %v7287 = vadd.f32 %v7273, %v7286
    %v7288 = vpop.f32.mrf.mxu0
    %v7289 = vadd.f32 %v7275, %v7288
    %7290 = vdwg.mxu0
    %7291 = vmatpush.bf16.msra.mxu0 %v5243
    %7292 = vmatpush.bf16.msra.mxu0 %v5235
    %7293 = vmatpush.bf16.msra.mxu0 %v5227
    %7294 = vmatpush.bf16.msra.mxu0 %v5219
    %7295 = vmatpush.bf16.msra.mxu0 %v5211
    %7296 = vmatpush.bf16.msra.mxu0 %v5203
    %7297 = vmatpush.bf16.msra.mxu0 %v5195
    %7298 = vmatpush.bf16.msra.mxu0 %v5187
    %7299 = vmatmul.bf16.gmra.mxu0 %v1955
    %v7300 = vpop.f32.mrf.mxu0
    %v7301 = vadd.f32 %v7287, %v7300
    %v7302 = vpop.f32.mrf.mxu0
    %v7303 = vadd.f32 %v7289, %v7302
    %7304 = vdwg.mxu0
    %7305 = vmatpush.bf16.msra.mxu0 %v5307
    %7306 = vmatpush.bf16.msra.mxu0 %v5299
    %7307 = vmatpush.bf16.msra.mxu0 %v5291
    %7308 = vmatpush.bf16.msra.mxu0 %v5283
    %7309 = vmatpush.bf16.msra.mxu0 %v5275
    %7310 = vmatpush.bf16.msra.mxu0 %v5267
    %7311 = vmatpush.bf16.msra.mxu0 %v5259
    %7312 = vmatpush.bf16.msra.mxu0 %v5251
    %7313 = vmatmul.bf16.gmra.mxu0 %v1956
    %v7314 = vpop.f32.mrf.mxu0
    %v7315 = vadd.f32 %v7301, %v7314
    %v7316 = vpop.f32.mrf.mxu0
    %v7317 = vadd.f32 %v7303, %v7316
    %7318 = vdwg.mxu0
    %7319 = vmatpush.bf16.msra.mxu0 %v5371
    %7320 = vmatpush.bf16.msra.mxu0 %v5363
    %7321 = vmatpush.bf16.msra.mxu0 %v5355
    %7322 = vmatpush.bf16.msra.mxu0 %v5347
    %7323 = vmatpush.bf16.msra.mxu0 %v5339
    %7324 = vmatpush.bf16.msra.mxu0 %v5331
    %7325 = vmatpush.bf16.msra.mxu0 %v5323
    %7326 = vmatpush.bf16.msra.mxu0 %v5315
    %7327 = vmatmul.bf16.gmra.mxu0 %v1957
    %v7328 = vpop.f32.mrf.mxu0
    %v7329 = vadd.f32 %v7315, %v7328
    %v7330 = vpop.f32.mrf.mxu0
    %v7331 = vadd.f32 %v7317, %v7330
    %7332 = vdwg.mxu0
    %7333 = vmatpush.bf16.msra.mxu0 %v5435
    %7334 = vmatpush.bf16.msra.mxu0 %v5427
    %7335 = vmatpush.bf16.msra.mxu0 %v5419
    %7336 = vmatpush.bf16.msra.mxu0 %v5411
    %7337 = vmatpush.bf16.msra.mxu0 %v5403
    %7338 = vmatpush.bf16.msra.mxu0 %v5395
    %7339 = vmatpush.bf16.msra.mxu0 %v5387
    %7340 = vmatpush.bf16.msra.mxu0 %v5379
    %7341 = vmatmul.bf16.gmra.mxu0 %v1958
    %v7342 = vpop.f32.mrf.mxu0
    %v7343 = vadd.f32 %v7329, %v7342
    %v7344 = vpop.f32.mrf.mxu0
    %v7345 = vadd.f32 %v7331, %v7344
    %7346 = vdwg.mxu0
    %7347 = vmatpush.bf16.msra.mxu0 %v5499
    %7348 = vmatpush.bf16.msra.mxu0 %v5491
    %7349 = vmatpush.bf16.msra.mxu0 %v5483
    %7350 = vmatpush.bf16.msra.mxu0 %v5475
    %7351 = vmatpush.bf16.msra.mxu0 %v5467
    %7352 = vmatpush.bf16.msra.mxu0 %v5459
    %7353 = vmatpush.bf16.msra.mxu0 %v5451
    %7354 = vmatpush.bf16.msra.mxu0 %v5443
    %7355 = vmatmul.bf16.gmra.mxu0 %v1959
    %v7356 = vpop.f32.mrf.mxu0
    %v7357 = vadd.f32 %v7343, %v7356
    %v7358 = vpop.f32.mrf.mxu0
    %v7359 = vadd.f32 %v7345, %v7358
    %7360 = vdwg.mxu0
    %7361 = vmatpush.bf16.msra.mxu0 %v5563
    %7362 = vmatpush.bf16.msra.mxu0 %v5555
    %7363 = vmatpush.bf16.msra.mxu0 %v5547
    %7364 = vmatpush.bf16.msra.mxu0 %v5539
    %7365 = vmatpush.bf16.msra.mxu0 %v5531
    %7366 = vmatpush.bf16.msra.mxu0 %v5523
    %7367 = vmatpush.bf16.msra.mxu0 %v5515
    %7368 = vmatpush.bf16.msra.mxu0 %v5507
    %7369 = vmatmul.bf16.gmra.mxu0 %v1960
    %v7370 = vpop.f32.mrf.mxu0
    %v7371 = vadd.f32 %v7357, %v7370
    %v7372 = vpop.f32.mrf.mxu0
    %v7373 = vadd.f32 %v7359, %v7372
    %7374 = vdwg.mxu0
    %7375 = vmatpush.bf16.msra.mxu0 %v5627
    %7376 = vmatpush.bf16.msra.mxu0 %v5619
    %7377 = vmatpush.bf16.msra.mxu0 %v5611
    %7378 = vmatpush.bf16.msra.mxu0 %v5603
    %7379 = vmatpush.bf16.msra.mxu0 %v5595
    %7380 = vmatpush.bf16.msra.mxu0 %v5587
    %7381 = vmatpush.bf16.msra.mxu0 %v5579
    %7382 = vmatpush.bf16.msra.mxu0 %v5571
    %7383 = vmatmul.bf16.gmra.mxu0 %v1961
    %v7384 = vpop.f32.mrf.mxu0
    %v7385 = vadd.f32 %v7371, %v7384
    %v7386 = vpop.f32.mrf.mxu0
    %v7387 = vadd.f32 %v7373, %v7386
    %7388 = vdwg.mxu0
    %7389 = vmatpush.bf16.msra.mxu0 %v5691
    %7390 = vmatpush.bf16.msra.mxu0 %v5683
    %7391 = vmatpush.bf16.msra.mxu0 %v5675
    %7392 = vmatpush.bf16.msra.mxu0 %v5667
    %7393 = vmatpush.bf16.msra.mxu0 %v5659
    %7394 = vmatpush.bf16.msra.mxu0 %v5651
    %7395 = vmatpush.bf16.msra.mxu0 %v5643
    %7396 = vmatpush.bf16.msra.mxu0 %v5635
    %7397 = vmatmul.bf16.gmra.mxu0 %v1962
    %v7398 = vpop.f32.mrf.mxu0
    %v7399 = vadd.f32 %v7385, %v7398
    %v7400 = vpop.f32.mrf.mxu0
    %v7401 = vadd.f32 %v7387, %v7400
    %7402 = vdwg.mxu0
    %7403 = vmatpush.bf16.msra.mxu0 %v5755
    %7404 = vmatpush.bf16.msra.mxu0 %v5747
    %7405 = vmatpush.bf16.msra.mxu0 %v5739
    %7406 = vmatpush.bf16.msra.mxu0 %v5731
    %7407 = vmatpush.bf16.msra.mxu0 %v5723
    %7408 = vmatpush.bf16.msra.mxu0 %v5715
    %7409 = vmatpush.bf16.msra.mxu0 %v5707
    %7410 = vmatpush.bf16.msra.mxu0 %v5699
    %7411 = vmatmul.bf16.gmra.mxu0 %v1963
    %v7412 = vpop.f32.mrf.mxu0
    %v7413 = vadd.f32 %v7399, %v7412
    %v7414 = vpop.f32.mrf.mxu0
    %v7415 = vadd.f32 %v7401, %v7414
    %7416 = vdwg.mxu0
    %7417 = vmatpush.bf16.msra.mxu0 %v5819
    %7418 = vmatpush.bf16.msra.mxu0 %v5811
    %7419 = vmatpush.bf16.msra.mxu0 %v5803
    %7420 = vmatpush.bf16.msra.mxu0 %v5795
    %7421 = vmatpush.bf16.msra.mxu0 %v5787
    %7422 = vmatpush.bf16.msra.mxu0 %v5779
    %7423 = vmatpush.bf16.msra.mxu0 %v5771
    %7424 = vmatpush.bf16.msra.mxu0 %v5763
    %7425 = vmatmul.bf16.gmra.mxu0 %v1964
    %v7426 = vpop.f32.mrf.mxu0
    %v7427 = vadd.f32 %v7413, %v7426
    %v7428 = vpop.f32.mrf.mxu0
    %v7429 = vadd.f32 %v7415, %v7428
    %7430 = vdwg.mxu0
    %7431 = vmatpush.bf16.msra.mxu0 %v5116
    %7432 = vmatpush.bf16.msra.mxu0 %v5108
    %7433 = vmatpush.bf16.msra.mxu0 %v5100
    %7434 = vmatpush.bf16.msra.mxu0 %v5092
    %7435 = vmatpush.bf16.msra.mxu0 %v5084
    %7436 = vmatpush.bf16.msra.mxu0 %v5076
    %7437 = vmatpush.bf16.msra.mxu0 %v5068
    %7438 = vmatpush.bf16.msra.mxu0 %v5060
    %7439 = vmatmul.bf16.gmra.mxu0 %v1953
    %v7440 = vpop.f32.mrf.mxu0
    %v7441 = vadd.f32 %v2740, %v7440
    %v7442 = vpop.f32.mrf.mxu0
    %v7443 = vadd.f32 %v2740, %v7442
    %7444 = vdwg.mxu0
    %7445 = vmatpush.bf16.msra.mxu0 %v5180
    %7446 = vmatpush.bf16.msra.mxu0 %v5172
    %7447 = vmatpush.bf16.msra.mxu0 %v5164
    %7448 = vmatpush.bf16.msra.mxu0 %v5156
    %7449 = vmatpush.bf16.msra.mxu0 %v5148
    %7450 = vmatpush.bf16.msra.mxu0 %v5140
    %7451 = vmatpush.bf16.msra.mxu0 %v5132
    %7452 = vmatpush.bf16.msra.mxu0 %v5124
    %7453 = vmatmul.bf16.gmra.mxu0 %v1954
    %v7454 = vpop.f32.mrf.mxu0
    %v7455 = vadd.f32 %v7441, %v7454
    %v7456 = vpop.f32.mrf.mxu0
    %v7457 = vadd.f32 %v7443, %v7456
    %7458 = vdwg.mxu0
    %7459 = vmatpush.bf16.msra.mxu0 %v5244
    %7460 = vmatpush.bf16.msra.mxu0 %v5236
    %7461 = vmatpush.bf16.msra.mxu0 %v5228
    %7462 = vmatpush.bf16.msra.mxu0 %v5220
    %7463 = vmatpush.bf16.msra.mxu0 %v5212
    %7464 = vmatpush.bf16.msra.mxu0 %v5204
    %7465 = vmatpush.bf16.msra.mxu0 %v5196
    %7466 = vmatpush.bf16.msra.mxu0 %v5188
    %7467 = vmatmul.bf16.gmra.mxu0 %v1955
    %v7468 = vpop.f32.mrf.mxu0
    %v7469 = vadd.f32 %v7455, %v7468
    %v7470 = vpop.f32.mrf.mxu0
    %v7471 = vadd.f32 %v7457, %v7470
    %7472 = vdwg.mxu0
    %7473 = vmatpush.bf16.msra.mxu0 %v5308
    %7474 = vmatpush.bf16.msra.mxu0 %v5300
    %7475 = vmatpush.bf16.msra.mxu0 %v5292
    %7476 = vmatpush.bf16.msra.mxu0 %v5284
    %7477 = vmatpush.bf16.msra.mxu0 %v5276
    %7478 = vmatpush.bf16.msra.mxu0 %v5268
    %7479 = vmatpush.bf16.msra.mxu0 %v5260
    %7480 = vmatpush.bf16.msra.mxu0 %v5252
    %7481 = vmatmul.bf16.gmra.mxu0 %v1956
    %v7482 = vpop.f32.mrf.mxu0
    %v7483 = vadd.f32 %v7469, %v7482
    %v7484 = vpop.f32.mrf.mxu0
    %v7485 = vadd.f32 %v7471, %v7484
    %7486 = vdwg.mxu0
    %7487 = vmatpush.bf16.msra.mxu0 %v5372
    %7488 = vmatpush.bf16.msra.mxu0 %v5364
    %7489 = vmatpush.bf16.msra.mxu0 %v5356
    %7490 = vmatpush.bf16.msra.mxu0 %v5348
    %7491 = vmatpush.bf16.msra.mxu0 %v5340
    %7492 = vmatpush.bf16.msra.mxu0 %v5332
    %7493 = vmatpush.bf16.msra.mxu0 %v5324
    %7494 = vmatpush.bf16.msra.mxu0 %v5316
    %7495 = vmatmul.bf16.gmra.mxu0 %v1957
    %v7496 = vpop.f32.mrf.mxu0
    %v7497 = vadd.f32 %v7483, %v7496
    %v7498 = vpop.f32.mrf.mxu0
    %v7499 = vadd.f32 %v7485, %v7498
    %7500 = vdwg.mxu0
    %7501 = vmatpush.bf16.msra.mxu0 %v5436
    %7502 = vmatpush.bf16.msra.mxu0 %v5428
    %7503 = vmatpush.bf16.msra.mxu0 %v5420
    %7504 = vmatpush.bf16.msra.mxu0 %v5412
    %7505 = vmatpush.bf16.msra.mxu0 %v5404
    %7506 = vmatpush.bf16.msra.mxu0 %v5396
    %7507 = vmatpush.bf16.msra.mxu0 %v5388
    %7508 = vmatpush.bf16.msra.mxu0 %v5380
    %7509 = vmatmul.bf16.gmra.mxu0 %v1958
    %v7510 = vpop.f32.mrf.mxu0
    %v7511 = vadd.f32 %v7497, %v7510
    %v7512 = vpop.f32.mrf.mxu0
    %v7513 = vadd.f32 %v7499, %v7512
    %7514 = vdwg.mxu0
    %7515 = vmatpush.bf16.msra.mxu0 %v5500
    %7516 = vmatpush.bf16.msra.mxu0 %v5492
    %7517 = vmatpush.bf16.msra.mxu0 %v5484
    %7518 = vmatpush.bf16.msra.mxu0 %v5476
    %7519 = vmatpush.bf16.msra.mxu0 %v5468
    %7520 = vmatpush.bf16.msra.mxu0 %v5460
    %7521 = vmatpush.bf16.msra.mxu0 %v5452
    %7522 = vmatpush.bf16.msra.mxu0 %v5444
    %7523 = vmatmul.bf16.gmra.mxu0 %v1959
    %v7524 = vpop.f32.mrf.mxu0
    %v7525 = vadd.f32 %v7511, %v7524
    %v7526 = vpop.f32.mrf.mxu0
    %v7527 = vadd.f32 %v7513, %v7526
    %7528 = vdwg.mxu0
    %7529 = vmatpush.bf16.msra.mxu0 %v5564
    %7530 = vmatpush.bf16.msra.mxu0 %v5556
    %7531 = vmatpush.bf16.msra.mxu0 %v5548
    %7532 = vmatpush.bf16.msra.mxu0 %v5540
    %7533 = vmatpush.bf16.msra.mxu0 %v5532
    %7534 = vmatpush.bf16.msra.mxu0 %v5524
    %7535 = vmatpush.bf16.msra.mxu0 %v5516
    %7536 = vmatpush.bf16.msra.mxu0 %v5508
    %7537 = vmatmul.bf16.gmra.mxu0 %v1960
    %v7538 = vpop.f32.mrf.mxu0
    %v7539 = vadd.f32 %v7525, %v7538
    %v7540 = vpop.f32.mrf.mxu0
    %v7541 = vadd.f32 %v7527, %v7540
    %7542 = vdwg.mxu0
    %7543 = vmatpush.bf16.msra.mxu0 %v5628
    %7544 = vmatpush.bf16.msra.mxu0 %v5620
    %7545 = vmatpush.bf16.msra.mxu0 %v5612
    %7546 = vmatpush.bf16.msra.mxu0 %v5604
    %7547 = vmatpush.bf16.msra.mxu0 %v5596
    %7548 = vmatpush.bf16.msra.mxu0 %v5588
    %7549 = vmatpush.bf16.msra.mxu0 %v5580
    %7550 = vmatpush.bf16.msra.mxu0 %v5572
    %7551 = vmatmul.bf16.gmra.mxu0 %v1961
    %v7552 = vpop.f32.mrf.mxu0
    %v7553 = vadd.f32 %v7539, %v7552
    %v7554 = vpop.f32.mrf.mxu0
    %v7555 = vadd.f32 %v7541, %v7554
    %7556 = vdwg.mxu0
    %7557 = vmatpush.bf16.msra.mxu0 %v5692
    %7558 = vmatpush.bf16.msra.mxu0 %v5684
    %7559 = vmatpush.bf16.msra.mxu0 %v5676
    %7560 = vmatpush.bf16.msra.mxu0 %v5668
    %7561 = vmatpush.bf16.msra.mxu0 %v5660
    %7562 = vmatpush.bf16.msra.mxu0 %v5652
    %7563 = vmatpush.bf16.msra.mxu0 %v5644
    %7564 = vmatpush.bf16.msra.mxu0 %v5636
    %7565 = vmatmul.bf16.gmra.mxu0 %v1962
    %v7566 = vpop.f32.mrf.mxu0
    %v7567 = vadd.f32 %v7553, %v7566
    %v7568 = vpop.f32.mrf.mxu0
    %v7569 = vadd.f32 %v7555, %v7568
    %7570 = vdwg.mxu0
    %7571 = vmatpush.bf16.msra.mxu0 %v5756
    %7572 = vmatpush.bf16.msra.mxu0 %v5748
    %7573 = vmatpush.bf16.msra.mxu0 %v5740
    %7574 = vmatpush.bf16.msra.mxu0 %v5732
    %7575 = vmatpush.bf16.msra.mxu0 %v5724
    %7576 = vmatpush.bf16.msra.mxu0 %v5716
    %7577 = vmatpush.bf16.msra.mxu0 %v5708
    %7578 = vmatpush.bf16.msra.mxu0 %v5700
    %7579 = vmatmul.bf16.gmra.mxu0 %v1963
    %v7580 = vpop.f32.mrf.mxu0
    %v7581 = vadd.f32 %v7567, %v7580
    %v7582 = vpop.f32.mrf.mxu0
    %v7583 = vadd.f32 %v7569, %v7582
    %7584 = vdwg.mxu0
    %7585 = vmatpush.bf16.msra.mxu0 %v5820
    %7586 = vmatpush.bf16.msra.mxu0 %v5812
    %7587 = vmatpush.bf16.msra.mxu0 %v5804
    %7588 = vmatpush.bf16.msra.mxu0 %v5796
    %7589 = vmatpush.bf16.msra.mxu0 %v5788
    %7590 = vmatpush.bf16.msra.mxu0 %v5780
    %7591 = vmatpush.bf16.msra.mxu0 %v5772
    %7592 = vmatpush.bf16.msra.mxu0 %v5764
    %7593 = vmatmul.bf16.gmra.mxu0 %v1964
    %v7594 = vpop.f32.mrf.mxu0
    %v7595 = vadd.f32 %v7581, %v7594
    %v7596 = vpop.f32.mrf.mxu0
    %v7597 = vadd.f32 %v7583, %v7596
    %7598 = vdwg.mxu0
    %7599 = vmatpush.bf16.msra.mxu0 %v5117
    %7600 = vmatpush.bf16.msra.mxu0 %v5109
    %7601 = vmatpush.bf16.msra.mxu0 %v5101
    %7602 = vmatpush.bf16.msra.mxu0 %v5093
    %7603 = vmatpush.bf16.msra.mxu0 %v5085
    %7604 = vmatpush.bf16.msra.mxu0 %v5077
    %7605 = vmatpush.bf16.msra.mxu0 %v5069
    %7606 = vmatpush.bf16.msra.mxu0 %v5061
    %7607 = vmatmul.bf16.gmra.mxu0 %v1953
    %v7608 = vpop.f32.mrf.mxu0
    %v7609 = vadd.f32 %v2741, %v7608
    %v7610 = vpop.f32.mrf.mxu0
    %v7611 = vadd.f32 %v2741, %v7610
    %7612 = vdwg.mxu0
    %7613 = vmatpush.bf16.msra.mxu0 %v5181
    %7614 = vmatpush.bf16.msra.mxu0 %v5173
    %7615 = vmatpush.bf16.msra.mxu0 %v5165
    %7616 = vmatpush.bf16.msra.mxu0 %v5157
    %7617 = vmatpush.bf16.msra.mxu0 %v5149
    %7618 = vmatpush.bf16.msra.mxu0 %v5141
    %7619 = vmatpush.bf16.msra.mxu0 %v5133
    %7620 = vmatpush.bf16.msra.mxu0 %v5125
    %7621 = vmatmul.bf16.gmra.mxu0 %v1954
    %v7622 = vpop.f32.mrf.mxu0
    %v7623 = vadd.f32 %v7609, %v7622
    %v7624 = vpop.f32.mrf.mxu0
    %v7625 = vadd.f32 %v7611, %v7624
    %7626 = vdwg.mxu0
    %7627 = vmatpush.bf16.msra.mxu0 %v5245
    %7628 = vmatpush.bf16.msra.mxu0 %v5237
    %7629 = vmatpush.bf16.msra.mxu0 %v5229
    %7630 = vmatpush.bf16.msra.mxu0 %v5221
    %7631 = vmatpush.bf16.msra.mxu0 %v5213
    %7632 = vmatpush.bf16.msra.mxu0 %v5205
    %7633 = vmatpush.bf16.msra.mxu0 %v5197
    %7634 = vmatpush.bf16.msra.mxu0 %v5189
    %7635 = vmatmul.bf16.gmra.mxu0 %v1955
    %v7636 = vpop.f32.mrf.mxu0
    %v7637 = vadd.f32 %v7623, %v7636
    %v7638 = vpop.f32.mrf.mxu0
    %v7639 = vadd.f32 %v7625, %v7638
    %7640 = vdwg.mxu0
    %7641 = vmatpush.bf16.msra.mxu0 %v5309
    %7642 = vmatpush.bf16.msra.mxu0 %v5301
    %7643 = vmatpush.bf16.msra.mxu0 %v5293
    %7644 = vmatpush.bf16.msra.mxu0 %v5285
    %7645 = vmatpush.bf16.msra.mxu0 %v5277
    %7646 = vmatpush.bf16.msra.mxu0 %v5269
    %7647 = vmatpush.bf16.msra.mxu0 %v5261
    %7648 = vmatpush.bf16.msra.mxu0 %v5253
    %7649 = vmatmul.bf16.gmra.mxu0 %v1956
    %v7650 = vpop.f32.mrf.mxu0
    %v7651 = vadd.f32 %v7637, %v7650
    %v7652 = vpop.f32.mrf.mxu0
    %v7653 = vadd.f32 %v7639, %v7652
    %7654 = vdwg.mxu0
    %7655 = vmatpush.bf16.msra.mxu0 %v5373
    %7656 = vmatpush.bf16.msra.mxu0 %v5365
    %7657 = vmatpush.bf16.msra.mxu0 %v5357
    %7658 = vmatpush.bf16.msra.mxu0 %v5349
    %7659 = vmatpush.bf16.msra.mxu0 %v5341
    %7660 = vmatpush.bf16.msra.mxu0 %v5333
    %7661 = vmatpush.bf16.msra.mxu0 %v5325
    %7662 = vmatpush.bf16.msra.mxu0 %v5317
    %7663 = vmatmul.bf16.gmra.mxu0 %v1957
    %v7664 = vpop.f32.mrf.mxu0
    %v7665 = vadd.f32 %v7651, %v7664
    %v7666 = vpop.f32.mrf.mxu0
    %v7667 = vadd.f32 %v7653, %v7666
    %7668 = vdwg.mxu0
    %7669 = vmatpush.bf16.msra.mxu0 %v5437
    %7670 = vmatpush.bf16.msra.mxu0 %v5429
    %7671 = vmatpush.bf16.msra.mxu0 %v5421
    %7672 = vmatpush.bf16.msra.mxu0 %v5413
    %7673 = vmatpush.bf16.msra.mxu0 %v5405
    %7674 = vmatpush.bf16.msra.mxu0 %v5397
    %7675 = vmatpush.bf16.msra.mxu0 %v5389
    %7676 = vmatpush.bf16.msra.mxu0 %v5381
    %7677 = vmatmul.bf16.gmra.mxu0 %v1958
    %v7678 = vpop.f32.mrf.mxu0
    %v7679 = vadd.f32 %v7665, %v7678
    %v7680 = vpop.f32.mrf.mxu0
    %v7681 = vadd.f32 %v7667, %v7680
    %7682 = vdwg.mxu0
    %7683 = vmatpush.bf16.msra.mxu0 %v5501
    %7684 = vmatpush.bf16.msra.mxu0 %v5493
    %7685 = vmatpush.bf16.msra.mxu0 %v5485
    %7686 = vmatpush.bf16.msra.mxu0 %v5477
    %7687 = vmatpush.bf16.msra.mxu0 %v5469
    %7688 = vmatpush.bf16.msra.mxu0 %v5461
    %7689 = vmatpush.bf16.msra.mxu0 %v5453
    %7690 = vmatpush.bf16.msra.mxu0 %v5445
    %7691 = vmatmul.bf16.gmra.mxu0 %v1959
    %v7692 = vpop.f32.mrf.mxu0
    %v7693 = vadd.f32 %v7679, %v7692
    %v7694 = vpop.f32.mrf.mxu0
    %v7695 = vadd.f32 %v7681, %v7694
    %7696 = vdwg.mxu0
    %7697 = vmatpush.bf16.msra.mxu0 %v5565
    %7698 = vmatpush.bf16.msra.mxu0 %v5557
    %7699 = vmatpush.bf16.msra.mxu0 %v5549
    %7700 = vmatpush.bf16.msra.mxu0 %v5541
    %7701 = vmatpush.bf16.msra.mxu0 %v5533
    %7702 = vmatpush.bf16.msra.mxu0 %v5525
    %7703 = vmatpush.bf16.msra.mxu0 %v5517
    %7704 = vmatpush.bf16.msra.mxu0 %v5509
    %7705 = vmatmul.bf16.gmra.mxu0 %v1960
    %v7706 = vpop.f32.mrf.mxu0
    %v7707 = vadd.f32 %v7693, %v7706
    %v7708 = vpop.f32.mrf.mxu0
    %v7709 = vadd.f32 %v7695, %v7708
    %7710 = vdwg.mxu0
    %7711 = vmatpush.bf16.msra.mxu0 %v5629
    %7712 = vmatpush.bf16.msra.mxu0 %v5621
    %7713 = vmatpush.bf16.msra.mxu0 %v5613
    %7714 = vmatpush.bf16.msra.mxu0 %v5605
    %7715 = vmatpush.bf16.msra.mxu0 %v5597
    %7716 = vmatpush.bf16.msra.mxu0 %v5589
    %7717 = vmatpush.bf16.msra.mxu0 %v5581
    %7718 = vmatpush.bf16.msra.mxu0 %v5573
    %7719 = vmatmul.bf16.gmra.mxu0 %v1961
    %v7720 = vpop.f32.mrf.mxu0
    %v7721 = vadd.f32 %v7707, %v7720
    %v7722 = vpop.f32.mrf.mxu0
    %v7723 = vadd.f32 %v7709, %v7722
    %7724 = vdwg.mxu0
    %7725 = vmatpush.bf16.msra.mxu0 %v5693
    %7726 = vmatpush.bf16.msra.mxu0 %v5685
    %7727 = vmatpush.bf16.msra.mxu0 %v5677
    %7728 = vmatpush.bf16.msra.mxu0 %v5669
    %7729 = vmatpush.bf16.msra.mxu0 %v5661
    %7730 = vmatpush.bf16.msra.mxu0 %v5653
    %7731 = vmatpush.bf16.msra.mxu0 %v5645
    %7732 = vmatpush.bf16.msra.mxu0 %v5637
    %7733 = vmatmul.bf16.gmra.mxu0 %v1962
    %v7734 = vpop.f32.mrf.mxu0
    %v7735 = vadd.f32 %v7721, %v7734
    %v7736 = vpop.f32.mrf.mxu0
    %v7737 = vadd.f32 %v7723, %v7736
    %7738 = vdwg.mxu0
    %7739 = vmatpush.bf16.msra.mxu0 %v5757
    %7740 = vmatpush.bf16.msra.mxu0 %v5749
    %7741 = vmatpush.bf16.msra.mxu0 %v5741
    %7742 = vmatpush.bf16.msra.mxu0 %v5733
    %7743 = vmatpush.bf16.msra.mxu0 %v5725
    %7744 = vmatpush.bf16.msra.mxu0 %v5717
    %7745 = vmatpush.bf16.msra.mxu0 %v5709
    %7746 = vmatpush.bf16.msra.mxu0 %v5701
    %7747 = vmatmul.bf16.gmra.mxu0 %v1963
    %v7748 = vpop.f32.mrf.mxu0
    %v7749 = vadd.f32 %v7735, %v7748
    %v7750 = vpop.f32.mrf.mxu0
    %v7751 = vadd.f32 %v7737, %v7750
    %7752 = vdwg.mxu0
    %7753 = vmatpush.bf16.msra.mxu0 %v5821
    %7754 = vmatpush.bf16.msra.mxu0 %v5813
    %7755 = vmatpush.bf16.msra.mxu0 %v5805
    %7756 = vmatpush.bf16.msra.mxu0 %v5797
    %7757 = vmatpush.bf16.msra.mxu0 %v5789
    %7758 = vmatpush.bf16.msra.mxu0 %v5781
    %7759 = vmatpush.bf16.msra.mxu0 %v5773
    %7760 = vmatpush.bf16.msra.mxu0 %v5765
    %7761 = vmatmul.bf16.gmra.mxu0 %v1964
    %v7762 = vpop.f32.mrf.mxu0
    %v7763 = vadd.f32 %v7749, %v7762
    %v7764 = vpop.f32.mrf.mxu0
    %v7765 = vadd.f32 %v7751, %v7764
    %7766 = vdwg.mxu0
    %7767 = vmatpush.bf16.msra.mxu0 %v5118
    %7768 = vmatpush.bf16.msra.mxu0 %v5110
    %7769 = vmatpush.bf16.msra.mxu0 %v5102
    %7770 = vmatpush.bf16.msra.mxu0 %v5094
    %7771 = vmatpush.bf16.msra.mxu0 %v5086
    %7772 = vmatpush.bf16.msra.mxu0 %v5078
    %7773 = vmatpush.bf16.msra.mxu0 %v5070
    %7774 = vmatpush.bf16.msra.mxu0 %v5062
    %7775 = vmatmul.bf16.gmra.mxu0 %v1953
    %v7776 = vpop.f32.mrf.mxu0
    %v7777 = vadd.f32 %v2742, %v7776
    %v7778 = vpop.f32.mrf.mxu0
    %v7779 = vadd.f32 %v2742, %v7778
    %7780 = vdwg.mxu0
    %7781 = vmatpush.bf16.msra.mxu0 %v5182
    %7782 = vmatpush.bf16.msra.mxu0 %v5174
    %7783 = vmatpush.bf16.msra.mxu0 %v5166
    %7784 = vmatpush.bf16.msra.mxu0 %v5158
    %7785 = vmatpush.bf16.msra.mxu0 %v5150
    %7786 = vmatpush.bf16.msra.mxu0 %v5142
    %7787 = vmatpush.bf16.msra.mxu0 %v5134
    %7788 = vmatpush.bf16.msra.mxu0 %v5126
    %7789 = vmatmul.bf16.gmra.mxu0 %v1954
    %v7790 = vpop.f32.mrf.mxu0
    %v7791 = vadd.f32 %v7777, %v7790
    %v7792 = vpop.f32.mrf.mxu0
    %v7793 = vadd.f32 %v7779, %v7792
    %7794 = vdwg.mxu0
    %7795 = vmatpush.bf16.msra.mxu0 %v5246
    %7796 = vmatpush.bf16.msra.mxu0 %v5238
    %7797 = vmatpush.bf16.msra.mxu0 %v5230
    %7798 = vmatpush.bf16.msra.mxu0 %v5222
    %7799 = vmatpush.bf16.msra.mxu0 %v5214
    %7800 = vmatpush.bf16.msra.mxu0 %v5206
    %7801 = vmatpush.bf16.msra.mxu0 %v5198
    %7802 = vmatpush.bf16.msra.mxu0 %v5190
    %7803 = vmatmul.bf16.gmra.mxu0 %v1955
    %v7804 = vpop.f32.mrf.mxu0
    %v7805 = vadd.f32 %v7791, %v7804
    %v7806 = vpop.f32.mrf.mxu0
    %v7807 = vadd.f32 %v7793, %v7806
    %7808 = vdwg.mxu0
    %7809 = vmatpush.bf16.msra.mxu0 %v5310
    %7810 = vmatpush.bf16.msra.mxu0 %v5302
    %7811 = vmatpush.bf16.msra.mxu0 %v5294
    %7812 = vmatpush.bf16.msra.mxu0 %v5286
    %7813 = vmatpush.bf16.msra.mxu0 %v5278
    %7814 = vmatpush.bf16.msra.mxu0 %v5270
    %7815 = vmatpush.bf16.msra.mxu0 %v5262
    %7816 = vmatpush.bf16.msra.mxu0 %v5254
    %7817 = vmatmul.bf16.gmra.mxu0 %v1956
    %v7818 = vpop.f32.mrf.mxu0
    %v7819 = vadd.f32 %v7805, %v7818
    %v7820 = vpop.f32.mrf.mxu0
    %v7821 = vadd.f32 %v7807, %v7820
    %7822 = vdwg.mxu0
    %7823 = vmatpush.bf16.msra.mxu0 %v5374
    %7824 = vmatpush.bf16.msra.mxu0 %v5366
    %7825 = vmatpush.bf16.msra.mxu0 %v5358
    %7826 = vmatpush.bf16.msra.mxu0 %v5350
    %7827 = vmatpush.bf16.msra.mxu0 %v5342
    %7828 = vmatpush.bf16.msra.mxu0 %v5334
    %7829 = vmatpush.bf16.msra.mxu0 %v5326
    %7830 = vmatpush.bf16.msra.mxu0 %v5318
    %7831 = vmatmul.bf16.gmra.mxu0 %v1957
    %v7832 = vpop.f32.mrf.mxu0
    %v7833 = vadd.f32 %v7819, %v7832
    %v7834 = vpop.f32.mrf.mxu0
    %v7835 = vadd.f32 %v7821, %v7834
    %7836 = vdwg.mxu0
    %7837 = vmatpush.bf16.msra.mxu0 %v5438
    %7838 = vmatpush.bf16.msra.mxu0 %v5430
    %7839 = vmatpush.bf16.msra.mxu0 %v5422
    %7840 = vmatpush.bf16.msra.mxu0 %v5414
    %7841 = vmatpush.bf16.msra.mxu0 %v5406
    %7842 = vmatpush.bf16.msra.mxu0 %v5398
    %7843 = vmatpush.bf16.msra.mxu0 %v5390
    %7844 = vmatpush.bf16.msra.mxu0 %v5382
    %7845 = vmatmul.bf16.gmra.mxu0 %v1958
    %v7846 = vpop.f32.mrf.mxu0
    %v7847 = vadd.f32 %v7833, %v7846
    %v7848 = vpop.f32.mrf.mxu0
    %v7849 = vadd.f32 %v7835, %v7848
    %7850 = vdwg.mxu0
    %7851 = vmatpush.bf16.msra.mxu0 %v5502
    %7852 = vmatpush.bf16.msra.mxu0 %v5494
    %7853 = vmatpush.bf16.msra.mxu0 %v5486
    %7854 = vmatpush.bf16.msra.mxu0 %v5478
    %7855 = vmatpush.bf16.msra.mxu0 %v5470
    %7856 = vmatpush.bf16.msra.mxu0 %v5462
    %7857 = vmatpush.bf16.msra.mxu0 %v5454
    %7858 = vmatpush.bf16.msra.mxu0 %v5446
    %7859 = vmatmul.bf16.gmra.mxu0 %v1959
    %v7860 = vpop.f32.mrf.mxu0
    %v7861 = vadd.f32 %v7847, %v7860
    %v7862 = vpop.f32.mrf.mxu0
    %v7863 = vadd.f32 %v7849, %v7862
    %7864 = vdwg.mxu0
    %7865 = vmatpush.bf16.msra.mxu0 %v5566
    %7866 = vmatpush.bf16.msra.mxu0 %v5558
    %7867 = vmatpush.bf16.msra.mxu0 %v5550
    %7868 = vmatpush.bf16.msra.mxu0 %v5542
    %7869 = vmatpush.bf16.msra.mxu0 %v5534
    %7870 = vmatpush.bf16.msra.mxu0 %v5526
    %7871 = vmatpush.bf16.msra.mxu0 %v5518
    %7872 = vmatpush.bf16.msra.mxu0 %v5510
    %7873 = vmatmul.bf16.gmra.mxu0 %v1960
    %v7874 = vpop.f32.mrf.mxu0
    %v7875 = vadd.f32 %v7861, %v7874
    %v7876 = vpop.f32.mrf.mxu0
    %v7877 = vadd.f32 %v7863, %v7876
    %7878 = vdwg.mxu0
    %7879 = vmatpush.bf16.msra.mxu0 %v5630
    %7880 = vmatpush.bf16.msra.mxu0 %v5622
    %7881 = vmatpush.bf16.msra.mxu0 %v5614
    %7882 = vmatpush.bf16.msra.mxu0 %v5606
    %7883 = vmatpush.bf16.msra.mxu0 %v5598
    %7884 = vmatpush.bf16.msra.mxu0 %v5590
    %7885 = vmatpush.bf16.msra.mxu0 %v5582
    %7886 = vmatpush.bf16.msra.mxu0 %v5574
    %7887 = vmatmul.bf16.gmra.mxu0 %v1961
    %v7888 = vpop.f32.mrf.mxu0
    %v7889 = vadd.f32 %v7875, %v7888
    %v7890 = vpop.f32.mrf.mxu0
    %v7891 = vadd.f32 %v7877, %v7890
    %7892 = vdwg.mxu0
    %7893 = vmatpush.bf16.msra.mxu0 %v5694
    %7894 = vmatpush.bf16.msra.mxu0 %v5686
    %7895 = vmatpush.bf16.msra.mxu0 %v5678
    %7896 = vmatpush.bf16.msra.mxu0 %v5670
    %7897 = vmatpush.bf16.msra.mxu0 %v5662
    %7898 = vmatpush.bf16.msra.mxu0 %v5654
    %7899 = vmatpush.bf16.msra.mxu0 %v5646
    %7900 = vmatpush.bf16.msra.mxu0 %v5638
    %7901 = vmatmul.bf16.gmra.mxu0 %v1962
    %v7902 = vpop.f32.mrf.mxu0
    %v7903 = vadd.f32 %v7889, %v7902
    %v7904 = vpop.f32.mrf.mxu0
    %v7905 = vadd.f32 %v7891, %v7904
    %7906 = vdwg.mxu0
    %7907 = vmatpush.bf16.msra.mxu0 %v5758
    %7908 = vmatpush.bf16.msra.mxu0 %v5750
    %7909 = vmatpush.bf16.msra.mxu0 %v5742
    %7910 = vmatpush.bf16.msra.mxu0 %v5734
    %7911 = vmatpush.bf16.msra.mxu0 %v5726
    %7912 = vmatpush.bf16.msra.mxu0 %v5718
    %7913 = vmatpush.bf16.msra.mxu0 %v5710
    %7914 = vmatpush.bf16.msra.mxu0 %v5702
    %7915 = vmatmul.bf16.gmra.mxu0 %v1963
    %v7916 = vpop.f32.mrf.mxu0
    %v7917 = vadd.f32 %v7903, %v7916
    %v7918 = vpop.f32.mrf.mxu0
    %v7919 = vadd.f32 %v7905, %v7918
    %7920 = vdwg.mxu0
    %7921 = vmatpush.bf16.msra.mxu0 %v5822
    %7922 = vmatpush.bf16.msra.mxu0 %v5814
    %7923 = vmatpush.bf16.msra.mxu0 %v5806
    %7924 = vmatpush.bf16.msra.mxu0 %v5798
    %7925 = vmatpush.bf16.msra.mxu0 %v5790
    %7926 = vmatpush.bf16.msra.mxu0 %v5782
    %7927 = vmatpush.bf16.msra.mxu0 %v5774
    %7928 = vmatpush.bf16.msra.mxu0 %v5766
    %7929 = vmatmul.bf16.gmra.mxu0 %v1964
    %v7930 = vpop.f32.mrf.mxu0
    %v7931 = vadd.f32 %v7917, %v7930
    %v7932 = vpop.f32.mrf.mxu0
    %v7933 = vadd.f32 %v7919, %v7932
    %7934 = vdwg.mxu0
    %v7935 = vadd.f32 %v6755, %v6757
    %v7936 = vrot.slane %v7935, 4
    %v7937 = vadd.f32 %v7935, %v7936
    %v7938 = vrot.slane %v7937, 2
    %v7939 = vadd.f32 %v7937, %v7938
    %v7940 = vrot.slane %v7939, 1
    %v7941 = vadd.f32 %v7939, %v7940
    %v7942 = vadd.f32 %v6923, %v6925
    %v7943 = vrot.slane %v7942, 4
    %v7944 = vadd.f32 %v7942, %v7943
    %v7945 = vrot.slane %v7944, 2
    %v7946 = vadd.f32 %v7944, %v7945
    %v7947 = vrot.slane %v7946, 1
    %v7948 = vadd.f32 %v7946, %v7947
    %v7949 = vadd.f32 %v7091, %v7093
    %v7950 = vrot.slane %v7949, 4
    %v7951 = vadd.f32 %v7949, %v7950
    %v7952 = vrot.slane %v7951, 2
    %v7953 = vadd.f32 %v7951, %v7952
    %v7954 = vrot.slane %v7953, 1
    %v7955 = vadd.f32 %v7953, %v7954
    %v7956 = vadd.f32 %v7259, %v7261
    %v7957 = vrot.slane %v7956, 4
    %v7958 = vadd.f32 %v7956, %v7957
    %v7959 = vrot.slane %v7958, 2
    %v7960 = vadd.f32 %v7958, %v7959
    %v7961 = vrot.slane %v7960, 1
    %v7962 = vadd.f32 %v7960, %v7961
    %v7963 = vadd.f32 %v7427, %v7429
    %v7964 = vrot.slane %v7963, 4
    %v7965 = vadd.f32 %v7963, %v7964
    %v7966 = vrot.slane %v7965, 2
    %v7967 = vadd.f32 %v7965, %v7966
    %v7968 = vrot.slane %v7967, 1
    %v7969 = vadd.f32 %v7967, %v7968
    %v7970 = vadd.f32 %v7595, %v7597
    %v7971 = vrot.slane %v7970, 4
    %v7972 = vadd.f32 %v7970, %v7971
    %v7973 = vrot.slane %v7972, 2
    %v7974 = vadd.f32 %v7972, %v7973
    %v7975 = vrot.slane %v7974, 1
    %v7976 = vadd.f32 %v7974, %v7975
    %v7977 = vadd.f32 %v7763, %v7765
    %v7978 = vrot.slane %v7977, 4
    %v7979 = vadd.f32 %v7977, %v7978
    %v7980 = vrot.slane %v7979, 2
    %v7981 = vadd.f32 %v7979, %v7980
    %v7982 = vrot.slane %v7981, 1
    %v7983 = vadd.f32 %v7981, %v7982
    %v7984 = vadd.f32 %v7931, %v7933
    %v7985 = vrot.slane %v7984, 4
    %v7986 = vadd.f32 %v7984, %v7985
    %v7987 = vrot.slane %v7986, 2
    %v7988 = vadd.f32 %v7986, %v7987
    %v7989 = vrot.slane %v7988, 1
    %v7990 = vadd.f32 %v7988, %v7989
    %7992 = vrot.lane.b32.xlu0 %v7941, 64
    %v7993 = vpop.permute.xlu0 %7992
    %v7995 = vadd.f32 %v7941, %v7993
    %v7996 = vadd.f32 %v7995, %v7948
    %7998 = vrot.lane.b32.xlu0 %v7948, 64
    %v7999 = vpop.permute.xlu0 %7998
    %v8001 = vadd.f32 %v7996, %v7999
    %v8002 = vadd.f32 %v8001, %v7955
    %8004 = vrot.lane.b32.xlu0 %v7955, 64
    %v8005 = vpop.permute.xlu0 %8004
    %v8007 = vadd.f32 %v8002, %v8005
    %v8008 = vadd.f32 %v8007, %v7962
    %8010 = vrot.lane.b32.xlu0 %v7962, 64
    %v8011 = vpop.permute.xlu0 %8010
    %v8013 = vadd.f32 %v8008, %v8011
    %v8014 = vadd.f32 %v8013, %v7969
    %8016 = vrot.lane.b32.xlu0 %v7969, 64
    %v8017 = vpop.permute.xlu0 %8016
    %v8019 = vadd.f32 %v8014, %v8017
    %v8020 = vadd.f32 %v8019, %v7976
    %8022 = vrot.lane.b32.xlu0 %v7976, 64
    %v8023 = vpop.permute.xlu0 %8022
    %v8025 = vadd.f32 %v8020, %v8023
    %v8026 = vadd.f32 %v8025, %v7983
    %8028 = vrot.lane.b32.xlu0 %v7983, 64
    %v8029 = vpop.permute.xlu0 %8028
    %v8031 = vadd.f32 %v8026, %v8029
    %v8032 = vadd.f32 %v8031, %v7990
    %8034 = vrot.lane.b32.xlu0 %v7990, 64
    %v8035 = vpop.permute.xlu0 %8034
    %v8037 = vadd.f32 %v8032, %v8035
    %v8038 = vrcp.pop 256.0
    %v8039 = vmul.f32 256.0, %v8038
    %v8040 = vsub.f32 1.0, %v8039
    %v8041 = vmul.f32 %v8038, %v8040
    %v8042 = vadd.f32 %v8038, %v8041
    %vm8043 = vweird.f32 %v8038
    %v8044 = vsel %vm8043, %v8038, %v8042
    %v8045 = vmul.f32 %v8037, %v8044
    %8047 = vrot.lane.b32.xlu0 %v8045, 64
    %v8048 = vpop.permute.xlu0 %8047
    %vm8050 = vcmask 523264
    %v8051 = vsel %vm8050, %v8045, %v8048
    %v8052 = vperm.slane %v8051, 0
    %v8053 = vsub.f32 %v6755, %v8052
    %v8054 = vsub.f32 %v6923, %v8052
    %v8055 = vsub.f32 %v7091, %v8052
    %v8056 = vsub.f32 %v7259, %v8052
    %v8057 = vsub.f32 %v7427, %v8052
    %v8058 = vsub.f32 %v7595, %v8052
    %v8059 = vsub.f32 %v7763, %v8052
    %v8060 = vsub.f32 %v7931, %v8052
    %v8061 = vsub.f32 %v6757, %v8052
    %v8062 = vsub.f32 %v6925, %v8052
    %v8063 = vsub.f32 %v7093, %v8052
    %v8064 = vsub.f32 %v7261, %v8052
    %v8065 = vsub.f32 %v7429, %v8052
    %v8066 = vsub.f32 %v7597, %v8052
    %v8067 = vsub.f32 %v7765, %v8052
    %v8068 = vsub.f32 %v7933, %v8052
    %v8069 = vmul.f32 %v8053, %v8053
    %v8070 = vmul.f32 %v8054, %v8054
    %v8071 = vmul.f32 %v8055, %v8055
    %v8072 = vmul.f32 %v8056, %v8056
    %v8073 = vmul.f32 %v8057, %v8057
    %v8074 = vmul.f32 %v8058, %v8058
    %v8075 = vmul.f32 %v8059, %v8059
    %v8076 = vmul.f32 %v8060, %v8060
    %v8077 = vmul.f32 %v8061, %v8061
    %v8078 = vmul.f32 %v8062, %v8062
    %v8079 = vmul.f32 %v8063, %v8063
    %v8080 = vmul.f32 %v8064, %v8064
    %v8081 = vmul.f32 %v8065, %v8065
    %v8082 = vmul.f32 %v8066, %v8066
    %v8083 = vmul.f32 %v8067, %v8067
    %v8084 = vmul.f32 %v8068, %v8068
    %v8085 = vadd.f32 %v8069, %v8077
    %v8086 = vrot.slane %v8085, 4
    %v8087 = vadd.f32 %v8085, %v8086
    %v8088 = vrot.slane %v8087, 2
    %v8089 = vadd.f32 %v8087, %v8088
    %v8090 = vrot.slane %v8089, 1
    %v8091 = vadd.f32 %v8089, %v8090
    %v8092 = vadd.f32 %v8070, %v8078
    %v8093 = vrot.slane %v8092, 4
    %v8094 = vadd.f32 %v8092, %v8093
    %v8095 = vrot.slane %v8094, 2
    %v8096 = vadd.f32 %v8094, %v8095
    %v8097 = vrot.slane %v8096, 1
    %v8098 = vadd.f32 %v8096, %v8097
    %v8099 = vadd.f32 %v8071, %v8079
    %v8100 = vrot.slane %v8099, 4
    %v8101 = vadd.f32 %v8099, %v8100
    %v8102 = vrot.slane %v8101, 2
    %v8103 = vadd.f32 %v8101, %v8102
    %v8104 = vrot.slane %v8103, 1
    %v8105 = vadd.f32 %v8103, %v8104
    %v8106 = vadd.f32 %v8072, %v8080
    %v8107 = vrot.slane %v8106, 4
    %v8108 = vadd.f32 %v8106, %v8107
    %v8109 = vrot.slane %v8108, 2
    %v8110 = vadd.f32 %v8108, %v8109
    %v8111 = vrot.slane %v8110, 1
    %v8112 = vadd.f32 %v8110, %v8111
    %v8113 = vadd.f32 %v8073, %v8081
    %v8114 = vrot.slane %v8113, 4
    %v8115 = vadd.f32 %v8113, %v8114
    %v8116 = vrot.slane %v8115, 2
    %v8117 = vadd.f32 %v8115, %v8116
    %v8118 = vrot.slane %v8117, 1
    %v8119 = vadd.f32 %v8117, %v8118
    %v8120 = vadd.f32 %v8074, %v8082
    %v8121 = vrot.slane %v8120, 4
    %v8122 = vadd.f32 %v8120, %v8121
    %v8123 = vrot.slane %v8122, 2
    %v8124 = vadd.f32 %v8122, %v8123
    %v8125 = vrot.slane %v8124, 1
    %v8126 = vadd.f32 %v8124, %v8125
    %v8127 = vadd.f32 %v8075, %v8083
    %v8128 = vrot.slane %v8127, 4
    %v8129 = vadd.f32 %v8127, %v8128
    %v8130 = vrot.slane %v8129, 2
    %v8131 = vadd.f32 %v8129, %v8130
    %v8132 = vrot.slane %v8131, 1
    %v8133 = vadd.f32 %v8131, %v8132
    %v8134 = vadd.f32 %v8076, %v8084
    %v8135 = vrot.slane %v8134, 4
    %v8136 = vadd.f32 %v8134, %v8135
    %v8137 = vrot.slane %v8136, 2
    %v8138 = vadd.f32 %v8136, %v8137
    %v8139 = vrot.slane %v8138, 1
    %v8140 = vadd.f32 %v8138, %v8139
    %8142 = vrot.lane.b32.xlu0 %v8091, 64
    %v8143 = vpop.permute.xlu0 %8142
    %v8145 = vadd.f32 %v8091, %v8143
    %v8146 = vadd.f32 %v8145, %v8098
    %8148 = vrot.lane.b32.xlu0 %v8098, 64
    %v8149 = vpop.permute.xlu0 %8148
    %v8151 = vadd.f32 %v8146, %v8149
    %v8152 = vadd.f32 %v8151, %v8105
    %8154 = vrot.lane.b32.xlu0 %v8105, 64
    %v8155 = vpop.permute.xlu0 %8154
    %v8157 = vadd.f32 %v8152, %v8155
    %v8158 = vadd.f32 %v8157, %v8112
    %8160 = vrot.lane.b32.xlu0 %v8112, 64
    %v8161 = vpop.permute.xlu0 %8160
    %v8163 = vadd.f32 %v8158, %v8161
    %v8164 = vadd.f32 %v8163, %v8119
    %8166 = vrot.lane.b32.xlu0 %v8119, 64
    %v8167 = vpop.permute.xlu0 %8166
    %v8169 = vadd.f32 %v8164, %v8167
    %v8170 = vadd.f32 %v8169, %v8126
    %8172 = vrot.lane.b32.xlu0 %v8126, 64
    %v8173 = vpop.permute.xlu0 %8172
    %v8175 = vadd.f32 %v8170, %v8173
    %v8176 = vadd.f32 %v8175, %v8133
    %8178 = vrot.lane.b32.xlu0 %v8133, 64
    %v8179 = vpop.permute.xlu0 %8178
    %v8181 = vadd.f32 %v8176, %v8179
    %v8182 = vadd.f32 %v8181, %v8140
    %8184 = vrot.lane.b32.xlu0 %v8140, 64
    %v8185 = vpop.permute.xlu0 %8184
    %v8187 = vadd.f32 %v8182, %v8185
    %v8188 = vmul.f32 %v8187, %v8044
    %v8189 = vld [vmem:[#allocation19] sm:$0x1]
    %v8190 = vadd.f32 %v8188, 1e-05
    %v8191 = vrsqrt.pop %v8190
    %v8192 = vmul.f32 %v8191, %v8190
    %v8193 = vmul.f32 %v8192, %v8191
    %v8194 = vmul.f32 0.5, %v8193
    %v8195 = vsub.f32 1.5, %v8194
    %v8196 = vmul.f32 %v8191, %v8195
    %vm8197 = vweird.f32 %v8190
    %vm8198 = vweird.f32 %v8191
    %vm8199 = vmor %vm8197, %vm8198
    %v8200 = vsel %vm8199, %v8191, %v8196
    %v8201 = vmul.f32 %v8189, %v8200
    %v8203 = vperm.slane %v8201, 0
    %8204 = vrot.lane.b32.xlu0 %v8203, 64
    %v8205 = vpop.permute.xlu0 %8204
    %v8207 = vsel %vm8050, %v8201, %v8205
    %v8208 = vld [vmem:[#allocation21] sm:$0x1]
    %v8210 = vperm.slane %v8208, 0
    %8211 = vrot.lane.b32.xlu0 %v8210, 64
    %v8212 = vpop.permute.xlu0 %8211
    %v8214 = vsel %vm8050, %v8208, %v8212
    %v8215 = vperm.slane %v8207, 0
    %v8216 = vmul.f32 %v8053, %v8215
    %v8217 = vmul.f32 %v8054, %v8215
    %v8218 = vmul.f32 %v8055, %v8215
    %v8219 = vmul.f32 %v8056, %v8215
    %v8220 = vmul.f32 %v8057, %v8215
    %v8221 = vmul.f32 %v8058, %v8215
    %v8222 = vmul.f32 %v8059, %v8215
    %v8223 = vmul.f32 %v8060, %v8215
    %v8224 = vmul.f32 %v8061, %v8215
    %v8225 = vmul.f32 %v8062, %v8215
    %v8226 = vmul.f32 %v8063, %v8215
    %v8227 = vmul.f32 %v8064, %v8215
    %v8228 = vmul.f32 %v8065, %v8215
    %v8229 = vmul.f32 %v8066, %v8215
    %v8230 = vmul.f32 %v8067, %v8215
    %v8231 = vmul.f32 %v8068, %v8215
    %v8232 = vperm.slane %v8214, 0
    %v8233 = vadd.f32 %v8216, %v8232
    %v8234 = vadd.f32 %v8217, %v8232
    %v8235 = vadd.f32 %v8218, %v8232
    %v8236 = vadd.f32 %v8219, %v8232
    %v8237 = vadd.f32 %v8220, %v8232
    %v8238 = vadd.f32 %v8221, %v8232
    %v8239 = vadd.f32 %v8222, %v8232
    %v8240 = vadd.f32 %v8223, %v8232
    %v8241 = vadd.f32 %v8224, %v8232
    %v8242 = vadd.f32 %v8225, %v8232
    %v8243 = vadd.f32 %v8226, %v8232
    %v8244 = vadd.f32 %v8227, %v8232
    %v8245 = vadd.f32 %v8228, %v8232
    %v8246 = vadd.f32 %v8229, %v8232
    %v8247 = vadd.f32 %v8230, %v8232
    %v8248 = vadd.f32 %v8231, %v8232
    %vm8249 = vcmp.ge.f32.partialorder %v8233, 0.0
    %vm8250 = vcmp.ge.f32.partialorder %v8234, 0.0
    %vm8251 = vcmp.ge.f32.partialorder %v8235, 0.0
    %vm8252 = vcmp.ge.f32.partialorder %v8236, 0.0
    %vm8253 = vcmp.ge.f32.partialorder %v8237, 0.0
    %vm8254 = vcmp.ge.f32.partialorder %v8238, 0.0
    %vm8255 = vcmp.ge.f32.partialorder %v8239, 0.0
    %vm8256 = vcmp.ge.f32.partialorder %v8240, 0.0
    %vm8257 = vcmp.ge.f32.partialorder %v8241, 0.0
    %vm8258 = vcmp.ge.f32.partialorder %v8242, 0.0
    %vm8259 = vcmp.ge.f32.partialorder %v8243, 0.0
    %vm8260 = vcmp.ge.f32.partialorder %v8244, 0.0
    %vm8261 = vcmp.ge.f32.partialorder %v8245, 0.0
    %vm8262 = vcmp.ge.f32.partialorder %v8246, 0.0
    %vm8263 = vcmp.ge.f32.partialorder %v8247, 0.0
    %vm8264 = vcmp.ge.f32.partialorder %v8248, 0.0
    %v8265 = vmul.f32 %v8233, 0.2
    %v8266 = vmul.f32 %v8234, 0.2
    %v8267 = vmul.f32 %v8235, 0.2
    %v8268 = vmul.f32 %v8236, 0.2
    %v8269 = vmul.f32 %v8237, 0.2
    %v8270 = vmul.f32 %v8238, 0.2
    %v8271 = vmul.f32 %v8239, 0.2
    %v8272 = vmul.f32 %v8240, 0.2
    %v8273 = vmul.f32 %v8241, 0.2
    %v8274 = vmul.f32 %v8242, 0.2
    %v8275 = vmul.f32 %v8243, 0.2
    %v8276 = vmul.f32 %v8244, 0.2
    %v8277 = vmul.f32 %v8245, 0.2
    %v8278 = vmul.f32 %v8246, 0.2
    %v8279 = vmul.f32 %v8247, 0.2
    %v8280 = vmul.f32 %v8248, 0.2
    %v8281 = vsel %vm8249, %v8233, %v8265
    %v8282 = vsel %vm8250, %v8234, %v8266
    %v8283 = vsel %vm8251, %v8235, %v8267
    %v8284 = vsel %vm8252, %v8236, %v8268
    %v8285 = vsel %vm8253, %v8237, %v8269
    %v8286 = vsel %vm8254, %v8238, %v8270
    %v8287 = vsel %vm8255, %v8239, %v8271
    %v8288 = vsel %vm8256, %v8240, %v8272
    %v8289 = vsel %vm8257, %v8241, %v8273
    %v8290 = vsel %vm8258, %v8242, %v8274
    %v8291 = vsel %vm8259, %v8243, %v8275
    %v8292 = vsel %vm8260, %v8244, %v8276
    %v8293 = vsel %vm8261, %v8245, %v8277
    %v8294 = vsel %vm8262, %v8246, %v8278
    %v8295 = vsel %vm8263, %v8247, %v8279
    %v8296 = vsel %vm8264, %v8248, %v8280
    %v8301 = vrot.slane %v8285, 4
    %v8302 = vrot.slane %v8286, 4
    %v8303 = vrot.slane %v8287, 4
    %v8304 = vrot.slane %v8288, 4
    %v8313 = vrot.slane %v8281, 4
    %v8314 = vrot.slane %v8282, 4
    %v8315 = vrot.slane %v8283, 4
    %v8316 = vrot.slane %v8284, 4
    %v8325 = vrot.slane %v8293, 4
    %v8326 = vrot.slane %v8294, 4
    %v8327 = vrot.slane %v8295, 4
    %v8328 = vrot.slane %v8296, 4
    %v8337 = vrot.slane %v8289, 4
    %v8338 = vrot.slane %v8290, 4
    %v8339 = vrot.slane %v8291, 4
    %v8340 = vrot.slane %v8292, 4
    %v8345 = vsel %vm257, %v8281, %v8301
    %v8346 = vsel %vm257, %v8282, %v8302
    %v8347 = vsel %vm257, %v8283, %v8303
    %v8348 = vsel %vm257, %v8284, %v8304
    %v8349 = vsel %vm257, %v8313, %v8285
    %v8350 = vsel %vm257, %v8314, %v8286
    %v8351 = vsel %vm257, %v8315, %v8287
    %v8352 = vsel %vm257, %v8316, %v8288
    %v8353 = vsel %vm257, %v8289, %v8325
    %v8354 = vsel %vm257, %v8290, %v8326
    %v8355 = vsel %vm257, %v8291, %v8327
    %v8356 = vsel %vm257, %v8292, %v8328
    %v8357 = vsel %vm257, %v8337, %v8293
    %v8358 = vsel %vm257, %v8338, %v8294
    %v8359 = vsel %vm257, %v8339, %v8295
    %v8360 = vsel %vm257, %v8340, %v8296
    %v8377 = vrot.slane %v8345, 4
    %v8378 = vrot.slane %v8346, 4
    %v8379 = vrot.slane %v8347, 4
    %v8380 = vrot.slane %v8348, 4
    %v8381 = vrot.slane %v8349, 4
    %v8382 = vsel %vm257, %v8377, %v8381
    %v8383 = vrot.slane %v8350, 4
    %v8384 = vsel %vm257, %v8378, %v8383
    %v8385 = vrot.slane %v8351, 4
    %v8386 = vsel %vm257, %v8379, %v8385
    %v8387 = vrot.slane %v8352, 4
    %v8388 = vsel %vm257, %v8380, %v8387
    %v8389 = vrot.slane %v8353, 4
    %v8390 = vsel %vm257, %v8381, %v8389
    %v8391 = vrot.slane %v8354, 4
    %v8392 = vsel %vm257, %v8383, %v8391
    %v8393 = vrot.slane %v8355, 4
    %v8394 = vsel %vm257, %v8385, %v8393
    %v8395 = vrot.slane %v8356, 4
    %v8396 = vsel %vm257, %v8387, %v8395
    %v8397 = vrot.slane %v8357, 4
    %v8398 = vsel %vm257, %v8389, %v8397
    %v8399 = vrot.slane %v8358, 4
    %v8400 = vsel %vm257, %v8391, %v8399
    %v8401 = vrot.slane %v8359, 4
    %v8402 = vsel %vm257, %v8393, %v8401
    %v8403 = vrot.slane %v8360, 4
    %v8404 = vsel %vm257, %v8395, %v8403
    %v8421 = vsel %vm257, 0.0, %v8377
    %v8422 = vsel %vm257, 0.0, %v8378
    %v8423 = vsel %vm257, 0.0, %v8379
    %v8424 = vsel %vm257, 0.0, %v8380
    %v8429 = vsel %vm257, %v8397, 0.0
    %v8430 = vsel %vm257, %v8399, 0.0
    %v8431 = vsel %vm257, %v8401, 0.0
    %v8432 = vsel %vm257, %v8403, 0.0
    %v8433 = vpack.c.bf16 %v8382, %v8421
    %v8434 = vpack.c.bf16 %v8384, %v8422
    %v8435 = vpack.c.bf16 %v8386, %v8423
    %v8436 = vpack.c.bf16 %v8388, %v8424
    %v8437 = vpack.c.bf16 %v8349, %v8345
    %v8438 = vpack.c.bf16 %v8350, %v8346
    %v8439 = vpack.c.bf16 %v8351, %v8347
    %v8440 = vpack.c.bf16 %v8352, %v8348
    %v8441 = vpack.c.bf16 %v8390, %v8382
    %v8442 = vpack.c.bf16 %v8392, %v8384
    %v8443 = vpack.c.bf16 %v8394, %v8386
    %v8444 = vpack.c.bf16 %v8396, %v8388
    %v8445 = vpack.c.bf16 %v8398, %v8390
    %v8446 = vpack.c.bf16 %v8400, %v8392
    %v8447 = vpack.c.bf16 %v8402, %v8394
    %v8448 = vpack.c.bf16 %v8404, %v8396
    %v8449 = vpack.c.bf16 %v8357, %v8353
    %v8450 = vpack.c.bf16 %v8358, %v8354
    %v8451 = vpack.c.bf16 %v8359, %v8355
    %v8452 = vpack.c.bf16 %v8360, %v8356
    %v8453 = vpack.c.bf16 %v8429, %v8398
    %v8454 = vpack.c.bf16 %v8430, %v8400
    %v8455 = vpack.c.bf16 %v8431, %v8402
    %v8456 = vpack.c.bf16 %v8432, %v8404
    %v8457 = vld [vmem:[%s14] sm:$0xf]
    %v8458 = vld [vmem:[%s14 + $0x4] sm:$0xf]
    %v8459 = vld [vmem:[%s14 + $0x8] sm:$0xf]
    %v8460 = vld [vmem:[%s14 + $0xc] sm:$0xf]
    %v8461 = vld [vmem:[%s14 + $0x10] sm:$0xf]
    %v8462 = vld [vmem:[%s14 + $0x14] sm:$0xf]
    %v8463 = vld [vmem:[%s14 + $0x18] sm:$0xf]
    %v8464 = vld [vmem:[%s14 + $0x1c] sm:$0xf]
    %v8465 = vld [vmem:[%s14 + $0x20] sm:$0xf]
    %v8466 = vld [vmem:[%s14 + $0x24] sm:$0xf]
    %v8467 = vld [vmem:[%s14 + $0x28] sm:$0xf]
    %v8468 = vld [vmem:[%s14 + $0x2c] sm:$0xf]
    %v8469 = vld [vmem:[%s14 + $0x30] sm:$0xf]
    %v8470 = vld [vmem:[%s14 + $0x34] sm:$0xf]
    %v8471 = vld [vmem:[%s14 + $0x38] sm:$0xf]
    %v8472 = vld [vmem:[%s14 + $0x3c] sm:$0xf]
    %v8473 = vld [vmem:[%s14 + $0x40] sm:$0xf]
    %v8474 = vld [vmem:[%s14 + $0x44] sm:$0xf]
    %v8475 = vld [vmem:[%s14 + $0x48] sm:$0xf]
    %v8476 = vld [vmem:[%s14 + $0x4c] sm:$0xf]
    %v8477 = vld [vmem:[%s14 + $0x50] sm:$0xf]
    %v8478 = vld [vmem:[%s14 + $0x54] sm:$0xf]
    %v8479 = vld [vmem:[%s14 + $0x58] sm:$0xf]
    %v8480 = vld [vmem:[%s14 + $0x5c] sm:$0xf]
    %v8481 = vld [vmem:[%s14 + $0x60] sm:$0xf]
    %v8482 = vld [vmem:[%s14 + $0x64] sm:$0xf]
    %v8483 = vld [vmem:[%s14 + $0x68] sm:$0xf]
    %v8484 = vld [vmem:[%s14 + $0x6c] sm:$0xf]
    %v8485 = vld [vmem:[%s14 + $0x70] sm:$0xf]
    %v8486 = vld [vmem:[%s14 + $0x74] sm:$0xf]
    %v8487 = vld [vmem:[%s14 + $0x78] sm:$0xf]
    %v8488 = vld [vmem:[%s14 + $0x7c] sm:$0xf]
    %v8489 = vld [vmem:[%s14 + $0x80] sm:$0xf]
    %v8490 = vld [vmem:[%s14 + $0x84] sm:$0xf]
    %v8491 = vld [vmem:[%s14 + $0x88] sm:$0xf]
    %v8492 = vld [vmem:[%s14 + $0x8c] sm:$0xf]
    %v8493 = vld [vmem:[%s14 + $0x90] sm:$0xf]
    %v8494 = vld [vmem:[%s14 + $0x94] sm:$0xf]
    %v8495 = vld [vmem:[%s14 + $0x98] sm:$0xf]
    %v8496 = vld [vmem:[%s14 + $0x9c] sm:$0xf]
    %v8497 = vld [vmem:[%s14 + $0xa0] sm:$0xf]
    %v8498 = vld [vmem:[%s14 + $0xa4] sm:$0xf]
    %v8499 = vld [vmem:[%s14 + $0xa8] sm:$0xf]
    %v8500 = vld [vmem:[%s14 + $0xac] sm:$0xf]
    %v8501 = vld [vmem:[%s14 + $0xb0] sm:$0xf]
    %v8502 = vld [vmem:[%s14 + $0xb4] sm:$0xf]
    %v8503 = vld [vmem:[%s14 + $0xb8] sm:$0xf]
    %v8504 = vld [vmem:[%s14 + $0xbc] sm:$0xf]
    %v8505 = vld [vmem:[%s14 + $0xc0] sm:$0xf]
    %v8506 = vld [vmem:[%s14 + $0xc4] sm:$0xf]
    %v8507 = vld [vmem:[%s14 + $0xc8] sm:$0xf]
    %v8508 = vld [vmem:[%s14 + $0xcc] sm:$0xf]
    %v8509 = vld [vmem:[%s14 + $0xd0] sm:$0xf]
    %v8510 = vld [vmem:[%s14 + $0xd4] sm:$0xf]
    %v8511 = vld [vmem:[%s14 + $0xd8] sm:$0xf]
    %v8512 = vld [vmem:[%s14 + $0xdc] sm:$0xf]
    %v8513 = vld [vmem:[%s14 + $0xe0] sm:$0xf]
    %v8514 = vld [vmem:[%s14 + $0xe4] sm:$0xf]
    %v8515 = vld [vmem:[%s14 + $0xe8] sm:$0xf]
    %v8516 = vld [vmem:[%s14 + $0xec] sm:$0xf]
    %v8517 = vld [vmem:[%s14 + $0xf0] sm:$0xf]
    %v8518 = vld [vmem:[%s14 + $0xf4] sm:$0xf]
    %v8519 = vld [vmem:[%s14 + $0xf8] sm:$0xf]
    %v8520 = vld [vmem:[%s14 + $0xfc] sm:$0xf]
    %v8521 = vld [vmem:[%s14 + $0x100] sm:$0xf]
    %v8522 = vld [vmem:[%s14 + $0x104] sm:$0xf]
    %v8523 = vld [vmem:[%s14 + $0x108] sm:$0xf]
    %v8524 = vld [vmem:[%s14 + $0x10c] sm:$0xf]
    %v8525 = vld [vmem:[%s14 + $0x110] sm:$0xf]
    %v8526 = vld [vmem:[%s14 + $0x114] sm:$0xf]
    %v8527 = vld [vmem:[%s14 + $0x118] sm:$0xf]
    %v8528 = vld [vmem:[%s14 + $0x11c] sm:$0xf]
    %v8529 = vld [vmem:[%s14 + $0x120] sm:$0xf]
    %v8530 = vld [vmem:[%s14 + $0x124] sm:$0xf]
    %v8531 = vld [vmem:[%s14 + $0x128] sm:$0xf]
    %v8532 = vld [vmem:[%s14 + $0x12c] sm:$0xf]
    %v8533 = vld [vmem:[%s14 + $0x130] sm:$0xf]
    %v8534 = vld [vmem:[%s14 + $0x134] sm:$0xf]
    %v8535 = vld [vmem:[%s14 + $0x138] sm:$0xf]
    %v8536 = vld [vmem:[%s14 + $0x13c] sm:$0xf]
    %v8537 = vld [vmem:[%s14 + $0x140] sm:$0xf]
    %v8538 = vld [vmem:[%s14 + $0x144] sm:$0xf]
    %v8539 = vld [vmem:[%s14 + $0x148] sm:$0xf]
    %v8540 = vld [vmem:[%s14 + $0x14c] sm:$0xf]
    %v8541 = vld [vmem:[%s14 + $0x150] sm:$0xf]
    %v8542 = vld [vmem:[%s14 + $0x154] sm:$0xf]
    %v8543 = vld [vmem:[%s14 + $0x158] sm:$0xf]
    %v8544 = vld [vmem:[%s14 + $0x15c] sm:$0xf]
    %v8545 = vld [vmem:[%s14 + $0x160] sm:$0xf]
    %v8546 = vld [vmem:[%s14 + $0x164] sm:$0xf]
    %v8547 = vld [vmem:[%s14 + $0x168] sm:$0xf]
    %v8548 = vld [vmem:[%s14 + $0x16c] sm:$0xf]
    %v8549 = vld [vmem:[%s14 + $0x170] sm:$0xf]
    %v8550 = vld [vmem:[%s14 + $0x174] sm:$0xf]
    %v8551 = vld [vmem:[%s14 + $0x178] sm:$0xf]
    %v8552 = vld [vmem:[%s14 + $0x17c] sm:$0xf]
    %v8553 = vld [vmem:[%s14 + $0x180] sm:$0xf]
    %v8554 = vld [vmem:[%s14 + $0x184] sm:$0xf]
    %v8555 = vld [vmem:[%s14 + $0x188] sm:$0xf]
    %v8556 = vld [vmem:[%s14 + $0x18c] sm:$0xf]
    %v8557 = vld [vmem:[%s14 + $0x190] sm:$0xf]
    %v8558 = vld [vmem:[%s14 + $0x194] sm:$0xf]
    %v8559 = vld [vmem:[%s14 + $0x198] sm:$0xf]
    %v8560 = vld [vmem:[%s14 + $0x19c] sm:$0xf]
    %v8561 = vld [vmem:[%s14 + $0x1a0] sm:$0xf]
    %v8562 = vld [vmem:[%s14 + $0x1a4] sm:$0xf]
    %v8563 = vld [vmem:[%s14 + $0x1a8] sm:$0xf]
    %v8564 = vld [vmem:[%s14 + $0x1ac] sm:$0xf]
    %v8565 = vld [vmem:[%s14 + $0x1b0] sm:$0xf]
    %v8566 = vld [vmem:[%s14 + $0x1b4] sm:$0xf]
    %v8567 = vld [vmem:[%s14 + $0x1b8] sm:$0xf]
    %v8568 = vld [vmem:[%s14 + $0x1bc] sm:$0xf]
    %v8569 = vld [vmem:[%s14 + $0x1c0] sm:$0xf]
    %v8570 = vld [vmem:[%s14 + $0x1c4] sm:$0xf]
    %v8571 = vld [vmem:[%s14 + $0x1c8] sm:$0xf]
    %v8572 = vld [vmem:[%s14 + $0x1cc] sm:$0xf]
    %v8573 = vld [vmem:[%s14 + $0x1d0] sm:$0xf]
    %v8574 = vld [vmem:[%s14 + $0x1d4] sm:$0xf]
    %v8575 = vld [vmem:[%s14 + $0x1d8] sm:$0xf]
    %v8576 = vld [vmem:[%s14 + $0x1dc] sm:$0xf]
    %v8577 = vld [vmem:[%s14 + $0x1e0] sm:$0xf]
    %v8578 = vld [vmem:[%s14 + $0x1e4] sm:$0xf]
    %v8579 = vld [vmem:[%s14 + $0x1e8] sm:$0xf]
    %v8580 = vld [vmem:[%s14 + $0x1ec] sm:$0xf]
    %v8581 = vld [vmem:[%s14 + $0x1f0] sm:$0xf]
    %v8582 = vld [vmem:[%s14 + $0x1f4] sm:$0xf]
    %v8583 = vld [vmem:[%s14 + $0x1f8] sm:$0xf]
    %v8584 = vld [vmem:[%s14 + $0x1fc] sm:$0xf]
    %v8585 = vld [vmem:[%s14 + $0x200] sm:$0xf]
    %v8586 = vld [vmem:[%s14 + $0x204] sm:$0xf]
    %v8587 = vld [vmem:[%s14 + $0x208] sm:$0xf]
    %v8588 = vld [vmem:[%s14 + $0x20c] sm:$0xf]
    %v8589 = vld [vmem:[%s14 + $0x210] sm:$0xf]
    %v8590 = vld [vmem:[%s14 + $0x214] sm:$0xf]
    %v8591 = vld [vmem:[%s14 + $0x218] sm:$0xf]
    %v8592 = vld [vmem:[%s14 + $0x21c] sm:$0xf]
    %v8593 = vld [vmem:[%s14 + $0x220] sm:$0xf]
    %v8594 = vld [vmem:[%s14 + $0x224] sm:$0xf]
    %v8595 = vld [vmem:[%s14 + $0x228] sm:$0xf]
    %v8596 = vld [vmem:[%s14 + $0x22c] sm:$0xf]
    %v8597 = vld [vmem:[%s14 + $0x230] sm:$0xf]
    %v8598 = vld [vmem:[%s14 + $0x234] sm:$0xf]
    %v8599 = vld [vmem:[%s14 + $0x238] sm:$0xf]
    %v8600 = vld [vmem:[%s14 + $0x23c] sm:$0xf]
    %v8601 = vld [vmem:[%s14 + $0x240] sm:$0xf]
    %v8602 = vld [vmem:[%s14 + $0x244] sm:$0xf]
    %v8603 = vld [vmem:[%s14 + $0x248] sm:$0xf]
    %v8604 = vld [vmem:[%s14 + $0x24c] sm:$0xf]
    %v8605 = vld [vmem:[%s14 + $0x250] sm:$0xf]
    %v8606 = vld [vmem:[%s14 + $0x254] sm:$0xf]
    %v8607 = vld [vmem:[%s14 + $0x258] sm:$0xf]
    %v8608 = vld [vmem:[%s14 + $0x25c] sm:$0xf]
    %v8609 = vld [vmem:[%s14 + $0x260] sm:$0xf]
    %v8610 = vld [vmem:[%s14 + $0x264] sm:$0xf]
    %v8611 = vld [vmem:[%s14 + $0x268] sm:$0xf]
    %v8612 = vld [vmem:[%s14 + $0x26c] sm:$0xf]
    %v8613 = vld [vmem:[%s14 + $0x270] sm:$0xf]
    %v8614 = vld [vmem:[%s14 + $0x274] sm:$0xf]
    %v8615 = vld [vmem:[%s14 + $0x278] sm:$0xf]
    %v8616 = vld [vmem:[%s14 + $0x27c] sm:$0xf]
    %v8617 = vld [vmem:[%s14 + $0x280] sm:$0xf]
    %v8618 = vld [vmem:[%s14 + $0x284] sm:$0xf]
    %v8619 = vld [vmem:[%s14 + $0x288] sm:$0xf]
    %v8620 = vld [vmem:[%s14 + $0x28c] sm:$0xf]
    %v8621 = vld [vmem:[%s14 + $0x290] sm:$0xf]
    %v8622 = vld [vmem:[%s14 + $0x294] sm:$0xf]
    %v8623 = vld [vmem:[%s14 + $0x298] sm:$0xf]
    %v8624 = vld [vmem:[%s14 + $0x29c] sm:$0xf]
    %v8625 = vld [vmem:[%s14 + $0x2a0] sm:$0xf]
    %v8626 = vld [vmem:[%s14 + $0x2a4] sm:$0xf]
    %v8627 = vld [vmem:[%s14 + $0x2a8] sm:$0xf]
    %v8628 = vld [vmem:[%s14 + $0x2ac] sm:$0xf]
    %v8629 = vld [vmem:[%s14 + $0x2b0] sm:$0xf]
    %v8630 = vld [vmem:[%s14 + $0x2b4] sm:$0xf]
    %v8631 = vld [vmem:[%s14 + $0x2b8] sm:$0xf]
    %v8632 = vld [vmem:[%s14 + $0x2bc] sm:$0xf]
    %v8633 = vld [vmem:[%s14 + $0x2c0] sm:$0xf]
    %v8634 = vld [vmem:[%s14 + $0x2c4] sm:$0xf]
    %v8635 = vld [vmem:[%s14 + $0x2c8] sm:$0xf]
    %v8636 = vld [vmem:[%s14 + $0x2cc] sm:$0xf]
    %v8637 = vld [vmem:[%s14 + $0x2d0] sm:$0xf]
    %v8638 = vld [vmem:[%s14 + $0x2d4] sm:$0xf]
    %v8639 = vld [vmem:[%s14 + $0x2d8] sm:$0xf]
    %v8640 = vld [vmem:[%s14 + $0x2dc] sm:$0xf]
    %v8641 = vld [vmem:[%s14 + $0x2e0] sm:$0xf]
    %v8642 = vld [vmem:[%s14 + $0x2e4] sm:$0xf]
    %v8643 = vld [vmem:[%s14 + $0x2e8] sm:$0xf]
    %v8644 = vld [vmem:[%s14 + $0x2ec] sm:$0xf]
    %v8645 = vld [vmem:[%s14 + $0x2f0] sm:$0xf]
    %v8646 = vld [vmem:[%s14 + $0x2f4] sm:$0xf]
    %v8647 = vld [vmem:[%s14 + $0x2f8] sm:$0xf]
    %v8648 = vld [vmem:[%s14 + $0x2fc] sm:$0xf]
    %v8649 = vld [vmem:[#allocation22] sm:$0x1]
    %v8651 = vperm.slane %v8649, 0
    %v8845 = vunpack.c.l.b16 %v8457
    %v8846 = vunpack.c.l.b16 %v8458
    %v8847 = vunpack.c.l.b16 %v8459
    %v8848 = vunpack.c.l.b16 %v8460
    %v8849 = vunpack.c.l.b16 %v8461
    %v8850 = vunpack.c.l.b16 %v8462
    %v8851 = vunpack.c.l.b16 %v8463
    %v8852 = vunpack.c.l.b16 %v8464
    %v8853 = vunpack.c.l.b16 %v8465
    %v8854 = vunpack.c.l.b16 %v8466
    %v8855 = vunpack.c.l.b16 %v8467
    %v8856 = vunpack.c.l.b16 %v8468
    %v8857 = vunpack.c.l.b16 %v8469
    %v8858 = vunpack.c.l.b16 %v8470
    %v8859 = vunpack.c.l.b16 %v8471
    %v8860 = vunpack.c.l.b16 %v8472
    %v8861 = vunpack.c.l.b16 %v8473
    %v8862 = vunpack.c.l.b16 %v8474
    %v8863 = vunpack.c.l.b16 %v8475
    %v8864 = vunpack.c.l.b16 %v8476
    %v8865 = vunpack.c.l.b16 %v8477
    %v8866 = vunpack.c.l.b16 %v8478
    %v8867 = vunpack.c.l.b16 %v8479
    %v8868 = vunpack.c.l.b16 %v8480
    %v8869 = vunpack.c.l.b16 %v8481
    %v8870 = vunpack.c.l.b16 %v8482
    %v8871 = vunpack.c.l.b16 %v8483
    %v8872 = vunpack.c.l.b16 %v8484
    %v8873 = vunpack.c.l.b16 %v8485
    %v8874 = vunpack.c.l.b16 %v8486
    %v8875 = vunpack.c.l.b16 %v8487
    %v8876 = vunpack.c.l.b16 %v8488
    %v8877 = vunpack.c.l.b16 %v8489
    %v8878 = vunpack.c.l.b16 %v8490
    %v8879 = vunpack.c.l.b16 %v8491
    %v8880 = vunpack.c.l.b16 %v8492
    %v8881 = vunpack.c.l.b16 %v8493
    %v8882 = vunpack.c.l.b16 %v8494
    %v8883 = vunpack.c.l.b16 %v8495
    %v8884 = vunpack.c.l.b16 %v8496
    %v8885 = vunpack.c.l.b16 %v8497
    %v8886 = vunpack.c.l.b16 %v8498
    %v8887 = vunpack.c.l.b16 %v8499
    %v8888 = vunpack.c.l.b16 %v8500
    %v8889 = vunpack.c.l.b16 %v8501
    %v8890 = vunpack.c.l.b16 %v8502
    %v8891 = vunpack.c.l.b16 %v8503
    %v8892 = vunpack.c.l.b16 %v8504
    %v8893 = vunpack.c.l.b16 %v8505
    %v8894 = vunpack.c.l.b16 %v8506
    %v8895 = vunpack.c.l.b16 %v8507
    %v8896 = vunpack.c.l.b16 %v8508
    %v8897 = vunpack.c.l.b16 %v8509
    %v8898 = vunpack.c.l.b16 %v8510
    %v8899 = vunpack.c.l.b16 %v8511
    %v8900 = vunpack.c.l.b16 %v8512
    %v8901 = vunpack.c.l.b16 %v8513
    %v8902 = vunpack.c.l.b16 %v8514
    %v8903 = vunpack.c.l.b16 %v8515
    %v8904 = vunpack.c.l.b16 %v8516
    %v8905 = vunpack.c.l.b16 %v8517
    %v8906 = vunpack.c.l.b16 %v8518
    %v8907 = vunpack.c.l.b16 %v8519
    %v8908 = vunpack.c.l.b16 %v8520
    %v8909 = vunpack.c.l.b16 %v8521
    %v8910 = vunpack.c.l.b16 %v8522
    %v8911 = vunpack.c.l.b16 %v8523
    %v8912 = vunpack.c.l.b16 %v8524
    %v8913 = vunpack.c.l.b16 %v8525
    %v8914 = vunpack.c.l.b16 %v8526
    %v8915 = vunpack.c.l.b16 %v8527
    %v8916 = vunpack.c.l.b16 %v8528
    %v8917 = vunpack.c.l.b16 %v8529
    %v8918 = vunpack.c.l.b16 %v8530
    %v8919 = vunpack.c.l.b16 %v8531
    %v8920 = vunpack.c.l.b16 %v8532
    %v8921 = vunpack.c.l.b16 %v8533
    %v8922 = vunpack.c.l.b16 %v8534
    %v8923 = vunpack.c.l.b16 %v8535
    %v8924 = vunpack.c.l.b16 %v8536
    %v8925 = vunpack.c.l.b16 %v8537
    %v8926 = vunpack.c.l.b16 %v8538
    %v8927 = vunpack.c.l.b16 %v8539
    %v8928 = vunpack.c.l.b16 %v8540
    %v8929 = vunpack.c.l.b16 %v8541
    %v8930 = vunpack.c.l.b16 %v8542
    %v8931 = vunpack.c.l.b16 %v8543
    %v8932 = vunpack.c.l.b16 %v8544
    %v8933 = vunpack.c.l.b16 %v8545
    %v8934 = vunpack.c.l.b16 %v8546
    %v8935 = vunpack.c.l.b16 %v8547
    %v8936 = vunpack.c.l.b16 %v8548
    %v8937 = vunpack.c.l.b16 %v8549
    %v8938 = vunpack.c.l.b16 %v8550
    %v8939 = vunpack.c.l.b16 %v8551
    %v8940 = vunpack.c.l.b16 %v8552
    %v8941 = vunpack.c.l.b16 %v8553
    %v8942 = vunpack.c.l.b16 %v8554
    %v8943 = vunpack.c.l.b16 %v8555
    %v8944 = vunpack.c.l.b16 %v8556
    %v8945 = vunpack.c.l.b16 %v8557
    %v8946 = vunpack.c.l.b16 %v8558
    %v8947 = vunpack.c.l.b16 %v8559
    %v8948 = vunpack.c.l.b16 %v8560
    %v8949 = vunpack.c.l.b16 %v8561
    %v8950 = vunpack.c.l.b16 %v8562
    %v8951 = vunpack.c.l.b16 %v8563
    %v8952 = vunpack.c.l.b16 %v8564
    %v8953 = vunpack.c.l.b16 %v8565
    %v8954 = vunpack.c.l.b16 %v8566
    %v8955 = vunpack.c.l.b16 %v8567
    %v8956 = vunpack.c.l.b16 %v8568
    %v8957 = vunpack.c.l.b16 %v8569
    %v8958 = vunpack.c.l.b16 %v8570
    %v8959 = vunpack.c.l.b16 %v8571
    %v8960 = vunpack.c.l.b16 %v8572
    %v8961 = vunpack.c.l.b16 %v8573
    %v8962 = vunpack.c.l.b16 %v8574
    %v8963 = vunpack.c.l.b16 %v8575
    %v8964 = vunpack.c.l.b16 %v8576
    %v8965 = vunpack.c.l.b16 %v8577
    %v8966 = vunpack.c.l.b16 %v8578
    %v8967 = vunpack.c.l.b16 %v8579
    %v8968 = vunpack.c.l.b16 %v8580
    %v8969 = vunpack.c.l.b16 %v8581
    %v8970 = vunpack.c.l.b16 %v8582
    %v8971 = vunpack.c.l.b16 %v8583
    %v8972 = vunpack.c.l.b16 %v8584
    %v8973 = vunpack.c.l.b16 %v8585
    %v8974 = vunpack.c.l.b16 %v8586
    %v8975 = vunpack.c.l.b16 %v8587
    %v8976 = vunpack.c.l.b16 %v8588
    %v8977 = vunpack.c.l.b16 %v8589
    %v8978 = vunpack.c.l.b16 %v8590
    %v8979 = vunpack.c.l.b16 %v8591
    %v8980 = vunpack.c.l.b16 %v8592
    %v8981 = vunpack.c.l.b16 %v8593
    %v8982 = vunpack.c.l.b16 %v8594
    %v8983 = vunpack.c.l.b16 %v8595
    %v8984 = vunpack.c.l.b16 %v8596
    %v8985 = vunpack.c.l.b16 %v8597
    %v8986 = vunpack.c.l.b16 %v8598
    %v8987 = vunpack.c.l.b16 %v8599
    %v8988 = vunpack.c.l.b16 %v8600
    %v8989 = vunpack.c.l.b16 %v8601
    %v8990 = vunpack.c.l.b16 %v8602
    %v8991 = vunpack.c.l.b16 %v8603
    %v8992 = vunpack.c.l.b16 %v8604
    %v8993 = vunpack.c.l.b16 %v8605
    %v8994 = vunpack.c.l.b16 %v8606
    %v8995 = vunpack.c.l.b16 %v8607
    %v8996 = vunpack.c.l.b16 %v8608
    %v8997 = vunpack.c.l.b16 %v8609
    %v8998 = vunpack.c.l.b16 %v8610
    %v8999 = vunpack.c.l.b16 %v8611
    %v9000 = vunpack.c.l.b16 %v8612
    %v9001 = vunpack.c.l.b16 %v8613
    %v9002 = vunpack.c.l.b16 %v8614
    %v9003 = vunpack.c.l.b16 %v8615
    %v9004 = vunpack.c.l.b16 %v8616
    %v9005 = vunpack.c.l.b16 %v8617
    %v9006 = vunpack.c.l.b16 %v8618
    %v9007 = vunpack.c.l.b16 %v8619
    %v9008 = vunpack.c.l.b16 %v8620
    %v9009 = vunpack.c.l.b16 %v8621
    %v9010 = vunpack.c.l.b16 %v8622
    %v9011 = vunpack.c.l.b16 %v8623
    %v9012 = vunpack.c.l.b16 %v8624
    %v9013 = vunpack.c.l.b16 %v8625
    %v9014 = vunpack.c.l.b16 %v8626
    %v9015 = vunpack.c.l.b16 %v8627
    %v9016 = vunpack.c.l.b16 %v8628
    %v9017 = vunpack.c.l.b16 %v8629
    %v9018 = vunpack.c.l.b16 %v8630
    %v9019 = vunpack.c.l.b16 %v8631
    %v9020 = vunpack.c.l.b16 %v8632
    %v9021 = vunpack.c.l.b16 %v8633
    %v9022 = vunpack.c.l.b16 %v8634
    %v9023 = vunpack.c.l.b16 %v8635
    %v9024 = vunpack.c.l.b16 %v8636
    %v9025 = vunpack.c.l.b16 %v8637
    %v9026 = vunpack.c.l.b16 %v8638
    %v9027 = vunpack.c.l.b16 %v8639
    %v9028 = vunpack.c.l.b16 %v8640
    %v9029 = vunpack.c.l.b16 %v8641
    %v9030 = vunpack.c.l.b16 %v8642
    %v9031 = vunpack.c.l.b16 %v8643
    %v9032 = vunpack.c.l.b16 %v8644
    %v9033 = vunpack.c.l.b16 %v8645
    %v9034 = vunpack.c.l.b16 %v8646
    %v9035 = vunpack.c.l.b16 %v8647
    %v9036 = vunpack.c.l.b16 %v8648
    %v9037 = vpack.c.b16 %v8846, %v8845
    %v9038 = vpack.c.b16 %v8848, %v8847
    %v9039 = vpack.c.b16 %v8850, %v8849
    %v9040 = vpack.c.b16 %v8852, %v8851
    %v9041 = vpack.c.b16 %v8854, %v8853
    %v9042 = vpack.c.b16 %v8856, %v8855
    %v9043 = vpack.c.b16 %v8858, %v8857
    %v9044 = vpack.c.b16 %v8860, %v8859
    %v9045 = vpack.c.b16 %v8862, %v8861
    %v9046 = vpack.c.b16 %v8864, %v8863
    %v9047 = vpack.c.b16 %v8866, %v8865
    %v9048 = vpack.c.b16 %v8868, %v8867
    %v9049 = vpack.c.b16 %v8870, %v8869
    %v9050 = vpack.c.b16 %v8872, %v8871
    %v9051 = vpack.c.b16 %v8874, %v8873
    %v9052 = vpack.c.b16 %v8876, %v8875
    %v9053 = vpack.c.b16 %v8878, %v8877
    %v9054 = vpack.c.b16 %v8880, %v8879
    %v9055 = vpack.c.b16 %v8882, %v8881
    %v9056 = vpack.c.b16 %v8884, %v8883
    %v9057 = vpack.c.b16 %v8886, %v8885
    %v9058 = vpack.c.b16 %v8888, %v8887
    %v9059 = vpack.c.b16 %v8890, %v8889
    %v9060 = vpack.c.b16 %v8892, %v8891
    %v9061 = vpack.c.b16 %v8894, %v8893
    %v9062 = vpack.c.b16 %v8896, %v8895
    %v9063 = vpack.c.b16 %v8898, %v8897
    %v9064 = vpack.c.b16 %v8900, %v8899
    %v9065 = vpack.c.b16 %v8902, %v8901
    %v9066 = vpack.c.b16 %v8904, %v8903
    %v9067 = vpack.c.b16 %v8906, %v8905
    %v9068 = vpack.c.b16 %v8908, %v8907
    %v9069 = vpack.c.b16 %v8910, %v8909
    %v9070 = vpack.c.b16 %v8912, %v8911
    %v9071 = vpack.c.b16 %v8914, %v8913
    %v9072 = vpack.c.b16 %v8916, %v8915
    %v9073 = vpack.c.b16 %v8918, %v8917
    %v9074 = vpack.c.b16 %v8920, %v8919
    %v9075 = vpack.c.b16 %v8922, %v8921
    %v9076 = vpack.c.b16 %v8924, %v8923
    %v9077 = vpack.c.b16 %v8926, %v8925
    %v9078 = vpack.c.b16 %v8928, %v8927
    %v9079 = vpack.c.b16 %v8930, %v8929
    %v9080 = vpack.c.b16 %v8932, %v8931
    %v9081 = vpack.c.b16 %v8934, %v8933
    %v9082 = vpack.c.b16 %v8936, %v8935
    %v9083 = vpack.c.b16 %v8938, %v8937
    %v9084 = vpack.c.b16 %v8940, %v8939
    %v9085 = vpack.c.b16 %v8942, %v8941
    %v9086 = vpack.c.b16 %v8944, %v8943
    %v9087 = vpack.c.b16 %v8946, %v8945
    %v9088 = vpack.c.b16 %v8948, %v8947
    %v9089 = vpack.c.b16 %v8950, %v8949
    %v9090 = vpack.c.b16 %v8952, %v8951
    %v9091 = vpack.c.b16 %v8954, %v8953
    %v9092 = vpack.c.b16 %v8956, %v8955
    %v9093 = vpack.c.b16 %v8958, %v8957
    %v9094 = vpack.c.b16 %v8960, %v8959
    %v9095 = vpack.c.b16 %v8962, %v8961
    %v9096 = vpack.c.b16 %v8964, %v8963
    %v9097 = vpack.c.b16 %v8966, %v8965
    %v9098 = vpack.c.b16 %v8968, %v8967
    %v9099 = vpack.c.b16 %v8970, %v8969
    %v9100 = vpack.c.b16 %v8972, %v8971
    %v9101 = vpack.c.b16 %v8974, %v8973
    %v9102 = vpack.c.b16 %v8976, %v8975
    %v9103 = vpack.c.b16 %v8978, %v8977
    %v9104 = vpack.c.b16 %v8980, %v8979
    %v9105 = vpack.c.b16 %v8982, %v8981
    %v9106 = vpack.c.b16 %v8984, %v8983
    %v9107 = vpack.c.b16 %v8986, %v8985
    %v9108 = vpack.c.b16 %v8988, %v8987
    %v9109 = vpack.c.b16 %v8990, %v8989
    %v9110 = vpack.c.b16 %v8992, %v8991
    %v9111 = vpack.c.b16 %v8994, %v8993
    %v9112 = vpack.c.b16 %v8996, %v8995
    %v9113 = vpack.c.b16 %v8998, %v8997
    %v9114 = vpack.c.b16 %v9000, %v8999
    %v9115 = vpack.c.b16 %v9002, %v9001
    %v9116 = vpack.c.b16 %v9004, %v9003
    %v9117 = vpack.c.b16 %v9006, %v9005
    %v9118 = vpack.c.b16 %v9008, %v9007
    %v9119 = vpack.c.b16 %v9010, %v9009
    %v9120 = vpack.c.b16 %v9012, %v9011
    %v9121 = vpack.c.b16 %v9014, %v9013
    %v9122 = vpack.c.b16 %v9016, %v9015
    %v9123 = vpack.c.b16 %v9018, %v9017
    %v9124 = vpack.c.b16 %v9020, %v9019
    %v9125 = vpack.c.b16 %v9022, %v9021
    %v9126 = vpack.c.b16 %v9024, %v9023
    %v9127 = vpack.c.b16 %v9026, %v9025
    %v9128 = vpack.c.b16 %v9028, %v9027
    %v9129 = vpack.c.b16 %v9030, %v9029
    %v9130 = vpack.c.b16 %v9032, %v9031
    %v9131 = vpack.c.b16 %v9034, %v9033
    %v9132 = vpack.c.b16 %v9036, %v9035
    %9229 = vmatpush.bf16.msra.mxu0 %v9044
    %9230 = vmatpush.bf16.msra.mxu0 %v9043
    %9231 = vmatpush.bf16.msra.mxu0 %v9042
    %9232 = vmatpush.bf16.msra.mxu0 %v9041
    %9233 = vmatpush.bf16.msra.mxu0 %v9040
    %9234 = vmatpush.bf16.msra.mxu0 %v9039
    %9235 = vmatpush.bf16.msra.mxu0 %v9038
    %9236 = vmatpush.bf16.msra.mxu0 %v9037
    %9237 = vmatmul.bf16.gmra.mxu0 %v8433
    %v9238 = vpop.f32.mrf.mxu0
    %v9239 = vadd.f32 %v8651, %v9238
    %v9240 = vpop.f32.mrf.mxu0
    %v9241 = vadd.f32 %v8651, %v9240
    %9242 = vmatmul.bf16.gmra.mxu0 %v8445
    %v9243 = vpop.f32.mrf.mxu0
    %v9244 = vadd.f32 %v8651, %v9243
    %v9245 = vpop.f32.mrf.mxu0
    %v9246 = vadd.f32 %v8651, %v9245
    %9247 = vdwg.mxu0
    %9248 = vmatpush.bf16.msra.mxu0 %v9052
    %9249 = vmatpush.bf16.msra.mxu0 %v9051
    %9250 = vmatpush.bf16.msra.mxu0 %v9050
    %9251 = vmatpush.bf16.msra.mxu0 %v9049
    %9252 = vmatpush.bf16.msra.mxu0 %v9048
    %9253 = vmatpush.bf16.msra.mxu0 %v9047
    %9254 = vmatpush.bf16.msra.mxu0 %v9046
    %9255 = vmatpush.bf16.msra.mxu0 %v9045
    %9256 = vmatmul.bf16.gmra.mxu0 %v8434
    %v9257 = vpop.f32.mrf.mxu0
    %v9258 = vadd.f32 %v9239, %v9257
    %v9259 = vpop.f32.mrf.mxu0
    %v9260 = vadd.f32 %v9241, %v9259
    %9261 = vmatmul.bf16.gmra.mxu0 %v8446
    %v9262 = vpop.f32.mrf.mxu0
    %v9263 = vadd.f32 %v9244, %v9262
    %v9264 = vpop.f32.mrf.mxu0
    %v9265 = vadd.f32 %v9246, %v9264
    %9266 = vdwg.mxu0
    %9267 = vmatpush.bf16.msra.mxu0 %v9060
    %9268 = vmatpush.bf16.msra.mxu0 %v9059
    %9269 = vmatpush.bf16.msra.mxu0 %v9058
    %9270 = vmatpush.bf16.msra.mxu0 %v9057
    %9271 = vmatpush.bf16.msra.mxu0 %v9056
    %9272 = vmatpush.bf16.msra.mxu0 %v9055
    %9273 = vmatpush.bf16.msra.mxu0 %v9054
    %9274 = vmatpush.bf16.msra.mxu0 %v9053
    %9275 = vmatmul.bf16.gmra.mxu0 %v8435
    %v9276 = vpop.f32.mrf.mxu0
    %v9277 = vadd.f32 %v9258, %v9276
    %v9278 = vpop.f32.mrf.mxu0
    %v9279 = vadd.f32 %v9260, %v9278
    %9280 = vmatmul.bf16.gmra.mxu0 %v8447
    %v9281 = vpop.f32.mrf.mxu0
    %v9282 = vadd.f32 %v9263, %v9281
    %v9283 = vpop.f32.mrf.mxu0
    %v9284 = vadd.f32 %v9265, %v9283
    %9285 = vdwg.mxu0
    %9286 = vmatpush.bf16.msra.mxu0 %v9068
    %9287 = vmatpush.bf16.msra.mxu0 %v9067
    %9288 = vmatpush.bf16.msra.mxu0 %v9066
    %9289 = vmatpush.bf16.msra.mxu0 %v9065
    %9290 = vmatpush.bf16.msra.mxu0 %v9064
    %9291 = vmatpush.bf16.msra.mxu0 %v9063
    %9292 = vmatpush.bf16.msra.mxu0 %v9062
    %9293 = vmatpush.bf16.msra.mxu0 %v9061
    %9294 = vmatmul.bf16.gmra.mxu0 %v8436
    %v9295 = vpop.f32.mrf.mxu0
    %v9296 = vadd.f32 %v9277, %v9295
    %v9297 = vpop.f32.mrf.mxu0
    %v9298 = vadd.f32 %v9279, %v9297
    %9299 = vmatmul.bf16.gmra.mxu0 %v8448
    %v9300 = vpop.f32.mrf.mxu0
    %v9301 = vadd.f32 %v9282, %v9300
    %v9302 = vpop.f32.mrf.mxu0
    %v9303 = vadd.f32 %v9284, %v9302
    %9304 = vdwg.mxu0
    %9305 = vmatpush.bf16.msra.mxu0 %v9076
    %9306 = vmatpush.bf16.msra.mxu0 %v9075
    %9307 = vmatpush.bf16.msra.mxu0 %v9074
    %9308 = vmatpush.bf16.msra.mxu0 %v9073
    %9309 = vmatpush.bf16.msra.mxu0 %v9072
    %9310 = vmatpush.bf16.msra.mxu0 %v9071
    %9311 = vmatpush.bf16.msra.mxu0 %v9070
    %9312 = vmatpush.bf16.msra.mxu0 %v9069
    %9313 = vmatmul.bf16.gmra.mxu0 %v8437
    %v9314 = vpop.f32.mrf.mxu0
    %v9315 = vadd.f32 %v9296, %v9314
    %v9316 = vpop.f32.mrf.mxu0
    %v9317 = vadd.f32 %v9298, %v9316
    %9318 = vmatmul.bf16.gmra.mxu0 %v8449
    %v9319 = vpop.f32.mrf.mxu0
    %v9320 = vadd.f32 %v9301, %v9319
    %v9321 = vpop.f32.mrf.mxu0
    %v9322 = vadd.f32 %v9303, %v9321
    %9323 = vdwg.mxu0
    %9324 = vmatpush.bf16.msra.mxu0 %v9084
    %9325 = vmatpush.bf16.msra.mxu0 %v9083
    %9326 = vmatpush.bf16.msra.mxu0 %v9082
    %9327 = vmatpush.bf16.msra.mxu0 %v9081
    %9328 = vmatpush.bf16.msra.mxu0 %v9080
    %9329 = vmatpush.bf16.msra.mxu0 %v9079
    %9330 = vmatpush.bf16.msra.mxu0 %v9078
    %9331 = vmatpush.bf16.msra.mxu0 %v9077
    %9332 = vmatmul.bf16.gmra.mxu0 %v8438
    %v9333 = vpop.f32.mrf.mxu0
    %v9334 = vadd.f32 %v9315, %v9333
    %v9335 = vpop.f32.mrf.mxu0
    %v9336 = vadd.f32 %v9317, %v9335
    %9337 = vmatmul.bf16.gmra.mxu0 %v8450
    %v9338 = vpop.f32.mrf.mxu0
    %v9339 = vadd.f32 %v9320, %v9338
    %v9340 = vpop.f32.mrf.mxu0
    %v9341 = vadd.f32 %v9322, %v9340
    %9342 = vdwg.mxu0
    %9343 = vmatpush.bf16.msra.mxu0 %v9092
    %9344 = vmatpush.bf16.msra.mxu0 %v9091
    %9345 = vmatpush.bf16.msra.mxu0 %v9090
    %9346 = vmatpush.bf16.msra.mxu0 %v9089
    %9347 = vmatpush.bf16.msra.mxu0 %v9088
    %9348 = vmatpush.bf16.msra.mxu0 %v9087
    %9349 = vmatpush.bf16.msra.mxu0 %v9086
    %9350 = vmatpush.bf16.msra.mxu0 %v9085
    %9351 = vmatmul.bf16.gmra.mxu0 %v8439
    %v9352 = vpop.f32.mrf.mxu0
    %v9353 = vadd.f32 %v9334, %v9352
    %v9354 = vpop.f32.mrf.mxu0
    %v9355 = vadd.f32 %v9336, %v9354
    %9356 = vmatmul.bf16.gmra.mxu0 %v8451
    %v9357 = vpop.f32.mrf.mxu0
    %v9358 = vadd.f32 %v9339, %v9357
    %v9359 = vpop.f32.mrf.mxu0
    %v9360 = vadd.f32 %v9341, %v9359
    %9361 = vdwg.mxu0
    %9362 = vmatpush.bf16.msra.mxu0 %v9100
    %9363 = vmatpush.bf16.msra.mxu0 %v9099
    %9364 = vmatpush.bf16.msra.mxu0 %v9098
    %9365 = vmatpush.bf16.msra.mxu0 %v9097
    %9366 = vmatpush.bf16.msra.mxu0 %v9096
    %9367 = vmatpush.bf16.msra.mxu0 %v9095
    %9368 = vmatpush.bf16.msra.mxu0 %v9094
    %9369 = vmatpush.bf16.msra.mxu0 %v9093
    %9370 = vmatmul.bf16.gmra.mxu0 %v8440
    %v9371 = vpop.f32.mrf.mxu0
    %v9372 = vadd.f32 %v9353, %v9371
    %v9373 = vpop.f32.mrf.mxu0
    %v9374 = vadd.f32 %v9355, %v9373
    %9375 = vmatmul.bf16.gmra.mxu0 %v8452
    %v9376 = vpop.f32.mrf.mxu0
    %v9377 = vadd.f32 %v9358, %v9376
    %v9378 = vpop.f32.mrf.mxu0
    %v9379 = vadd.f32 %v9360, %v9378
    %9380 = vdwg.mxu0
    %9381 = vmatpush.bf16.msra.mxu0 %v9108
    %9382 = vmatpush.bf16.msra.mxu0 %v9107
    %9383 = vmatpush.bf16.msra.mxu0 %v9106
    %9384 = vmatpush.bf16.msra.mxu0 %v9105
    %9385 = vmatpush.bf16.msra.mxu0 %v9104
    %9386 = vmatpush.bf16.msra.mxu0 %v9103
    %9387 = vmatpush.bf16.msra.mxu0 %v9102
    %9388 = vmatpush.bf16.msra.mxu0 %v9101
    %9389 = vmatmul.bf16.gmra.mxu0 %v8441
    %v9390 = vpop.f32.mrf.mxu0
    %v9391 = vadd.f32 %v9372, %v9390
    %v9392 = vpop.f32.mrf.mxu0
    %v9393 = vadd.f32 %v9374, %v9392
    %9394 = vmatmul.bf16.gmra.mxu0 %v8453
    %v9395 = vpop.f32.mrf.mxu0
    %v9396 = vadd.f32 %v9377, %v9395
    %v9397 = vpop.f32.mrf.mxu0
    %v9398 = vadd.f32 %v9379, %v9397
    %9399 = vdwg.mxu0
    %9400 = vmatpush.bf16.msra.mxu0 %v9116
    %9401 = vmatpush.bf16.msra.mxu0 %v9115
    %9402 = vmatpush.bf16.msra.mxu0 %v9114
    %9403 = vmatpush.bf16.msra.mxu0 %v9113
    %9404 = vmatpush.bf16.msra.mxu0 %v9112
    %9405 = vmatpush.bf16.msra.mxu0 %v9111
    %9406 = vmatpush.bf16.msra.mxu0 %v9110
    %9407 = vmatpush.bf16.msra.mxu0 %v9109
    %9408 = vmatmul.bf16.gmra.mxu0 %v8442
    %v9409 = vpop.f32.mrf.mxu0
    %v9410 = vadd.f32 %v9391, %v9409
    %v9411 = vpop.f32.mrf.mxu0
    %v9412 = vadd.f32 %v9393, %v9411
    %9413 = vmatmul.bf16.gmra.mxu0 %v8454
    %v9414 = vpop.f32.mrf.mxu0
    %v9415 = vadd.f32 %v9396, %v9414
    %v9416 = vpop.f32.mrf.mxu0
    %v9417 = vadd.f32 %v9398, %v9416
    %9418 = vdwg.mxu0
    %9419 = vmatpush.bf16.msra.mxu0 %v9124
    %9420 = vmatpush.bf16.msra.mxu0 %v9123
    %9421 = vmatpush.bf16.msra.mxu0 %v9122
    %9422 = vmatpush.bf16.msra.mxu0 %v9121
    %9423 = vmatpush.bf16.msra.mxu0 %v9120
    %9424 = vmatpush.bf16.msra.mxu0 %v9119
    %9425 = vmatpush.bf16.msra.mxu0 %v9118
    %9426 = vmatpush.bf16.msra.mxu0 %v9117
    %9427 = vmatmul.bf16.gmra.mxu0 %v8443
    %v9428 = vpop.f32.mrf.mxu0
    %v9429 = vadd.f32 %v9410, %v9428
    %v9430 = vpop.f32.mrf.mxu0
    %v9431 = vadd.f32 %v9412, %v9430
    %9432 = vmatmul.bf16.gmra.mxu0 %v8455
    %v9433 = vpop.f32.mrf.mxu0
    %v9434 = vadd.f32 %v9415, %v9433
    %v9435 = vpop.f32.mrf.mxu0
    %v9436 = vadd.f32 %v9417, %v9435
    %9437 = vdwg.mxu0
    %9438 = vmatpush.bf16.msra.mxu0 %v9132
    %9439 = vmatpush.bf16.msra.mxu0 %v9131
    %9440 = vmatpush.bf16.msra.mxu0 %v9130
    %9441 = vmatpush.bf16.msra.mxu0 %v9129
    %9442 = vmatpush.bf16.msra.mxu0 %v9128
    %9443 = vmatpush.bf16.msra.mxu0 %v9127
    %9444 = vmatpush.bf16.msra.mxu0 %v9126
    %9445 = vmatpush.bf16.msra.mxu0 %v9125
    %9446 = vmatmul.bf16.gmra.mxu0 %v8444
    %v9447 = vpop.f32.mrf.mxu0
    %v9448 = vadd.f32 %v9429, %v9447
    %v9449 = vpop.f32.mrf.mxu0
    %v9450 = vadd.f32 %v9431, %v9449
    %9451 = vmatmul.bf16.gmra.mxu0 %v8456
    %v9452 = vpop.f32.mrf.mxu0
    %v9453 = vadd.f32 %v9434, %v9452
    %v9454 = vpop.f32.mrf.mxu0
    %v9455 = vadd.f32 %v9436, %v9454
    %9456 = vdwg.mxu0
    %v9457 = vsub.f32 0.0, %v9448
    %v9458 = vsub.f32 0.0, %v9450
    %v9459 = vsub.f32 0.0, %v9453
    %v9460 = vsub.f32 0.0, %v9455
    %v9461 = vmul.f32 %v9457, 1.442695
    %v9462 = vpow.pop %v9461
    %v9463 = vmul.f32 %v9458, 1.442695
    %v9464 = vpow.pop %v9463
    %v9465 = vmul.f32 %v9459, 1.442695
    %v9466 = vpow.pop %v9465
    %v9467 = vmul.f32 %v9460, 1.442695
    %v9468 = vpow.pop %v9467
    %v9469 = vadd.f32 %v9462, 1.0
    %v9470 = vadd.f32 %v9464, 1.0
    %v9471 = vadd.f32 %v9466, 1.0
    %v9472 = vadd.f32 %v9468, 1.0
    %v9473 = vrcp.pop %v9469
    %v9474 = vmul.f32 %v9469, %v9473
    %v9475 = vsub.f32 1.0, %v9474
    %v9476 = vmul.f32 %v9473, %v9475
    %v9477 = vadd.f32 %v9473, %v9476
    %vm9478 = vweird.f32 %v9469
    %vm9479 = vweird.f32 %v9473
    %vm9480 = vmor %vm9478, %vm9479
    %v9481 = vsel %vm9480, %v9473, %v9477
    %v9482 = vand.u32 2147483647, %v9469
    %vm9483 = vcmp.eq.f32.partialorder %v9482, 8.507059e+37
    %v9484 = vand.u32 %v9469, 2147483648
    %v9485 = vor.u32 1.1754944e-38, %v9484
    %v9486 = vsel %vm9483, %v9485, %v9481
    %v9487 = vmul.f32 1.0, %v9486
    %v9488 = vrcp.pop %v9470
    %v9489 = vmul.f32 %v9470, %v9488
    %v9490 = vsub.f32 1.0, %v9489
    %v9491 = vmul.f32 %v9488, %v9490
    %v9492 = vadd.f32 %v9488, %v9491
    %vm9493 = vweird.f32 %v9470
    %vm9494 = vweird.f32 %v9488
    %vm9495 = vmor %vm9493, %vm9494
    %v9496 = vsel %vm9495, %v9488, %v9492
    %v9497 = vand.u32 2147483647, %v9470
    %vm9498 = vcmp.eq.f32.partialorder %v9497, 8.507059e+37
    %v9499 = vand.u32 %v9470, 2147483648
    %v9500 = vor.u32 1.1754944e-38, %v9499
    %v9501 = vsel %vm9498, %v9500, %v9496
    %v9502 = vmul.f32 1.0, %v9501
    %v9503 = vrcp.pop %v9471
    %v9504 = vmul.f32 %v9471, %v9503
    %v9505 = vsub.f32 1.0, %v9504
    %v9506 = vmul.f32 %v9503, %v9505
    %v9507 = vadd.f32 %v9503, %v9506
    %vm9508 = vweird.f32 %v9471
    %vm9509 = vweird.f32 %v9503
    %vm9510 = vmor %vm9508, %vm9509
    %v9511 = vsel %vm9510, %v9503, %v9507
    %v9512 = vand.u32 2147483647, %v9471
    %vm9513 = vcmp.eq.f32.partialorder %v9512, 8.507059e+37
    %v9514 = vand.u32 %v9471, 2147483648
    %v9515 = vor.u32 1.1754944e-38, %v9514
    %v9516 = vsel %vm9513, %v9515, %v9511
    %v9517 = vmul.f32 1.0, %v9516
    %v9518 = vrcp.pop %v9472
    %v9519 = vmul.f32 %v9472, %v9518
    %v9520 = vsub.f32 1.0, %v9519
    %v9521 = vmul.f32 %v9518, %v9520
    %v9522 = vadd.f32 %v9518, %v9521
    %vm9523 = vweird.f32 %v9472
    %vm9524 = vweird.f32 %v9518
    %vm9525 = vmor %vm9523, %vm9524
    %v9526 = vsel %vm9525, %v9518, %v9522
    %v9527 = vand.u32 2147483647, %v9472
    %vm9528 = vcmp.eq.f32.partialorder %v9527, 8.507059e+37
    %v9529 = vand.u32 %v9472, 2147483648
    %v9530 = vor.u32 1.1754944e-38, %v9529
    %v9531 = vsel %vm9528, %v9530, %v9526
    %v9532 = vmul.f32 1.0, %v9531
    %vm9533 = vcmask 785408
    %9534 = vst.msk [vmem:[%s16] sm:$0xff] %vm9533, %v9487
    %9535 = vst.msk [vmem:[%s16 + $0x8] sm:$0xff] %vm9533, %v9502
    %9536 = vst.msk [vmem:[%s16 + $0x10] sm:$0xff] %vm9533, %v9517
    %9537 = vst.msk [vmem:[%s16 + $0x18] sm:$0xff] %vm9533, %v9532
    // Predicated region
    $region122: #{generator_forward.1} parent=1 // pred_check
      _
    $region123: #{generator_forward.1} parent=1 // pred_check_branch
      %9539 = sbr.rel (0) target = $region125
    $region124: #{generator_forward.1} parent=1 // pred_region
      _
    $region125: #{generator_forward.1} parent=1 // pred_fallthru
      _
    // Predicated region
    $region126: #{generator_forward.1} parent=1 // pred_check
      _
    $region127: #{generator_forward.1} parent=1 // pred_check_branch
      %9541 = sbr.rel (0) target = $region129
    $region128: #{generator_forward.1} parent=1 // pred_region
      _
    $region129: #{generator_forward.1} parent=1 // pred_fallthru
      _
    %9542 = vsyncpa [#allocation3], 1
    %9543 = vsyncpa [#allocation5], 1
    %9544 = vsyncpa [#allocation8], 1
    %9545 = vsyncpa [#allocation11], 1
    %9546 = vsyncpa [#allocation14], 1
    %9547 = vsyncpa [#allocation17], 1
    %9548 = vsyncpa [#allocation20], 1
    %9549 = vsyncpa [#allocation23], 1

</llo_original>
